<compile_context>
chip_gen: v5e
topology: v5e:2x2
jax: 0.10.0
libtpu: 0.0.40
codegen_flags: <defaults>
</compile_context>

<pallas_src>
import functools

import jax
import jax.numpy as jnp
from jax import lax
from jax.experimental import pallas as pl
from jax.experimental.pallas import tpu as pltpu


def _round_up(x, m):
    return ((x + m - 1) // m) * m


def _fit(dim, tile, align):
    """Return (padded_dim, tile) with align | tile and tile | padded_dim."""
    d = _round_up(dim, align)
    if d <= tile:
        return d, d
    return _round_up(d, tile), tile


# --------------------------------------------------------------------- Pallas matmul
def _matmul_kernel(*refs, n_ab):
    """sum_i A_i @ B_i + bias.  refs = (a_0, b_0, ..., a_{n-1}, b_{n-1}, bias, out, acc)."""
    bias_ref = refs[2 * n_ab]
    o_ref = refs[2 * n_ab + 1]
    acc_ref = refs[2 * n_ab + 2]
    k = pl.program_id(2)

    @pl.when(k == 0)
    def _():
        acc_ref[...] = jnp.zeros_like(acc_ref)

    # MXU fed with bf16 operands (the cast is a no-op for pre-cast weights / bf16
    # activations); accumulation stays f32 in VMEM scratch.
    for i in range(n_ab):
        acc_ref[...] += jnp.dot(refs[2 * i][...].astype(jnp.bfloat16),
                                refs[2 * i + 1][...].astype(jnp.bfloat16),
                                preferred_element_type=jnp.float32)

    @pl.when(k == pl.num_programs(2) - 1)
    def _():
        o_ref[...] = (acc_ref[...] + bias_ref[...]).astype(o_ref.dtype)


def matmul_bias(ab, bias, *, out_dtype=jnp.float32, tm=256, tn=512, tk=512):
    """sum_i a_i @ b_i + bias[None, :].

    ab: list of (a_i (M, K), b_i (K, N)) pairs sharing M, K, N.  A operands may be f32
    (cast to bf16 inside the kernel — no HBM cast copies); B operands are expected to
    be pre-cast bf16 weights.  Only dims that are actually misaligned get padded.
    """
    M, K = ab[0][0].shape
    N = ab[0][1].shape[1]
    for a, b in ab:
        assert a.shape == (M, K) and b.shape == (K, N)
    assert bias.shape == (N,)

    Mp, tm = _fit(M, tm, 8)
    Kp, tk = _fit(K, tk, 128)
    Np, tn = _fit(N, tn, 128)

    ops = []
    for a, b in ab:
        if (Mp, Kp) != (M, K):
            a = jnp.pad(a, ((0, Mp - M), (0, Kp - K)))
        if (Kp, Np) != (K, N):
            b = jnp.pad(b, ((0, Kp - K), (0, Np - N)))
        ops += [a, b]
    bias_p = bias if Np == N else jnp.pad(bias, (0, Np - N))
    bias_p = bias_p.astype(jnp.float32).reshape(1, Np)

    in_specs = []
    for _ in range(len(ab)):
        in_specs += [pl.BlockSpec((tm, tk), lambda i, j, k: (i, k)),
                     pl.BlockSpec((tk, tn), lambda i, j, k: (k, j))]
    in_specs.append(pl.BlockSpec((1, tn), lambda i, j, k: (0, j)))

    out = pl.pallas_call(
        functools.partial(_matmul_kernel, n_ab=len(ab)),
        out_shape=jax.ShapeDtypeStruct((Mp, Np), out_dtype),
        grid_spec=pltpu.PrefetchScalarGridSpec(
            num_scalar_prefetch=0,
            grid=(Mp // tm, Np // tn, Kp // tk),
            in_specs=in_specs,
            out_specs=pl.BlockSpec((tm, tn), lambda i, j, k: (i, j)),
            scratch_shapes=[pltpu.VMEM((tm, tn), jnp.float32)],
        ),
        compiler_params=pltpu.CompilerParams(
            dimension_semantics=("parallel", "parallel", "arbitrary"),
            vmem_limit_bytes=32 * 1024 * 1024),
    )(*ops, bias_p)

    if (Mp, Np) != (M, N):
        out = out[:M, :N]
    return out


# --------------------------------------------------------------- bi-LSTM recurrence
def _bilstm_kernel(gxf_ref, gxb_ref, whh_ref, of_ref, ob_ref,
                   hf_ref, cf_ref, hb_ref, cb_ref, *, TB, H):
    tb = pl.program_id(0)

    # h/c scratch is carried across the single "arbitrary" time-block axis and reset
    # exactly once at the first block.  Do not reorder / fuse grid axes.
    @pl.when(tb == 0)
    def _():
        hf_ref[...] = jnp.zeros_like(hf_ref)
        cf_ref[...] = jnp.zeros_like(cf_ref)
        hb_ref[...] = jnp.zeros_like(hb_ref)
        cb_ref[...] = jnp.zeros_like(cb_ref)

    def cell(gx_ref, s, d, h_ref, c_ref, out_ref):
        # static index s -> aligned, unmasked loads/stores; Bp x H is a full (8,128) tile
        gates = gx_ref[s].astype(jnp.float32) + jnp.dot(
            h_ref[...].astype(jnp.bfloat16), whh_ref[d],
            preferred_element_type=jnp.float32)
        i = jax.nn.sigmoid(gates[:, 0:H])
        f = jax.nn.sigmoid(gates[:, H:2 * H])
        g = jnp.tanh(gates[:, 2 * H:3 * H])
        o = jax.nn.sigmoid(gates[:, 3 * H:4 * H])
        c_new = f * c_ref[...] + i * g
        h_new = o * jnp.tanh(c_new)
        c_ref[...] = c_new
        h_ref[...] = h_new
        out_ref[s] = h_new.astype(out_ref.dtype)

    # Interleave forward (ascending time) and backward (descending time) steps: the two
    # dependence chains are independent, so EUP/VPU work of one hides MXU latency of
    # the other.  Fully unrolled with static indices.
    for s in range(TB):
        cell(gxf_ref, s, 0, hf_ref, cf_ref, of_ref)
        cell(gxb_ref, TB - 1 - s, 1, hb_ref, cb_ref, ob_ref)


def _bilstm_recurrence(gx, whh, *, T, Bp, H, TB):
    nTB = T // TB
    hf, hb = pl.pallas_call(
        functools.partial(_bilstm_kernel, TB=TB, H=H),
        out_shape=(jax.ShapeDtypeStruct((T, Bp, H), jnp.bfloat16),
                   jax.ShapeDtypeStruct((T, Bp, H), jnp.bfloat16)),
        grid_spec=pltpu.PrefetchScalarGridSpec(
            num_scalar_prefetch=0,
            grid=(nTB,),
            in_specs=[
                # forward gate columns: time blocks walked forward
                pl.BlockSpec((TB, Bp, 4 * H), lambda tb: (tb, 0, 0)),
                # backward gate columns: time blocks walked in reverse purely via the
                # index_map — no reversed copy of gx is ever materialized in HBM
                pl.BlockSpec((TB, Bp, 4 * H), lambda tb: (nTB - 1 - tb, 0, 1)),
                # both directions' recurrent weights; constant block index keeps them
                # VMEM-resident for the whole sweep (DMA elided after the first step)
                pl.BlockSpec((2, H, 4 * H), lambda tb: (0, 0, 0)),
            ],
            out_specs=[
                pl.BlockSpec((TB, Bp, H), lambda tb: (tb, 0, 0)),
                pl.BlockSpec((TB, Bp, H), lambda tb: (nTB - 1 - tb, 0, 0)),
            ],
            scratch_shapes=[pltpu.VMEM((Bp, H), jnp.float32),   # h fwd
                            pltpu.VMEM((Bp, H), jnp.float32),   # c fwd
                            pltpu.VMEM((Bp, H), jnp.float32),   # h bwd
                            pltpu.VMEM((Bp, H), jnp.float32)],  # c bwd
        ),
        compiler_params=pltpu.CompilerParams(
            dimension_semantics=("arbitrary",),
            vmem_limit_bytes=32 * 1024 * 1024),
    )(gx, gx, whh)
    return hf, hb


# --------------------------------------------------------------------------- forward
def prepare_params(p):
    """One-time weight reshuffle: transpose / concat / stack and cast to bf16."""
    H = p['w_hh_f'].shape[1]
    w_ih = jnp.concatenate([p['w_ih_f'].T, p['w_ih_b'].T], axis=1).astype(jnp.bfloat16)  # (nIn, 8H)
    b_ih = jnp.concatenate([p['b_ih_f'] + p['b_hh_f'],
                            p['b_ih_b'] + p['b_hh_b']]).astype(jnp.float32)              # (8H,)
    whh = jnp.stack([p['w_hh_f'].T, p['w_hh_b'].T]).astype(jnp.bfloat16)                 # (2, H, 4H)
    emb_wf = p['emb_w'][:, :H].T.astype(jnp.bfloat16)                                    # (H, nOut)
    emb_wb = p['emb_w'][:, H:].T.astype(jnp.bfloat16)                                    # (H, nOut)
    emb_b = p['emb_b'].astype(jnp.float32)
    return {'w_ih': w_ih, 'b_ih': b_ih, 'whh': whh,
            'emb_wf': emb_wf, 'emb_wb': emb_wb, 'emb_b': emb_b}


def bidirectional_lstm(x, q):
    """BidirectionalLSTM forward.  x: (T, B, nIn) f32; q = prepare_params(raw_params)."""
    T, B, nIn = x.shape
    H = q['whh'].shape[1]
    nOut = q['emb_b'].shape[0]

    # Pad batch to the f32/bf16 sublane (8): full-tile stores + 4x better MXU row use.
    Bp = _round_up(B, 8)
    if Bp != B:
        x = jnp.pad(x, ((0, 0), (0, Bp - B), (0, 0)))

    # Fused input projection for BOTH directions; (b_ih + b_hh) folded into the bias
    # once so the recurrence never re-adds it.  Kept in bf16 (halves gx HBM traffic).
    gx = matmul_bias([(x.reshape(T * Bp, nIn), q['w_ih'])], q['b_ih'],
                     out_dtype=jnp.bfloat16)                       # (T*Bp, 8H)
    gx = gx.reshape(T, Bp, 8 * H)

    TB = next(t for t in (16, 8, 4, 2, 1) if T % t == 0)           # timesteps per grid step
    hf, hb = _bilstm_recurrence(gx, q['whh'], T=T, Bp=Bp, H=H, TB=TB)

    # Final linear: [hf, hb] @ emb_w.T + b  ==  hf @ Wf + hb @ Wb + b, computed in one
    # Pallas call, so the (T, B, 2H) hidden sequence is never concatenated in HBM.
    out = matmul_bias([(hf.reshape(T * Bp, H), q['emb_wf']),
                       (hb.reshape(T * Bp, H), q['emb_wb'])],
                      q['emb_b'], out_dtype=jnp.float32)           # (T*Bp, nOut)
    return out.reshape(T, Bp, nOut)[:, :B, :]


# --------------------------------------------------------------------------- params
def init_params(key, nIn, nHidden, nOut):
    keys = iter(jax.random.split(key, 16))
    s = 1.0 / jnp.sqrt(nHidden)
    p = {}
    for d in ('f', 'b'):
        p[f'w_ih_{d}'] = jax.random.uniform(next(keys), (4 * nHidden, nIn), jnp.float32, -s, s)
        p[f'w_hh_{d}'] = jax.random.uniform(next(keys), (4 * nHidden, nHidden), jnp.float32, -s, s)
        p[f'b_ih_{d}'] = jax.random.uniform(next(keys), (4 * nHidden,), jnp.float32, -s, s)
        p[f'b_hh_{d}'] = jax.random.uniform(next(keys), (4 * nHidden,), jnp.float32, -s, s)
    se = 1.0 / jnp.sqrt(2.0 * nHidden)
    p['emb_w'] = jax.random.uniform(next(keys), (nOut, 2 * nHidden), jnp.float32, -se, se)
    p['emb_b'] = jax.random.uniform(next(keys), (nOut,), jnp.float32, -se, se)
    return p


# ------------------------------------------------------------------ pure-JAX reference
def _lstm_ref_dir(x, w_ih, w_hh, b_ih, b_hh):
    H = w_hh.shape[1]
    B = x.shape[1]

    def step(carry, xt):
        h, c = carry
        g = xt @ w_ih.T + b_ih + h @ w_hh.T + b_hh
        i = jax.nn.sigmoid(g[:, :H])
        f = jax.nn.sigmoid(g[:, H:2 * H])
        gg = jnp.tanh(g[:, 2 * H:3 * H])
        o = jax.nn.sigmoid(g[:, 3 * H:])
        c = f * c + i * gg
        h = o * jnp.tanh(c)
        return (h, c), h

    init = (jnp.zeros((B, H), jnp.float32), jnp.zeros((B, H), jnp.float32))
    _, hs = lax.scan(step, init, x)
    return hs


def bidirectional_lstm_ref(x, p):
    hf = _lstm_ref_dir(x, p['w_ih_f'], p['w_hh_f'], p['b_ih_f'], p['b_hh_f'])
    hb = _lstm_ref_dir(x[::-1], p['w_ih_b'], p['w_hh_b'], p['b_ih_b'], p['b_hh_b'])[::-1]
    rec = jnp.concatenate([hf, hb], axis=-1)
    T, B, h2 = rec.shape
    out = rec.reshape(T * B, h2) @ p['emb_w'].T + p['emb_b']
    return out.reshape(T, B, -1)


# ----------------------------------------------------------------------------- main
if __name__ == "__main__":
    key = jax.random.PRNGKey(0)
    kx, kp = jax.random.split(key)

    T, B, nIn, nHidden, nOut = 8, 2, 128, 128, 64
    x = jax.random.normal(kx, (T, B, nIn), jnp.float32)
    params = init_params(kp, nIn, nHidden, nOut)
    prepped = prepare_params(params)        # one-time weight transpose/concat/bf16 cast

    out = jax.jit(bidirectional_lstm)(x, prepped)
    jax.block_until_ready(out)
    assert out.shape == (T, B, nOut), out.shape
    assert out.dtype == jnp.float32

    ref = bidirectional_lstm_ref(x, params)
    err = float(jnp.max(jnp.abs(out - ref)))
    assert err < 1e-1, f"max abs err {err}"   # bf16 MXU operands / bf16 gx + h storage
    print("KERNEL_OK")
</pallas_src>

<mosaic_0001>
module attributes {stable_mosaic.version = 11 : i64} {
  func.func @_matmul_kernel(%arg0: i32, %arg1: i32, %arg2: i32, %arg3: memref<64x128xf32, #tpu.memory_space<vmem>>, %arg4: memref<128x512xbf16, #tpu.memory_space<vmem>>, %arg5: memref<1x512xf32, #tpu.memory_space<vmem>>, %arg6: memref<64x512xbf16, #tpu.memory_space<vmem>>, %arg7: memref<64x512xf32, #tpu.memory_space<vmem>>) attributes {dimension_semantics = [#tpu.dimension_semantics<parallel>, #tpu.dimension_semantics<parallel>, #tpu.dimension_semantics<arbitrary>], iteration_bounds = array<i64: 1, 2, 1>, scalar_prefetch = 0 : i64, scratch_operands = 1 : i64, tpu.core_type = #tpu.core_type<tc>, window_params = [{transform_indices = @transform_0, window_bounds = array<i64: 64, 128>}, {transform_indices = @transform_1, window_bounds = array<i64: 128, 512>}, {transform_indices = @transform_2, window_bounds = array<i64: 1, 512>}, {transform_indices = @transform_3, window_bounds = array<i64: 64, 512>}]} {
    %c0_i32 = arith.constant 0 : i32
    %0 = arith.cmpi eq, %arg2, %c0_i32 : i32
    %1 = arith.extui %0 : i1 to i32
    %c0_i32_0 = arith.constant 0 : i32
    %2 = arith.cmpi ne, %1, %c0_i32_0 : i32
    scf.if %2 {
      %cst_10 = arith.constant 0.000000e+00 : f32
      %13 = vector.broadcast %cst_10 : f32 to vector<64x512xf32>
      %c0_11 = arith.constant 0 : index
      %c0_12 = arith.constant 0 : index
      %14 = vector.load %arg7[%c0_11, %c0_12] : memref<64x512xf32, #tpu.memory_space<vmem>>, vector<64x512xf32>
      tpu.vector_store %arg7[%c0_11, %c0_12], %13 {strides = array<i32>} : memref<64x512xf32, #tpu.memory_space<vmem>>, vector<64x512xf32>,
    } else {
    }
    %c0 = arith.constant 0 : index
    %c0_1 = arith.constant 0 : index
    %3 = vector.load %arg7[%c0, %c0_1] : memref<64x512xf32, #tpu.memory_space<vmem>>, vector<64x512xf32>
    %c0_2 = arith.constant 0 : index
    %c0_3 = arith.constant 0 : index
    %4 = vector.load %arg3[%c0_2, %c0_3] : memref<64x128xf32, #tpu.memory_space<vmem>>, vector<64x128xf32>
    %5 = arith.truncf %4 : vector<64x128xf32> to vector<64x128xbf16>
    %c0_4 = arith.constant 0 : index
    %c0_5 = arith.constant 0 : index
    %6 = vector.load %arg4[%c0_4, %c0_5] : memref<128x512xbf16, #tpu.memory_space<vmem>>, vector<128x512xbf16>
    %cst = arith.constant dense<0.000000e+00> : vector<64x512xf32>
    %7 = tpu.matmul %5, %6, %cst {dimension_numbers = #tpu.dot_dimension_numbers<[1], [0], [0], [1], [0, 0, 1, 1], [], []>} : vector<64x128xbf16>, vector<128x512xbf16>, vector<64x512xf32> -> vector<64x512xf32>
    %8 = arith.addf %3, %7 : vector<64x512xf32>
    %c0_6 = arith.constant 0 : index
    %c0_7 = arith.constant 0 : index
    %9 = vector.load %arg7[%c0_6, %c0_7] : memref<64x512xf32, #tpu.memory_space<vmem>>, vector<64x512xf32>
    tpu.vector_store %arg7[%c0_6, %c0_7], %8 {strides = array<i32>} : memref<64x512xf32, #tpu.memory_space<vmem>>, vector<64x512xf32>,
    %c0_i32_8 = arith.constant 0 : i32
    %10 = arith.cmpi eq, %arg2, %c0_i32_8 : i32
    %11 = arith.extui %10 : i1 to i32
    %c0_i32_9 = arith.constant 0 : i32
    %12 = arith.cmpi ne, %11, %c0_i32_9 : i32
    scf.if %12 {
      %c0_10 = arith.constant 0 : index
      %c0_11 = arith.constant 0 : index
      %13 = vector.load %arg7[%c0_10, %c0_11] : memref<64x512xf32, #tpu.memory_space<vmem>>, vector<64x512xf32>
      %c0_12 = arith.constant 0 : index
      %c0_13 = arith.constant 0 : index
      %14 = vector.load %arg5[%c0_12, %c0_13] : memref<1x512xf32, #tpu.memory_space<vmem>>, vector<1x512xf32>
      %15 = vector.broadcast %14 : vector<1x512xf32> to vector<64x512xf32>
      %16 = arith.addf %13, %15 : vector<64x512xf32>
      %17 = arith.truncf %16 : vector<64x512xf32> to vector<64x512xbf16>
      %c0_14 = arith.constant 0 : index
      %c0_15 = arith.constant 0 : index
      %18 = vector.load %arg6[%c0_14, %c0_15] : memref<64x512xbf16, #tpu.memory_space<vmem>>, vector<64x512xbf16>
      tpu.vector_store %arg6[%c0_14, %c0_15], %17 {strides = array<i32>} : memref<64x512xbf16, #tpu.memory_space<vmem>>, vector<64x512xbf16>,
    } else {
    }
    return
  }
  func.func @transform_0(%arg0: i32, %arg1: i32, %arg2: i32) -> (i32, i32) {
    %c0_i32 = arith.constant 0 : i32
    return %arg0, %arg2 : i32, i32
  }
  func.func @transform_1(%arg0: i32, %arg1: i32, %arg2: i32) -> (i32, i32) {
    %c0_i32 = arith.constant 0 : i32
    return %arg2, %arg1 : i32, i32
  }
  func.func @transform_2(%arg0: i32, %arg1: i32, %arg2: i32) -> (i32, i32) {
    %c0_i32 = arith.constant 0 : i32
    %c0_i32_0 = arith.constant 0 : i32
    return %c0_i32, %arg1 : i32, i32
  }
  func.func @transform_3(%arg0: i32, %arg1: i32, %arg2: i32) -> (i32, i32) {
    %c0_i32 = arith.constant 0 : i32
    return %arg0, %arg1 : i32, i32
  }
}

module attributes {stable_mosaic.version = 11 : i64} {
  func.func @_bilstm_kernel(%arg0: i32, %arg1: memref<8x8x512xbf16, #tpu.memory_space<vmem>>, %arg2: memref<8x8x512xbf16, #tpu.memory_space<vmem>>, %arg3: memref<2x128x512xbf16, #tpu.memory_space<vmem>>, %arg4: memref<8x8x128xbf16, #tpu.memory_space<vmem>>, %arg5: memref<8x8x128xbf16, #tpu.memory_space<vmem>>, %arg6: memref<8x128xf32, #tpu.memory_space<vmem>>, %arg7: memref<8x128xf32, #tpu.memory_space<vmem>>, %arg8: memref<8x128xf32, #tpu.memory_space<vmem>>, %arg9: memref<8x128xf32, #tpu.memory_space<vmem>>) attributes {dimension_semantics = [#tpu.dimension_semantics<arbitrary>], iteration_bounds = array<i64: 1>, scalar_prefetch = 0 : i64, scratch_operands = 4 : i64, tpu.core_type = #tpu.core_type<tc>, window_params = [{transform_indices = @transform_0, window_bounds = array<i64: 8, 8, 512>}, {transform_indices = @transform_1, window_bounds = array<i64: 8, 8, 512>}, {pipeline_mode = #tpu.pipeline_mode<synchronous>, transform_indices = @transform_2, window_bounds = array<i64: 2, 128, 512>}, {transform_indices = @transform_3, window_bounds = array<i64: 8, 8, 128>}, {transform_indices = @transform_4, window_bounds = array<i64: 8, 8, 128>}]} {
    %c0_i32 = arith.constant 0 : i32
    %0 = arith.cmpi eq, %arg0, %c0_i32 : i32
    %1 = arith.extui %0 : i1 to i32
    %c0_i32_0 = arith.constant 0 : i32
    %2 = arith.cmpi ne, %1, %c0_i32_0 : i32
    scf.if %2 {
      %cst_328 = arith.constant 0.000000e+00 : f32
      %659 = vector.broadcast %cst_328 : f32 to vector<8x128xf32>
      %c0_329 = arith.constant 0 : index
      %c0_330 = arith.constant 0 : index
      %660 = vector.load %arg6[%c0_329, %c0_330] : memref<8x128xf32, #tpu.memory_space<vmem>>, vector<8x128xf32>
      tpu.vector_store %arg6[%c0_329, %c0_330], %659 {strides = array<i32>} : memref<8x128xf32, #tpu.memory_space<vmem>>, vector<8x128xf32>,
      %cst_331 = arith.constant 0.000000e+00 : f32
      %661 = vector.broadcast %cst_331 : f32 to vector<8x128xf32>
      %c0_332 = arith.constant 0 : index
      %c0_333 = arith.constant 0 : index
      %662 = vector.load %arg7[%c0_332, %c0_333] : memref<8x128xf32, #tpu.memory_space<vmem>>, vector<8x128xf32>
      tpu.vector_store %arg7[%c0_332, %c0_333], %661 {strides = array<i32>} : memref<8x128xf32, #tpu.memory_space<vmem>>, vector<8x128xf32>,
      %cst_334 = arith.constant 0.000000e+00 : f32
      %663 = vector.broadcast %cst_334 : f32 to vector<8x128xf32>
      %c0_335 = arith.constant 0 : index
      %c0_336 = arith.constant 0 : index
      %664 = vector.load %arg8[%c0_335, %c0_336] : memref<8x128xf32, #tpu.memory_space<vmem>>, vector<8x128xf32>
      tpu.vector_store %arg8[%c0_335, %c0_336], %663 {strides = array<i32>} : memref<8x128xf32, #tpu.memory_space<vmem>>, vector<8x128xf32>,
      %cst_337 = arith.constant 0.000000e+00 : f32
      %665 = vector.broadcast %cst_337 : f32 to vector<8x128xf32>
      %c0_338 = arith.constant 0 : index
      %c0_339 = arith.constant 0 : index
      %666 = vector.load %arg9[%c0_338, %c0_339] : memref<8x128xf32, #tpu.memory_space<vmem>>, vector<8x128xf32>
      tpu.vector_store %arg9[%c0_338, %c0_339], %665 {strides = array<i32>} : memref<8x128xf32, #tpu.memory_space<vmem>>, vector<8x128xf32>,
    } else {
    }
    %c0 = arith.constant 0 : index
    %c0_1 = arith.constant 0 : index
    %c0_2 = arith.constant 0 : index
    %3 = vector.load %arg1[%c0, %c0_1, %c0_2] : memref<8x8x512xbf16, #tpu.memory_space<vmem>>, vector<1x8x512xbf16>
    %4 = vector.shape_cast %3 : vector<1x8x512xbf16> to vector<8x512xbf16>
    %5 = arith.extf %4 : vector<8x512xbf16> to vector<8x512xf32>
    %c0_3 = arith.constant 0 : index
    %c0_4 = arith.constant 0 : index
    %6 = vector.load %arg6[%c0_3, %c0_4] : memref<8x128xf32, #tpu.memory_space<vmem>>, vector<8x128xf32>
    %7 = arith.truncf %6 : vector<8x128xf32> to vector<8x128xbf16>
    %c0_5 = arith.constant 0 : index
    %c0_6 = arith.constant 0 : index
    %c0_7 = arith.constant 0 : index
    %8 = vector.load %arg3[%c0_5, %c0_6, %c0_7] : memref<2x128x512xbf16, #tpu.memory_space<vmem>>, vector<1x128x512xbf16>
    %9 = vector.shape_cast %8 : vector<1x128x512xbf16> to vector<128x512xbf16>
    %cst = arith.constant dense<0.000000e+00> : vector<8x512xf32>
    %10 = tpu.matmul %7, %9, %cst {dimension_numbers = #tpu.dot_dimension_numbers<[1], [0], [0], [1], [0, 0, 1, 1], [], []>} : vector<8x128xbf16>, vector<128x512xbf16>, vector<8x512xf32> -> vector<8x512xf32>
    %11 = arith.addf %5, %10 : vector<8x512xf32>
    %12 = vector.extract_strided_slice %11 {offsets = [0, 0], sizes = [8, 128], strides = [1, 1]} : vector<8x512xf32> to vector<8x128xf32>
    %13 = arith.negf %12 : vector<8x128xf32>
    %14 = math.exp %13 : vector<8x128xf32>
    %cst_8 = arith.constant 1.000000e+00 : f32
    %15 = vector.broadcast %cst_8 : f32 to vector<8x128xf32>
    %16 = arith.addf %15, %14 : vector<8x128xf32>
    %17 = arith.divf %15, %16 : vector<8x128xf32>
    %18 = vector.extract_strided_slice %11 {offsets = [0, 128], sizes = [8, 128], strides = [1, 1]} : vector<8x512xf32> to vector<8x128xf32>
    %19 = arith.negf %18 : vector<8x128xf32>
    %20 = math.exp %19 : vector<8x128xf32>
    %cst_9 = arith.constant 1.000000e+00 : f32
    %21 = vector.broadcast %cst_9 : f32 to vector<8x128xf32>
    %22 = arith.addf %21, %20 : vector<8x128xf32>
    %23 = arith.divf %21, %22 : vector<8x128xf32>
    %24 = vector.extract_strided_slice %11 {offsets = [0, 256], sizes = [8, 128], strides = [1, 1]} : vector<8x512xf32> to vector<8x128xf32>
    %25 = math.tanh %24 : vector<8x128xf32>
    %26 = vector.extract_strided_slice %11 {offsets = [0, 384], sizes = [8, 128], strides = [1, 1]} : vector<8x512xf32> to vector<8x128xf32>
    %27 = arith.negf %26 : vector<8x128xf32>
    %28 = math.exp %27 : vector<8x128xf32>
    %cst_10 = arith.constant 1.000000e+00 : f32
    %29 = vector.broadcast %cst_10 : f32 to vector<8x128xf32>
    %30 = arith.addf %29, %28 : vector<8x128xf32>
    %31 = arith.divf %29, %30 : vector<8x128xf32>
    %c0_11 = arith.constant 0 : index
    %c0_12 = arith.constant 0 : index
    %32 = vector.load %arg7[%c0_11, %c0_12] : memref<8x128xf32, #tpu.memory_space<vmem>>, vector<8x128xf32>
    %33 = arith.mulf %23, %32 : vector<8x128xf32>
    %34 = arith.mulf %17, %25 : vector<8x128xf32>
    %35 = arith.addf %33, %34 : vector<8x128xf32>
    %36 = math.tanh %35 : vector<8x128xf32>
    %37 = arith.mulf %31, %36 : vector<8x128xf32>
    %c0_13 = arith.constant 0 : index
    %c0_14 = arith.constant 0 : index
    %38 = vector.load %arg7[%c0_13, %c0_14] : memref<8x128xf32, #tpu.memory_space<vmem>>, vector<8x128xf32>
    tpu.vector_store %arg7[%c0_13, %c0_14], %35 {strides = array<i32>} : memref<8x128xf32, #tpu.memory_space<vmem>>, vector<8x128xf32>,
    %c0_15 = arith.constant 0 : index
    %c0_16 = arith.constant 0 : index
    %39 = vector.load %arg6[%c0_15, %c0_16] : memref<8x128xf32, #tpu.memory_space<vmem>>, vector<8x128xf32>
    tpu.vector_store %arg6[%c0_15, %c0_16], %37 {strides = array<i32>} : memref<8x128xf32, #tpu.memory_space<vmem>>, vector<8x128xf32>,
    %40 = arith.truncf %37 : vector<8x128xf32> to vector<8x128xbf16>
    %c0_17 = arith.constant 0 : index
    %c0_18 = arith.constant 0 : index
    %c0_19 = arith.constant 0 : index
    %41 = vector.load %arg4[%c0_17, %c0_18, %c0_19] : memref<8x8x128xbf16, #tpu.memory_space<vmem>>, vector<1x8x128xbf16>
    %42 = vector.shape_cast %41 : vector<1x8x128xbf16> to vector<8x128xbf16>
    %43 = vector.shape_cast %40 : vector<8x128xbf16> to vector<1x8x128xbf16>
    tpu.vector_store %arg4[%c0_17, %c0_18, %c0_19], %43 {strides = array<i32>} : memref<8x8x128xbf16, #tpu.memory_space<vmem>>, vector<1x8x128xbf16>,
    %c7 = arith.constant 7 : index
    %c0_20 = arith.constant 0 : index
    %c0_21 = arith.constant 0 : index
    %44 = vector.load %arg2[%c7, %c0_20, %c0_21] : memref<8x8x512xbf16, #tpu.memory_space<vmem>>, vector<1x8x512xbf16>
    %45 = vector.shape_cast %44 : vector<1x8x512xbf16> to vector<8x512xbf16>
    %46 = arith.extf %45 : vector<8x512xbf16> to vector<8x512xf32>
    %c0_22 = arith.constant 0 : index
    %c0_23 = arith.constant 0 : index
    %47 = vector.load %arg8[%c0_22, %c0_23] : memref<8x128xf32, #tpu.memory_space<vmem>>, vector<8x128xf32>
    %48 = arith.truncf %47 : vector<8x128xf32> to vector<8x128xbf16>
    %c1 = arith.constant 1 : index
    %c0_24 = arith.constant 0 : index
    %c0_25 = arith.constant 0 : index
    %49 = vector.load %arg3[%c1, %c0_24, %c0_25] : memref<2x128x512xbf16, #tpu.memory_space<vmem>>, vector<1x128x512xbf16>
    %50 = vector.shape_cast %49 : vector<1x128x512xbf16> to vector<128x512xbf16>
    %cst_26 = arith.constant dense<0.000000e+00> : vector<8x512xf32>
    %51 = tpu.matmul %48, %50, %cst_26 {dimension_numbers = #tpu.dot_dimension_numbers<[1], [0], [0], [1], [0, 0, 1, 1], [], []>} : vector<8x128xbf16>, vector<128x512xbf16>, vector<8x512xf32> -> vector<8x512xf32>
    %52 = arith.addf %46, %51 : vector<8x512xf32>
    %53 = vector.extract_strided_slice %52 {offsets = [0, 0], sizes = [8, 128], strides = [1, 1]} : vector<8x512xf32> to vector<8x128xf32>
    %54 = arith.negf %53 : vector<8x128xf32>
    %55 = math.exp %54 : vector<8x128xf32>
    %cst_27 = arith.constant 1.000000e+00 : f32
    %56 = vector.broadcast %cst_27 : f32 to vector<8x128xf32>
    %57 = arith.addf %56, %55 : vector<8x128xf32>
    %58 = arith.divf %56, %57 : vector<8x128xf32>
    %59 = vector.extract_strided_slice %52 {offsets = [0, 128], sizes = [8, 128], strides = [1, 1]} : vector<8x512xf32> to vector<8x128xf32>
    %60 = arith.negf %59 : vector<8x128xf32>
    %61 = math.exp %60 : vector<8x128xf32>
    %cst_28 = arith.constant 1.000000e+00 : f32
    %62 = vector.broadcast %cst_28 : f32 to vector<8x128xf32>
    %63 = arith.addf %62, %61 : vector<8x128xf32>
    %64 = arith.divf %62, %63 : vector<8x128xf32>
    %65 = vector.extract_strided_slice %52 {offsets = [0, 256], sizes = [8, 128], strides = [1, 1]} : vector<8x512xf32> to vector<8x128xf32>
    %66 = math.tanh %65 : vector<8x128xf32>
    %67 = vector.extract_strided_slice %52 {offsets = [0, 384], sizes = [8, 128], strides = [1, 1]} : vector<8x512xf32> to vector<8x128xf32>
    %68 = arith.negf %67 : vector<8x128xf32>
    %69 = math.exp %68 : vector<8x128xf32>
    %cst_29 = arith.constant 1.000000e+00 : f32
    %70 = vector.broadcast %cst_29 : f32 to vector<8x128xf32>
    %71 = arith.addf %70, %69 : vector<8x128xf32>
    %72 = arith.divf %70, %71 : vector<8x128xf32>
    %c0_30 = arith.constant 0 : index
    %c0_31 = arith.constant 0 : index
    %73 = vector.load %arg9[%c0_30, %c0_31] : memref<8x128xf32, #tpu.memory_space<vmem>>, vector<8x128xf32>
    %74 = arith.mulf %64, %73 : vector<8x128xf32>
    %75 = arith.mulf %58, %66 : vector<8x128xf32>
    %76 = arith.addf %74, %75 : vector<8x128xf32>
    %77 = math.tanh %76 : vector<8x128xf32>
    %78 = arith.mulf %72, %77 : vector<8x128xf32>
    %c0_32 = arith.constant 0 : index
    %c0_33 = arith.constant 0 : index
    %79 = vector.load %arg9[%c0_32, %c0_33] : memref<8x128xf32, #tpu.memory_space<vmem>>, vector<8x128xf32>
    tpu.vector_store %arg9[%c0_32, %c0_33], %76 {strides = array<i32>} : memref<8x128xf32, #tpu.memory_space<vmem>>, vector<8x128xf32>,
    %c0_34 = arith.constant 0 : index
    %c0_35 = arith.constant 0 : index
    %80 = vector.load %arg8[%c0_34, %c0_35] : memref<8x128xf32, #tpu.memory_space<vmem>>, vector<8x128xf32>
    tpu.vector_store %arg8[%c0_34, %c0_35], %78 {strides = array<i32>} : memref<8x128xf32, #tpu.memory_space<vmem>>, vector<8x128xf32>,
    %81 = arith.truncf %78 : vector<8x128xf32> to vector<8x128xbf16>
    %c7_36 = arith.constant 7 : index
    %c0_37 = arith.constant 0 : index
    %c0_38 = arith.constant 0 : index
    %82 = vector.load %arg5[%c7_36, %c0_37, %c0_38] : memref<8x8x128xbf16, #tpu.memory_space<vmem>>, vector<1x8x128xbf16>
    %83 = vector.shape_cast %82 : vector<1x8x128xbf16> to vector<8x128xbf16>
    %84 = vector.shape_cast %81 : vector<8x128xbf16> to vector<1x8x128xbf16>
    tpu.vector_store %arg5[%c7_36, %c0_37, %c0_38], %84 {strides = array<i32>} : memref<8x8x128xbf16, #tpu.memory_space<vmem>>, vector<1x8x128xbf16>,
    %c1_39 = arith.constant 1 : index
    %c0_40 = arith.constant 0 : index
    %c0_41 = arith.constant 0 : index
    %85 = vector.load %arg1[%c1_39, %c0_40, %c0_41] : memref<8x8x512xbf16, #tpu.memory_space<vmem>>, vector<1x8x512xbf16>
    %86 = vector.shape_cast %85 : vector<1x8x512xbf16> to vector<8x512xbf16>
    %87 = arith.extf %86 : vector<8x512xbf16> to vector<8x512xf32>
    %c0_42 = arith.constant 0 : index
    %c0_43 = arith.constant 0 : index
    %88 = vector.load %arg6[%c0_42, %c0_43] : memref<8x128xf32, #tpu.memory_space<vmem>>, vector<8x128xf32>
    %89 = arith.truncf %88 : vector<8x128xf32> to vector<8x128xbf16>
    %c0_44 = arith.constant 0 : index
    %c0_45 = arith.constant 0 : index
    %c0_46 = arith.constant 0 : index
    %90 = vector.load %arg3[%c0_44, %c0_45, %c0_46] : memref<2x128x512xbf16, #tpu.memory_space<vmem>>, vector<1x128x512xbf16>
    %91 = vector.shape_cast %90 : vector<1x128x512xbf16> to vector<128x512xbf16>
    %cst_47 = arith.constant dense<0.000000e+00> : vector<8x512xf32>
    %92 = tpu.matmul %89, %91, %cst_47 {dimension_numbers = #tpu.dot_dimension_numbers<[1], [0], [0], [1], [0, 0, 1, 1], [], []>} : vector<8x128xbf16>, vector<128x512xbf16>, vector<8x512xf32> -> vector<8x512xf32>
    %93 = arith.addf %87, %92 : vector<8x512xf32>
    %94 = vector.extract_strided_slice %93 {offsets = [0, 0], sizes = [8, 128], strides = [1, 1]} : vector<8x512xf32> to vector<8x128xf32>
    %95 = arith.negf %94 : vector<8x128xf32>
    %96 = math.exp %95 : vector<8x128xf32>
    %cst_48 = arith.constant 1.000000e+00 : f32
    %97 = vector.broadcast %cst_48 : f32 to vector<8x128xf32>
    %98 = arith.addf %97, %96 : vector<8x128xf32>
    %99 = arith.divf %97, %98 : vector<8x128xf32>
    %100 = vector.extract_strided_slice %93 {offsets = [0, 128], sizes = [8, 128], strides = [1, 1]} : vector<8x512xf32> to vector<8x128xf32>
    %101 = arith.negf %100 : vector<8x128xf32>
    %102 = math.exp %101 : vector<8x128xf32>
    %cst_49 = arith.constant 1.000000e+00 : f32
    %103 = vector.broadcast %cst_49 : f32 to vector<8x128xf32>
    %104 = arith.addf %103, %102 : vector<8x128xf32>
    %105 = arith.divf %103, %104 : vector<8x128xf32>
    %106 = vector.extract_strided_slice %93 {offsets = [0, 256], sizes = [8, 128], strides = [1, 1]} : vector<8x512xf32> to vector<8x128xf32>
    %107 = math.tanh %106 : vector<8x128xf32>
    %108 = vector.extract_strided_slice %93 {offsets = [0, 384], sizes = [8, 128], strides = [1, 1]} : vector<8x512xf32> to vector<8x128xf32>
    %109 = arith.negf %108 : vector<8x128xf32>
    %110 = math.exp %109 : vector<8x128xf32>
    %cst_50 = arith.constant 1.000000e+00 : f32
    %111 = vector.broadcast %cst_50 : f32 to vector<8x128xf32>
    %112 = arith.addf %111, %110 : vector<8x128xf32>
    %113 = arith.divf %111, %112 : vector<8x128xf32>
    %c0_51 = arith.constant 0 : index
    %c0_52 = arith.constant 0 : index
    %114 = vector.load %arg7[%c0_51, %c0_52] : memref<8x128xf32, #tpu.memory_space<vmem>>, vector<8x128xf32>
    %115 = arith.mulf %105, %114 : vector<8x128xf32>
    %116 = arith.mulf %99, %107 : vector<8x128xf32>
    %117 = arith.addf %115, %116 : vector<8x128xf32>
    %118 = math.tanh %117 : vector<8x128xf32>
    %119 = arith.mulf %113, %118 : vector<8x128xf32>
    %c0_53 = arith.constant 0 : index
    %c0_54 = arith.constant 0 : index
    %120 = vector.load %arg7[%c0_53, %c0_54] : memref<8x128xf32, #tpu.memory_space<vmem>>, vector<8x128xf32>
    tpu.vector_store %arg7[%c0_53, %c0_54], %117 {strides = array<i32>} : memref<8x128xf32, #tpu.memory_space<vmem>>, vector<8x128xf32>,
    %c0_55 = arith.constant 0 : index
    %c0_56 = arith.constant 0 : index
    %121 = vector.load %arg6[%c0_55, %c0_56] : memref<8x128xf32, #tpu.memory_space<vmem>>, vector<8x128xf32>
    tpu.vector_store %arg6[%c0_55, %c0_56], %119 {strides = array<i32>} : memref<8x128xf32, #tpu.memory_space<vmem>>, vector<8x128xf32>,
    %122 = arith.truncf %119 : vector<8x128xf32> to vector<8x128xbf16>
    %c1_57 = arith.constant 1 : index
    %c0_58 = arith.constant 0 : index
    %c0_59 = arith.constant 0 : index
    %123 = vector.load %arg4[%c1_57, %c0_58, %c0_59] : memref<8x8x128xbf16, #tpu.memory_space<vmem>>, vector<1x8x128xbf16>
    %124 = vector.shape_cast %123 : vector<1x8x128xbf16> to vector<8x128xbf16>
    %125 = vector.shape_cast %122 : vector<8x128xbf16> to vector<1x8x128xbf16>
    tpu.vector_store %arg4[%c1_57, %c0_58, %c0_59], %125 {strides = array<i32>} : memref<8x8x128xbf16, #tpu.memory_space<vmem>>, vector<1x8x128xbf16>,
    %c6 = arith.constant 6 : index
    %c0_60 = arith.constant 0 : index
    %c0_61 = arith.constant 0 : index
    %126 = vector.load %arg2[%c6, %c0_60, %c0_61] : memref<8x8x512xbf16, #tpu.memory_space<vmem>>, vector<1x8x512xbf16>
    %127 = vector.shape_cast %126 : vector<1x8x512xbf16> to vector<8x512xbf16>
    %128 = arith.extf %127 : vector<8x512xbf16> to vector<8x512xf32>
    %c0_62 = arith.constant 0 : index
    %c0_63 = arith.constant 0 : index
    %129 = vector.load %arg8[%c0_62, %c0_63] : memref<8x128xf32, #tpu.memory_space<vmem>>, vector<8x128xf32>
    %130 = arith.truncf %129 : vector<8x128xf32> to vector<8x128xbf16>
    %c1_64 = arith.constant 1 : index
    %c0_65 = arith.constant 0 : index
    %c0_66 = arith.constant 0 : index
    %131 = vector.load %arg3[%c1_64, %c0_65, %c0_66] : memref<2x128x512xbf16, #tpu.memory_space<vmem>>, vector<1x128x512xbf16>
    %132 = vector.shape_cast %131 : vector<1x128x512xbf16> to vector<128x512xbf16>
    %cst_67 = arith.constant dense<0.000000e+00> : vector<8x512xf32>
    %133 = tpu.matmul %130, %132, %cst_67 {dimension_numbers = #tpu.dot_dimension_numbers<[1], [0], [0], [1], [0, 0, 1, 1], [], []>} : vector<8x128xbf16>, vector<128x512xbf16>, vector<8x512xf32> -> vector<8x512xf32>
    %134 = arith.addf %128, %133 : vector<8x512xf32>
    %135 = vector.extract_strided_slice %134 {offsets = [0, 0], sizes = [8, 128], strides = [1, 1]} : vector<8x512xf32> to vector<8x128xf32>
    %136 = arith.negf %135 : vector<8x128xf32>
    %137 = math.exp %136 : vector<8x128xf32>
    %cst_68 = arith.constant 1.000000e+00 : f32
    %138 = vector.broadcast %cst_68 : f32 to vector<8x128xf32>
    %139 = arith.addf %138, %137 : vector<8x128xf32>
    %140 = arith.divf %138, %139 : vector<8x128xf32>
    %141 = vector.extract_strided_slice %134 {offsets = [0, 128], sizes = [8, 128], strides = [1, 1]} : vector<8x512xf32> to vector<8x128xf32>
    %142 = arith.negf %141 : vector<8x128xf32>
    %143 = math.exp %142 : vector<8x128xf32>
    %cst_69 = arith.constant 1.000000e+00 : f32
    %144 = vector.broadcast %cst_69 : f32 to vector<8x128xf32>
    %145 = arith.addf %144, %143 : vector<8x128xf32>
    %146 = arith.divf %144, %145 : vector<8x128xf32>
    %147 = vector.extract_strided_slice %134 {offsets = [0, 256], sizes = [8, 128], strides = [1, 1]} : vector<8x512xf32> to vector<8x128xf32>
    %148 = math.tanh %147 : vector<8x128xf32>
    %149 = vector.extract_strided_slice %134 {offsets = [0, 384], sizes = [8, 128], strides = [1, 1]} : vector<8x512xf32> to vector<8x128xf32>
    %150 = arith.negf %149 : vector<8x128xf32>
    %151 = math.exp %150 : vector<8x128xf32>
    %cst_70 = arith.constant 1.000000e+00 : f32
    %152 = vector.broadcast %cst_70 : f32 to vector<8x128xf32>
    %153 = arith.addf %152, %151 : vector<8x128xf32>
    %154 = arith.divf %152, %153 : vector<8x128xf32>
    %c0_71 = arith.constant 0 : index
    %c0_72 = arith.constant 0 : index
    %155 = vector.load %arg9[%c0_71, %c0_72] : memref<8x128xf32, #tpu.memory_space<vmem>>, vector<8x128xf32>
    %156 = arith.mulf %146, %155 : vector<8x128xf32>
    %157 = arith.mulf %140, %148 : vector<8x128xf32>
    %158 = arith.addf %156, %157 : vector<8x128xf32>
    %159 = math.tanh %158 : vector<8x128xf32>
    %160 = arith.mulf %154, %159 : vector<8x128xf32>
    %c0_73 = arith.constant 0 : index
    %c0_74 = arith.constant 0 : index
    %161 = vector.load %arg9[%c0_73, %c0_74] : memref<8x128xf32, #tpu.memory_space<vmem>>, vector<8x128xf32>
    tpu.vector_store %arg9[%c0_73, %c0_74], %158 {strides = array<i32>} : memref<8x128xf32, #tpu.memory_space<vmem>>, vector<8x128xf32>,
    %c0_75 = arith.constant 0 : index
    %c0_76 = arith.constant 0 : index
    %162 = vector.load %arg8[%c0_75, %c0_76] : memref<8x128xf32, #tpu.memory_space<vmem>>, vector<8x128xf32>
    tpu.vector_store %arg8[%c0_75, %c0_76], %160 {strides = array<i32>} : memref<8x128xf32, #tpu.memory_space<vmem>>, vector<8x128xf32>,
    %163 = arith.truncf %160 : vector<8x128xf32> to vector<8x128xbf16>
    %c6_77 = arith.constant 6 : index
    %c0_78 = arith.constant 0 : index
    %c0_79 = arith.constant 0 : index
    %164 = vector.load %arg5[%c6_77, %c0_78, %c0_79] : memref<8x8x128xbf16, #tpu.memory_space<vmem>>, vector<1x8x128xbf16>
    %165 = vector.shape_cast %164 : vector<1x8x128xbf16> to vector<8x128xbf16>
    %166 = vector.shape_cast %163 : vector<8x128xbf16> to vector<1x8x128xbf16>
    tpu.vector_store %arg5[%c6_77, %c0_78, %c0_79], %166 {strides = array<i32>} : memref<8x8x128xbf16, #tpu.memory_space<vmem>>, vector<1x8x128xbf16>,
    %c2 = arith.constant 2 : index
    %c0_80 = arith.constant 0 : index
    %c0_81 = arith.constant 0 : index
    %167 = vector.load %arg1[%c2, %c0_80, %c0_81] : memref<8x8x512xbf16, #tpu.memory_space<vmem>>, vector<1x8x512xbf16>
    %168 = vector.shape_cast %167 : vector<1x8x512xbf16> to vector<8x512xbf16>
    %169 = arith.extf %168 : vector<8x512xbf16> to vector<8x512xf32>
    %c0_82 = arith.constant 0 : index
    %c0_83 = arith.constant 0 : index
    %170 = vector.load %arg6[%c0_82, %c0_83] : memref<8x128xf32, #tpu.memory_space<vmem>>, vector<8x128xf32>
    %171 = arith.truncf %170 : vector<8x128xf32> to vector<8x128xbf16>
    %c0_84 = arith.constant 0 : index
    %c0_85 = arith.constant 0 : index
    %c0_86 = arith.constant 0 : index
    %172 = vector.load %arg3[%c0_84, %c0_85, %c0_86] : memref<2x128x512xbf16, #tpu.memory_space<vmem>>, vector<1x128x512xbf16>
    %173 = vector.shape_cast %172 : vector<1x128x512xbf16> to vector<128x512xbf16>
    %cst_87 = arith.constant dense<0.000000e+00> : vector<8x512xf32>
    %174 = tpu.matmul %171, %173, %cst_87 {dimension_numbers = #tpu.dot_dimension_numbers<[1], [0], [0], [1], [0, 0, 1, 1], [], []>} : vector<8x128xbf16>, vector<128x512xbf16>, vector<8x512xf32> -> vector<8x512xf32>
    %175 = arith.addf %169, %174 : vector<8x512xf32>
    %176 = vector.extract_strided_slice %175 {offsets = [0, 0], sizes = [8, 128], strides = [1, 1]} : vector<8x512xf32> to vector<8x128xf32>
    %177 = arith.negf %176 : vector<8x128xf32>
    %178 = math.exp %177 : vector<8x128xf32>
    %cst_88 = arith.constant 1.000000e+00 : f32
    %179 = vector.broadcast %cst_88 : f32 to vector<8x128xf32>
    %180 = arith.addf %179, %178 : vector<8x128xf32>
    %181 = arith.divf %179, %180 : vector<8x128xf32>
    %182 = vector.extract_strided_slice %175 {offsets = [0, 128], sizes = [8, 128], strides = [1, 1]} : vector<8x512xf32> to vector<8x128xf32>
    %183 = arith.negf %182 : vector<8x128xf32>
    %184 = math.exp %183 : vector<8x128xf32>
    %cst_89 = arith.constant 1.000000e+00 : f32
    %185 = vector.broadcast %cst_89 : f32 to vector<8x128xf32>
    %186 = arith.addf %185, %184 : vector<8x128xf32>
    %187 = arith.divf %185, %186 : vector<8x128xf32>
    %188 = vector.extract_strided_slice %175 {offsets = [0, 256], sizes = [8, 128], strides = [1, 1]} : vector<8x512xf32> to vector<8x128xf32>
    %189 = math.tanh %188 : vector<8x128xf32>
    %190 = vector.extract_strided_slice %175 {offsets = [0, 384], sizes = [8, 128], strides = [1, 1]} : vector<8x512xf32> to vector<8x128xf32>
    %191 = arith.negf %190 : vector<8x128xf32>
    %192 = math.exp %191 : vector<8x128xf32>
    %cst_90 = arith.constant 1.000000e+00 : f32
    %193 = vector.broadcast %cst_90 : f32 to vector<8x128xf32>
    %194 = arith.addf %193, %192 : vector<8x128xf32>
    %195 = arith.divf %193, %194 : vector<8x128xf32>
    %c0_91 = arith.constant 0 : index
    %c0_92 = arith.constant 0 : index
    %196 = vector.load %arg7[%c0_91, %c0_92] : memref<8x128xf32, #tpu.memory_space<vmem>>, vector<8x128xf32>
    %197 = arith.mulf %187, %196 : vector<8x128xf32>
    %198 = arith.mulf %181, %189 : vector<8x128xf32>
    %199 = arith.addf %197, %198 : vector<8x128xf32>
    %200 = math.tanh %199 : vector<8x128xf32>
    %201 = arith.mulf %195, %200 : vector<8x128xf32>
    %c0_93 = arith.constant 0 : index
    %c0_94 = arith.constant 0 : index
    %202 = vector.load %arg7[%c0_93, %c0_94] : memref<8x128xf32, #tpu.memory_space<vmem>>, vector<8x128xf32>
    tpu.vector_store %arg7[%c0_93, %c0_94], %199 {strides = array<i32>} : memref<8x128xf32, #tpu.memory_space<vmem>>, vector<8x128xf32>,
    %c0_95 = arith.constant 0 : index
    %c0_96 = arith.constant 0 : index
    %203 = vector.load %arg6[%c0_95, %c0_96] : memref<8x128xf32, #tpu.memory_space<vmem>>, vector<8x128xf32>
    tpu.vector_store %arg6[%c0_95, %c0_96], %201 {strides = array<i32>} : memref<8x128xf32, #tpu.memory_space<vmem>>, vector<8x128xf32>,
    %204 = arith.truncf %201 : vector<8x128xf32> to vector<8x128xbf16>
    %c2_97 = arith.constant 2 : index
    %c0_98 = arith.constant 0 : index
    %c0_99 = arith.constant 0 : index
    %205 = vector.load %arg4[%c2_97, %c0_98, %c0_99] : memref<8x8x128xbf16, #tpu.memory_space<vmem>>, vector<1x8x128xbf16>
    %206 = vector.shape_cast %205 : vector<1x8x128xbf16> to vector<8x128xbf16>
    %207 = vector.shape_cast %204 : vector<8x128xbf16> to vector<1x8x128xbf16>
    tpu.vector_store %arg4[%c2_97, %c0_98, %c0_99], %207 {strides = array<i32>} : memref<8x8x128xbf16, #tpu.memory_space<vmem>>, vector<1x8x128xbf16>,
    %c5 = arith.constant 5 : index
    %c0_100 = arith.constant 0 : index
    %c0_101 = arith.constant 0 : index
    %208 = vector.load %arg2[%c5, %c0_100, %c0_101] : memref<8x8x512xbf16, #tpu.memory_space<vmem>>, vector<1x8x512xbf16>
    %209 = vector.shape_cast %208 : vector<1x8x512xbf16> to vector<8x512xbf16>
    %210 = arith.extf %209 : vector<8x512xbf16> to vector<8x512xf32>
    %c0_102 = arith.constant 0 : index
    %c0_103 = arith.constant 0 : index
    %211 = vector.load %arg8[%c0_102, %c0_103] : memref<8x128xf32, #tpu.memory_space<vmem>>, vector<8x128xf32>
    %212 = arith.truncf %211 : vector<8x128xf32> to vector<8x128xbf16>
    %c1_104 = arith.constant 1 : index
    %c0_105 = arith.constant 0 : index
    %c0_106 = arith.constant 0 : index
    %213 = vector.load %arg3[%c1_104, %c0_105, %c0_106] : memref<2x128x512xbf16, #tpu.memory_space<vmem>>, vector<1x128x512xbf16>
    %214 = vector.shape_cast %213 : vector<1x128x512xbf16> to vector<128x512xbf16>
    %cst_107 = arith.constant dense<0.000000e+00> : vector<8x512xf32>
    %215 = tpu.matmul %212, %214, %cst_107 {dimension_numbers = #tpu.dot_dimension_numbers<[1], [0], [0], [1], [0, 0, 1, 1], [], []>} : vector<8x128xbf16>, vector<128x512xbf16>, vector<8x512xf32> -> vector<8x512xf32>
    %216 = arith.addf %210, %215 : vector<8x512xf32>
    %217 = vector.extract_strided_slice %216 {offsets = [0, 0], sizes = [8, 128], strides = [1, 1]} : vector<8x512xf32> to vector<8x128xf32>
    %218 = arith.negf %217 : vector<8x128xf32>
    %219 = math.exp %218 : vector<8x128xf32>
    %cst_108 = arith.constant 1.000000e+00 : f32
    %220 = vector.broadcast %cst_108 : f32 to vector<8x128xf32>
    %221 = arith.addf %220, %219 : vector<8x128xf32>
    %222 = arith.divf %220, %221 : vector<8x128xf32>
    %223 = vector.extract_strided_slice %216 {offsets = [0, 128], sizes = [8, 128], strides = [1, 1]} : vector<8x512xf32> to vector<8x128xf32>
    %224 = arith.negf %223 : vector<8x128xf32>
    %225 = math.exp %224 : vector<8x128xf32>
    %cst_109 = arith.constant 1.000000e+00 : f32
    %226 = vector.broadcast %cst_109 : f32 to vector<8x128xf32>
    %227 = arith.addf %226, %225 : vector<8x128xf32>
    %228 = arith.divf %226, %227 : vector<8x128xf32>
    %229 = vector.extract_strided_slice %216 {offsets = [0, 256], sizes = [8, 128], strides = [1, 1]} : vector<8x512xf32> to vector<8x128xf32>
    %230 = math.tanh %229 : vector<8x128xf32>
    %231 = vector.extract_strided_slice %216 {offsets = [0, 384], sizes = [8, 128], strides = [1, 1]} : vector<8x512xf32> to vector<8x128xf32>
    %232 = arith.negf %231 : vector<8x128xf32>
    %233 = math.exp %232 : vector<8x128xf32>
    %cst_110 = arith.constant 1.000000e+00 : f32
    %234 = vector.broadcast %cst_110 : f32 to vector<8x128xf32>
    %235 = arith.addf %234, %233 : vector<8x128xf32>
    %236 = arith.divf %234, %235 : vector<8x128xf32>
    %c0_111 = arith.constant 0 : index
    %c0_112 = arith.constant 0 : index
    %237 = vector.load %arg9[%c0_111, %c0_112] : memref<8x128xf32, #tpu.memory_space<vmem>>, vector<8x128xf32>
    %238 = arith.mulf %228, %237 : vector<8x128xf32>
    %239 = arith.mulf %222, %230 : vector<8x128xf32>
    %240 = arith.addf %238, %239 : vector<8x128xf32>
    %241 = math.tanh %240 : vector<8x128xf32>
    %242 = arith.mulf %236, %241 : vector<8x128xf32>
    %c0_113 = arith.constant 0 : index
    %c0_114 = arith.constant 0 : index
    %243 = vector.load %arg9[%c0_113, %c0_114] : memref<8x128xf32, #tpu.memory_space<vmem>>, vector<8x128xf32>
    tpu.vector_store %arg9[%c0_113, %c0_114], %240 {strides = array<i32>} : memref<8x128xf32, #tpu.memory_space<vmem>>, vector<8x128xf32>,
    %c0_115 = arith.constant 0 : index
    %c0_116 = arith.constant 0 : index
    %244 = vector.load %arg8[%c0_115, %c0_116] : memref<8x128xf32, #tpu.memory_space<vmem>>, vector<8x128xf32>
    tpu.vector_store %arg8[%c0_115, %c0_116], %242 {strides = array<i32>} : memref<8x128xf32, #tpu.memory_space<vmem>>, vector<8x128xf32>,
    %245 = arith.truncf %242 : vector<8x128xf32> to vector<8x128xbf16>
    %c5_117 = arith.constant 5 : index
    %c0_118 = arith.constant 0 : index
    %c0_119 = arith.constant 0 : index
    %246 = vector.load %arg5[%c5_117, %c0_118, %c0_119] : memref<8x8x128xbf16, #tpu.memory_space<vmem>>, vector<1x8x128xbf16>
    %247 = vector.shape_cast %246 : vector<1x8x128xbf16> to vector<8x128xbf16>
    %248 = vector.shape_cast %245 : vector<8x128xbf16> to vector<1x8x128xbf16>
    tpu.vector_store %arg5[%c5_117, %c0_118, %c0_119], %248 {strides = array<i32>} : memref<8x8x128xbf16, #tpu.memory_space<vmem>>, vector<1x8x128xbf16>,
    %c3 = arith.constant 3 : index
    %c0_120 = arith.constant 0 : index
    %c0_121 = arith.constant 0 : index
    %249 = vector.load %arg1[%c3, %c0_120, %c0_121] : memref<8x8x512xbf16, #tpu.memory_space<vmem>>, vector<1x8x512xbf16>
    %250 = vector.shape_cast %249 : vector<1x8x512xbf16> to vector<8x512xbf16>
    %251 = arith.extf %250 : vector<8x512xbf16> to vector<8x512xf32>
    %c0_122 = arith.constant 0 : index
    %c0_123 = arith.constant 0 : index
    %252 = vector.load %arg6[%c0_122, %c0_123] : memref<8x128xf32, #tpu.memory_space<vmem>>, vector<8x128xf32>
    %253 = arith.truncf %252 : vector<8x128xf32> to vector<8x128xbf16>
    %c0_124 = arith.constant 0 : index
    %c0_125 = arith.constant 0 : index
    %c0_126 = arith.constant 0 : index
    %254 = vector.load %arg3[%c0_124, %c0_125, %c0_126] : memref<2x128x512xbf16, #tpu.memory_space<vmem>>, vector<1x128x512xbf16>
    %255 = vector.shape_cast %254 : vector<1x128x512xbf16> to vector<128x512xbf16>
    %cst_127 = arith.constant dense<0.000000e+00> : vector<8x512xf32>
    %256 = tpu.matmul %253, %255, %cst_127 {dimension_numbers = #tpu.dot_dimension_numbers<[1], [0], [0], [1], [0, 0, 1, 1], [], []>} : vector<8x128xbf16>, vector<128x512xbf16>, vector<8x512xf32> -> vector<8x512xf32>
    %257 = arith.addf %251, %256 : vector<8x512xf32>
    %258 = vector.extract_strided_slice %257 {offsets = [0, 0], sizes = [8, 128], strides = [1, 1]} : vector<8x512xf32> to vector<8x128xf32>
    %259 = arith.negf %258 : vector<8x128xf32>
    %260 = math.exp %259 : vector<8x128xf32>
    %cst_128 = arith.constant 1.000000e+00 : f32
    %261 = vector.broadcast %cst_128 : f32 to vector<8x128xf32>
    %262 = arith.addf %261, %260 : vector<8x128xf32>
    %263 = arith.divf %261, %262 : vector<8x128xf32>
    %264 = vector.extract_strided_slice %257 {offsets = [0, 128], sizes = [8, 128], strides = [1, 1]} : vector<8x512xf32> to vector<8x128xf32>
    %265 = arith.negf %264 : vector<8x128xf32>
    %266 = math.exp %265 : vector<8x128xf32>
    %cst_129 = arith.constant 1.000000e+00 : f32
    %267 = vector.broadcast %cst_129 : f32 to vector<8x128xf32>
    %268 = arith.addf %267, %266 : vector<8x128xf32>
    %269 = arith.divf %267, %268 : vector<8x128xf32>
    %270 = vector.extract_strided_slice %257 {offsets = [0, 256], sizes = [8, 128], strides = [1, 1]} : vector<8x512xf32> to vector<8x128xf32>
    %271 = math.tanh %270 : vector<8x128xf32>
    %272 = vector.extract_strided_slice %257 {offsets = [0, 384], sizes = [8, 128], strides = [1, 1]} : vector<8x512xf32> to vector<8x128xf32>
    %273 = arith.negf %272 : vector<8x128xf32>
    %274 = math.exp %273 : vector<8x128xf32>
    %cst_130 = arith.constant 1.000000e+00 : f32
    %275 = vector.broadcast %cst_130 : f32 to vector<8x128xf32>
    %276 = arith.addf %275, %274 : vector<8x128xf32>
    %277 = arith.divf %275, %276 : vector<8x128xf32>
    %c0_131 = arith.constant 0 : index
    %c0_132 = arith.constant 0 : index
    %278 = vector.load %arg7[%c0_131, %c0_132] : memref<8x128xf32, #tpu.memory_space<vmem>>, vector<8x128xf32>
    %279 = arith.mulf %269, %278 : vector<8x128xf32>
    %280 = arith.mulf %263, %271 : vector<8x128xf32>
    %281 = arith.addf %279, %280 : vector<8x128xf32>
    %282 = math.tanh %281 : vector<8x128xf32>
    %283 = arith.mulf %277, %282 : vector<8x128xf32>
    %c0_133 = arith.constant 0 : index
    %c0_134 = arith.constant 0 : index
    %284 = vector.load %arg7[%c0_133, %c0_134] : memref<8x128xf32, #tpu.memory_space<vmem>>, vector<8x128xf32>
    tpu.vector_store %arg7[%c0_133, %c0_134], %281 {strides = array<i32>} : memref<8x128xf32, #tpu.memory_space<vmem>>, vector<8x128xf32>,
    %c0_135 = arith.constant 0 : index
    %c0_136 = arith.constant 0 : index
    %285 = vector.load %arg6[%c0_135, %c0_136] : memref<8x128xf32, #tpu.memory_space<vmem>>, vector<8x128xf32>
    tpu.vector_store %arg6[%c0_135, %c0_136], %283 {strides = array<i32>} : memref<8x128xf32, #tpu.memory_space<vmem>>, vector<8x128xf32>,
    %286 = arith.truncf %283 : vector<8x128xf32> to vector<8x128xbf16>
    %c3_137 = arith.constant 3 : index
    %c0_138 = arith.constant 0 : index
    %c0_139 = arith.constant 0 : index
    %287 = vector.load %arg4[%c3_137, %c0_138, %c0_139] : memref<8x8x128xbf16, #tpu.memory_space<vmem>>, vector<1x8x128xbf16>
    %288 = vector.shape_cast %287 : vector<1x8x128xbf16> to vector<8x128xbf16>
    %289 = vector.shape_cast %286 : vector<8x128xbf16> to vector<1x8x128xbf16>
    tpu.vector_store %arg4[%c3_137, %c0_138, %c0_139], %289 {strides = array<i32>} : memref<8x8x128xbf16, #tpu.memory_space<vmem>>, vector<1x8x128xbf16>,
    %c4 = arith.constant 4 : index
    %c0_140 = arith.constant 0 : index
    %c0_141 = arith.constant 0 : index
    %290 = vector.load %arg2[%c4, %c0_140, %c0_141] : memref<8x8x512xbf16, #tpu.memory_space<vmem>>, vector<1x8x512xbf16>
    %291 = vector.shape_cast %290 : vector<1x8x512xbf16> to vector<8x512xbf16>
    %292 = arith.extf %291 : vector<8x512xbf16> to vector<8x512xf32>
    %c0_142 = arith.constant 0 : index
    %c0_143 = arith.constant 0 : index
    %293 = vector.load %arg8[%c0_142, %c0_143] : memref<8x128xf32, #tpu.memory_space<vmem>>, vector<8x128xf32>
    %294 = arith.truncf %293 : vector<8x128xf32> to vector<8x128xbf16>
    %c1_144 = arith.constant 1 : index
    %c0_145 = arith.constant 0 : index
    %c0_146 = arith.constant 0 : index
    %295 = vector.load %arg3[%c1_144, %c0_145, %c0_146] : memref<2x128x512xbf16, #tpu.memory_space<vmem>>, vector<1x128x512xbf16>
    %296 = vector.shape_cast %295 : vector<1x128x512xbf16> to vector<128x512xbf16>
    %cst_147 = arith.constant dense<0.000000e+00> : vector<8x512xf32>
    %297 = tpu.matmul %294, %296, %cst_147 {dimension_numbers = #tpu.dot_dimension_numbers<[1], [0], [0], [1], [0, 0, 1, 1], [], []>} : vector<8x128xbf16>, vector<128x512xbf16>, vector<8x512xf32> -> vector<8x512xf32>
    %298 = arith.addf %292, %297 : vector<8x512xf32>
    %299 = vector.extract_strided_slice %298 {offsets = [0, 0], sizes = [8, 128], strides = [1, 1]} : vector<8x512xf32> to vector<8x128xf32>
    %300 = arith.negf %299 : vector<8x128xf32>
    %301 = math.exp %300 : vector<8x128xf32>
    %cst_148 = arith.constant 1.000000e+00 : f32
    %302 = vector.broadcast %cst_148 : f32 to vector<8x128xf32>
    %303 = arith.addf %302, %301 : vector<8x128xf32>
    %304 = arith.divf %302, %303 : vector<8x128xf32>
    %305 = vector.extract_strided_slice %298 {offsets = [0, 128], sizes = [8, 128], strides = [1, 1]} : vector<8x512xf32> to vector<8x128xf32>
    %306 = arith.negf %305 : vector<8x128xf32>
    %307 = math.exp %306 : vector<8x128xf32>
    %cst_149 = arith.constant 1.000000e+00 : f32
    %308 = vector.broadcast %cst_149 : f32 to vector<8x128xf32>
    %309 = arith.addf %308, %307 : vector<8x128xf32>
    %310 = arith.divf %308, %309 : vector<8x128xf32>
    %311 = vector.extract_strided_slice %298 {offsets = [0, 256], sizes = [8, 128], strides = [1, 1]} : vector<8x512xf32> to vector<8x128xf32>
    %312 = math.tanh %311 : vector<8x128xf32>
    %313 = vector.extract_strided_slice %298 {offsets = [0, 384], sizes = [8, 128], strides = [1, 1]} : vector<8x512xf32> to vector<8x128xf32>
    %314 = arith.negf %313 : vector<8x128xf32>
    %315 = math.exp %314 : vector<8x128xf32>
    %cst_150 = arith.constant 1.000000e+00 : f32
    %316 = vector.broadcast %cst_150 : f32 to vector<8x128xf32>
    %317 = arith.addf %316, %315 : vector<8x128xf32>
    %318 = arith.divf %316, %317 : vector<8x128xf32>
    %c0_151 = arith.constant 0 : index
    %c0_152 = arith.constant 0 : index
    %319 = vector.load %arg9[%c0_151, %c0_152] : memref<8x128xf32, #tpu.memory_space<vmem>>, vector<8x128xf32>
    %320 = arith.mulf %310, %319 : vector<8x128xf32>
    %321 = arith.mulf %304, %312 : vector<8x128xf32>
    %322 = arith.addf %320, %321 : vector<8x128xf32>
    %323 = math.tanh %322 : vector<8x128xf32>
    %324 = arith.mulf %318, %323 : vector<8x128xf32>
    %c0_153 = arith.constant 0 : index
    %c0_154 = arith.constant 0 : index
    %325 = vector.load %arg9[%c0_153, %c0_154] : memref<8x128xf32, #tpu.memory_space<vmem>>, vector<8x128xf32>
    tpu.vector_store %arg9[%c0_153, %c0_154], %322 {strides = array<i32>} : memref<8x128xf32, #tpu.memory_space<vmem>>, vector<8x128xf32>,
    %c0_155 = arith.constant 0 : index
    %c0_156 = arith.constant 0 : index
    %326 = vector.load %arg8[%c0_155, %c0_156] : memref<8x128xf32, #tpu.memory_space<vmem>>, vector<8x128xf32>
    tpu.vector_store %arg8[%c0_155, %c0_156], %324 {strides = array<i32>} : memref<8x128xf32, #tpu.memory_space<vmem>>, vector<8x128xf32>,
    %327 = arith.truncf %324 : vector<8x128xf32> to vector<8x128xbf16>
    %c4_157 = arith.constant 4 : index
    %c0_158 = arith.constant 0 : index
    %c0_159 = arith.constant 0 : index
    %328 = vector.load %arg5[%c4_157, %c0_158, %c0_159] : memref<8x8x128xbf16, #tpu.memory_space<vmem>>, vector<1x8x128xbf16>
    %329 = vector.shape_cast %328 : vector<1x8x128xbf16> to vector<8x128xbf16>
    %330 = vector.shape_cast %327 : vector<8x128xbf16> to vector<1x8x128xbf16>
    tpu.vector_store %arg5[%c4_157, %c0_158, %c0_159], %330 {strides = array<i32>} : memref<8x8x128xbf16, #tpu.memory_space<vmem>>, vector<1x8x128xbf16>,
    %c4_160 = arith.constant 4 : index
    %c0_161 = arith.constant 0 : index
    %c0_162 = arith.constant 0 : index
    %331 = vector.load %arg1[%c4_160, %c0_161, %c0_162] : memref<8x8x512xbf16, #tpu.memory_space<vmem>>, vector<1x8x512xbf16>
    %332 = vector.shape_cast %331 : vector<1x8x512xbf16> to vector<8x512xbf16>
    %333 = arith.extf %332 : vector<8x512xbf16> to vector<8x512xf32>
    %c0_163 = arith.constant 0 : index
    %c0_164 = arith.constant 0 : index
    %334 = vector.load %arg6[%c0_163, %c0_164] : memref<8x128xf32, #tpu.memory_space<vmem>>, vector<8x128xf32>
    %335 = arith.truncf %334 : vector<8x128xf32> to vector<8x128xbf16>
    %c0_165 = arith.constant 0 : index
    %c0_166 = arith.constant 0 : index
    %c0_167 = arith.constant 0 : index
    %336 = vector.load %arg3[%c0_165, %c0_166, %c0_167] : memref<2x128x512xbf16, #tpu.memory_space<vmem>>, vector<1x128x512xbf16>
    %337 = vector.shape_cast %336 : vector<1x128x512xbf16> to vector<128x512xbf16>
    %cst_168 = arith.constant dense<0.000000e+00> : vector<8x512xf32>
    %338 = tpu.matmul %335, %337, %cst_168 {dimension_numbers = #tpu.dot_dimension_numbers<[1], [0], [0], [1], [0, 0, 1, 1], [], []>} : vector<8x128xbf16>, vector<128x512xbf16>, vector<8x512xf32> -> vector<8x512xf32>
    %339 = arith.addf %333, %338 : vector<8x512xf32>
    %340 = vector.extract_strided_slice %339 {offsets = [0, 0], sizes = [8, 128], strides = [1, 1]} : vector<8x512xf32> to vector<8x128xf32>
    %341 = arith.negf %340 : vector<8x128xf32>
    %342 = math.exp %341 : vector<8x128xf32>
    %cst_169 = arith.constant 1.000000e+00 : f32
    %343 = vector.broadcast %cst_169 : f32 to vector<8x128xf32>
    %344 = arith.addf %343, %342 : vector<8x128xf32>
    %345 = arith.divf %343, %344 : vector<8x128xf32>
    %346 = vector.extract_strided_slice %339 {offsets = [0, 128], sizes = [8, 128], strides = [1, 1]} : vector<8x512xf32> to vector<8x128xf32>
    %347 = arith.negf %346 : vector<8x128xf32>
    %348 = math.exp %347 : vector<8x128xf32>
    %cst_170 = arith.constant 1.000000e+00 : f32
    %349 = vector.broadcast %cst_170 : f32 to vector<8x128xf32>
    %350 = arith.addf %349, %348 : vector<8x128xf32>
    %351 = arith.divf %349, %350 : vector<8x128xf32>
    %352 = vector.extract_strided_slice %339 {offsets = [0, 256], sizes = [8, 128], strides = [1, 1]} : vector<8x512xf32> to vector<8x128xf32>
    %353 = math.tanh %352 : vector<8x128xf32>
    %354 = vector.extract_strided_slice %339 {offsets = [0, 384], sizes = [8, 128], strides = [1, 1]} : vector<8x512xf32> to vector<8x128xf32>
    %355 = arith.negf %354 : vector<8x128xf32>
    %356 = math.exp %355 : vector<8x128xf32>
    %cst_171 = arith.constant 1.000000e+00 : f32
    %357 = vector.broadcast %cst_171 : f32 to vector<8x128xf32>
    %358 = arith.addf %357, %356 : vector<8x128xf32>
    %359 = arith.divf %357, %358 : vector<8x128xf32>
    %c0_172 = arith.constant 0 : index
    %c0_173 = arith.constant 0 : index
    %360 = vector.load %arg7[%c0_172, %c0_173] : memref<8x128xf32, #tpu.memory_space<vmem>>, vector<8x128xf32>
    %361 = arith.mulf %351, %360 : vector<8x128xf32>
    %362 = arith.mulf %345, %353 : vector<8x128xf32>
    %363 = arith.addf %361, %362 : vector<8x128xf32>
    %364 = math.tanh %363 : vector<8x128xf32>
    %365 = arith.mulf %359, %364 : vector<8x128xf32>
    %c0_174 = arith.constant 0 : index
    %c0_175 = arith.constant 0 : index
    %366 = vector.load %arg7[%c0_174, %c0_175] : memref<8x128xf32, #tpu.memory_space<vmem>>, vector<8x128xf32>
    tpu.vector_store %arg7[%c0_174, %c0_175], %363 {strides = array<i32>} : memref<8x128xf32, #tpu.memory_space<vmem>>, vector<8x128xf32>,
    %c0_176 = arith.constant 0 : index
    %c0_177 = arith.constant 0 : index
    %367 = vector.load %arg6[%c0_176, %c0_177] : memref<8x128xf32, #tpu.memory_space<vmem>>, vector<8x128xf32>
    tpu.vector_store %arg6[%c0_176, %c0_177], %365 {strides = array<i32>} : memref<8x128xf32, #tpu.memory_space<vmem>>, vector<8x128xf32>,
    %368 = arith.truncf %365 : vector<8x128xf32> to vector<8x128xbf16>
    %c4_178 = arith.constant 4 : index
    %c0_179 = arith.constant 0 : index
    %c0_180 = arith.constant 0 : index
    %369 = vector.load %arg4[%c4_178, %c0_179, %c0_180] : memref<8x8x128xbf16, #tpu.memory_space<vmem>>, vector<1x8x128xbf16>
    %370 = vector.shape_cast %369 : vector<1x8x128xbf16> to vector<8x128xbf16>
    %371 = vector.shape_cast %368 : vector<8x128xbf16> to vector<1x8x128xbf16>
    tpu.vector_store %arg4[%c4_178, %c0_179, %c0_180], %371 {strides = array<i32>} : memref<8x8x128xbf16, #tpu.memory_space<vmem>>, vector<1x8x128xbf16>,
    %c3_181 = arith.constant 3 : index
    %c0_182 = arith.constant 0 : index
    %c0_183 = arith.constant 0 : index
    %372 = vector.load %arg2[%c3_181, %c0_182, %c0_183] : memref<8x8x512xbf16, #tpu.memory_space<vmem>>, vector<1x8x512xbf16>
    %373 = vector.shape_cast %372 : vector<1x8x512xbf16> to vector<8x512xbf16>
    %374 = arith.extf %373 : vector<8x512xbf16> to vector<8x512xf32>
    %c0_184 = arith.constant 0 : index
    %c0_185 = arith.constant 0 : index
    %375 = vector.load %arg8[%c0_184, %c0_185] : memref<8x128xf32, #tpu.memory_space<vmem>>, vector<8x128xf32>
    %376 = arith.truncf %375 : vector<8x128xf32> to vector<8x128xbf16>
    %c1_186 = arith.constant 1 : index
    %c0_187 = arith.constant 0 : index
    %c0_188 = arith.constant 0 : index
    %377 = vector.load %arg3[%c1_186, %c0_187, %c0_188] : memref<2x128x512xbf16, #tpu.memory_space<vmem>>, vector<1x128x512xbf16>
    %378 = vector.shape_cast %377 : vector<1x128x512xbf16> to vector<128x512xbf16>
    %cst_189 = arith.constant dense<0.000000e+00> : vector<8x512xf32>
    %379 = tpu.matmul %376, %378, %cst_189 {dimension_numbers = #tpu.dot_dimension_numbers<[1], [0], [0], [1], [0, 0, 1, 1], [], []>} : vector<8x128xbf16>, vector<128x512xbf16>, vector<8x512xf32> -> vector<8x512xf32>
    %380 = arith.addf %374, %379 : vector<8x512xf32>
    %381 = vector.extract_strided_slice %380 {offsets = [0, 0], sizes = [8, 128], strides = [1, 1]} : vector<8x512xf32> to vector<8x128xf32>
    %382 = arith.negf %381 : vector<8x128xf32>
    %383 = math.exp %382 : vector<8x128xf32>
    %cst_190 = arith.constant 1.000000e+00 : f32
    %384 = vector.broadcast %cst_190 : f32 to vector<8x128xf32>
    %385 = arith.addf %384, %383 : vector<8x128xf32>
    %386 = arith.divf %384, %385 : vector<8x128xf32>
    %387 = vector.extract_strided_slice %380 {offsets = [0, 128], sizes = [8, 128], strides = [1, 1]} : vector<8x512xf32> to vector<8x128xf32>
    %388 = arith.negf %387 : vector<8x128xf32>
    %389 = math.exp %388 : vector<8x128xf32>
    %cst_191 = arith.constant 1.000000e+00 : f32
    %390 = vector.broadcast %cst_191 : f32 to vector<8x128xf32>
    %391 = arith.addf %390, %389 : vector<8x128xf32>
    %392 = arith.divf %390, %391 : vector<8x128xf32>
    %393 = vector.extract_strided_slice %380 {offsets = [0, 256], sizes = [8, 128], strides = [1, 1]} : vector<8x512xf32> to vector<8x128xf32>
    %394 = math.tanh %393 : vector<8x128xf32>
    %395 = vector.extract_strided_slice %380 {offsets = [0, 384], sizes = [8, 128], strides = [1, 1]} : vector<8x512xf32> to vector<8x128xf32>
    %396 = arith.negf %395 : vector<8x128xf32>
    %397 = math.exp %396 : vector<8x128xf32>
    %cst_192 = arith.constant 1.000000e+00 : f32
    %398 = vector.broadcast %cst_192 : f32 to vector<8x128xf32>
    %399 = arith.addf %398, %397 : vector<8x128xf32>
    %400 = arith.divf %398, %399 : vector<8x128xf32>
    %c0_193 = arith.constant 0 : index
    %c0_194 = arith.constant 0 : index
    %401 = vector.load %arg9[%c0_193, %c0_194] : memref<8x128xf32, #tpu.memory_space<vmem>>, vector<8x128xf32>
    %402 = arith.mulf %392, %401 : vector<8x128xf32>
    %403 = arith.mulf %386, %394 : vector<8x128xf32>
    %404 = arith.addf %402, %403 : vector<8x128xf32>
    %405 = math.tanh %404 : vector<8x128xf32>
    %406 = arith.mulf %400, %405 : vector<8x128xf32>
    %c0_195 = arith.constant 0 : index
    %c0_196 = arith.constant 0 : index
    %407 = vector.load %arg9[%c0_195, %c0_196] : memref<8x128xf32, #tpu.memory_space<vmem>>, vector<8x128xf32>
    tpu.vector_store %arg9[%c0_195, %c0_196], %404 {strides = array<i32>} : memref<8x128xf32, #tpu.memory_space<vmem>>, vector<8x128xf32>,
    %c0_197 = arith.constant 0 : index
    %c0_198 = arith.constant 0 : index
    %408 = vector.load %arg8[%c0_197, %c0_198] : memref<8x128xf32, #tpu.memory_space<vmem>>, vector<8x128xf32>
    tpu.vector_store %arg8[%c0_197, %c0_198], %406 {strides = array<i32>} : memref<8x128xf32, #tpu.memory_space<vmem>>, vector<8x128xf32>,
    %409 = arith.truncf %406 : vector<8x128xf32> to vector<8x128xbf16>
    %c3_199 = arith.constant 3 : index
    %c0_200 = arith.constant 0 : index
    %c0_201 = arith.constant 0 : index
    %410 = vector.load %arg5[%c3_199, %c0_200, %c0_201] : memref<8x8x128xbf16, #tpu.memory_space<vmem>>, vector<1x8x128xbf16>
    %411 = vector.shape_cast %410 : vector<1x8x128xbf16> to vector<8x128xbf16>
    %412 = vector.shape_cast %409 : vector<8x128xbf16> to vector<1x8x128xbf16>
    tpu.vector_store %arg5[%c3_199, %c0_200, %c0_201], %412 {strides = array<i32>} : memref<8x8x128xbf16, #tpu.memory_space<vmem>>, vector<1x8x128xbf16>,
    %c5_202 = arith.constant 5 : index
    %c0_203 = arith.constant 0 : index
    %c0_204 = arith.constant 0 : index
    %413 = vector.load %arg1[%c5_202, %c0_203, %c0_204] : memref<8x8x512xbf16, #tpu.memory_space<vmem>>, vector<1x8x512xbf16>
    %414 = vector.shape_cast %413 : vector<1x8x512xbf16> to vector<8x512xbf16>
    %415 = arith.extf %414 : vector<8x512xbf16> to vector<8x512xf32>
    %c0_205 = arith.constant 0 : index
    %c0_206 = arith.constant 0 : index
    %416 = vector.load %arg6[%c0_205, %c0_206] : memref<8x128xf32, #tpu.memory_space<vmem>>, vector<8x128xf32>
    %417 = arith.truncf %416 : vector<8x128xf32> to vector<8x128xbf16>
    %c0_207 = arith.constant 0 : index
    %c0_208 = arith.constant 0 : index
    %c0_209 = arith.constant 0 : index
    %418 = vector.load %arg3[%c0_207, %c0_208, %c0_209] : memref<2x128x512xbf16, #tpu.memory_space<vmem>>, vector<1x128x512xbf16>
    %419 = vector.shape_cast %418 : vector<1x128x512xbf16> to vector<128x512xbf16>
    %cst_210 = arith.constant dense<0.000000e+00> : vector<8x512xf32>
    %420 = tpu.matmul %417, %419, %cst_210 {dimension_numbers = #tpu.dot_dimension_numbers<[1], [0], [0], [1], [0, 0, 1, 1], [], []>} : vector<8x128xbf16>, vector<128x512xbf16>, vector<8x512xf32> -> vector<8x512xf32>
    %421 = arith.addf %415, %420 : vector<8x512xf32>
    %422 = vector.extract_strided_slice %421 {offsets = [0, 0], sizes = [8, 128], strides = [1, 1]} : vector<8x512xf32> to vector<8x128xf32>
    %423 = arith.negf %422 : vector<8x128xf32>
    %424 = math.exp %423 : vector<8x128xf32>
    %cst_211 = arith.constant 1.000000e+00 : f32
    %425 = vector.broadcast %cst_211 : f32 to vector<8x128xf32>
    %426 = arith.addf %425, %424 : vector<8x128xf32>
    %427 = arith.divf %425, %426 : vector<8x128xf32>
    %428 = vector.extract_strided_slice %421 {offsets = [0, 128], sizes = [8, 128], strides = [1, 1]} : vector<8x512xf32> to vector<8x128xf32>
    %429 = arith.negf %428 : vector<8x128xf32>
    %430 = math.exp %429 : vector<8x128xf32>
    %cst_212 = arith.constant 1.000000e+00 : f32
    %431 = vector.broadcast %cst_212 : f32 to vector<8x128xf32>
    %432 = arith.addf %431, %430 : vector<8x128xf32>
    %433 = arith.divf %431, %432 : vector<8x128xf32>
    %434 = vector.extract_strided_slice %421 {offsets = [0, 256], sizes = [8, 128], strides = [1, 1]} : vector<8x512xf32> to vector<8x128xf32>
    %435 = math.tanh %434 : vector<8x128xf32>
    %436 = vector.extract_strided_slice %421 {offsets = [0, 384], sizes = [8, 128], strides = [1, 1]} : vector<8x512xf32> to vector<8x128xf32>
    %437 = arith.negf %436 : vector<8x128xf32>
    %438 = math.exp %437 : vector<8x128xf32>
    %cst_213 = arith.constant 1.000000e+00 : f32
    %439 = vector.broadcast %cst_213 : f32 to vector<8x128xf32>
    %440 = arith.addf %439, %438 : vector<8x128xf32>
    %441 = arith.divf %439, %440 : vector<8x128xf32>
    %c0_214 = arith.constant 0 : index
    %c0_215 = arith.constant 0 : index
    %442 = vector.load %arg7[%c0_214, %c0_215] : memref<8x128xf32, #tpu.memory_space<vmem>>, vector<8x128xf32>
    %443 = arith.mulf %433, %442 : vector<8x128xf32>
    %444 = arith.mulf %427, %435 : vector<8x128xf32>
    %445 = arith.addf %443, %444 : vector<8x128xf32>
    %446 = math.tanh %445 : vector<8x128xf32>
    %447 = arith.mulf %441, %446 : vector<8x128xf32>
    %c0_216 = arith.constant 0 : index
    %c0_217 = arith.constant 0 : index
    %448 = vector.load %arg7[%c0_216, %c0_217] : memref<8x128xf32, #tpu.memory_space<vmem>>, vector<8x128xf32>
    tpu.vector_store %arg7[%c0_216, %c0_217], %445 {strides = array<i32>} : memref<8x128xf32, #tpu.memory_space<vmem>>, vector<8x128xf32>,
    %c0_218 = arith.constant 0 : index
    %c0_219 = arith.constant 0 : index
    %449 = vector.load %arg6[%c0_218, %c0_219] : memref<8x128xf32, #tpu.memory_space<vmem>>, vector<8x128xf32>
    tpu.vector_store %arg6[%c0_218, %c0_219], %447 {strides = array<i32>} : memref<8x128xf32, #tpu.memory_space<vmem>>, vector<8x128xf32>,
    %450 = arith.truncf %447 : vector<8x128xf32> to vector<8x128xbf16>
    %c5_220 = arith.constant 5 : index
    %c0_221 = arith.constant 0 : index
    %c0_222 = arith.constant 0 : index
    %451 = vector.load %arg4[%c5_220, %c0_221, %c0_222] : memref<8x8x128xbf16, #tpu.memory_space<vmem>>, vector<1x8x128xbf16>
    %452 = vector.shape_cast %451 : vector<1x8x128xbf16> to vector<8x128xbf16>
    %453 = vector.shape_cast %450 : vector<8x128xbf16> to vector<1x8x128xbf16>
    tpu.vector_store %arg4[%c5_220, %c0_221, %c0_222], %453 {strides = array<i32>} : memref<8x8x128xbf16, #tpu.memory_space<vmem>>, vector<1x8x128xbf16>,
    %c2_223 = arith.constant 2 : index
    %c0_224 = arith.constant 0 : index
    %c0_225 = arith.constant 0 : index
    %454 = vector.load %arg2[%c2_223, %c0_224, %c0_225] : memref<8x8x512xbf16, #tpu.memory_space<vmem>>, vector<1x8x512xbf16>
    %455 = vector.shape_cast %454 : vector<1x8x512xbf16> to vector<8x512xbf16>
    %456 = arith.extf %455 : vector<8x512xbf16> to vector<8x512xf32>
    %c0_226 = arith.constant 0 : index
    %c0_227 = arith.constant 0 : index
    %457 = vector.load %arg8[%c0_226, %c0_227] : memref<8x128xf32, #tpu.memory_space<vmem>>, vector<8x128xf32>
    %458 = arith.truncf %457 : vector<8x128xf32> to vector<8x128xbf16>
    %c1_228 = arith.constant 1 : index
    %c0_229 = arith.constant 0 : index
    %c0_230 = arith.constant 0 : index
    %459 = vector.load %arg3[%c1_228, %c0_229, %c0_230] : memref<2x128x512xbf16, #tpu.memory_space<vmem>>, vector<1x128x512xbf16>
    %460 = vector.shape_cast %459 : vector<1x128x512xbf16> to vector<128x512xbf16>
    %cst_231 = arith.constant dense<0.000000e+00> : vector<8x512xf32>
    %461 = tpu.matmul %458, %460, %cst_231 {dimension_numbers = #tpu.dot_dimension_numbers<[1], [0], [0], [1], [0, 0, 1, 1], [], []>} : vector<8x128xbf16>, vector<128x512xbf16>, vector<8x512xf32> -> vector<8x512xf32>
    %462 = arith.addf %456, %461 : vector<8x512xf32>
    %463 = vector.extract_strided_slice %462 {offsets = [0, 0], sizes = [8, 128], strides = [1, 1]} : vector<8x512xf32> to vector<8x128xf32>
    %464 = arith.negf %463 : vector<8x128xf32>
    %465 = math.exp %464 : vector<8x128xf32>
    %cst_232 = arith.constant 1.000000e+00 : f32
    %466 = vector.broadcast %cst_232 : f32 to vector<8x128xf32>
    %467 = arith.addf %466, %465 : vector<8x128xf32>
    %468 = arith.divf %466, %467 : vector<8x128xf32>
    %469 = vector.extract_strided_slice %462 {offsets = [0, 128], sizes = [8, 128], strides = [1, 1]} : vector<8x512xf32> to vector<8x128xf32>
    %470 = arith.negf %469 : vector<8x128xf32>
    %471 = math.exp %470 : vector<8x128xf32>
    %cst_233 = arith.constant 1.000000e+00 : f32
    %472 = vector.broadcast %cst_233 : f32 to vector<8x128xf32>
    %473 = arith.addf %472, %471 : vector<8x128xf32>
    %474 = arith.divf %472, %473 : vector<8x128xf32>
    %475 = vector.extract_strided_slice %462 {offsets = [0, 256], sizes = [8, 128], strides = [1, 1]} : vector<8x512xf32> to vector<8x128xf32>
    %476 = math.tanh %475 : vector<8x128xf32>
    %477 = vector.extract_strided_slice %462 {offsets = [0, 384], sizes = [8, 128], strides = [1, 1]} : vector<8x512xf32> to vector<8x128xf32>
    %478 = arith.negf %477 : vector<8x128xf32>
    %479 = math.exp %478 : vector<8x128xf32>
    %cst_234 = arith.constant 1.000000e+00 : f32
    %480 = vector.broadcast %cst_234 : f32 to vector<8x128xf32>
    %481 = arith.addf %480, %479 : vector<8x128xf32>
    %482 = arith.divf %480, %481 : vector<8x128xf32>
    %c0_235 = arith.constant 0 : index
    %c0_236 = arith.constant 0 : index
    %483 = vector.load %arg9[%c0_235, %c0_236] : memref<8x128xf32, #tpu.memory_space<vmem>>, vector<8x128xf32>
    %484 = arith.mulf %474, %483 : vector<8x128xf32>
    %485 = arith.mulf %468, %476 : vector<8x128xf32>
    %486 = arith.addf %484, %485 : vector<8x128xf32>
    %487 = math.tanh %486 : vector<8x128xf32>
    %488 = arith.mulf %482, %487 : vector<8x128xf32>
    %c0_237 = arith.constant 0 : index
    %c0_238 = arith.constant 0 : index
    %489 = vector.load %arg9[%c0_237, %c0_238] : memref<8x128xf32, #tpu.memory_space<vmem>>, vector<8x128xf32>
    tpu.vector_store %arg9[%c0_237, %c0_238], %486 {strides = array<i32>} : memref<8x128xf32, #tpu.memory_space<vmem>>, vector<8x128xf32>,
    %c0_239 = arith.constant 0 : index
    %c0_240 = arith.constant 0 : index
    %490 = vector.load %arg8[%c0_239, %c0_240] : memref<8x128xf32, #tpu.memory_space<vmem>>, vector<8x128xf32>
    tpu.vector_store %arg8[%c0_239, %c0_240], %488 {strides = array<i32>} : memref<8x128xf32, #tpu.memory_space<vmem>>, vector<8x128xf32>,
    %491 = arith.truncf %488 : vector<8x128xf32> to vector<8x128xbf16>
    %c2_241 = arith.constant 2 : index
    %c0_242 = arith.constant 0 : index
    %c0_243 = arith.constant 0 : index
    %492 = vector.load %arg5[%c2_241, %c0_242, %c0_243] : memref<8x8x128xbf16, #tpu.memory_space<vmem>>, vector<1x8x128xbf16>
    %493 = vector.shape_cast %492 : vector<1x8x128xbf16> to vector<8x128xbf16>
    %494 = vector.shape_cast %491 : vector<8x128xbf16> to vector<1x8x128xbf16>
    tpu.vector_store %arg5[%c2_241, %c0_242, %c0_243], %494 {strides = array<i32>} : memref<8x8x128xbf16, #tpu.memory_space<vmem>>, vector<1x8x128xbf16>,
    %c6_244 = arith.constant 6 : index
    %c0_245 = arith.constant 0 : index
    %c0_246 = arith.constant 0 : index
    %495 = vector.load %arg1[%c6_244, %c0_245, %c0_246] : memref<8x8x512xbf16, #tpu.memory_space<vmem>>, vector<1x8x512xbf16>
    %496 = vector.shape_cast %495 : vector<1x8x512xbf16> to vector<8x512xbf16>
    %497 = arith.extf %496 : vector<8x512xbf16> to vector<8x512xf32>
    %c0_247 = arith.constant 0 : index
    %c0_248 = arith.constant 0 : index
    %498 = vector.load %arg6[%c0_247, %c0_248] : memref<8x128xf32, #tpu.memory_space<vmem>>, vector<8x128xf32>
    %499 = arith.truncf %498 : vector<8x128xf32> to vector<8x128xbf16>
    %c0_249 = arith.constant 0 : index
    %c0_250 = arith.constant 0 : index
    %c0_251 = arith.constant 0 : index
    %500 = vector.load %arg3[%c0_249, %c0_250, %c0_251] : memref<2x128x512xbf16, #tpu.memory_space<vmem>>, vector<1x128x512xbf16>
    %501 = vector.shape_cast %500 : vector<1x128x512xbf16> to vector<128x512xbf16>
    %cst_252 = arith.constant dense<0.000000e+00> : vector<8x512xf32>
    %502 = tpu.matmul %499, %501, %cst_252 {dimension_numbers = #tpu.dot_dimension_numbers<[1], [0], [0], [1], [0, 0, 1, 1], [], []>} : vector<8x128xbf16>, vector<128x512xbf16>, vector<8x512xf32> -> vector<8x512xf32>
    %503 = arith.addf %497, %502 : vector<8x512xf32>
    %504 = vector.extract_strided_slice %503 {offsets = [0, 0], sizes = [8, 128], strides = [1, 1]} : vector<8x512xf32> to vector<8x128xf32>
    %505 = arith.negf %504 : vector<8x128xf32>
    %506 = math.exp %505 : vector<8x128xf32>
    %cst_253 = arith.constant 1.000000e+00 : f32
    %507 = vector.broadcast %cst_253 : f32 to vector<8x128xf32>
    %508 = arith.addf %507, %506 : vector<8x128xf32>
    %509 = arith.divf %507, %508 : vector<8x128xf32>
    %510 = vector.extract_strided_slice %503 {offsets = [0, 128], sizes = [8, 128], strides = [1, 1]} : vector<8x512xf32> to vector<8x128xf32>
    %511 = arith.negf %510 : vector<8x128xf32>
    %512 = math.exp %511 : vector<8x128xf32>
    %cst_254 = arith.constant 1.000000e+00 : f32
    %513 = vector.broadcast %cst_254 : f32 to vector<8x128xf32>
    %514 = arith.addf %513, %512 : vector<8x128xf32>
    %515 = arith.divf %513, %514 : vector<8x128xf32>
    %516 = vector.extract_strided_slice %503 {offsets = [0, 256], sizes = [8, 128], strides = [1, 1]} : vector<8x512xf32> to vector<8x128xf32>
    %517 = math.tanh %516 : vector<8x128xf32>
    %518 = vector.extract_strided_slice %503 {offsets = [0, 384], sizes = [8, 128], strides = [1, 1]} : vector<8x512xf32> to vector<8x128xf32>
    %519 = arith.negf %518 : vector<8x128xf32>
    %520 = math.exp %519 : vector<8x128xf32>
    %cst_255 = arith.constant 1.000000e+00 : f32
    %521 = vector.broadcast %cst_255 : f32 to vector<8x128xf32>
    %522 = arith.addf %521, %520 : vector<8x128xf32>
    %523 = arith.divf %521, %522 : vector<8x128xf32>
    %c0_256 = arith.constant 0 : index
    %c0_257 = arith.constant 0 : index
    %524 = vector.load %arg7[%c0_256, %c0_257] : memref<8x128xf32, #tpu.memory_space<vmem>>, vector<8x128xf32>
    %525 = arith.mulf %515, %524 : vector<8x128xf32>
    %526 = arith.mulf %509, %517 : vector<8x128xf32>
    %527 = arith.addf %525, %526 : vector<8x128xf32>
    %528 = math.tanh %527 : vector<8x128xf32>
    %529 = arith.mulf %523, %528 : vector<8x128xf32>
    %c0_258 = arith.constant 0 : index
    %c0_259 = arith.constant 0 : index
    %530 = vector.load %arg7[%c0_258, %c0_259] : memref<8x128xf32, #tpu.memory_space<vmem>>, vector<8x128xf32>
    tpu.vector_store %arg7[%c0_258, %c0_259], %527 {strides = array<i32>} : memref<8x128xf32, #tpu.memory_space<vmem>>, vector<8x128xf32>,
    %c0_260 = arith.constant 0 : index
    %c0_261 = arith.constant 0 : index
    %531 = vector.load %arg6[%c0_260, %c0_261] : memref<8x128xf32, #tpu.memory_space<vmem>>, vector<8x128xf32>
    tpu.vector_store %arg6[%c0_260, %c0_261], %529 {strides = array<i32>} : memref<8x128xf32, #tpu.memory_space<vmem>>, vector<8x128xf32>,
    %532 = arith.truncf %529 : vector<8x128xf32> to vector<8x128xbf16>
    %c6_262 = arith.constant 6 : index
    %c0_263 = arith.constant 0 : index
    %c0_264 = arith.constant 0 : index
    %533 = vector.load %arg4[%c6_262, %c0_263, %c0_264] : memref<8x8x128xbf16, #tpu.memory_space<vmem>>, vector<1x8x128xbf16>
    %534 = vector.shape_cast %533 : vector<1x8x128xbf16> to vector<8x128xbf16>
    %535 = vector.shape_cast %532 : vector<8x128xbf16> to vector<1x8x128xbf16>
    tpu.vector_store %arg4[%c6_262, %c0_263, %c0_264], %535 {strides = array<i32>} : memref<8x8x128xbf16, #tpu.memory_space<vmem>>, vector<1x8x128xbf16>,
    %c1_265 = arith.constant 1 : index
    %c0_266 = arith.constant 0 : index
    %c0_267 = arith.constant 0 : index
    %536 = vector.load %arg2[%c1_265, %c0_266, %c0_267] : memref<8x8x512xbf16, #tpu.memory_space<vmem>>, vector<1x8x512xbf16>
    %537 = vector.shape_cast %536 : vector<1x8x512xbf16> to vector<8x512xbf16>
    %538 = arith.extf %537 : vector<8x512xbf16> to vector<8x512xf32>
    %c0_268 = arith.constant 0 : index
    %c0_269 = arith.constant 0 : index
    %539 = vector.load %arg8[%c0_268, %c0_269] : memref<8x128xf32, #tpu.memory_space<vmem>>, vector<8x128xf32>
    %540 = arith.truncf %539 : vector<8x128xf32> to vector<8x128xbf16>
    %c1_270 = arith.constant 1 : index
    %c0_271 = arith.constant 0 : index
    %c0_272 = arith.constant 0 : index
    %541 = vector.load %arg3[%c1_270, %c0_271, %c0_272] : memref<2x128x512xbf16, #tpu.memory_space<vmem>>, vector<1x128x512xbf16>
    %542 = vector.shape_cast %541 : vector<1x128x512xbf16> to vector<128x512xbf16>
    %cst_273 = arith.constant dense<0.000000e+00> : vector<8x512xf32>
    %543 = tpu.matmul %540, %542, %cst_273 {dimension_numbers = #tpu.dot_dimension_numbers<[1], [0], [0], [1], [0, 0, 1, 1], [], []>} : vector<8x128xbf16>, vector<128x512xbf16>, vector<8x512xf32> -> vector<8x512xf32>
    %544 = arith.addf %538, %543 : vector<8x512xf32>
    %545 = vector.extract_strided_slice %544 {offsets = [0, 0], sizes = [8, 128], strides = [1, 1]} : vector<8x512xf32> to vector<8x128xf32>
    %546 = arith.negf %545 : vector<8x128xf32>
    %547 = math.exp %546 : vector<8x128xf32>
    %cst_274 = arith.constant 1.000000e+00 : f32
    %548 = vector.broadcast %cst_274 : f32 to vector<8x128xf32>
    %549 = arith.addf %548, %547 : vector<8x128xf32>
    %550 = arith.divf %548, %549 : vector<8x128xf32>
    %551 = vector.extract_strided_slice %544 {offsets = [0, 128], sizes = [8, 128], strides = [1, 1]} : vector<8x512xf32> to vector<8x128xf32>
    %552 = arith.negf %551 : vector<8x128xf32>
    %553 = math.exp %552 : vector<8x128xf32>
    %cst_275 = arith.constant 1.000000e+00 : f32
    %554 = vector.broadcast %cst_275 : f32 to vector<8x128xf32>
    %555 = arith.addf %554, %553 : vector<8x128xf32>
    %556 = arith.divf %554, %555 : vector<8x128xf32>
    %557 = vector.extract_strided_slice %544 {offsets = [0, 256], sizes = [8, 128], strides = [1, 1]} : vector<8x512xf32> to vector<8x128xf32>
    %558 = math.tanh %557 : vector<8x128xf32>
    %559 = vector.extract_strided_slice %544 {offsets = [0, 384], sizes = [8, 128], strides = [1, 1]} : vector<8x512xf32> to vector<8x128xf32>
    %560 = arith.negf %559 : vector<8x128xf32>
    %561 = math.exp %560 : vector<8x128xf32>
    %cst_276 = arith.constant 1.000000e+00 : f32
    %562 = vector.broadcast %cst_276 : f32 to vector<8x128xf32>
    %563 = arith.addf %562, %561 : vector<8x128xf32>
    %564 = arith.divf %562, %563 : vector<8x128xf32>
    %c0_277 = arith.constant 0 : index
    %c0_278 = arith.constant 0 : index
    %565 = vector.load %arg9[%c0_277, %c0_278] : memref<8x128xf32, #tpu.memory_space<vmem>>, vector<8x128xf32>
    %566 = arith.mulf %556, %565 : vector<8x128xf32>
    %567 = arith.mulf %550, %558 : vector<8x128xf32>
    %568 = arith.addf %566, %567 : vector<8x128xf32>
    %569 = math.tanh %568 : vector<8x128xf32>
    %570 = arith.mulf %564, %569 : vector<8x128xf32>
    %c0_279 = arith.constant 0 : index
    %c0_280 = arith.constant 0 : index
    %571 = vector.load %arg9[%c0_279, %c0_280] : memref<8x128xf32, #tpu.memory_space<vmem>>, vector<8x128xf32>
    tpu.vector_store %arg9[%c0_279, %c0_280], %568 {strides = array<i32>} : memref<8x128xf32, #tpu.memory_space<vmem>>, vector<8x128xf32>,
    %c0_281 = arith.constant 0 : index
    %c0_282 = arith.constant 0 : index
    %572 = vector.load %arg8[%c0_281, %c0_282] : memref<8x128xf32, #tpu.memory_space<vmem>>, vector<8x128xf32>
    tpu.vector_store %arg8[%c0_281, %c0_282], %570 {strides = array<i32>} : memref<8x128xf32, #tpu.memory_space<vmem>>, vector<8x128xf32>,
    %573 = arith.truncf %570 : vector<8x128xf32> to vector<8x128xbf16>
    %c1_283 = arith.constant 1 : index
    %c0_284 = arith.constant 0 : index
    %c0_285 = arith.constant 0 : index
    %574 = vector.load %arg5[%c1_283, %c0_284, %c0_285] : memref<8x8x128xbf16, #tpu.memory_space<vmem>>, vector<1x8x128xbf16>
    %575 = vector.shape_cast %574 : vector<1x8x128xbf16> to vector<8x128xbf16>
    %576 = vector.shape_cast %573 : vector<8x128xbf16> to vector<1x8x128xbf16>
    tpu.vector_store %arg5[%c1_283, %c0_284, %c0_285], %576 {strides = array<i32>} : memref<8x8x128xbf16, #tpu.memory_space<vmem>>, vector<1x8x128xbf16>,
    %c7_286 = arith.constant 7 : index
    %c0_287 = arith.constant 0 : index
    %c0_288 = arith.constant 0 : index
    %577 = vector.load %arg1[%c7_286, %c0_287, %c0_288] : memref<8x8x512xbf16, #tpu.memory_space<vmem>>, vector<1x8x512xbf16>
    %578 = vector.shape_cast %577 : vector<1x8x512xbf16> to vector<8x512xbf16>
    %579 = arith.extf %578 : vector<8x512xbf16> to vector<8x512xf32>
    %c0_289 = arith.constant 0 : index
    %c0_290 = arith.constant 0 : index
    %580 = vector.load %arg6[%c0_289, %c0_290] : memref<8x128xf32, #tpu.memory_space<vmem>>, vector<8x128xf32>
    %581 = arith.truncf %580 : vector<8x128xf32> to vector<8x128xbf16>
    %c0_291 = arith.constant 0 : index
    %c0_292 = arith.constant 0 : index
    %c0_293 = arith.constant 0 : index
    %582 = vector.load %arg3[%c0_291, %c0_292, %c0_293] : memref<2x128x512xbf16, #tpu.memory_space<vmem>>, vector<1x128x512xbf16>
    %583 = vector.shape_cast %582 : vector<1x128x512xbf16> to vector<128x512xbf16>
    %cst_294 = arith.constant dense<0.000000e+00> : vector<8x512xf32>
    %584 = tpu.matmul %581, %583, %cst_294 {dimension_numbers = #tpu.dot_dimension_numbers<[1], [0], [0], [1], [0, 0, 1, 1], [], []>} : vector<8x128xbf16>, vector<128x512xbf16>, vector<8x512xf32> -> vector<8x512xf32>
    %585 = arith.addf %579, %584 : vector<8x512xf32>
    %586 = vector.extract_strided_slice %585 {offsets = [0, 0], sizes = [8, 128], strides = [1, 1]} : vector<8x512xf32> to vector<8x128xf32>
    %587 = arith.negf %586 : vector<8x128xf32>
    %588 = math.exp %587 : vector<8x128xf32>
    %cst_295 = arith.constant 1.000000e+00 : f32
    %589 = vector.broadcast %cst_295 : f32 to vector<8x128xf32>
    %590 = arith.addf %589, %588 : vector<8x128xf32>
    %591 = arith.divf %589, %590 : vector<8x128xf32>
    %592 = vector.extract_strided_slice %585 {offsets = [0, 128], sizes = [8, 128], strides = [1, 1]} : vector<8x512xf32> to vector<8x128xf32>
    %593 = arith.negf %592 : vector<8x128xf32>
    %594 = math.exp %593 : vector<8x128xf32>
    %cst_296 = arith.constant 1.000000e+00 : f32
    %595 = vector.broadcast %cst_296 : f32 to vector<8x128xf32>
    %596 = arith.addf %595, %594 : vector<8x128xf32>
    %597 = arith.divf %595, %596 : vector<8x128xf32>
    %598 = vector.extract_strided_slice %585 {offsets = [0, 256], sizes = [8, 128], strides = [1, 1]} : vector<8x512xf32> to vector<8x128xf32>
    %599 = math.tanh %598 : vector<8x128xf32>
    %600 = vector.extract_strided_slice %585 {offsets = [0, 384], sizes = [8, 128], strides = [1, 1]} : vector<8x512xf32> to vector<8x128xf32>
    %601 = arith.negf %600 : vector<8x128xf32>
    %602 = math.exp %601 : vector<8x128xf32>
    %cst_297 = arith.constant 1.000000e+00 : f32
    %603 = vector.broadcast %cst_297 : f32 to vector<8x128xf32>
    %604 = arith.addf %603, %602 : vector<8x128xf32>
    %605 = arith.divf %603, %604 : vector<8x128xf32>
    %c0_298 = arith.constant 0 : index
    %c0_299 = arith.constant 0 : index
    %606 = vector.load %arg7[%c0_298, %c0_299] : memref<8x128xf32, #tpu.memory_space<vmem>>, vector<8x128xf32>
    %607 = arith.mulf %597, %606 : vector<8x128xf32>
    %608 = arith.mulf %591, %599 : vector<8x128xf32>
    %609 = arith.addf %607, %608 : vector<8x128xf32>
    %610 = math.tanh %609 : vector<8x128xf32>
    %611 = arith.mulf %605, %610 : vector<8x128xf32>
    %c0_300 = arith.constant 0 : index
    %c0_301 = arith.constant 0 : index
    %612 = vector.load %arg7[%c0_300, %c0_301] : memref<8x128xf32, #tpu.memory_space<vmem>>, vector<8x128xf32>
    tpu.vector_store %arg7[%c0_300, %c0_301], %609 {strides = array<i32>} : memref<8x128xf32, #tpu.memory_space<vmem>>, vector<8x128xf32>,
    %c0_302 = arith.constant 0 : index
    %c0_303 = arith.constant 0 : index
    %613 = vector.load %arg6[%c0_302, %c0_303] : memref<8x128xf32, #tpu.memory_space<vmem>>, vector<8x128xf32>
    tpu.vector_store %arg6[%c0_302, %c0_303], %611 {strides = array<i32>} : memref<8x128xf32, #tpu.memory_space<vmem>>, vector<8x128xf32>,
    %614 = arith.truncf %611 : vector<8x128xf32> to vector<8x128xbf16>
    %c7_304 = arith.constant 7 : index
    %c0_305 = arith.constant 0 : index
    %c0_306 = arith.constant 0 : index
    %615 = vector.load %arg4[%c7_304, %c0_305, %c0_306] : memref<8x8x128xbf16, #tpu.memory_space<vmem>>, vector<1x8x128xbf16>
    %616 = vector.shape_cast %615 : vector<1x8x128xbf16> to vector<8x128xbf16>
    %617 = vector.shape_cast %614 : vector<8x128xbf16> to vector<1x8x128xbf16>
    tpu.vector_store %arg4[%c7_304, %c0_305, %c0_306], %617 {strides = array<i32>} : memref<8x8x128xbf16, #tpu.memory_space<vmem>>, vector<1x8x128xbf16>,
    %c0_307 = arith.constant 0 : index
    %c0_308 = arith.constant 0 : index
    %c0_309 = arith.constant 0 : index
    %618 = vector.load %arg2[%c0_307, %c0_308, %c0_309] : memref<8x8x512xbf16, #tpu.memory_space<vmem>>, vector<1x8x512xbf16>
    %619 = vector.shape_cast %618 : vector<1x8x512xbf16> to vector<8x512xbf16>
    %620 = arith.extf %619 : vector<8x512xbf16> to vector<8x512xf32>
    %c0_310 = arith.constant 0 : index
    %c0_311 = arith.constant 0 : index
    %621 = vector.load %arg8[%c0_310, %c0_311] : memref<8x128xf32, #tpu.memory_space<vmem>>, vector<8x128xf32>
    %622 = arith.truncf %621 : vector<8x128xf32> to vector<8x128xbf16>
    %c1_312 = arith.constant 1 : index
    %c0_313 = arith.constant 0 : index
    %c0_314 = arith.constant 0 : index
    %623 = vector.load %arg3[%c1_312, %c0_313, %c0_314] : memref<2x128x512xbf16, #tpu.memory_space<vmem>>, vector<1x128x512xbf16>
    %624 = vector.shape_cast %623 : vector<1x128x512xbf16> to vector<128x512xbf16>
    %cst_315 = arith.constant dense<0.000000e+00> : vector<8x512xf32>
    %625 = tpu.matmul %622, %624, %cst_315 {dimension_numbers = #tpu.dot_dimension_numbers<[1], [0], [0], [1], [0, 0, 1, 1], [], []>} : vector<8x128xbf16>, vector<128x512xbf16>, vector<8x512xf32> -> vector<8x512xf32>
    %626 = arith.addf %620, %625 : vector<8x512xf32>
    %627 = vector.extract_strided_slice %626 {offsets = [0, 0], sizes = [8, 128], strides = [1, 1]} : vector<8x512xf32> to vector<8x128xf32>
    %628 = arith.negf %627 : vector<8x128xf32>
    %629 = math.exp %628 : vector<8x128xf32>
    %cst_316 = arith.constant 1.000000e+00 : f32
    %630 = vector.broadcast %cst_316 : f32 to vector<8x128xf32>
    %631 = arith.addf %630, %629 : vector<8x128xf32>
    %632 = arith.divf %630, %631 : vector<8x128xf32>
    %633 = vector.extract_strided_slice %626 {offsets = [0, 128], sizes = [8, 128], strides = [1, 1]} : vector<8x512xf32> to vector<8x128xf32>
    %634 = arith.negf %633 : vector<8x128xf32>
    %635 = math.exp %634 : vector<8x128xf32>
    %cst_317 = arith.constant 1.000000e+00 : f32
    %636 = vector.broadcast %cst_317 : f32 to vector<8x128xf32>
    %637 = arith.addf %636, %635 : vector<8x128xf32>
    %638 = arith.divf %636, %637 : vector<8x128xf32>
    %639 = vector.extract_strided_slice %626 {offsets = [0, 256], sizes = [8, 128], strides = [1, 1]} : vector<8x512xf32> to vector<8x128xf32>
    %640 = math.tanh %639 : vector<8x128xf32>
    %641 = vector.extract_strided_slice %626 {offsets = [0, 384], sizes = [8, 128], strides = [1, 1]} : vector<8x512xf32> to vector<8x128xf32>
    %642 = arith.negf %641 : vector<8x128xf32>
    %643 = math.exp %642 : vector<8x128xf32>
    %cst_318 = arith.constant 1.000000e+00 : f32
    %644 = vector.broadcast %cst_318 : f32 to vector<8x128xf32>
    %645 = arith.addf %644, %643 : vector<8x128xf32>
    %646 = arith.divf %644, %645 : vector<8x128xf32>
    %c0_319 = arith.constant 0 : index
    %c0_320 = arith.constant 0 : index
    %647 = vector.load %arg9[%c0_319, %c0_320] : memref<8x128xf32, #tpu.memory_space<vmem>>, vector<8x128xf32>
    %648 = arith.mulf %638, %647 : vector<8x128xf32>
    %649 = arith.mulf %632, %640 : vector<8x128xf32>
    %650 = arith.addf %648, %649 : vector<8x128xf32>
    %651 = math.tanh %650 : vector<8x128xf32>
    %652 = arith.mulf %646, %651 : vector<8x128xf32>
    %c0_321 = arith.constant 0 : index
    %c0_322 = arith.constant 0 : index
    %653 = vector.load %arg9[%c0_321, %c0_322] : memref<8x128xf32, #tpu.memory_space<vmem>>, vector<8x128xf32>
    tpu.vector_store %arg9[%c0_321, %c0_322], %650 {strides = array<i32>} : memref<8x128xf32, #tpu.memory_space<vmem>>, vector<8x128xf32>,
    %c0_323 = arith.constant 0 : index
    %c0_324 = arith.constant 0 : index
    %654 = vector.load %arg8[%c0_323, %c0_324] : memref<8x128xf32, #tpu.memory_space<vmem>>, vector<8x128xf32>
    tpu.vector_store %arg8[%c0_323, %c0_324], %652 {strides = array<i32>} : memref<8x128xf32, #tpu.memory_space<vmem>>, vector<8x128xf32>,
    %655 = arith.truncf %652 : vector<8x128xf32> to vector<8x128xbf16>
    %c0_325 = arith.constant 0 : index
    %c0_326 = arith.constant 0 : index
    %c0_327 = arith.constant 0 : index
    %656 = vector.load %arg5[%c0_325, %c0_326, %c0_327] : memref<8x8x128xbf16, #tpu.memory_space<vmem>>, vector<1x8x128xbf16>
    %657 = vector.shape_cast %656 : vector<1x8x128xbf16> to vector<8x128xbf16>
    %658 = vector.shape_cast %655 : vector<8x128xbf16> to vector<1x8x128xbf16>
    tpu.vector_store %arg5[%c0_325, %c0_326, %c0_327], %658 {strides = array<i32>} : memref<8x8x128xbf16, #tpu.memory_space<vmem>>, vector<1x8x128xbf16>,
    return
  }
  func.func @transform_0(%arg0: i32) -> (i32, i32, i32) {
    %c0_i32 = arith.constant 0 : i32
    %c0_i32_0 = arith.constant 0 : i32
    %c0_i32_1 = arith.constant 0 : i32
    return %arg0, %c0_i32, %c0_i32_0 : i32, i32, i32
  }
  func.func @transform_1(%arg0: i32) -> (i32, i32, i32) {
    %c0_i32 = arith.constant 0 : i32
    %0 = arith.subi %c0_i32, %arg0 : i32
    %c0_i32_0 = arith.constant 0 : i32
    %c1_i32 = arith.constant 1 : i32
    %c0_i32_1 = arith.constant 0 : i32
    return %0, %c0_i32_0, %c1_i32 : i32, i32, i32
  }
  func.func @transform_2(%arg0: i32) -> (i32, i32, i32) {
    %c0_i32 = arith.constant 0 : i32
    %c0_i32_0 = arith.constant 0 : i32
    %c0_i32_1 = arith.constant 0 : i32
    %c0_i32_2 = arith.constant 0 : i32
    return %c0_i32, %c0_i32_0, %c0_i32_1 : i32, i32, i32
  }
  func.func @transform_3(%arg0: i32) -> (i32, i32, i32) {
    %c0_i32 = arith.constant 0 : i32
    %c0_i32_0 = arith.constant 0 : i32
    %c0_i32_1 = arith.constant 0 : i32
    return %arg0, %c0_i32, %c0_i32_0 : i32, i32, i32
  }
  func.func @transform_4(%arg0: i32) -> (i32, i32, i32) {
    %c0_i32 = arith.constant 0 : i32
    %0 = arith.subi %c0_i32, %arg0 : i32
    %c0_i32_0 = arith.constant 0 : i32
    %c0_i32_1 = arith.constant 0 : i32
    %c0_i32_2 = arith.constant 0 : i32
    return %0, %c0_i32_0, %c0_i32_1 : i32, i32, i32
  }
}

module attributes {stable_mosaic.version = 11 : i64} {
  func.func @_matmul_kernel(%arg0: i32, %arg1: i32, %arg2: i32, %arg3: memref<64x128xbf16, #tpu.memory_space<vmem>>, %arg4: memref<128x128xbf16, #tpu.memory_space<vmem>>, %arg5: memref<64x128xbf16, #tpu.memory_space<vmem>>, %arg6: memref<128x128xbf16, #tpu.memory_space<vmem>>, %arg7: memref<1x128xf32, #tpu.memory_space<vmem>>, %arg8: memref<64x128xf32, #tpu.memory_space<vmem>>, %arg9: memref<64x128xf32, #tpu.memory_space<vmem>>) attributes {dimension_semantics = [#tpu.dimension_semantics<parallel>, #tpu.dimension_semantics<parallel>, #tpu.dimension_semantics<arbitrary>], iteration_bounds = array<i64: 1, 1, 1>, scalar_prefetch = 0 : i64, scratch_operands = 1 : i64, tpu.core_type = #tpu.core_type<tc>, window_params = [{transform_indices = @transform_0, window_bounds = array<i64: 64, 128>}, {transform_indices = @transform_1, window_bounds = array<i64: 128, 128>}, {transform_indices = @transform_2, window_bounds = array<i64: 64, 128>}, {transform_indices = @transform_3, window_bounds = array<i64: 128, 128>}, {transform_indices = @transform_4, window_bounds = array<i64: 1, 128>}, {transform_indices = @transform_5, window_bounds = array<i64: 64, 128>}]} {
    %c0_i32 = arith.constant 0 : i32
    %0 = arith.cmpi eq, %arg2, %c0_i32 : i32
    %1 = arith.extui %0 : i1 to i32
    %c0_i32_0 = arith.constant 0 : i32
    %2 = arith.cmpi ne, %1, %c0_i32_0 : i32
    scf.if %2 {
      %cst_19 = arith.constant 0.000000e+00 : f32
      %18 = vector.broadcast %cst_19 : f32 to vector<64x128xf32>
      %c0_20 = arith.constant 0 : index
      %c0_21 = arith.constant 0 : index
      %19 = vector.load %arg9[%c0_20, %c0_21] : memref<64x128xf32, #tpu.memory_space<vmem>>, vector<64x128xf32>
      tpu.vector_store %arg9[%c0_20, %c0_21], %18 {strides = array<i32>} : memref<64x128xf32, #tpu.memory_space<vmem>>, vector<64x128xf32>,
    } else {
    }
    %c0 = arith.constant 0 : index
    %c0_1 = arith.constant 0 : index
    %3 = vector.load %arg9[%c0, %c0_1] : memref<64x128xf32, #tpu.memory_space<vmem>>, vector<64x128xf32>
    %c0_2 = arith.constant 0 : index
    %c0_3 = arith.constant 0 : index
    %4 = vector.load %arg3[%c0_2, %c0_3] : memref<64x128xbf16, #tpu.memory_space<vmem>>, vector<64x128xbf16>
    %c0_4 = arith.constant 0 : index
    %c0_5 = arith.constant 0 : index
    %5 = vector.load %arg4[%c0_4, %c0_5] : memref<128x128xbf16, #tpu.memory_space<vmem>>, vector<128x128xbf16>
    %cst = arith.constant dense<0.000000e+00> : vector<64x128xf32>
    %6 = tpu.matmul %4, %5, %cst {dimension_numbers = #tpu.dot_dimension_numbers<[1], [0], [0], [1], [0, 0, 1, 1], [], []>} : vector<64x128xbf16>, vector<128x128xbf16>, vector<64x128xf32> -> vector<64x128xf32>
    %7 = arith.addf %3, %6 : vector<64x128xf32>
    %c0_6 = arith.constant 0 : index
    %c0_7 = arith.constant 0 : index
    %8 = vector.load %arg9[%c0_6, %c0_7] : memref<64x128xf32, #tpu.memory_space<vmem>>, vector<64x128xf32>
    tpu.vector_store %arg9[%c0_6, %c0_7], %7 {strides = array<i32>} : memref<64x128xf32, #tpu.memory_space<vmem>>, vector<64x128xf32>,
    %c0_8 = arith.constant 0 : index
    %c0_9 = arith.constant 0 : index
    %9 = vector.load %arg9[%c0_8, %c0_9] : memref<64x128xf32, #tpu.memory_space<vmem>>, vector<64x128xf32>
    %c0_10 = arith.constant 0 : index
    %c0_11 = arith.constant 0 : index
    %10 = vector.load %arg5[%c0_10, %c0_11] : memref<64x128xbf16, #tpu.memory_space<vmem>>, vector<64x128xbf16>
    %c0_12 = arith.constant 0 : index
    %c0_13 = arith.constant 0 : index
    %11 = vector.load %arg6[%c0_12, %c0_13] : memref<128x128xbf16, #tpu.memory_space<vmem>>, vector<128x128xbf16>
    %cst_14 = arith.constant dense<0.000000e+00> : vector<64x128xf32>
    %12 = tpu.matmul %10, %11, %cst_14 {dimension_numbers = #tpu.dot_dimension_numbers<[1], [0], [0], [1], [0, 0, 1, 1], [], []>} : vector<64x128xbf16>, vector<128x128xbf16>, vector<64x128xf32> -> vector<64x128xf32>
    %13 = arith.addf %9, %12 : vector<64x128xf32>
    %c0_15 = arith.constant 0 : index
    %c0_16 = arith.constant 0 : index
    %14 = vector.load %arg9[%c0_15, %c0_16] : memref<64x128xf32, #tpu.memory_space<vmem>>, vector<64x128xf32>
    tpu.vector_store %arg9[%c0_15, %c0_16], %13 {strides = array<i32>} : memref<64x128xf32, #tpu.memory_space<vmem>>, vector<64x128xf32>,
    %c0_i32_17 = arith.constant 0 : i32
    %15 = arith.cmpi eq, %arg2, %c0_i32_17 : i32
    %16 = arith.extui %15 : i1 to i32
    %c0_i32_18 = arith.constant 0 : i32
    %17 = arith.cmpi ne, %16, %c0_i32_18 : i32
    scf.if %17 {
      %c0_19 = arith.constant 0 : index
      %c0_20 = arith.constant 0 : index
      %18 = vector.load %arg9[%c0_19, %c0_20] : memref<64x128xf32, #tpu.memory_space<vmem>>, vector<64x128xf32>
      %c0_21 = arith.constant 0 : index
      %c0_22 = arith.constant 0 : index
      %19 = vector.load %arg7[%c0_21, %c0_22] : memref<1x128xf32, #tpu.memory_space<vmem>>, vector<1x128xf32>
      %20 = vector.broadcast %19 : vector<1x128xf32> to vector<64x128xf32>
      %21 = arith.addf %18, %20 : vector<64x128xf32>
      %c0_23 = arith.constant 0 : index
      %c0_24 = arith.constant 0 : index
      %22 = vector.load %arg8[%c0_23, %c0_24] : memref<64x128xf32, #tpu.memory_space<vmem>>, vector<64x128xf32>
      tpu.vector_store %arg8[%c0_23, %c0_24], %21 {strides = array<i32>} : memref<64x128xf32, #tpu.memory_space<vmem>>, vector<64x128xf32>,
    } else {
    }
    return
  }
  func.func @transform_0(%arg0: i32, %arg1: i32, %arg2: i32) -> (i32, i32) {
    %c0_i32 = arith.constant 0 : i32
    return %arg0, %arg2 : i32, i32
  }
  func.func @transform_1(%arg0: i32, %arg1: i32, %arg2: i32) -> (i32, i32) {
    %c0_i32 = arith.constant 0 : i32
    return %arg2, %arg1 : i32, i32
  }
  func.func @transform_2(%arg0: i32, %arg1: i32, %arg2: i32) -> (i32, i32) {
    %c0_i32 = arith.constant 0 : i32
    return %arg0, %arg2 : i32, i32
  }
  func.func @transform_3(%arg0: i32, %arg1: i32, %arg2: i32) -> (i32, i32) {
    %c0_i32 = arith.constant 0 : i32
    return %arg2, %arg1 : i32, i32
  }
  func.func @transform_4(%arg0: i32, %arg1: i32, %arg2: i32) -> (i32, i32) {
    %c0_i32 = arith.constant 0 : i32
    %c0_i32_0 = arith.constant 0 : i32
    return %c0_i32, %arg1 : i32, i32
  }
  func.func @transform_5(%arg0: i32, %arg1: i32, %arg2: i32) -> (i32, i32) {
    %c0_i32 = arith.constant 0 : i32
    return %arg0, %arg1 : i32, i32
  }
}

</mosaic_0001>

<llo_original>
// kernel: bidirectional_lstm.5
$region0: #{bidirectional_lstm.5}
  #allocation0 [shape = 'u32[]', space=smem, size = 0x4, offset = 0x4, fixed_abs, tag = 'smem constant byte address 0x4 - core index']
  #allocation1 [shape = 'u32[72,128]{1,0:T(1,128)}', space=vmem, size = 0x9000, scoped, tag = 'internal scratch']
  #allocation2 [shape = 'f32[64,128]{1,0:T(8,128)}', space=vmem, size = 0x8000, scoped, tag = 'scratch operand']
  %s0 = inlined_call_operand.vmem [shape: bf16[64,128], index: 0, kind: input, shape index: {}]
  %s1 = inlined_call_operand.vmem [shape: bf16[128,128], index: 1, kind: input, shape index: {}]
  %s2 = inlined_call_operand.vmem [shape: bf16[64,128], index: 2, kind: input, shape index: {}]
  %s3 = inlined_call_operand.vmem [shape: bf16[128,128], index: 3, kind: input, shape index: {}]
  %s4 = inlined_call_operand.vmem [shape: f32[1,128], index: 4, kind: input, shape index: {}]
  %s5 = inlined_call_operand.vmem [shape: f32[64,128], index: 5, kind: output, shape index: {}]
  %s6 = sld [smem:[#allocation0]]
  $region38: #{bidirectional_lstm.5} parent=0
    _
  %s8 = ssub.s32 1, %s6
  %s9 = scalar_select 0, %s8, %s6
  // Predicated region
  $region2: #{bidirectional_lstm.5} parent=0 // pred_check
    _
  $region3: #{bidirectional_lstm.5} parent=0 // pred_check_branch
    %11 = sbr.rel (0) target = $region5
  $region4: #{bidirectional_lstm.5} parent=0 // pred_region
    _
  $region5: #{bidirectional_lstm.5} parent=0 // pred_fallthru
    _
  // Predicated region
  $region6: #{bidirectional_lstm.5} parent=0 // pred_check
    _
  $region7: #{bidirectional_lstm.5} parent=0 // pred_check_branch
    %13 = sbr.rel (0) target = $region9
  $region8: #{bidirectional_lstm.5} parent=0 // pred_region
    _
  $region9: #{bidirectional_lstm.5} parent=0 // pred_fallthru
    _
  // Predicated region
  $region10: #{bidirectional_lstm.5} parent=0 // pred_check
    _
  $region11: #{bidirectional_lstm.5} parent=0 // pred_check_branch
    %15 = sbr.rel (0) target = $region13
  $region12: #{bidirectional_lstm.5} parent=0 // pred_region
    _
  $region13: #{bidirectional_lstm.5} parent=0 // pred_fallthru
    _
  // Predicated region
  $region14: #{bidirectional_lstm.5} parent=0 // pred_check
    _
  $region15: #{bidirectional_lstm.5} parent=0 // pred_check_branch
    %17 = sbr.rel (0) target = $region17
  $region16: #{bidirectional_lstm.5} parent=0 // pred_region
    _
  $region17: #{bidirectional_lstm.5} parent=0 // pred_fallthru
    _
  // Predicated region
  $region18: #{bidirectional_lstm.5} parent=0 // pred_check
    _
  $region19: #{bidirectional_lstm.5} parent=0 // pred_check_branch
    %19 = sbr.rel (0) target = $region21
  $region20: #{bidirectional_lstm.5} parent=0 // pred_region
    _
  $region21: #{bidirectional_lstm.5} parent=0 // pred_fallthru
    _
  %p20 = scmp.eq.s32.totalorder 0, 0
  // Predicated region
  $region22: #{bidirectional_lstm.5} parent=0 // pred_check
    %p21 = pneg %p20
  $region23: #{bidirectional_lstm.5} parent=0 // pred_check_branch
    %23 = sbr.rel (%p21) target = $region25
  $region24: #{bidirectional_lstm.5} parent=0 // pred_region
    %24 = vst [vmem:[#allocation2] sm:$0xff] 0.0
    %25 = vst [vmem:[#allocation2 + $0x8] sm:$0xff] 0.0
    %26 = vst [vmem:[#allocation2 + $0x10] sm:$0xff] 0.0
    %27 = vst [vmem:[#allocation2 + $0x18] sm:$0xff] 0.0
    %28 = vst [vmem:[#allocation2 + $0x20] sm:$0xff] 0.0
    %29 = vst [vmem:[#allocation2 + $0x28] sm:$0xff] 0.0
    %30 = vst [vmem:[#allocation2 + $0x30] sm:$0xff] 0.0
    %31 = vst [vmem:[#allocation2 + $0x38] sm:$0xff] 0.0
  $region25: #{bidirectional_lstm.5} parent=0 // pred_fallthru
    _
  %v32 = vld [vmem:[#allocation2] sm:$0xff]
  %v33 = vld [vmem:[#allocation2 + $0x8] sm:$0xff]
  %v34 = vld [vmem:[#allocation2 + $0x10] sm:$0xff]
  %v35 = vld [vmem:[#allocation2 + $0x18] sm:$0xff]
  %v36 = vld [vmem:[#allocation2 + $0x20] sm:$0xff]
  %v37 = vld [vmem:[#allocation2 + $0x28] sm:$0xff]
  %v38 = vld [vmem:[#allocation2 + $0x30] sm:$0xff]
  %v39 = vld [vmem:[#allocation2 + $0x38] sm:$0xff]
  %v40 = vld [vmem:[%s0] sm:$0xf]
  %v41 = vld [vmem:[%s0 + $0x4] sm:$0xf]
  %v42 = vld [vmem:[%s0 + $0x8] sm:$0xf]
  %v43 = vld [vmem:[%s0 + $0xc] sm:$0xf]
  %v44 = vld [vmem:[%s0 + $0x10] sm:$0xf]
  %v45 = vld [vmem:[%s0 + $0x14] sm:$0xf]
  %v46 = vld [vmem:[%s0 + $0x18] sm:$0xf]
  %v47 = vld [vmem:[%s0 + $0x1c] sm:$0xf]
  %v48 = vld [vmem:[%s1] sm:$0xf]
  %v49 = vld [vmem:[%s1 + $0x4] sm:$0xf]
  %v50 = vld [vmem:[%s1 + $0x8] sm:$0xf]
  %v51 = vld [vmem:[%s1 + $0xc] sm:$0xf]
  %v52 = vld [vmem:[%s1 + $0x10] sm:$0xf]
  %v53 = vld [vmem:[%s1 + $0x14] sm:$0xf]
  %v54 = vld [vmem:[%s1 + $0x18] sm:$0xf]
  %v55 = vld [vmem:[%s1 + $0x1c] sm:$0xf]
  %v56 = vld [vmem:[%s1 + $0x20] sm:$0xf]
  %v57 = vld [vmem:[%s1 + $0x24] sm:$0xf]
  %v58 = vld [vmem:[%s1 + $0x28] sm:$0xf]
  %v59 = vld [vmem:[%s1 + $0x2c] sm:$0xf]
  %v60 = vld [vmem:[%s1 + $0x30] sm:$0xf]
  %v61 = vld [vmem:[%s1 + $0x34] sm:$0xf]
  %v62 = vld [vmem:[%s1 + $0x38] sm:$0xf]
  %v63 = vld [vmem:[%s1 + $0x3c] sm:$0xf]
  %v72 = vunpack.c.l.b16 %v40
  %v73 = vunpack.c.l.b16 %v41
  %v74 = vunpack.c.l.b16 %v42
  %v75 = vunpack.c.l.b16 %v43
  %v76 = vunpack.c.l.b16 %v44
  %v77 = vunpack.c.l.b16 %v45
  %v78 = vunpack.c.l.b16 %v46
  %v79 = vunpack.c.l.b16 %v47
  %v80 = vpack.c.b16 %v73, %v72
  %v81 = vpack.c.b16 %v75, %v74
  %v82 = vpack.c.b16 %v77, %v76
  %v83 = vpack.c.b16 %v79, %v78
  %v104 = vunpack.c.l.b16 %v48
  %v105 = vunpack.c.l.b16 %v49
  %v106 = vunpack.c.l.b16 %v50
  %v107 = vunpack.c.l.b16 %v51
  %v108 = vunpack.c.l.b16 %v52
  %v109 = vunpack.c.l.b16 %v53
  %v110 = vunpack.c.l.b16 %v54
  %v111 = vunpack.c.l.b16 %v55
  %v112 = vunpack.c.l.b16 %v56
  %v113 = vunpack.c.l.b16 %v57
  %v114 = vunpack.c.l.b16 %v58
  %v115 = vunpack.c.l.b16 %v59
  %v116 = vunpack.c.l.b16 %v60
  %v117 = vunpack.c.l.b16 %v61
  %v118 = vunpack.c.l.b16 %v62
  %v119 = vunpack.c.l.b16 %v63
  %v120 = vpack.c.b16 %v105, %v104
  %v121 = vpack.c.b16 %v107, %v106
  %v122 = vpack.c.b16 %v109, %v108
  %v123 = vpack.c.b16 %v111, %v110
  %v124 = vpack.c.b16 %v113, %v112
  %v125 = vpack.c.b16 %v115, %v114
  %v126 = vpack.c.b16 %v117, %v116
  %v127 = vpack.c.b16 %v119, %v118
  %136 = vmatpush.bf16.msra.mxu0 %v127
  %137 = vmatpush.bf16.msra.mxu0 %v126
  %138 = vmatpush.bf16.msra.mxu0 %v125
  %139 = vmatpush.bf16.msra.mxu0 %v124
  %140 = vmatpush.bf16.msra.mxu0 %v123
  %141 = vmatpush.bf16.msra.mxu0 %v122
  %142 = vmatpush.bf16.msra.mxu0 %v121
  %143 = vmatpush.bf16.msra.mxu0 %v120
  %144 = vmatmul.bf16.gmra.mxu0 %v80
  %v145 = vpop.f32.mrf.mxu0
  %v146 = vadd.f32 0.0, %v145
  %v147 = vpop.f32.mrf.mxu0
  %v148 = vadd.f32 0.0, %v147
  %149 = vmatmul.bf16.gmra.mxu0 %v81
  %v150 = vpop.f32.mrf.mxu0
  %v151 = vadd.f32 0.0, %v150
  %v152 = vpop.f32.mrf.mxu0
  %v153 = vadd.f32 0.0, %v152
  %154 = vmatmul.bf16.gmra.mxu0 %v82
  %v155 = vpop.f32.mrf.mxu0
  %v156 = vadd.f32 0.0, %v155
  %v157 = vpop.f32.mrf.mxu0
  %v158 = vadd.f32 0.0, %v157
  %159 = vmatmul.bf16.gmra.mxu0 %v83
  %v160 = vpop.f32.mrf.mxu0
  %v161 = vadd.f32 0.0, %v160
  %v162 = vpop.f32.mrf.mxu0
  %v163 = vadd.f32 0.0, %v162
  %164 = vdwg.mxu0
  %v165 = vadd.f32 %v32, %v146
  %v166 = vadd.f32 %v33, %v148
  %v167 = vadd.f32 %v34, %v151
  %v168 = vadd.f32 %v35, %v153
  %v169 = vadd.f32 %v36, %v156
  %v170 = vadd.f32 %v37, %v158
  %v171 = vadd.f32 %v38, %v161
  %v172 = vadd.f32 %v39, %v163
  %173 = vst [vmem:[#allocation2] sm:$0xff] %v165
  %174 = vst [vmem:[#allocation2 + $0x8] sm:$0xff] %v166
  %175 = vst [vmem:[#allocation2 + $0x10] sm:$0xff] %v167
  %176 = vst [vmem:[#allocation2 + $0x18] sm:$0xff] %v168
  %177 = vst [vmem:[#allocation2 + $0x20] sm:$0xff] %v169
  %178 = vst [vmem:[#allocation2 + $0x28] sm:$0xff] %v170
  %179 = vst [vmem:[#allocation2 + $0x30] sm:$0xff] %v171
  %180 = vst [vmem:[#allocation2 + $0x38] sm:$0xff] %v172
  %v181 = vld [vmem:[#allocation2] sm:$0xff]
  %v182 = vld [vmem:[#allocation2 + $0x8] sm:$0xff]
  %v183 = vld [vmem:[#allocation2 + $0x10] sm:$0xff]
  %v184 = vld [vmem:[#allocation2 + $0x18] sm:$0xff]
  %v185 = vld [vmem:[#allocation2 + $0x20] sm:$0xff]
  %v186 = vld [vmem:[#allocation2 + $0x28] sm:$0xff]
  %v187 = vld [vmem:[#allocation2 + $0x30] sm:$0xff]
  %v188 = vld [vmem:[#allocation2 + $0x38] sm:$0xff]
  %v189 = vld [vmem:[%s2] sm:$0xf]
  %v190 = vld [vmem:[%s2 + $0x4] sm:$0xf]
  %v191 = vld [vmem:[%s2 + $0x8] sm:$0xf]
  %v192 = vld [vmem:[%s2 + $0xc] sm:$0xf]
  %v193 = vld [vmem:[%s2 + $0x10] sm:$0xf]
  %v194 = vld [vmem:[%s2 + $0x14] sm:$0xf]
  %v195 = vld [vmem:[%s2 + $0x18] sm:$0xf]
  %v196 = vld [vmem:[%s2 + $0x1c] sm:$0xf]
  %v197 = vld [vmem:[%s3] sm:$0xf]
  %v198 = vld [vmem:[%s3 + $0x4] sm:$0xf]
  %v199 = vld [vmem:[%s3 + $0x8] sm:$0xf]
  %v200 = vld [vmem:[%s3 + $0xc] sm:$0xf]
  %v201 = vld [vmem:[%s3 + $0x10] sm:$0xf]
  %v202 = vld [vmem:[%s3 + $0x14] sm:$0xf]
  %v203 = vld [vmem:[%s3 + $0x18] sm:$0xf]
  %v204 = vld [vmem:[%s3 + $0x1c] sm:$0xf]
  %v205 = vld [vmem:[%s3 + $0x20] sm:$0xf]
  %v206 = vld [vmem:[%s3 + $0x24] sm:$0xf]
  %v207 = vld [vmem:[%s3 + $0x28] sm:$0xf]
  %v208 = vld [vmem:[%s3 + $0x2c] sm:$0xf]
  %v209 = vld [vmem:[%s3 + $0x30] sm:$0xf]
  %v210 = vld [vmem:[%s3 + $0x34] sm:$0xf]
  %v211 = vld [vmem:[%s3 + $0x38] sm:$0xf]
  %v212 = vld [vmem:[%s3 + $0x3c] sm:$0xf]
  %v221 = vunpack.c.l.b16 %v189
  %v222 = vunpack.c.l.b16 %v190
  %v223 = vunpack.c.l.b16 %v191
  %v224 = vunpack.c.l.b16 %v192
  %v225 = vunpack.c.l.b16 %v193
  %v226 = vunpack.c.l.b16 %v194
  %v227 = vunpack.c.l.b16 %v195
  %v228 = vunpack.c.l.b16 %v196
  %v229 = vpack.c.b16 %v222, %v221
  %v230 = vpack.c.b16 %v224, %v223
  %v231 = vpack.c.b16 %v226, %v225
  %v232 = vpack.c.b16 %v228, %v227
  %v253 = vunpack.c.l.b16 %v197
  %v254 = vunpack.c.l.b16 %v198
  %v255 = vunpack.c.l.b16 %v199
  %v256 = vunpack.c.l.b16 %v200
  %v257 = vunpack.c.l.b16 %v201
  %v258 = vunpack.c.l.b16 %v202
  %v259 = vunpack.c.l.b16 %v203
  %v260 = vunpack.c.l.b16 %v204
  %v261 = vunpack.c.l.b16 %v205
  %v262 = vunpack.c.l.b16 %v206
  %v263 = vunpack.c.l.b16 %v207
  %v264 = vunpack.c.l.b16 %v208
  %v265 = vunpack.c.l.b16 %v209
  %v266 = vunpack.c.l.b16 %v210
  %v267 = vunpack.c.l.b16 %v211
  %v268 = vunpack.c.l.b16 %v212
  %v269 = vpack.c.b16 %v254, %v253
  %v270 = vpack.c.b16 %v256, %v255
  %v271 = vpack.c.b16 %v258, %v257
  %v272 = vpack.c.b16 %v260, %v259
  %v273 = vpack.c.b16 %v262, %v261
  %v274 = vpack.c.b16 %v264, %v263
  %v275 = vpack.c.b16 %v266, %v265
  %v276 = vpack.c.b16 %v268, %v267
  %285 = vmatpush.bf16.msra.mxu0 %v276
  %286 = vmatpush.bf16.msra.mxu0 %v275
  %287 = vmatpush.bf16.msra.mxu0 %v274
  %288 = vmatpush.bf16.msra.mxu0 %v273
  %289 = vmatpush.bf16.msra.mxu0 %v272
  %290 = vmatpush.bf16.msra.mxu0 %v271
  %291 = vmatpush.bf16.msra.mxu0 %v270
  %292 = vmatpush.bf16.msra.mxu0 %v269
  %293 = vmatmul.bf16.gmra.mxu0 %v229
  %v294 = vpop.f32.mrf.mxu0
  %v295 = vadd.f32 0.0, %v294
  %v296 = vpop.f32.mrf.mxu0
  %v297 = vadd.f32 0.0, %v296
  %298 = vmatmul.bf16.gmra.mxu0 %v230
  %v299 = vpop.f32.mrf.mxu0
  %v300 = vadd.f32 0.0, %v299
  %v301 = vpop.f32.mrf.mxu0
  %v302 = vadd.f32 0.0, %v301
  %303 = vmatmul.bf16.gmra.mxu0 %v231
  %v304 = vpop.f32.mrf.mxu0
  %v305 = vadd.f32 0.0, %v304
  %v306 = vpop.f32.mrf.mxu0
  %v307 = vadd.f32 0.0, %v306
  %308 = vmatmul.bf16.gmra.mxu0 %v232
  %v309 = vpop.f32.mrf.mxu0
  %v310 = vadd.f32 0.0, %v309
  %v311 = vpop.f32.mrf.mxu0
  %v312 = vadd.f32 0.0, %v311
  %313 = vdwg.mxu0
  %v314 = vadd.f32 %v181, %v295
  %v315 = vadd.f32 %v182, %v297
  %v316 = vadd.f32 %v183, %v300
  %v317 = vadd.f32 %v184, %v302
  %v318 = vadd.f32 %v185, %v305
  %v319 = vadd.f32 %v186, %v307
  %v320 = vadd.f32 %v187, %v310
  %v321 = vadd.f32 %v188, %v312
  %322 = vst [vmem:[#allocation2] sm:$0xff] %v314
  %323 = vst [vmem:[#allocation2 + $0x8] sm:$0xff] %v315
  %324 = vst [vmem:[#allocation2 + $0x10] sm:$0xff] %v316
  %325 = vst [vmem:[#allocation2 + $0x18] sm:$0xff] %v317
  %326 = vst [vmem:[#allocation2 + $0x20] sm:$0xff] %v318
  %327 = vst [vmem:[#allocation2 + $0x28] sm:$0xff] %v319
  %328 = vst [vmem:[#allocation2 + $0x30] sm:$0xff] %v320
  %329 = vst [vmem:[#allocation2 + $0x38] sm:$0xff] %v321
  // Predicated region
  $region26: #{bidirectional_lstm.5} parent=0 // pred_check
    %p330 = pneg %p20
  $region27: #{bidirectional_lstm.5} parent=0 // pred_check_branch
    %332 = sbr.rel (%p330) target = $region29
  $region28: #{bidirectional_lstm.5} parent=0 // pred_region
    %v333 = vld [vmem:[#allocation2] sm:$0xff]
    %v334 = vld [vmem:[#allocation2 + $0x8] sm:$0xff]
    %v335 = vld [vmem:[#allocation2 + $0x10] sm:$0xff]
    %v336 = vld [vmem:[#allocation2 + $0x18] sm:$0xff]
    %v337 = vld [vmem:[#allocation2 + $0x20] sm:$0xff]
    %v338 = vld [vmem:[#allocation2 + $0x28] sm:$0xff]
    %v339 = vld [vmem:[#allocation2 + $0x30] sm:$0xff]
    %v340 = vld [vmem:[#allocation2 + $0x38] sm:$0xff]
    %v341 = vld [vmem:[%s4] sm:$0x1]
    %v343 = vperm.slane %v341, 0
    %v345 = vadd.f32 %v333, %v343
    %v346 = vadd.f32 %v334, %v343
    %v347 = vadd.f32 %v335, %v343
    %v348 = vadd.f32 %v336, %v343
    %v349 = vadd.f32 %v337, %v343
    %v350 = vadd.f32 %v338, %v343
    %v351 = vadd.f32 %v339, %v343
    %v352 = vadd.f32 %v340, %v343
    %353 = vst [vmem:[%s5] sm:$0xff] %v345
    %354 = vst [vmem:[%s5 + $0x8] sm:$0xff] %v346
    %355 = vst [vmem:[%s5 + $0x10] sm:$0xff] %v347
    %356 = vst [vmem:[%s5 + $0x18] sm:$0xff] %v348
    %357 = vst [vmem:[%s5 + $0x20] sm:$0xff] %v349
    %358 = vst [vmem:[%s5 + $0x28] sm:$0xff] %v350
    %359 = vst [vmem:[%s5 + $0x30] sm:$0xff] %v351
    %360 = vst [vmem:[%s5 + $0x38] sm:$0xff] %v352
  $region29: #{bidirectional_lstm.5} parent=0 // pred_fallthru
    _
  // Predicated region
  $region30: #{bidirectional_lstm.5} parent=0 // pred_check
    _
  $region31: #{bidirectional_lstm.5} parent=0 // pred_check_branch
    %362 = sbr.rel (0) target = $region33
  $region32: #{bidirectional_lstm.5} parent=0 // pred_region
    _
  $region33: #{bidirectional_lstm.5} parent=0 // pred_fallthru
    _
  // Predicated region
  $region34: #{bidirectional_lstm.5} parent=0 // pred_check
    _
  $region35: #{bidirectional_lstm.5} parent=0 // pred_check_branch
    %364 = sbr.rel (0) target = $region37
  $region36: #{bidirectional_lstm.5} parent=0 // pred_region
    _
  $region37: #{bidirectional_lstm.5} parent=0 // pred_fallthru
    _

// kernel: bidirectional_lstm.3
$region0: #{bidirectional_lstm.3}
  #allocation0 [shape = 'u32[]', space=smem, size = 0x4, offset = 0x4, fixed_abs, tag = 'smem constant byte address 0x4 - core index']
  #allocation1 [shape = 'u32[72,128]{1,0:T(1,128)}', space=vmem, size = 0x9000, scoped, tag = 'internal scratch']
  #allocation2 [shape = 'f32[64,512]{1,0:T(8,128)}', space=vmem, size = 0x20000, scoped, tag = 'scratch operand']
  %s0 = inlined_call_operand.vmem [shape: f32[64,128], index: 0, kind: input, shape index: {}]
  %s1 = inlined_call_operand.hbm [shape: bf16[128,1024], index: 1, kind: input, shape index: {}]
  %s2 = inlined_call_operand.vmem [shape: f32[1,1024], index: 2, kind: input, shape index: {}]
  %s3 = inlined_call_operand.vmem [shape: bf16[64,1024], index: 3, kind: output, shape index: {}]
  %s4 = sld [smem:[#allocation0]]
  $region76: #{bidirectional_lstm.3} parent=0
    _
  %s6 = ssub.s32 1, %s4
  %s7 = scalar_select 0, %s6, %s4
  $region1: #{bidirectional_lstm.3} parent=0
    #allocation3 [shape = 'u8[262144]{0}', space=vmem, size = 0x40000, scoped, tag = 'input window, operand 1']
    #allocation4 [shape = 's32[2]{0}', space=sflag, size = 0x8, scoped, tag = 'scoped memory for bidirectional_lstm.3']
    #allocation5 [shape = 'u8[131072]{0}', space=vmem, size = 0x20000, scoped, tag = 'output window, operand 0']
    %8 = vsyncpa [#allocation4], 0
    %s9 = scalar_lea.sflag [#allocation4], 1
    %10 = vsyncpa %s9, 0
    loop: start=0, step=1, limit=4
    $region2: #{bidirectional_lstm.3} parent=1 // loop_pre_header
      _
    $region3: #{bidirectional_lstm.3} parent=1 // loop_header
      %s12 = sphi 0, %s16
      %p13 = scmp.ge.s32.totalorder %s12, 4
      %s19 = sphi 0, %s38
      %s20 = sphi 0, %s34
      %s21 = sphi 0, %s30
      %s22 = sphi 0, %s19
      %s23 = sphi 0, %s20
      %s24 = sphi 0, %s21
      %s25 = sphi 0, %s22
      %s26 = sphi 0, %s23
      %s27 = sphi 0, %s24
      %s43 = sphi 0, %s45
      %s46 = sphi 0, %s43
      %s47 = sphi 0, %s46
      %s63 = sphi 0, %s47
      %s71 = sphi 0, %s73
      %s74 = sphi 0, %s71
      %s75 = sphi 0, %s74
      %s91 = sphi 0, %s75
      %s97 = sphi 0, %s99
      %s100 = sphi 0, %s97
      %s101 = sphi 0, %s100
      %s117 = sphi 0, %s101
      %s125 = sphi 0, %s127
      %s128 = sphi 0, %s125
      %s129 = sphi 0, %s128
      %s145 = sphi 0, %s129
    $region4: #{bidirectional_lstm.3} parent=1 // loop_header_branch
      %15 = sbr.rel (%p13) target = $region8
    $region5: #{bidirectional_lstm.3} parent=1 // loop_body
      %s17 = ssub.s32 %s12, 1
      %s18 = ssub.s32 %s12, 2
      %s28 = sadd.s32 1, %s21
      %p29 = scmp.ge.s32.totalorder %s28, 1
      %s30 = scalar_select %p29, 0, %s28
      %s31 = sadd.s32 1, %s20
      %s32 = scalar_select %p29, %s31, %s20
      %p33 = scmp.ge.s32.totalorder %s32, 2
      %s34 = scalar_select %p33, 0, %s32
      %s35 = sadd.s32 1, %s19
      %s36 = scalar_select %p33, %s35, %s19
      %p37 = scmp.ge.s32.totalorder %s36, 1
      %s38 = scalar_select %p37, 0, %s36
      %s39 = ssub.s32 %s19, %s38
      %s40 = ssub.s32 %s21, %s30
      %s41 = sor.u32 %s39, %s40
      %p42 = scmp.eq.s32.totalorder %s41, 0
      %s44 = sadd.s32 %s43, 1
      %s45 = scalar_select %p42, %s43, %s44
      %p48 = pneg %p42
      %p49 = scmp.eq.s32.totalorder %s12, 1
      %p50 = por %p48, %p49
      %p51 = scmp.ne.s32.totalorder %s43, %s46
      %p52 = scmp.eq.s32.totalorder %s12, 0
      %p53 = por %p51, %p52
      %p54 = scmp.ne.s32.totalorder %s43, %s46
      %p55 = scmp.eq.s32.totalorder %s17, 1
      %p56 = por %p54, %p55
      %p57 = scmp.ne.s32.totalorder %s46, %s47
      %p58 = scmp.eq.s32.totalorder %s17, 0
      %p59 = por %p57, %p58
      %p60 = scmp.ne.s32.totalorder %s46, %s47
      %p61 = scmp.eq.s32.totalorder %s18, 1
      %p62 = por %p60, %p61
      %p64 = scmp.ne.s32.totalorder %s47, %s63
      %p65 = scmp.eq.s32.totalorder %s18, 0
      %p66 = por %p64, %p65
      %s67 = ssub.s32 %s21, %s30
      %s68 = ssub.s32 %s20, %s34
      %s69 = sor.u32 %s67, %s68
      %p70 = scmp.eq.s32.totalorder %s69, 0
      %s72 = sadd.s32 %s71, 1
      %s73 = scalar_select %p70, %s71, %s72
      %p76 = pneg %p70
      %p77 = scmp.eq.s32.totalorder %s12, 1
      %p78 = por %p76, %p77
      %p79 = scmp.ne.s32.totalorder %s71, %s74
      %p80 = scmp.eq.s32.totalorder %s12, 0
      %p81 = por %p79, %p80
      %p82 = scmp.ne.s32.totalorder %s71, %s74
      %p83 = scmp.eq.s32.totalorder %s17, 1
      %p84 = por %p82, %p83
      %p85 = scmp.ne.s32.totalorder %s74, %s75
      %p86 = scmp.eq.s32.totalorder %s17, 0
      %p87 = por %p85, %p86
      %p88 = scmp.ne.s32.totalorder %s74, %s75
      %p89 = scmp.eq.s32.totalorder %s18, 1
      %p90 = por %p88, %p89
      %p92 = scmp.ne.s32.totalorder %s75, %s91
      %p93 = scmp.eq.s32.totalorder %s18, 0
      %p94 = por %p92, %p93
      %s95 = ssub.s32 %s20, %s34
      %p96 = scmp.eq.s32.totalorder %s95, 0
      %s98 = sadd.s32 %s97, 1
      %s99 = scalar_select %p96, %s97, %s98
      %p102 = pneg %p96
      %p103 = scmp.eq.s32.totalorder %s12, 1
      %p104 = por %p102, %p103
      %p105 = scmp.ne.s32.totalorder %s97, %s100
      %p106 = scmp.eq.s32.totalorder %s12, 0
      %p107 = por %p105, %p106
      %p108 = scmp.ne.s32.totalorder %s97, %s100
      %p109 = scmp.eq.s32.totalorder %s17, 1
      %p110 = por %p108, %p109
      %p111 = scmp.ne.s32.totalorder %s100, %s101
      %p112 = scmp.eq.s32.totalorder %s17, 0
      %p113 = por %p111, %p112
      %p114 = scmp.ne.s32.totalorder %s100, %s101
      %p115 = scmp.eq.s32.totalorder %s18, 1
      %p116 = por %p114, %p115
      %p118 = scmp.ne.s32.totalorder %s101, %s117
      %p119 = scmp.eq.s32.totalorder %s18, 0
      %p120 = por %p118, %p119
      %s121 = ssub.s32 %s19, %s38
      %s122 = ssub.s32 %s20, %s34
      %s123 = sor.u32 %s121, %s122
      %p124 = scmp.eq.s32.totalorder %s123, 0
      %s126 = sadd.s32 %s125, 1
      %s127 = scalar_select %p124, %s125, %s126
      %p130 = pneg %p124
      %p131 = scmp.eq.s32.totalorder %s12, 1
      %p132 = por %p130, %p131
      %p133 = scmp.ne.s32.totalorder %s125, %s128
      %p134 = scmp.eq.s32.totalorder %s12, 0
      %p135 = por %p133, %p134
      %p136 = scmp.ne.s32.totalorder %s125, %s128
      %p137 = scmp.eq.s32.totalorder %s17, 1
      %p138 = por %p136, %p137
      %p139 = scmp.ne.s32.totalorder %s128, %s129
      %p140 = scmp.eq.s32.totalorder %s17, 0
      %p141 = por %p139, %p140
      %p142 = scmp.ne.s32.totalorder %s128, %s129
      %p143 = scmp.eq.s32.totalorder %s18, 1
      %p144 = por %p142, %p143
      %p146 = scmp.ne.s32.totalorder %s129, %s145
      %p147 = scmp.eq.s32.totalorder %s18, 0
      %p148 = por %p146, %p147
      %p149 = scmp.le.s32.totalorder 1, %s12
      %p150 = scmp.lt.s32.totalorder %s12, 3
      %p151 = pnand %p149, %p150
      %p152 = pneg %p151
      // Predicated region
      $region9: #{bidirectional_lstm.3} parent=5 // pred_check
        _
      $region10: #{bidirectional_lstm.3} parent=5 // pred_check_branch
        %154 = sbr.rel (%p151) target = $region12
      $region11: #{bidirectional_lstm.3} parent=5 // pred_region
        %s155 = ssub.s32 %s12, 1
        // Predicated region
        $region13: #{bidirectional_lstm.3} parent=11 // pred_check
          %p156 = pneg %p59
        $region14: #{bidirectional_lstm.3} parent=11 // pred_check_branch
          %158 = sbr.rel (%p156) target = $region16
        $region15: #{bidirectional_lstm.3} parent=11 // pred_region
          %s159 = smul.u32 8, %s22
          %p160 = scmp.lt.s32.totalorder %s159, 7
          %s161 = scalar_select %p160, %s159, 7
          %p162 = scmp.lt.s32.totalorder %s24, 0
          %s163 = scalar_select %p162, %s24, 0
          %s164 = sadd.s32 %s163, %s161
          %s165 = smul.addr %s164, 8
          %s166 = scalar_lea.vmem %s0, %s165
          %s167 = smul.u32 8, %s22
        $region16: #{bidirectional_lstm.3} parent=11 // pred_fallthru
          _
      $region12: #{bidirectional_lstm.3} parent=5 // pred_fallthru
        _
      %p168 = scmp.lt.s32.totalorder %s12, 2
      // Predicated region
      $region17: #{bidirectional_lstm.3} parent=5 // pred_check
        %p169 = pneg %p168
      $region18: #{bidirectional_lstm.3} parent=5 // pred_check_branch
        %171 = sbr.rel (%p169) target = $region20
      $region19: #{bidirectional_lstm.3} parent=5 // pred_region
        // Predicated region
        $region21: #{bidirectional_lstm.3} parent=19 // pred_check
          %p172 = pneg %p81
        $region22: #{bidirectional_lstm.3} parent=19 // pred_check_branch
          %174 = sbr.rel (%p172) target = $region24
        $region23: #{bidirectional_lstm.3} parent=19 // pred_region
          %s175 = sand.u32 %s71, 1
          %s176 = scalar_lea.sflag [#allocation4], %s175
          %s177 = sand.u32 %s71, 1
          %s178 = smul.addr %s177, 256
          %s179 = scalar_lea.vmem [#allocation3], %s178
          %s180 = smul.u32 16, %s21
          %s181 = smul.u32 4, %s20
          %183 = vsyncadd %s176, 0
          %s184 = smul.addr %s180, 8
          %s185 = sadd.s32 %s181, %s184
          %s186 = smul.addr %s185, 4
          %s187 = scalar_lea.hbm %s1, %s186
          %s188 = sshll.u32 %s187, 4
          %s189 = int_to_ptr.hbm [resolvable:$true] %s188
          %s190 = sshll.u32 %s179, 4
          %s191 = int_to_ptr.vmem [resolvable:$true] %s190
          %196 = dma.hbm_to_vmem [thread:$0]  %s189, 4096, %s191, %s176, 512, 256, 16
        $region24: #{bidirectional_lstm.3} parent=19 // pred_fallthru
          _
        // Predicated region
        $region25: #{bidirectional_lstm.3} parent=19 // pred_check
          %p197 = pneg %p107
        $region26: #{bidirectional_lstm.3} parent=19 // pred_check_branch
          %199 = sbr.rel (%p197) target = $region28
        $region27: #{bidirectional_lstm.3} parent=19 // pred_region
          %s200 = smul.u32 4, %s20
          %p201 = scmp.lt.s32.totalorder %s200, 7
          %s202 = scalar_select %p201, %s200, 7
          %s203 = scalar_lea.vmem %s2, %s202
          %s204 = smul.u32 4, %s20
        $region28: #{bidirectional_lstm.3} parent=19 // pred_fallthru
          _
      $region20: #{bidirectional_lstm.3} parent=5 // pred_fallthru
        _
      %p205 = scmp.le.s32.totalorder 1, %s12
      %p206 = scmp.lt.s32.totalorder %s12, 3
      %p207 = pnand %p205, %p206
      %p208 = pneg %p207
      // Predicated region
      $region29: #{bidirectional_lstm.3} parent=5 // pred_check
        _
      $region30: #{bidirectional_lstm.3} parent=5 // pred_check_branch
        %210 = sbr.rel (%p207) target = $region32
      $region31: #{bidirectional_lstm.3} parent=5 // pred_region
        %s211 = ssub.s32 %s12, 1
        %s212 = sand.u32 %s74, 1
        %s213 = scalar_lea.sflag [#allocation4], %s212
        %s214 = sand.u32 %s74, 1
        %s215 = smul.addr %s214, 256
        %s216 = scalar_lea.vmem [#allocation3], %s215
        // Predicated region
        $region33: #{bidirectional_lstm.3} parent=31 // pred_check
          %p217 = pneg %p87
        $region34: #{bidirectional_lstm.3} parent=31 // pred_check_branch
          %219 = sbr.rel (%p217) target = $region36
        $region35: #{bidirectional_lstm.3} parent=31 // pred_region
          %221 = dma.done %s213, 4096
        $region36: #{bidirectional_lstm.3} parent=31 // pred_fallthru
          _
        %s222 = smul.u32 8, %s22
        %p223 = scmp.lt.s32.totalorder %s222, 7
        %s224 = scalar_select %p223, %s222, 7
        %p225 = scmp.lt.s32.totalorder %s24, 0
        %s226 = scalar_select %p225, %s24, 0
        %s227 = sadd.s32 %s226, %s224
        %s228 = smul.addr %s227, 8
        %s229 = scalar_lea.vmem %s0, %s228
        %p230 = pneg %p59
        %p231 = pneg %p56
        %s232 = sand.u32 %s74, 1
        %s233 = scalar_lea.sflag [#allocation4], %s232
        %s234 = sand.u32 %s74, 1
        %s235 = smul.addr %s234, 256
        %s236 = scalar_lea.vmem [#allocation3], %s235
        %p237 = pneg %p87
        %p238 = pneg %p84
        %s239 = smul.u32 4, %s23
        %p240 = scmp.lt.s32.totalorder %s239, 7
        %s241 = scalar_select %p240, %s239, 7
        %s242 = scalar_lea.vmem %s2, %s241
        %p243 = pneg %p113
        %p244 = pneg %p110
        %p245 = pneg %p141
        %p246 = pneg %p138
        %s247 = sand.u32 %s128, 1
        %s248 = sand.u32 %s128, 1
        %s249 = smul.addr %s248, 128
        %s250 = scalar_lea.vmem [#allocation5], %s249
        %s251 = smul.u32 8, %s22
        %p252 = scmp.lt.s32.totalorder %s251, 7
        %s253 = scalar_select %p252, %s251, 7
        %p254 = scmp.lt.s32.totalorder %s24, 0
        %s255 = scalar_select %p254, %s24, 0
        %s256 = sadd.s32 %s255, %s253
        %s257 = smul.addr %s256, 8
        %s258 = scalar_lea.vmem %s0, %s257
        %s259 = smul.u32 8, %s22
        %s260 = smul.u32 16, %s24
        %s261 = smul.u32 4, %s23
        %s262 = smul.u32 4, %s23
        %p263 = scmp.lt.s32.totalorder %s262, 7
        %s264 = scalar_select %p263, %s262, 7
        %s265 = scalar_lea.vmem %s2, %s264
        %s266 = smul.u32 4, %s23
        %s267 = smul.u32 8, %s22
        %s268 = smul.u32 4, %s23
        %p269 = scmp.eq.s32.totalorder %s24, 0
        // Predicated region
        $region37: #{bidirectional_lstm.3} parent=31 // pred_check
          %p270 = pneg %p269
        $region38: #{bidirectional_lstm.3} parent=31 // pred_check_branch
          %272 = sbr.rel (%p270) target = $region40
        $region39: #{bidirectional_lstm.3} parent=31 // pred_region
          %273 = vst [vmem:[#allocation2] sm:$0xff] 0.0
          %274 = vst [vmem:[#allocation2 + $0x8] sm:$0xff] 0.0
          %275 = vst [vmem:[#allocation2 + $0x10] sm:$0xff] 0.0
          %276 = vst [vmem:[#allocation2 + $0x18] sm:$0xff] 0.0
          %277 = vst [vmem:[#allocation2 + $0x20] sm:$0xff] 0.0
          %278 = vst [vmem:[#allocation2 + $0x28] sm:$0xff] 0.0
          %279 = vst [vmem:[#allocation2 + $0x30] sm:$0xff] 0.0
          %280 = vst [vmem:[#allocation2 + $0x38] sm:$0xff] 0.0
          %281 = vst [vmem:[#allocation2 + $0x40] sm:$0xff] 0.0
          %282 = vst [vmem:[#allocation2 + $0x48] sm:$0xff] 0.0
          %283 = vst [vmem:[#allocation2 + $0x50] sm:$0xff] 0.0
          %284 = vst [vmem:[#allocation2 + $0x58] sm:$0xff] 0.0
          %285 = vst [vmem:[#allocation2 + $0x60] sm:$0xff] 0.0
          %286 = vst [vmem:[#allocation2 + $0x68] sm:$0xff] 0.0
          %287 = vst [vmem:[#allocation2 + $0x70] sm:$0xff] 0.0
          %288 = vst [vmem:[#allocation2 + $0x78] sm:$0xff] 0.0
          %289 = vst [vmem:[#allocation2 + $0x80] sm:$0xff] 0.0
          %290 = vst [vmem:[#allocation2 + $0x88] sm:$0xff] 0.0
          %291 = vst [vmem:[#allocation2 + $0x90] sm:$0xff] 0.0
          %292 = vst [vmem:[#allocation2 + $0x98] sm:$0xff] 0.0
          %293 = vst [vmem:[#allocation2 + $0xa0] sm:$0xff] 0.0
          %294 = vst [vmem:[#allocation2 + $0xa8] sm:$0xff] 0.0
          %295 = vst [vmem:[#allocation2 + $0xb0] sm:$0xff] 0.0
          %296 = vst [vmem:[#allocation2 + $0xb8] sm:$0xff] 0.0
          %297 = vst [vmem:[#allocation2 + $0xc0] sm:$0xff] 0.0
          %298 = vst [vmem:[#allocation2 + $0xc8] sm:$0xff] 0.0
          %299 = vst [vmem:[#allocation2 + $0xd0] sm:$0xff] 0.0
          %300 = vst [vmem:[#allocation2 + $0xd8] sm:$0xff] 0.0
          %301 = vst [vmem:[#allocation2 + $0xe0] sm:$0xff] 0.0
          %302 = vst [vmem:[#allocation2 + $0xe8] sm:$0xff] 0.0
          %303 = vst [vmem:[#allocation2 + $0xf0] sm:$0xff] 0.0
          %304 = vst [vmem:[#allocation2 + $0xf8] sm:$0xff] 0.0
        $region40: #{bidirectional_lstm.3} parent=31 // pred_fallthru
          _
        %v305 = vld [vmem:[#allocation2] sm:$0xff]
        %v306 = vld [vmem:[#allocation2 + $0x8] sm:$0xff]
        %v307 = vld [vmem:[#allocation2 + $0x10] sm:$0xff]
        %v308 = vld [vmem:[#allocation2 + $0x18] sm:$0xff]
        %v309 = vld [vmem:[#allocation2 + $0x20] sm:$0xff]
        %v310 = vld [vmem:[#allocation2 + $0x28] sm:$0xff]
        %v311 = vld [vmem:[#allocation2 + $0x30] sm:$0xff]
        %v312 = vld [vmem:[#allocation2 + $0x38] sm:$0xff]
        %v313 = vld [vmem:[#allocation2 + $0x40] sm:$0xff]
        %v314 = vld [vmem:[#allocation2 + $0x48] sm:$0xff]
        %v315 = vld [vmem:[#allocation2 + $0x50] sm:$0xff]
        %v316 = vld [vmem:[#allocation2 + $0x58] sm:$0xff]
        %v317 = vld [vmem:[#allocation2 + $0x60] sm:$0xff]
        %v318 = vld [vmem:[#allocation2 + $0x68] sm:$0xff]
        %v319 = vld [vmem:[#allocation2 + $0x70] sm:$0xff]
        %v320 = vld [vmem:[#allocation2 + $0x78] sm:$0xff]
        %v321 = vld [vmem:[#allocation2 + $0x80] sm:$0xff]
        %v322 = vld [vmem:[#allocation2 + $0x88] sm:$0xff]
        %v323 = vld [vmem:[#allocation2 + $0x90] sm:$0xff]
        %v324 = vld [vmem:[#allocation2 + $0x98] sm:$0xff]
        %v325 = vld [vmem:[#allocation2 + $0xa0] sm:$0xff]
        %v326 = vld [vmem:[#allocation2 + $0xa8] sm:$0xff]
        %v327 = vld [vmem:[#allocation2 + $0xb0] sm:$0xff]
        %v328 = vld [vmem:[#allocation2 + $0xb8] sm:$0xff]
        %v329 = vld [vmem:[#allocation2 + $0xc0] sm:$0xff]
        %v330 = vld [vmem:[#allocation2 + $0xc8] sm:$0xff]
        %v331 = vld [vmem:[#allocation2 + $0xd0] sm:$0xff]
        %v332 = vld [vmem:[#allocation2 + $0xd8] sm:$0xff]
        %v333 = vld [vmem:[#allocation2 + $0xe0] sm:$0xff]
        %v334 = vld [vmem:[#allocation2 + $0xe8] sm:$0xff]
        %v335 = vld [vmem:[#allocation2 + $0xf0] sm:$0xff]
        %v336 = vld [vmem:[#allocation2 + $0xf8] sm:$0xff]
        %v337 = vld [vmem:[%s258] sm:$0xff]
        %v338 = vld [vmem:[%s258 + $0x8] sm:$0xff]
        %v339 = vld [vmem:[%s258 + $0x10] sm:$0xff]
        %v340 = vld [vmem:[%s258 + $0x18] sm:$0xff]
        %v341 = vld [vmem:[%s258 + $0x20] sm:$0xff]
        %v342 = vld [vmem:[%s258 + $0x28] sm:$0xff]
        %v343 = vld [vmem:[%s258 + $0x30] sm:$0xff]
        %v344 = vld [vmem:[%s258 + $0x38] sm:$0xff]
        %v345 = vpack.c.bf16 %v338, %v337
        %v346 = vpack.c.bf16 %v340, %v339
        %v347 = vpack.c.bf16 %v342, %v341
        %v348 = vpack.c.bf16 %v344, %v343
        %v349 = vld [vmem:[%s216] sm:$0xff]
        %v350 = vld [vmem:[%s216 + $0x8] sm:$0xff]
        %v351 = vld [vmem:[%s216 + $0x10] sm:$0xff]
        %v352 = vld [vmem:[%s216 + $0x18] sm:$0xff]
        %v353 = vld [vmem:[%s216 + $0x20] sm:$0xff]
        %v354 = vld [vmem:[%s216 + $0x28] sm:$0xff]
        %v355 = vld [vmem:[%s216 + $0x30] sm:$0xff]
        %v356 = vld [vmem:[%s216 + $0x38] sm:$0xff]
        %v357 = vld [vmem:[%s216 + $0x40] sm:$0xff]
        %v358 = vld [vmem:[%s216 + $0x48] sm:$0xff]
        %v359 = vld [vmem:[%s216 + $0x50] sm:$0xff]
        %v360 = vld [vmem:[%s216 + $0x58] sm:$0xff]
        %v361 = vld [vmem:[%s216 + $0x60] sm:$0xff]
        %v362 = vld [vmem:[%s216 + $0x68] sm:$0xff]
        %v363 = vld [vmem:[%s216 + $0x70] sm:$0xff]
        %v364 = vld [vmem:[%s216 + $0x78] sm:$0xff]
        %v365 = vld [vmem:[%s216 + $0x80] sm:$0xff]
        %v366 = vld [vmem:[%s216 + $0x88] sm:$0xff]
        %v367 = vld [vmem:[%s216 + $0x90] sm:$0xff]
        %v368 = vld [vmem:[%s216 + $0x98] sm:$0xff]
        %v369 = vld [vmem:[%s216 + $0xa0] sm:$0xff]
        %v370 = vld [vmem:[%s216 + $0xa8] sm:$0xff]
        %v371 = vld [vmem:[%s216 + $0xb0] sm:$0xff]
        %v372 = vld [vmem:[%s216 + $0xb8] sm:$0xff]
        %v373 = vld [vmem:[%s216 + $0xc0] sm:$0xff]
        %v374 = vld [vmem:[%s216 + $0xc8] sm:$0xff]
        %v375 = vld [vmem:[%s216 + $0xd0] sm:$0xff]
        %v376 = vld [vmem:[%s216 + $0xd8] sm:$0xff]
        %v377 = vld [vmem:[%s216 + $0xe0] sm:$0xff]
        %v378 = vld [vmem:[%s216 + $0xe8] sm:$0xff]
        %v379 = vld [vmem:[%s216 + $0xf0] sm:$0xff]
        %v380 = vld [vmem:[%s216 + $0xf8] sm:$0xff]
        %v413 = vunpack.c.l.b16 %v349
        %v414 = vunpack.c.h.b16 %v349
        %v415 = vunpack.c.l.b16 %v350
        %v416 = vunpack.c.h.b16 %v350
        %v417 = vunpack.c.l.b16 %v351
        %v418 = vunpack.c.h.b16 %v351
        %v419 = vunpack.c.l.b16 %v352
        %v420 = vunpack.c.h.b16 %v352
        %v421 = vunpack.c.l.b16 %v353
        %v422 = vunpack.c.h.b16 %v353
        %v423 = vunpack.c.l.b16 %v354
        %v424 = vunpack.c.h.b16 %v354
        %v425 = vunpack.c.l.b16 %v355
        %v426 = vunpack.c.h.b16 %v355
        %v427 = vunpack.c.l.b16 %v356
        %v428 = vunpack.c.h.b16 %v356
        %v429 = vunpack.c.l.b16 %v357
        %v430 = vunpack.c.h.b16 %v357
        %v431 = vunpack.c.l.b16 %v358
        %v432 = vunpack.c.h.b16 %v358
        %v433 = vunpack.c.l.b16 %v359
        %v434 = vunpack.c.h.b16 %v359
        %v435 = vunpack.c.l.b16 %v360
        %v436 = vunpack.c.h.b16 %v360
        %v437 = vunpack.c.l.b16 %v361
        %v438 = vunpack.c.h.b16 %v361
        %v439 = vunpack.c.l.b16 %v362
        %v440 = vunpack.c.h.b16 %v362
        %v441 = vunpack.c.l.b16 %v363
        %v442 = vunpack.c.h.b16 %v363
        %v443 = vunpack.c.l.b16 %v364
        %v444 = vunpack.c.h.b16 %v364
        %v445 = vunpack.c.l.b16 %v365
        %v446 = vunpack.c.h.b16 %v365
        %v447 = vunpack.c.l.b16 %v366
        %v448 = vunpack.c.h.b16 %v366
        %v449 = vunpack.c.l.b16 %v367
        %v450 = vunpack.c.h.b16 %v367
        %v451 = vunpack.c.l.b16 %v368
        %v452 = vunpack.c.h.b16 %v368
        %v453 = vunpack.c.l.b16 %v369
        %v454 = vunpack.c.h.b16 %v369
        %v455 = vunpack.c.l.b16 %v370
        %v456 = vunpack.c.h.b16 %v370
        %v457 = vunpack.c.l.b16 %v371
        %v458 = vunpack.c.h.b16 %v371
        %v459 = vunpack.c.l.b16 %v372
        %v460 = vunpack.c.h.b16 %v372
        %v461 = vunpack.c.l.b16 %v373
        %v462 = vunpack.c.h.b16 %v373
        %v463 = vunpack.c.l.b16 %v374
        %v464 = vunpack.c.h.b16 %v374
        %v465 = vunpack.c.l.b16 %v375
        %v466 = vunpack.c.h.b16 %v375
        %v467 = vunpack.c.l.b16 %v376
        %v468 = vunpack.c.h.b16 %v376
        %v469 = vunpack.c.l.b16 %v377
        %v470 = vunpack.c.h.b16 %v377
        %v471 = vunpack.c.l.b16 %v378
        %v472 = vunpack.c.h.b16 %v378
        %v473 = vunpack.c.l.b16 %v379
        %v474 = vunpack.c.h.b16 %v379
        %v475 = vunpack.c.l.b16 %v380
        %v476 = vunpack.c.h.b16 %v380
        %v477 = vpack.c.b16 %v417, %v413
        %v478 = vpack.c.b16 %v418, %v414
        %v479 = vpack.c.b16 %v419, %v415
        %v480 = vpack.c.b16 %v420, %v416
        %v481 = vpack.c.b16 %v425, %v421
        %v482 = vpack.c.b16 %v426, %v422
        %v483 = vpack.c.b16 %v427, %v423
        %v484 = vpack.c.b16 %v428, %v424
        %v485 = vpack.c.b16 %v433, %v429
        %v486 = vpack.c.b16 %v434, %v430
        %v487 = vpack.c.b16 %v435, %v431
        %v488 = vpack.c.b16 %v436, %v432
        %v489 = vpack.c.b16 %v441, %v437
        %v490 = vpack.c.b16 %v442, %v438
        %v491 = vpack.c.b16 %v443, %v439
        %v492 = vpack.c.b16 %v444, %v440
        %v493 = vpack.c.b16 %v449, %v445
        %v494 = vpack.c.b16 %v450, %v446
        %v495 = vpack.c.b16 %v451, %v447
        %v496 = vpack.c.b16 %v452, %v448
        %v497 = vpack.c.b16 %v457, %v453
        %v498 = vpack.c.b16 %v458, %v454
        %v499 = vpack.c.b16 %v459, %v455
        %v500 = vpack.c.b16 %v460, %v456
        %v501 = vpack.c.b16 %v465, %v461
        %v502 = vpack.c.b16 %v466, %v462
        %v503 = vpack.c.b16 %v467, %v463
        %v504 = vpack.c.b16 %v468, %v464
        %v505 = vpack.c.b16 %v473, %v469
        %v506 = vpack.c.b16 %v474, %v470
        %v507 = vpack.c.b16 %v475, %v471
        %v508 = vpack.c.b16 %v476, %v472
        %541 = vmatpush.bf16.msra.mxu0 %v505
        %542 = vmatpush.bf16.msra.mxu0 %v501
        %543 = vmatpush.bf16.msra.mxu0 %v497
        %544 = vmatpush.bf16.msra.mxu0 %v493
        %545 = vmatpush.bf16.msra.mxu0 %v489
        %546 = vmatpush.bf16.msra.mxu0 %v485
        %547 = vmatpush.bf16.msra.mxu0 %v481
        %548 = vmatpush.bf16.msra.mxu0 %v477
        %549 = vmatmul.bf16.gmra.mxu0 %v345
        %v550 = vpop.f32.mrf.mxu0
        %v551 = vadd.f32 0.0, %v550
        %v552 = vpop.f32.mrf.mxu0
        %v553 = vadd.f32 0.0, %v552
        %554 = vmatmul.bf16.gmra.mxu0 %v346
        %v555 = vpop.f32.mrf.mxu0
        %v556 = vadd.f32 0.0, %v555
        %v557 = vpop.f32.mrf.mxu0
        %v558 = vadd.f32 0.0, %v557
        %559 = vmatmul.bf16.gmra.mxu0 %v347
        %v560 = vpop.f32.mrf.mxu0
        %v561 = vadd.f32 0.0, %v560
        %v562 = vpop.f32.mrf.mxu0
        %v563 = vadd.f32 0.0, %v562
        %564 = vmatmul.bf16.gmra.mxu0 %v348
        %v565 = vpop.f32.mrf.mxu0
        %v566 = vadd.f32 0.0, %v565
        %v567 = vpop.f32.mrf.mxu0
        %v568 = vadd.f32 0.0, %v567
        %569 = vdwg.mxu0
        %570 = vmatpush.bf16.msra.mxu0 %v506
        %571 = vmatpush.bf16.msra.mxu0 %v502
        %572 = vmatpush.bf16.msra.mxu0 %v498
        %573 = vmatpush.bf16.msra.mxu0 %v494
        %574 = vmatpush.bf16.msra.mxu0 %v490
        %575 = vmatpush.bf16.msra.mxu0 %v486
        %576 = vmatpush.bf16.msra.mxu0 %v482
        %577 = vmatpush.bf16.msra.mxu0 %v478
        %578 = vmatmul.bf16.gmra.mxu0 %v345
        %v579 = vpop.f32.mrf.mxu0
        %v580 = vadd.f32 0.0, %v579
        %v581 = vpop.f32.mrf.mxu0
        %v582 = vadd.f32 0.0, %v581
        %583 = vmatmul.bf16.gmra.mxu0 %v346
        %v584 = vpop.f32.mrf.mxu0
        %v585 = vadd.f32 0.0, %v584
        %v586 = vpop.f32.mrf.mxu0
        %v587 = vadd.f32 0.0, %v586
        %588 = vmatmul.bf16.gmra.mxu0 %v347
        %v589 = vpop.f32.mrf.mxu0
        %v590 = vadd.f32 0.0, %v589
        %v591 = vpop.f32.mrf.mxu0
        %v592 = vadd.f32 0.0, %v591
        %593 = vmatmul.bf16.gmra.mxu0 %v348
        %v594 = vpop.f32.mrf.mxu0
        %v595 = vadd.f32 0.0, %v594
        %v596 = vpop.f32.mrf.mxu0
        %v597 = vadd.f32 0.0, %v596
        %598 = vdwg.mxu0
        %599 = vmatpush.bf16.msra.mxu0 %v507
        %600 = vmatpush.bf16.msra.mxu0 %v503
        %601 = vmatpush.bf16.msra.mxu0 %v499
        %602 = vmatpush.bf16.msra.mxu0 %v495
        %603 = vmatpush.bf16.msra.mxu0 %v491
        %604 = vmatpush.bf16.msra.mxu0 %v487
        %605 = vmatpush.bf16.msra.mxu0 %v483
        %606 = vmatpush.bf16.msra.mxu0 %v479
        %607 = vmatmul.bf16.gmra.mxu0 %v345
        %v608 = vpop.f32.mrf.mxu0
        %v609 = vadd.f32 0.0, %v608
        %v610 = vpop.f32.mrf.mxu0
        %v611 = vadd.f32 0.0, %v610
        %612 = vmatmul.bf16.gmra.mxu0 %v346
        %v613 = vpop.f32.mrf.mxu0
        %v614 = vadd.f32 0.0, %v613
        %v615 = vpop.f32.mrf.mxu0
        %v616 = vadd.f32 0.0, %v615
        %617 = vmatmul.bf16.gmra.mxu0 %v347
        %v618 = vpop.f32.mrf.mxu0
        %v619 = vadd.f32 0.0, %v618
        %v620 = vpop.f32.mrf.mxu0
        %v621 = vadd.f32 0.0, %v620
        %622 = vmatmul.bf16.gmra.mxu0 %v348
        %v623 = vpop.f32.mrf.mxu0
        %v624 = vadd.f32 0.0, %v623
        %v625 = vpop.f32.mrf.mxu0
        %v626 = vadd.f32 0.0, %v625
        %627 = vdwg.mxu0
        %628 = vmatpush.bf16.msra.mxu0 %v508
        %629 = vmatpush.bf16.msra.mxu0 %v504
        %630 = vmatpush.bf16.msra.mxu0 %v500
        %631 = vmatpush.bf16.msra.mxu0 %v496
        %632 = vmatpush.bf16.msra.mxu0 %v492
        %633 = vmatpush.bf16.msra.mxu0 %v488
        %634 = vmatpush.bf16.msra.mxu0 %v484
        %635 = vmatpush.bf16.msra.mxu0 %v480
        %636 = vmatmul.bf16.gmra.mxu0 %v345
        %v637 = vpop.f32.mrf.mxu0
        %v638 = vadd.f32 0.0, %v637
        %v639 = vpop.f32.mrf.mxu0
        %v640 = vadd.f32 0.0, %v639
        %641 = vmatmul.bf16.gmra.mxu0 %v346
        %v642 = vpop.f32.mrf.mxu0
        %v643 = vadd.f32 0.0, %v642
        %v644 = vpop.f32.mrf.mxu0
        %v645 = vadd.f32 0.0, %v644
        %646 = vmatmul.bf16.gmra.mxu0 %v347
        %v647 = vpop.f32.mrf.mxu0
        %v648 = vadd.f32 0.0, %v647
        %v649 = vpop.f32.mrf.mxu0
        %v650 = vadd.f32 0.0, %v649
        %651 = vmatmul.bf16.gmra.mxu0 %v348
        %v652 = vpop.f32.mrf.mxu0
        %v653 = vadd.f32 0.0, %v652
        %v654 = vpop.f32.mrf.mxu0
        %v655 = vadd.f32 0.0, %v654
        %656 = vdwg.mxu0
        %v657 = vadd.f32 %v305, %v551
        %v658 = vadd.f32 %v306, %v580
        %v659 = vadd.f32 %v307, %v609
        %v660 = vadd.f32 %v308, %v638
        %v661 = vadd.f32 %v309, %v553
        %v662 = vadd.f32 %v310, %v582
        %v663 = vadd.f32 %v311, %v611
        %v664 = vadd.f32 %v312, %v640
        %v665 = vadd.f32 %v313, %v556
        %v666 = vadd.f32 %v314, %v585
        %v667 = vadd.f32 %v315, %v614
        %v668 = vadd.f32 %v316, %v643
        %v669 = vadd.f32 %v317, %v558
        %v670 = vadd.f32 %v318, %v587
        %v671 = vadd.f32 %v319, %v616
        %v672 = vadd.f32 %v320, %v645
        %v673 = vadd.f32 %v321, %v561
        %v674 = vadd.f32 %v322, %v590
        %v675 = vadd.f32 %v323, %v619
        %v676 = vadd.f32 %v324, %v648
        %v677 = vadd.f32 %v325, %v563
        %v678 = vadd.f32 %v326, %v592
        %v679 = vadd.f32 %v327, %v621
        %v680 = vadd.f32 %v328, %v650
        %v681 = vadd.f32 %v329, %v566
        %v682 = vadd.f32 %v330, %v595
        %v683 = vadd.f32 %v331, %v624
        %v684 = vadd.f32 %v332, %v653
        %v685 = vadd.f32 %v333, %v568
        %v686 = vadd.f32 %v334, %v597
        %v687 = vadd.f32 %v335, %v626
        %v688 = vadd.f32 %v336, %v655
        %689 = vst [vmem:[#allocation2] sm:$0xff] %v657
        %690 = vst [vmem:[#allocation2 + $0x8] sm:$0xff] %v658
        %691 = vst [vmem:[#allocation2 + $0x10] sm:$0xff] %v659
        %692 = vst [vmem:[#allocation2 + $0x18] sm:$0xff] %v660
        %693 = vst [vmem:[#allocation2 + $0x20] sm:$0xff] %v661
        %694 = vst [vmem:[#allocation2 + $0x28] sm:$0xff] %v662
        %695 = vst [vmem:[#allocation2 + $0x30] sm:$0xff] %v663
        %696 = vst [vmem:[#allocation2 + $0x38] sm:$0xff] %v664
        %697 = vst [vmem:[#allocation2 + $0x40] sm:$0xff] %v665
        %698 = vst [vmem:[#allocation2 + $0x48] sm:$0xff] %v666
        %699 = vst [vmem:[#allocation2 + $0x50] sm:$0xff] %v667
        %700 = vst [vmem:[#allocation2 + $0x58] sm:$0xff] %v668
        %701 = vst [vmem:[#allocation2 + $0x60] sm:$0xff] %v669
        %702 = vst [vmem:[#allocation2 + $0x68] sm:$0xff] %v670
        %703 = vst [vmem:[#allocation2 + $0x70] sm:$0xff] %v671
        %704 = vst [vmem:[#allocation2 + $0x78] sm:$0xff] %v672
        %705 = vst [vmem:[#allocation2 + $0x80] sm:$0xff] %v673
        %706 = vst [vmem:[#allocation2 + $0x88] sm:$0xff] %v674
        %707 = vst [vmem:[#allocation2 + $0x90] sm:$0xff] %v675
        %708 = vst [vmem:[#allocation2 + $0x98] sm:$0xff] %v676
        %709 = vst [vmem:[#allocation2 + $0xa0] sm:$0xff] %v677
        %710 = vst [vmem:[#allocation2 + $0xa8] sm:$0xff] %v678
        %711 = vst [vmem:[#allocation2 + $0xb0] sm:$0xff] %v679
        %712 = vst [vmem:[#allocation2 + $0xb8] sm:$0xff] %v680
        %713 = vst [vmem:[#allocation2 + $0xc0] sm:$0xff] %v681
        %714 = vst [vmem:[#allocation2 + $0xc8] sm:$0xff] %v682
        %715 = vst [vmem:[#allocation2 + $0xd0] sm:$0xff] %v683
        %716 = vst [vmem:[#allocation2 + $0xd8] sm:$0xff] %v684
        %717 = vst [vmem:[#allocation2 + $0xe0] sm:$0xff] %v685
        %718 = vst [vmem:[#allocation2 + $0xe8] sm:$0xff] %v686
        %719 = vst [vmem:[#allocation2 + $0xf0] sm:$0xff] %v687
        %720 = vst [vmem:[#allocation2 + $0xf8] sm:$0xff] %v688
        // Predicated region
        $region41: #{bidirectional_lstm.3} parent=31 // pred_check
          %p721 = pneg %p269
        $region42: #{bidirectional_lstm.3} parent=31 // pred_check_branch
          %723 = sbr.rel (%p721) target = $region44
        $region43: #{bidirectional_lstm.3} parent=31 // pred_region
          %v724 = vld [vmem:[#allocation2] sm:$0xff]
          %v725 = vld [vmem:[#allocation2 + $0x8] sm:$0xff]
          %v726 = vld [vmem:[#allocation2 + $0x10] sm:$0xff]
          %v727 = vld [vmem:[#allocation2 + $0x18] sm:$0xff]
          %v728 = vld [vmem:[#allocation2 + $0x20] sm:$0xff]
          %v729 = vld [vmem:[#allocation2 + $0x28] sm:$0xff]
          %v730 = vld [vmem:[#allocation2 + $0x30] sm:$0xff]
          %v731 = vld [vmem:[#allocation2 + $0x38] sm:$0xff]
          %v732 = vld [vmem:[#allocation2 + $0x40] sm:$0xff]
          %v733 = vld [vmem:[#allocation2 + $0x48] sm:$0xff]
          %v734 = vld [vmem:[#allocation2 + $0x50] sm:$0xff]
          %v735 = vld [vmem:[#allocation2 + $0x58] sm:$0xff]
          %v736 = vld [vmem:[#allocation2 + $0x60] sm:$0xff]
          %v737 = vld [vmem:[#allocation2 + $0x68] sm:$0xff]
          %v738 = vld [vmem:[#allocation2 + $0x70] sm:$0xff]
          %v739 = vld [vmem:[#allocation2 + $0x78] sm:$0xff]
          %v740 = vld [vmem:[#allocation2 + $0x80] sm:$0xff]
          %v741 = vld [vmem:[#allocation2 + $0x88] sm:$0xff]
          %v742 = vld [vmem:[#allocation2 + $0x90] sm:$0xff]
          %v743 = vld [vmem:[#allocation2 + $0x98] sm:$0xff]
          %v744 = vld [vmem:[#allocation2 + $0xa0] sm:$0xff]
          %v745 = vld [vmem:[#allocation2 + $0xa8] sm:$0xff]
          %v746 = vld [vmem:[#allocation2 + $0xb0] sm:$0xff]
          %v747 = vld [vmem:[#allocation2 + $0xb8] sm:$0xff]
          %v748 = vld [vmem:[#allocation2 + $0xc0] sm:$0xff]
          %v749 = vld [vmem:[#allocation2 + $0xc8] sm:$0xff]
          %v750 = vld [vmem:[#allocation2 + $0xd0] sm:$0xff]
          %v751 = vld [vmem:[#allocation2 + $0xd8] sm:$0xff]
          %v752 = vld [vmem:[#allocation2 + $0xe0] sm:$0xff]
          %v753 = vld [vmem:[#allocation2 + $0xe8] sm:$0xff]
          %v754 = vld [vmem:[#allocation2 + $0xf0] sm:$0xff]
          %v755 = vld [vmem:[#allocation2 + $0xf8] sm:$0xff]
          %v756 = vld [vmem:[%s265] sm:$0xf]
          %v758 = vperm.slane %v756, 0
          %v759 = vperm.slane %v756, 1
          %v760 = vperm.slane %v756, 2
          %v761 = vperm.slane %v756, 3
          %v766 = vadd.f32 %v724, %v758
          %v767 = vadd.f32 %v725, %v759
          %v768 = vadd.f32 %v726, %v760
          %v769 = vadd.f32 %v727, %v761
          %v770 = vadd.f32 %v728, %v758
          %v771 = vadd.f32 %v729, %v759
          %v772 = vadd.f32 %v730, %v760
          %v773 = vadd.f32 %v731, %v761
          %v774 = vadd.f32 %v732, %v758
          %v775 = vadd.f32 %v733, %v759
          %v776 = vadd.f32 %v734, %v760
          %v777 = vadd.f32 %v735, %v761
          %v778 = vadd.f32 %v736, %v758
          %v779 = vadd.f32 %v737, %v759
          %v780 = vadd.f32 %v738, %v760
          %v781 = vadd.f32 %v739, %v761
          %v782 = vadd.f32 %v740, %v758
          %v783 = vadd.f32 %v741, %v759
          %v784 = vadd.f32 %v742, %v760
          %v785 = vadd.f32 %v743, %v761
          %v786 = vadd.f32 %v744, %v758
          %v787 = vadd.f32 %v745, %v759
          %v788 = vadd.f32 %v746, %v760
          %v789 = vadd.f32 %v747, %v761
          %v790 = vadd.f32 %v748, %v758
          %v791 = vadd.f32 %v749, %v759
          %v792 = vadd.f32 %v750, %v760
          %v793 = vadd.f32 %v751, %v761
          %v794 = vadd.f32 %v752, %v758
          %v795 = vadd.f32 %v753, %v759
          %v796 = vadd.f32 %v754, %v760
          %v797 = vadd.f32 %v755, %v761
          %v798 = vpack.c.bf16 %v767, %v766
          %v799 = vpack.c.bf16 %v769, %v768
          %v800 = vpack.c.bf16 %v771, %v770
          %v801 = vpack.c.bf16 %v773, %v772
          %v802 = vpack.c.bf16 %v775, %v774
          %v803 = vpack.c.bf16 %v777, %v776
          %v804 = vpack.c.bf16 %v779, %v778
          %v805 = vpack.c.bf16 %v781, %v780
          %v806 = vpack.c.bf16 %v783, %v782
          %v807 = vpack.c.bf16 %v785, %v784
          %v808 = vpack.c.bf16 %v787, %v786
          %v809 = vpack.c.bf16 %v789, %v788
          %v810 = vpack.c.bf16 %v791, %v790
          %v811 = vpack.c.bf16 %v793, %v792
          %v812 = vpack.c.bf16 %v795, %v794
          %v813 = vpack.c.bf16 %v797, %v796
          %814 = vst [vmem:[%s250] sm:$0xff] %v798
          %815 = vst [vmem:[%s250 + $0x8] sm:$0xff] %v799
          %816 = vst [vmem:[%s250 + $0x10] sm:$0xff] %v800
          %817 = vst [vmem:[%s250 + $0x18] sm:$0xff] %v801
          %818 = vst [vmem:[%s250 + $0x20] sm:$0xff] %v802
          %819 = vst [vmem:[%s250 + $0x28] sm:$0xff] %v803
          %820 = vst [vmem:[%s250 + $0x30] sm:$0xff] %v804
          %821 = vst [vmem:[%s250 + $0x38] sm:$0xff] %v805
          %822 = vst [vmem:[%s250 + $0x40] sm:$0xff] %v806
          %823 = vst [vmem:[%s250 + $0x48] sm:$0xff] %v807
          %824 = vst [vmem:[%s250 + $0x50] sm:$0xff] %v808
          %825 = vst [vmem:[%s250 + $0x58] sm:$0xff] %v809
          %826 = vst [vmem:[%s250 + $0x60] sm:$0xff] %v810
          %827 = vst [vmem:[%s250 + $0x68] sm:$0xff] %v811
          %828 = vst [vmem:[%s250 + $0x70] sm:$0xff] %v812
          %829 = vst [vmem:[%s250 + $0x78] sm:$0xff] %v813
        $region44: #{bidirectional_lstm.3} parent=31 // pred_fallthru
          _
        %s830 = sand.u32 %s128, 1
        %s831 = sand.u32 %s128, 1
        %s832 = smul.addr %s831, 128
        %s833 = scalar_lea.vmem [#allocation5], %s832
        // Predicated region
        $region45: #{bidirectional_lstm.3} parent=31 // pred_check
          %p834 = pneg %p138
        $region46: #{bidirectional_lstm.3} parent=31 // pred_check_branch
          %836 = sbr.rel (%p834) target = $region48
        $region47: #{bidirectional_lstm.3} parent=31 // pred_region
          %s837 = smul.u32 8, %s22
          %s838 = smul.u32 4, %s23
          %s839 = smul.addr %s837, 8
          %s840 = sadd.s32 %s838, %s839
          %s841 = smul.addr %s840, 4
          %s842 = scalar_lea.vmem %s3, %s841
          // Predicated region
          $region49: #{bidirectional_lstm.3} parent=47 // pred_check
            _
          $region50: #{bidirectional_lstm.3} parent=47 // pred_check_branch
            %844 = sbr.rel (0) target = $region52
          $region51: #{bidirectional_lstm.3} parent=47 // pred_region
            // Predicated region
            $region53: #{bidirectional_lstm.3} parent=51 // pred_check
              _
            $region54: #{bidirectional_lstm.3} parent=51 // pred_check_branch
              %846 = sbr.rel (0) target = $region56
            $region55: #{bidirectional_lstm.3} parent=51 // pred_region
              loop: start=0, step=1, limit=1
              $region57: #{bidirectional_lstm.3} parent=55 // loop_pre_header
                _
              $region58: #{bidirectional_lstm.3} parent=55 // loop_header
                %s848 = sphi 0, %s852
                %p849 = scmp.ge.s32.totalorder %s848, 1
                %s853 = sphi %s833, %s833
                %s854 = sphi %s842, %s842
              $region59: #{bidirectional_lstm.3} parent=55 // loop_header_branch
                %851 = sbr.rel (%p849) target = $region63
              $region60: #{bidirectional_lstm.3} parent=55 // loop_body
                %v855 = vld [vmem:[%s853] sm:$0xff]
                %856 = vst [vmem:[%s854] sm:$0xff] %v855
                %v857 = vld [vmem:[%s853 + $0x8] sm:$0xff]
                %858 = vst [vmem:[%s854 + $0x8] sm:$0xff] %v857
                %v859 = vld [vmem:[%s853 + $0x10] sm:$0xff]
                %860 = vst [vmem:[%s854 + $0x20] sm:$0xff] %v859
                %v861 = vld [vmem:[%s853 + $0x18] sm:$0xff]
                %862 = vst [vmem:[%s854 + $0x28] sm:$0xff] %v861
                %v863 = vld [vmem:[%s853 + $0x20] sm:$0xff]
                %864 = vst [vmem:[%s854 + $0x40] sm:$0xff] %v863
                %v865 = vld [vmem:[%s853 + $0x28] sm:$0xff]
                %866 = vst [vmem:[%s854 + $0x48] sm:$0xff] %v865
                %v867 = vld [vmem:[%s853 + $0x30] sm:$0xff]
                %868 = vst [vmem:[%s854 + $0x60] sm:$0xff] %v867
                %v869 = vld [vmem:[%s853 + $0x38] sm:$0xff]
                %870 = vst [vmem:[%s854 + $0x68] sm:$0xff] %v869
                %v871 = vld [vmem:[%s853 + $0x40] sm:$0xff]
                %872 = vst [vmem:[%s854 + $0x80] sm:$0xff] %v871
                %v873 = vld [vmem:[%s853 + $0x48] sm:$0xff]
                %874 = vst [vmem:[%s854 + $0x88] sm:$0xff] %v873
                %v875 = vld [vmem:[%s853 + $0x50] sm:$0xff]
                %876 = vst [vmem:[%s854 + $0xa0] sm:$0xff] %v875
                %v877 = vld [vmem:[%s853 + $0x58] sm:$0xff]
                %878 = vst [vmem:[%s854 + $0xa8] sm:$0xff] %v877
                %v879 = vld [vmem:[%s853 + $0x60] sm:$0xff]
                %880 = vst [vmem:[%s854 + $0xc0] sm:$0xff] %v879
                %v881 = vld [vmem:[%s853 + $0x68] sm:$0xff]
                %882 = vst [vmem:[%s854 + $0xc8] sm:$0xff] %v881
                %v883 = vld [vmem:[%s853 + $0x70] sm:$0xff]
                %884 = vst [vmem:[%s854 + $0xe0] sm:$0xff] %v883
                %v885 = vld [vmem:[%s853 + $0x78] sm:$0xff]
                %886 = vst [vmem:[%s854 + $0xe8] sm:$0xff] %v885
              $region61: #{bidirectional_lstm.3} parent=55 // loop_footer
                %s852 = sadd.s32 1, %s848
              $region62: #{bidirectional_lstm.3} parent=55 // loop_footer_branch
                %847 = sbr.rel target = $region58
              $region63: #{bidirectional_lstm.3} parent=55 // loop_exit
                _
            $region56: #{bidirectional_lstm.3} parent=51 // pred_fallthru
              _
            // Predicated region
            $region64: #{bidirectional_lstm.3} parent=51 // pred_check
              _
            $region65: #{bidirectional_lstm.3} parent=51 // pred_check_branch
              %888 = sbr.rel target = $region67
            $region66: #{bidirectional_lstm.3} parent=51 // pred_region
              _
            $region67: #{bidirectional_lstm.3} parent=51 // pred_fallthru
              _
          $region52: #{bidirectional_lstm.3} parent=47 // pred_fallthru
            _
          %889 = vnop
        $region48: #{bidirectional_lstm.3} parent=31 // pred_fallthru
          _
      $region32: #{bidirectional_lstm.3} parent=5 // pred_fallthru
        _
      %p890 = scmp.le.s32.totalorder 2, %s12
      // Predicated region
      $region68: #{bidirectional_lstm.3} parent=5 // pred_check
        %p891 = pneg %p890
      $region69: #{bidirectional_lstm.3} parent=5 // pred_check_branch
        %893 = sbr.rel (%p891) target = $region71
      $region70: #{bidirectional_lstm.3} parent=5 // pred_region
        %s894 = ssub.s32 %s12, 2
        // Predicated region
        $region72: #{bidirectional_lstm.3} parent=70 // pred_check
          %p895 = pneg %p144
        $region73: #{bidirectional_lstm.3} parent=70 // pred_check_branch
          %897 = sbr.rel (%p895) target = $region75
        $region74: #{bidirectional_lstm.3} parent=70 // pred_region
          %s898 = sand.u32 %s129, 1
          %s899 = sand.u32 %s129, 1
          %s900 = smul.addr %s899, 128
          %s901 = scalar_lea.vmem [#allocation5], %s900
        $region75: #{bidirectional_lstm.3} parent=70 // pred_fallthru
          _
      $region71: #{bidirectional_lstm.3} parent=5 // pred_fallthru
        _
    $region6: #{bidirectional_lstm.3} parent=1 // loop_footer
      %s16 = sadd.s32 1, %s12
    $region7: #{bidirectional_lstm.3} parent=1 // loop_footer_branch
      %11 = sbr.rel target = $region3
    $region8: #{bidirectional_lstm.3} parent=1 // loop_exit
      _
    %902 = vsyncpa [#allocation4], 1
    %s903 = scalar_lea.sflag [#allocation4], 1
    %904 = vsyncpa %s903, 1

// kernel: bidirectional_lstm.4
$region0: #{bidirectional_lstm.4}
  #allocation0 [shape = 'u32[]', space=smem, size = 0x4, offset = 0x4, fixed_abs, tag = 'smem constant byte address 0x4 - core index']
  #allocation1 [shape = 'u32[72,128]{1,0:T(1,128)}', space=vmem, size = 0x9000, scoped, tag = 'internal scratch']
  #allocation2 [shape = 'f32[8,128]{1,0:T(8,128)}', space=vmem, size = 0x1000, scoped, tag = 'scratch operand']
  #allocation3 [shape = 'f32[8,128]{1,0:T(8,128)}', space=vmem, size = 0x1000, scoped, tag = 'scratch operand']
  #allocation4 [shape = 'f32[8,128]{1,0:T(8,128)}', space=vmem, size = 0x1000, scoped, tag = 'scratch operand']
  #allocation5 [shape = 'f32[8,128]{1,0:T(8,128)}', space=vmem, size = 0x1000, scoped, tag = 'scratch operand']
  %s0 = inlined_call_operand.vmem [shape: bf16[8,8,1024], index: 0, kind: input, shape index: {}, may-alias: {0,1}]
  %s1 = inlined_call_operand.vmem [shape: bf16[8,8,1024], index: 1, kind: input, shape index: {}, may-alias: {0,1}]
  %s2 = inlined_call_operand.hbm [shape: bf16[2,128,512], index: 2, kind: input, shape index: {}]
  %s3 = inlined_call_operand.vmem [shape: bf16[8,8,128], index: 3, kind: output, shape index: {0}]
  %s4 = inlined_call_operand.vmem [shape: bf16[8,8,128], index: 4, kind: output, shape index: {1}]
  %5 = xla_tuple %s3, %s4
  %s6 = sld [smem:[#allocation0]]
  $region84: #{bidirectional_lstm.4} parent=0
    _
  %s8 = ssub.s32 1, %s6
  %s9 = scalar_select 0, %s8, %s6
  $region1: #{bidirectional_lstm.4} parent=0
    #allocation6 [shape = 'u8[65536]{0}', space=vmem, size = 0x10000, scoped, tag = 'input window, operand 0, single buffered']
    #allocation7 [shape = 'u8[65536]{0}', space=vmem, size = 0x10000, scoped, tag = 'input window, operand 1, single buffered']
    #allocation8 [shape = 'u8[262144]{0}', space=vmem, size = 0x40000, scoped, tag = 'input window, operand 2, single buffered']
    #allocation9 [shape = 's32[1]{0}', space=sflag, size = 0x4, scoped, tag = 'scoped memory for bidirectional_lstm.4']
    %10 = vsyncpa [#allocation9], 0
    // Predicated region
    $region2: #{bidirectional_lstm.4} parent=1 // pred_check
      _
    $region3: #{bidirectional_lstm.4} parent=1 // pred_check_branch
      %12 = sbr.rel (0) target = $region5
    $region4: #{bidirectional_lstm.4} parent=1 // pred_region
      // Predicated region
      $region6: #{bidirectional_lstm.4} parent=4 // pred_check
        _
      $region7: #{bidirectional_lstm.4} parent=4 // pred_check_branch
        %14 = sbr.rel (0) target = $region9
      $region8: #{bidirectional_lstm.4} parent=4 // pred_region
        // Predicated region
        $region10: #{bidirectional_lstm.4} parent=8 // pred_check
          _
        $region11: #{bidirectional_lstm.4} parent=8 // pred_check_branch
          %16 = sbr.rel (0) target = $region13
        $region12: #{bidirectional_lstm.4} parent=8 // pred_region
          loop: start=0, step=1, limit=1
          $region14: #{bidirectional_lstm.4} parent=12 // loop_pre_header
            _
          $region15: #{bidirectional_lstm.4} parent=12 // loop_header
            %s18 = sphi 0, %s22
            %p19 = scmp.ge.s32.totalorder %s18, 1
            %s23 = sphi %s0, %s0
            %s24 = sphi [#allocation6], [#allocation6]
          $region16: #{bidirectional_lstm.4} parent=12 // loop_header_branch
            %21 = sbr.rel (%p19) target = $region20
          $region17: #{bidirectional_lstm.4} parent=12 // loop_body
            %v25 = vld [vmem:[%s23] sm:$0xff]
            %26 = vst [vmem:[%s24] sm:$0xff] %v25
            %v27 = vld [vmem:[%s23 + $0x8] sm:$0xff]
            %28 = vst [vmem:[%s24 + $0x8] sm:$0xff] %v27
            %v29 = vld [vmem:[%s23 + $0x20] sm:$0xff]
            %30 = vst [vmem:[%s24 + $0x10] sm:$0xff] %v29
            %v31 = vld [vmem:[%s23 + $0x28] sm:$0xff]
            %32 = vst [vmem:[%s24 + $0x18] sm:$0xff] %v31
            %v33 = vld [vmem:[%s23 + $0x40] sm:$0xff]
            %34 = vst [vmem:[%s24 + $0x20] sm:$0xff] %v33
            %v35 = vld [vmem:[%s23 + $0x48] sm:$0xff]
            %36 = vst [vmem:[%s24 + $0x28] sm:$0xff] %v35
            %v37 = vld [vmem:[%s23 + $0x60] sm:$0xff]
            %38 = vst [vmem:[%s24 + $0x30] sm:$0xff] %v37
            %v39 = vld [vmem:[%s23 + $0x68] sm:$0xff]
            %40 = vst [vmem:[%s24 + $0x38] sm:$0xff] %v39
            %v41 = vld [vmem:[%s23 + $0x80] sm:$0xff]
            %42 = vst [vmem:[%s24 + $0x40] sm:$0xff] %v41
            %v43 = vld [vmem:[%s23 + $0x88] sm:$0xff]
            %44 = vst [vmem:[%s24 + $0x48] sm:$0xff] %v43
            %v45 = vld [vmem:[%s23 + $0xa0] sm:$0xff]
            %46 = vst [vmem:[%s24 + $0x50] sm:$0xff] %v45
            %v47 = vld [vmem:[%s23 + $0xa8] sm:$0xff]
            %48 = vst [vmem:[%s24 + $0x58] sm:$0xff] %v47
            %v49 = vld [vmem:[%s23 + $0xc0] sm:$0xff]
            %50 = vst [vmem:[%s24 + $0x60] sm:$0xff] %v49
            %v51 = vld [vmem:[%s23 + $0xc8] sm:$0xff]
            %52 = vst [vmem:[%s24 + $0x68] sm:$0xff] %v51
            %v53 = vld [vmem:[%s23 + $0xe0] sm:$0xff]
            %54 = vst [vmem:[%s24 + $0x70] sm:$0xff] %v53
            %v55 = vld [vmem:[%s23 + $0xe8] sm:$0xff]
            %56 = vst [vmem:[%s24 + $0x78] sm:$0xff] %v55
          $region18: #{bidirectional_lstm.4} parent=12 // loop_footer
            %s22 = sadd.s32 1, %s18
          $region19: #{bidirectional_lstm.4} parent=12 // loop_footer_branch
            %17 = sbr.rel target = $region15
          $region20: #{bidirectional_lstm.4} parent=12 // loop_exit
            _
        $region13: #{bidirectional_lstm.4} parent=8 // pred_fallthru
          _
        // Predicated region
        $region21: #{bidirectional_lstm.4} parent=8 // pred_check
          _
        $region22: #{bidirectional_lstm.4} parent=8 // pred_check_branch
          %58 = sbr.rel target = $region24
        $region23: #{bidirectional_lstm.4} parent=8 // pred_region
          _
        $region24: #{bidirectional_lstm.4} parent=8 // pred_fallthru
          _
      $region9: #{bidirectional_lstm.4} parent=4 // pred_fallthru
        _
      %59 = vnop
    $region5: #{bidirectional_lstm.4} parent=1 // pred_fallthru
      _
    // Predicated region
    $region25: #{bidirectional_lstm.4} parent=1 // pred_check
      _
    $region26: #{bidirectional_lstm.4} parent=1 // pred_check_branch
      %61 = sbr.rel (0) target = $region28
    $region27: #{bidirectional_lstm.4} parent=1 // pred_region
      %s62 = ssub.s32 0, 0
      %s63 = smul.u32 8, %s62
      %s64 = smul.addr %s63, 8
      %s65 = sadd.s32 4, %s64
      %s66 = smul.addr %s65, 4
      %s67 = scalar_lea.vmem %s1, %s66
      // Predicated region
      $region29: #{bidirectional_lstm.4} parent=27 // pred_check
        _
      $region30: #{bidirectional_lstm.4} parent=27 // pred_check_branch
        %69 = sbr.rel (0) target = $region32
      $region31: #{bidirectional_lstm.4} parent=27 // pred_region
        // Predicated region
        $region33: #{bidirectional_lstm.4} parent=31 // pred_check
          _
        $region34: #{bidirectional_lstm.4} parent=31 // pred_check_branch
          %71 = sbr.rel (0) target = $region36
        $region35: #{bidirectional_lstm.4} parent=31 // pred_region
          loop: start=0, step=1, limit=1
          $region37: #{bidirectional_lstm.4} parent=35 // loop_pre_header
            _
          $region38: #{bidirectional_lstm.4} parent=35 // loop_header
            %s73 = sphi 0, %s77
            %p74 = scmp.ge.s32.totalorder %s73, 1
            %s78 = sphi %s67, %s67
            %s79 = sphi [#allocation7], [#allocation7]
          $region39: #{bidirectional_lstm.4} parent=35 // loop_header_branch
            %76 = sbr.rel (%p74) target = $region43
          $region40: #{bidirectional_lstm.4} parent=35 // loop_body
            %v80 = vld [vmem:[%s78] sm:$0xff]
            %81 = vst [vmem:[%s79] sm:$0xff] %v80
            %v82 = vld [vmem:[%s78 + $0x8] sm:$0xff]
            %83 = vst [vmem:[%s79 + $0x8] sm:$0xff] %v82
            %v84 = vld [vmem:[%s78 + $0x20] sm:$0xff]
            %85 = vst [vmem:[%s79 + $0x10] sm:$0xff] %v84
            %v86 = vld [vmem:[%s78 + $0x28] sm:$0xff]
            %87 = vst [vmem:[%s79 + $0x18] sm:$0xff] %v86
            %v88 = vld [vmem:[%s78 + $0x40] sm:$0xff]
            %89 = vst [vmem:[%s79 + $0x20] sm:$0xff] %v88
            %v90 = vld [vmem:[%s78 + $0x48] sm:$0xff]
            %91 = vst [vmem:[%s79 + $0x28] sm:$0xff] %v90
            %v92 = vld [vmem:[%s78 + $0x60] sm:$0xff]
            %93 = vst [vmem:[%s79 + $0x30] sm:$0xff] %v92
            %v94 = vld [vmem:[%s78 + $0x68] sm:$0xff]
            %95 = vst [vmem:[%s79 + $0x38] sm:$0xff] %v94
            %v96 = vld [vmem:[%s78 + $0x80] sm:$0xff]
            %97 = vst [vmem:[%s79 + $0x40] sm:$0xff] %v96
            %v98 = vld [vmem:[%s78 + $0x88] sm:$0xff]
            %99 = vst [vmem:[%s79 + $0x48] sm:$0xff] %v98
            %v100 = vld [vmem:[%s78 + $0xa0] sm:$0xff]
            %101 = vst [vmem:[%s79 + $0x50] sm:$0xff] %v100
            %v102 = vld [vmem:[%s78 + $0xa8] sm:$0xff]
            %103 = vst [vmem:[%s79 + $0x58] sm:$0xff] %v102
            %v104 = vld [vmem:[%s78 + $0xc0] sm:$0xff]
            %105 = vst [vmem:[%s79 + $0x60] sm:$0xff] %v104
            %v106 = vld [vmem:[%s78 + $0xc8] sm:$0xff]
            %107 = vst [vmem:[%s79 + $0x68] sm:$0xff] %v106
            %v108 = vld [vmem:[%s78 + $0xe0] sm:$0xff]
            %109 = vst [vmem:[%s79 + $0x70] sm:$0xff] %v108
            %v110 = vld [vmem:[%s78 + $0xe8] sm:$0xff]
            %111 = vst [vmem:[%s79 + $0x78] sm:$0xff] %v110
          $region41: #{bidirectional_lstm.4} parent=35 // loop_footer
            %s77 = sadd.s32 1, %s73
          $region42: #{bidirectional_lstm.4} parent=35 // loop_footer_branch
            %72 = sbr.rel target = $region38
          $region43: #{bidirectional_lstm.4} parent=35 // loop_exit
            _
        $region36: #{bidirectional_lstm.4} parent=31 // pred_fallthru
          _
        // Predicated region
        $region44: #{bidirectional_lstm.4} parent=31 // pred_check
          _
        $region45: #{bidirectional_lstm.4} parent=31 // pred_check_branch
          %113 = sbr.rel target = $region47
        $region46: #{bidirectional_lstm.4} parent=31 // pred_region
          _
        $region47: #{bidirectional_lstm.4} parent=31 // pred_fallthru
          _
      $region32: #{bidirectional_lstm.4} parent=27 // pred_fallthru
        _
      %114 = vnop
    $region28: #{bidirectional_lstm.4} parent=1 // pred_fallthru
      _
    // Predicated region
    $region48: #{bidirectional_lstm.4} parent=1 // pred_check
      _
    $region49: #{bidirectional_lstm.4} parent=1 // pred_check_branch
      %116 = sbr.rel (0) target = $region51
    $region50: #{bidirectional_lstm.4} parent=1 // pred_region
      %118 = vsyncadd [#allocation9], 0
      %s119 = sshll.u32 %s2, 4
      %s120 = int_to_ptr.hbm [resolvable:$true] %s119
      %s121 = sshll.u32 [#allocation8], 4
      %s122 = int_to_ptr.vmem [resolvable:$true] %s121
      %127 = dma.hbm_to_vmem [thread:$0]  %s120, 8192, %s122, [#allocation9], 256, 256, 16
    $region51: #{bidirectional_lstm.4} parent=1 // pred_fallthru
      _
    // Predicated region
    $region52: #{bidirectional_lstm.4} parent=1 // pred_check
      _
    $region53: #{bidirectional_lstm.4} parent=1 // pred_check_branch
      %129 = sbr.rel (0) target = $region55
    $region54: #{bidirectional_lstm.4} parent=1 // pred_region
      _
    $region55: #{bidirectional_lstm.4} parent=1 // pred_fallthru
      _
    // Predicated region
    $region56: #{bidirectional_lstm.4} parent=1 // pred_check
      _
    $region57: #{bidirectional_lstm.4} parent=1 // pred_check_branch
      %131 = sbr.rel (0) target = $region59
    $region58: #{bidirectional_lstm.4} parent=1 // pred_region
      _
    $region59: #{bidirectional_lstm.4} parent=1 // pred_fallthru
      _
    // Predicated region
    $region60: #{bidirectional_lstm.4} parent=1 // pred_check
      _
    $region61: #{bidirectional_lstm.4} parent=1 // pred_check_branch
      %133 = sbr.rel (0) target = $region63
    $region62: #{bidirectional_lstm.4} parent=1 // pred_region
      %135 = dma.done [#allocation9], 8192
    $region63: #{bidirectional_lstm.4} parent=1 // pred_fallthru
      _
    %s136 = ssub.s32 0, 0
    %s137 = smul.u32 8, %s136
    %p138 = scmp.lt.s32.totalorder %s137, 7
    %s139 = scalar_select %p138, %s137, 7
    %s140 = smul.addr %s139, 4
    %s141 = scalar_lea.vmem %s4, %s140
    %s142 = ssub.s32 0, 0
    %s143 = smul.u32 8, %s142
    %s144 = ssub.s32 0, 0
    %s145 = smul.u32 8, %s144
    %p146 = scmp.lt.s32.totalorder %s145, 7
    %s147 = scalar_select %p146, %s145, 7
    %s148 = smul.addr %s147, 4
    %s149 = scalar_lea.vmem %s4, %s148
    %s150 = ssub.s32 0, 0
    %s151 = smul.u32 8, %s150
    %p152 = scmp.eq.s32.totalorder 0, 0
    // Predicated region
    $region64: #{bidirectional_lstm.4} parent=1 // pred_check
      %p153 = pneg %p152
    $region65: #{bidirectional_lstm.4} parent=1 // pred_check_branch
      %155 = sbr.rel (%p153) target = $region67
    $region66: #{bidirectional_lstm.4} parent=1 // pred_region
      %156 = vst [vmem:[#allocation2] sm:$0xff] 0.0
      %157 = vst [vmem:[#allocation3] sm:$0xff] 0.0
      %158 = vst [vmem:[#allocation4] sm:$0xff] 0.0
      %159 = vst [vmem:[#allocation5] sm:$0xff] 0.0
    $region67: #{bidirectional_lstm.4} parent=1 // pred_fallthru
      _
    %v160 = vld [vmem:[#allocation6] sm:$0xff]
    %v161 = vld [vmem:[#allocation6 + $0x8] sm:$0xff]
    %v162 = vunpack.c.l.bf16 %v160
    %v163 = vunpack.c.h.bf16 %v160
    %v164 = vunpack.c.l.bf16 %v161
    %v165 = vunpack.c.h.bf16 %v161
    %v166 = vld [vmem:[#allocation2] sm:$0xff]
    %v167 = vpack.c.bf16 %v166, %v166
    %v168 = vld [vmem:[#allocation8] sm:$0xff]
    %v169 = vld [vmem:[#allocation8 + $0x8] sm:$0xff]
    %v170 = vld [vmem:[#allocation8 + $0x10] sm:$0xff]
    %v171 = vld [vmem:[#allocation8 + $0x18] sm:$0xff]
    %v172 = vld [vmem:[#allocation8 + $0x20] sm:$0xff]
    %v173 = vld [vmem:[#allocation8 + $0x28] sm:$0xff]
    %v174 = vld [vmem:[#allocation8 + $0x30] sm:$0xff]
    %v175 = vld [vmem:[#allocation8 + $0x38] sm:$0xff]
    %v176 = vld [vmem:[#allocation8 + $0x40] sm:$0xff]
    %v177 = vld [vmem:[#allocation8 + $0x48] sm:$0xff]
    %v178 = vld [vmem:[#allocation8 + $0x50] sm:$0xff]
    %v179 = vld [vmem:[#allocation8 + $0x58] sm:$0xff]
    %v180 = vld [vmem:[#allocation8 + $0x60] sm:$0xff]
    %v181 = vld [vmem:[#allocation8 + $0x68] sm:$0xff]
    %v182 = vld [vmem:[#allocation8 + $0x70] sm:$0xff]
    %v183 = vld [vmem:[#allocation8 + $0x78] sm:$0xff]
    %v184 = vld [vmem:[#allocation8 + $0x80] sm:$0xff]
    %v185 = vld [vmem:[#allocation8 + $0x88] sm:$0xff]
    %v186 = vld [vmem:[#allocation8 + $0x90] sm:$0xff]
    %v187 = vld [vmem:[#allocation8 + $0x98] sm:$0xff]
    %v188 = vld [vmem:[#allocation8 + $0xa0] sm:$0xff]
    %v189 = vld [vmem:[#allocation8 + $0xa8] sm:$0xff]
    %v190 = vld [vmem:[#allocation8 + $0xb0] sm:$0xff]
    %v191 = vld [vmem:[#allocation8 + $0xb8] sm:$0xff]
    %v192 = vld [vmem:[#allocation8 + $0xc0] sm:$0xff]
    %v193 = vld [vmem:[#allocation8 + $0xc8] sm:$0xff]
    %v194 = vld [vmem:[#allocation8 + $0xd0] sm:$0xff]
    %v195 = vld [vmem:[#allocation8 + $0xd8] sm:$0xff]
    %v196 = vld [vmem:[#allocation8 + $0xe0] sm:$0xff]
    %v197 = vld [vmem:[#allocation8 + $0xe8] sm:$0xff]
    %v198 = vld [vmem:[#allocation8 + $0xf0] sm:$0xff]
    %v199 = vld [vmem:[#allocation8 + $0xf8] sm:$0xff]
    %v232 = vunpack.c.l.b16 %v168
    %v233 = vunpack.c.h.b16 %v168
    %v234 = vunpack.c.l.b16 %v169
    %v235 = vunpack.c.h.b16 %v169
    %v236 = vunpack.c.l.b16 %v170
    %v237 = vunpack.c.h.b16 %v170
    %v238 = vunpack.c.l.b16 %v171
    %v239 = vunpack.c.h.b16 %v171
    %v240 = vunpack.c.l.b16 %v172
    %v241 = vunpack.c.h.b16 %v172
    %v242 = vunpack.c.l.b16 %v173
    %v243 = vunpack.c.h.b16 %v173
    %v244 = vunpack.c.l.b16 %v174
    %v245 = vunpack.c.h.b16 %v174
    %v246 = vunpack.c.l.b16 %v175
    %v247 = vunpack.c.h.b16 %v175
    %v248 = vunpack.c.l.b16 %v176
    %v249 = vunpack.c.h.b16 %v176
    %v250 = vunpack.c.l.b16 %v177
    %v251 = vunpack.c.h.b16 %v177
    %v252 = vunpack.c.l.b16 %v178
    %v253 = vunpack.c.h.b16 %v178
    %v254 = vunpack.c.l.b16 %v179
    %v255 = vunpack.c.h.b16 %v179
    %v256 = vunpack.c.l.b16 %v180
    %v257 = vunpack.c.h.b16 %v180
    %v258 = vunpack.c.l.b16 %v181
    %v259 = vunpack.c.h.b16 %v181
    %v260 = vunpack.c.l.b16 %v182
    %v261 = vunpack.c.h.b16 %v182
    %v262 = vunpack.c.l.b16 %v183
    %v263 = vunpack.c.h.b16 %v183
    %v264 = vunpack.c.l.b16 %v184
    %v265 = vunpack.c.h.b16 %v184
    %v266 = vunpack.c.l.b16 %v185
    %v267 = vunpack.c.h.b16 %v185
    %v268 = vunpack.c.l.b16 %v186
    %v269 = vunpack.c.h.b16 %v186
    %v270 = vunpack.c.l.b16 %v187
    %v271 = vunpack.c.h.b16 %v187
    %v272 = vunpack.c.l.b16 %v188
    %v273 = vunpack.c.h.b16 %v188
    %v274 = vunpack.c.l.b16 %v189
    %v275 = vunpack.c.h.b16 %v189
    %v276 = vunpack.c.l.b16 %v190
    %v277 = vunpack.c.h.b16 %v190
    %v278 = vunpack.c.l.b16 %v191
    %v279 = vunpack.c.h.b16 %v191
    %v280 = vunpack.c.l.b16 %v192
    %v281 = vunpack.c.h.b16 %v192
    %v282 = vunpack.c.l.b16 %v193
    %v283 = vunpack.c.h.b16 %v193
    %v284 = vunpack.c.l.b16 %v194
    %v285 = vunpack.c.h.b16 %v194
    %v286 = vunpack.c.l.b16 %v195
    %v287 = vunpack.c.h.b16 %v195
    %v288 = vunpack.c.l.b16 %v196
    %v289 = vunpack.c.h.b16 %v196
    %v290 = vunpack.c.l.b16 %v197
    %v291 = vunpack.c.h.b16 %v197
    %v292 = vunpack.c.l.b16 %v198
    %v293 = vunpack.c.h.b16 %v198
    %v294 = vunpack.c.l.b16 %v199
    %v295 = vunpack.c.h.b16 %v199
    %v296 = vpack.c.b16 %v236, %v232
    %v297 = vpack.c.b16 %v237, %v233
    %v298 = vpack.c.b16 %v238, %v234
    %v299 = vpack.c.b16 %v239, %v235
    %v300 = vpack.c.b16 %v244, %v240
    %v301 = vpack.c.b16 %v245, %v241
    %v302 = vpack.c.b16 %v246, %v242
    %v303 = vpack.c.b16 %v247, %v243
    %v304 = vpack.c.b16 %v252, %v248
    %v305 = vpack.c.b16 %v253, %v249
    %v306 = vpack.c.b16 %v254, %v250
    %v307 = vpack.c.b16 %v255, %v251
    %v308 = vpack.c.b16 %v260, %v256
    %v309 = vpack.c.b16 %v261, %v257
    %v310 = vpack.c.b16 %v262, %v258
    %v311 = vpack.c.b16 %v263, %v259
    %v312 = vpack.c.b16 %v268, %v264
    %v313 = vpack.c.b16 %v269, %v265
    %v314 = vpack.c.b16 %v270, %v266
    %v315 = vpack.c.b16 %v271, %v267
    %v316 = vpack.c.b16 %v276, %v272
    %v317 = vpack.c.b16 %v277, %v273
    %v318 = vpack.c.b16 %v278, %v274
    %v319 = vpack.c.b16 %v279, %v275
    %v320 = vpack.c.b16 %v284, %v280
    %v321 = vpack.c.b16 %v285, %v281
    %v322 = vpack.c.b16 %v286, %v282
    %v323 = vpack.c.b16 %v287, %v283
    %v324 = vpack.c.b16 %v292, %v288
    %v325 = vpack.c.b16 %v293, %v289
    %v326 = vpack.c.b16 %v294, %v290
    %v327 = vpack.c.b16 %v295, %v291
    %360 = vmatpush.bf16.msra.mxu0 %v324
    %361 = vmatpush.bf16.msra.mxu0 %v320
    %362 = vmatpush.bf16.msra.mxu0 %v316
    %363 = vmatpush.bf16.msra.mxu0 %v312
    %364 = vmatpush.bf16.msra.mxu0 %v308
    %365 = vmatpush.bf16.msra.mxu0 %v304
    %366 = vmatpush.bf16.msra.mxu0 %v300
    %367 = vmatpush.bf16.msra.mxu0 %v296
    %368 = vmatmul.bf16.gmra.mxu0 %v167
    %v369 = vpop.f32.mrf.mxu0
    %v370 = vadd.f32 0.0, %v369
    %v371 = vpop.f32.mrf.mxu0
    %372 = vdwg.mxu0
    %373 = vmatpush.bf16.msra.mxu0 %v325
    %374 = vmatpush.bf16.msra.mxu0 %v321
    %375 = vmatpush.bf16.msra.mxu0 %v317
    %376 = vmatpush.bf16.msra.mxu0 %v313
    %377 = vmatpush.bf16.msra.mxu0 %v309
    %378 = vmatpush.bf16.msra.mxu0 %v305
    %379 = vmatpush.bf16.msra.mxu0 %v301
    %380 = vmatpush.bf16.msra.mxu0 %v297
    %381 = vmatmul.bf16.gmra.mxu0 %v167
    %v382 = vpop.f32.mrf.mxu0
    %v383 = vadd.f32 0.0, %v382
    %v384 = vpop.f32.mrf.mxu0
    %385 = vdwg.mxu0
    %386 = vmatpush.bf16.msra.mxu0 %v326
    %387 = vmatpush.bf16.msra.mxu0 %v322
    %388 = vmatpush.bf16.msra.mxu0 %v318
    %389 = vmatpush.bf16.msra.mxu0 %v314
    %390 = vmatpush.bf16.msra.mxu0 %v310
    %391 = vmatpush.bf16.msra.mxu0 %v306
    %392 = vmatpush.bf16.msra.mxu0 %v302
    %393 = vmatpush.bf16.msra.mxu0 %v298
    %394 = vmatmul.bf16.gmra.mxu0 %v167
    %v395 = vpop.f32.mrf.mxu0
    %v396 = vadd.f32 0.0, %v395
    %v397 = vpop.f32.mrf.mxu0
    %398 = vdwg.mxu0
    %399 = vmatpush.bf16.msra.mxu0 %v327
    %400 = vmatpush.bf16.msra.mxu0 %v323
    %401 = vmatpush.bf16.msra.mxu0 %v319
    %402 = vmatpush.bf16.msra.mxu0 %v315
    %403 = vmatpush.bf16.msra.mxu0 %v311
    %404 = vmatpush.bf16.msra.mxu0 %v307
    %405 = vmatpush.bf16.msra.mxu0 %v303
    %406 = vmatpush.bf16.msra.mxu0 %v299
    %407 = vmatmul.bf16.gmra.mxu0 %v167
    %v408 = vpop.f32.mrf.mxu0
    %v409 = vadd.f32 0.0, %v408
    %v410 = vpop.f32.mrf.mxu0
    %411 = vdwg.mxu0
    %v412 = vadd.f32 %v162, %v370
    %v413 = vadd.f32 %v163, %v383
    %v414 = vadd.f32 %v164, %v396
    %v415 = vadd.f32 %v165, %v409
    %v416 = vxor.u32 %v412, 2147483648
    %v417 = vmul.f32 %v416, 1.442695
    %v418 = vpow.pop %v417
    %v419 = vadd.f32 %v418, 1.0
    %v420 = vrcp.pop %v419
    %v421 = vmul.f32 %v419, %v420
    %v422 = vsub.f32 1.0, %v421
    %v423 = vmul.f32 %v420, %v422
    %v424 = vadd.f32 %v420, %v423
    %vm425 = vweird.f32 %v419
    %vm426 = vweird.f32 %v420
    %vm427 = vmor %vm425, %vm426
    %v428 = vsel %vm427, %v420, %v424
    %v429 = vand.u32 2147483647, %v419
    %vm430 = vcmp.eq.f32.partialorder %v429, 8.507059e+37
    %v431 = vand.u32 %v419, 2147483648
    %v432 = vor.u32 1.1754944e-38, %v431
    %v433 = vsel %vm430, %v432, %v428
    %v434 = vmul.f32 1.0, %v433
    %v435 = vxor.u32 %v413, 2147483648
    %v436 = vmul.f32 %v435, 1.442695
    %v437 = vpow.pop %v436
    %v438 = vadd.f32 %v437, 1.0
    %v439 = vrcp.pop %v438
    %v440 = vmul.f32 %v438, %v439
    %v441 = vsub.f32 1.0, %v440
    %v442 = vmul.f32 %v439, %v441
    %v443 = vadd.f32 %v439, %v442
    %vm444 = vweird.f32 %v438
    %vm445 = vweird.f32 %v439
    %vm446 = vmor %vm444, %vm445
    %v447 = vsel %vm446, %v439, %v443
    %v448 = vand.u32 2147483647, %v438
    %vm449 = vcmp.eq.f32.partialorder %v448, 8.507059e+37
    %v450 = vand.u32 %v438, 2147483648
    %v451 = vor.u32 1.1754944e-38, %v450
    %v452 = vsel %vm449, %v451, %v447
    %v453 = vmul.f32 1.0, %v452
    %v454 = vtanh.pop %v414
    %v455 = vxor.u32 %v415, 2147483648
    %v456 = vmul.f32 %v455, 1.442695
    %v457 = vpow.pop %v456
    %v458 = vadd.f32 %v457, 1.0
    %v459 = vrcp.pop %v458
    %v460 = vmul.f32 %v458, %v459
    %v461 = vsub.f32 1.0, %v460
    %v462 = vmul.f32 %v459, %v461
    %v463 = vadd.f32 %v459, %v462
    %vm464 = vweird.f32 %v458
    %vm465 = vweird.f32 %v459
    %vm466 = vmor %vm464, %vm465
    %v467 = vsel %vm466, %v459, %v463
    %v468 = vand.u32 2147483647, %v458
    %vm469 = vcmp.eq.f32.partialorder %v468, 8.507059e+37
    %v470 = vand.u32 %v458, 2147483648
    %v471 = vor.u32 1.1754944e-38, %v470
    %v472 = vsel %vm469, %v471, %v467
    %v473 = vmul.f32 1.0, %v472
    %v474 = vld [vmem:[#allocation3] sm:$0xff]
    %v475 = vmul.f32 %v453, %v474
    %v476 = vmul.f32 %v434, %v454
    %v477 = vadd.f32 %v475, %v476
    %v478 = vtanh.pop %v477
    %v479 = vmul.f32 %v473, %v478
    %480 = vst [vmem:[#allocation3] sm:$0xff] %v477
    %481 = vst [vmem:[#allocation2] sm:$0xff] %v479
    %v482 = vpack.c.bf16 %v479, %v479
    %483 = vst [vmem:[%s3] sm:$0xf] %v482
    %s484 = scalar_lea.vmem [#allocation7], 112
    %v485 = vld [vmem:[%s484] sm:$0xff]
    %v486 = vld [vmem:[%s484 + $0x8] sm:$0xff]
    %v487 = vunpack.c.l.bf16 %v485
    %v488 = vunpack.c.h.bf16 %v485
    %v489 = vunpack.c.l.bf16 %v486
    %v490 = vunpack.c.h.bf16 %v486
    %v491 = vld [vmem:[#allocation4] sm:$0xff]
    %v492 = vpack.c.bf16 %v491, %v491
    %s493 = scalar_lea.vmem [#allocation8], 256
    %v494 = vld [vmem:[%s493] sm:$0xff]
    %v495 = vld [vmem:[%s493 + $0x8] sm:$0xff]
    %v496 = vld [vmem:[%s493 + $0x10] sm:$0xff]
    %v497 = vld [vmem:[%s493 + $0x18] sm:$0xff]
    %v498 = vld [vmem:[%s493 + $0x20] sm:$0xff]
    %v499 = vld [vmem:[%s493 + $0x28] sm:$0xff]
    %v500 = vld [vmem:[%s493 + $0x30] sm:$0xff]
    %v501 = vld [vmem:[%s493 + $0x38] sm:$0xff]
    %v502 = vld [vmem:[%s493 + $0x40] sm:$0xff]
    %v503 = vld [vmem:[%s493 + $0x48] sm:$0xff]
    %v504 = vld [vmem:[%s493 + $0x50] sm:$0xff]
    %v505 = vld [vmem:[%s493 + $0x58] sm:$0xff]
    %v506 = vld [vmem:[%s493 + $0x60] sm:$0xff]
    %v507 = vld [vmem:[%s493 + $0x68] sm:$0xff]
    %v508 = vld [vmem:[%s493 + $0x70] sm:$0xff]
    %v509 = vld [vmem:[%s493 + $0x78] sm:$0xff]
    %v510 = vld [vmem:[%s493 + $0x80] sm:$0xff]
    %v511 = vld [vmem:[%s493 + $0x88] sm:$0xff]
    %v512 = vld [vmem:[%s493 + $0x90] sm:$0xff]
    %v513 = vld [vmem:[%s493 + $0x98] sm:$0xff]
    %v514 = vld [vmem:[%s493 + $0xa0] sm:$0xff]
    %v515 = vld [vmem:[%s493 + $0xa8] sm:$0xff]
    %v516 = vld [vmem:[%s493 + $0xb0] sm:$0xff]
    %v517 = vld [vmem:[%s493 + $0xb8] sm:$0xff]
    %v518 = vld [vmem:[%s493 + $0xc0] sm:$0xff]
    %v519 = vld [vmem:[%s493 + $0xc8] sm:$0xff]
    %v520 = vld [vmem:[%s493 + $0xd0] sm:$0xff]
    %v521 = vld [vmem:[%s493 + $0xd8] sm:$0xff]
    %v522 = vld [vmem:[%s493 + $0xe0] sm:$0xff]
    %v523 = vld [vmem:[%s493 + $0xe8] sm:$0xff]
    %v524 = vld [vmem:[%s493 + $0xf0] sm:$0xff]
    %v525 = vld [vmem:[%s493 + $0xf8] sm:$0xff]
    %v558 = vunpack.c.l.b16 %v494
    %v559 = vunpack.c.h.b16 %v494
    %v560 = vunpack.c.l.b16 %v495
    %v561 = vunpack.c.h.b16 %v495
    %v562 = vunpack.c.l.b16 %v496
    %v563 = vunpack.c.h.b16 %v496
    %v564 = vunpack.c.l.b16 %v497
    %v565 = vunpack.c.h.b16 %v497
    %v566 = vunpack.c.l.b16 %v498
    %v567 = vunpack.c.h.b16 %v498
    %v568 = vunpack.c.l.b16 %v499
    %v569 = vunpack.c.h.b16 %v499
    %v570 = vunpack.c.l.b16 %v500
    %v571 = vunpack.c.h.b16 %v500
    %v572 = vunpack.c.l.b16 %v501
    %v573 = vunpack.c.h.b16 %v501
    %v574 = vunpack.c.l.b16 %v502
    %v575 = vunpack.c.h.b16 %v502
    %v576 = vunpack.c.l.b16 %v503
    %v577 = vunpack.c.h.b16 %v503
    %v578 = vunpack.c.l.b16 %v504
    %v579 = vunpack.c.h.b16 %v504
    %v580 = vunpack.c.l.b16 %v505
    %v581 = vunpack.c.h.b16 %v505
    %v582 = vunpack.c.l.b16 %v506
    %v583 = vunpack.c.h.b16 %v506
    %v584 = vunpack.c.l.b16 %v507
    %v585 = vunpack.c.h.b16 %v507
    %v586 = vunpack.c.l.b16 %v508
    %v587 = vunpack.c.h.b16 %v508
    %v588 = vunpack.c.l.b16 %v509
    %v589 = vunpack.c.h.b16 %v509
    %v590 = vunpack.c.l.b16 %v510
    %v591 = vunpack.c.h.b16 %v510
    %v592 = vunpack.c.l.b16 %v511
    %v593 = vunpack.c.h.b16 %v511
    %v594 = vunpack.c.l.b16 %v512
    %v595 = vunpack.c.h.b16 %v512
    %v596 = vunpack.c.l.b16 %v513
    %v597 = vunpack.c.h.b16 %v513
    %v598 = vunpack.c.l.b16 %v514
    %v599 = vunpack.c.h.b16 %v514
    %v600 = vunpack.c.l.b16 %v515
    %v601 = vunpack.c.h.b16 %v515
    %v602 = vunpack.c.l.b16 %v516
    %v603 = vunpack.c.h.b16 %v516
    %v604 = vunpack.c.l.b16 %v517
    %v605 = vunpack.c.h.b16 %v517
    %v606 = vunpack.c.l.b16 %v518
    %v607 = vunpack.c.h.b16 %v518
    %v608 = vunpack.c.l.b16 %v519
    %v609 = vunpack.c.h.b16 %v519
    %v610 = vunpack.c.l.b16 %v520
    %v611 = vunpack.c.h.b16 %v520
    %v612 = vunpack.c.l.b16 %v521
    %v613 = vunpack.c.h.b16 %v521
    %v614 = vunpack.c.l.b16 %v522
    %v615 = vunpack.c.h.b16 %v522
    %v616 = vunpack.c.l.b16 %v523
    %v617 = vunpack.c.h.b16 %v523
    %v618 = vunpack.c.l.b16 %v524
    %v619 = vunpack.c.h.b16 %v524
    %v620 = vunpack.c.l.b16 %v525
    %v621 = vunpack.c.h.b16 %v525
    %v622 = vpack.c.b16 %v562, %v558
    %v623 = vpack.c.b16 %v563, %v559
    %v624 = vpack.c.b16 %v564, %v560
    %v625 = vpack.c.b16 %v565, %v561
    %v626 = vpack.c.b16 %v570, %v566
    %v627 = vpack.c.b16 %v571, %v567
    %v628 = vpack.c.b16 %v572, %v568
    %v629 = vpack.c.b16 %v573, %v569
    %v630 = vpack.c.b16 %v578, %v574
    %v631 = vpack.c.b16 %v579, %v575
    %v632 = vpack.c.b16 %v580, %v576
    %v633 = vpack.c.b16 %v581, %v577
    %v634 = vpack.c.b16 %v586, %v582
    %v635 = vpack.c.b16 %v587, %v583
    %v636 = vpack.c.b16 %v588, %v584
    %v637 = vpack.c.b16 %v589, %v585
    %v638 = vpack.c.b16 %v594, %v590
    %v639 = vpack.c.b16 %v595, %v591
    %v640 = vpack.c.b16 %v596, %v592
    %v641 = vpack.c.b16 %v597, %v593
    %v642 = vpack.c.b16 %v602, %v598
    %v643 = vpack.c.b16 %v603, %v599
    %v644 = vpack.c.b16 %v604, %v600
    %v645 = vpack.c.b16 %v605, %v601
    %v646 = vpack.c.b16 %v610, %v606
    %v647 = vpack.c.b16 %v611, %v607
    %v648 = vpack.c.b16 %v612, %v608
    %v649 = vpack.c.b16 %v613, %v609
    %v650 = vpack.c.b16 %v618, %v614
    %v651 = vpack.c.b16 %v619, %v615
    %v652 = vpack.c.b16 %v620, %v616
    %v653 = vpack.c.b16 %v621, %v617
    %686 = vmatpush.bf16.msra.mxu0 %v650
    %687 = vmatpush.bf16.msra.mxu0 %v646
    %688 = vmatpush.bf16.msra.mxu0 %v642
    %689 = vmatpush.bf16.msra.mxu0 %v638
    %690 = vmatpush.bf16.msra.mxu0 %v634
    %691 = vmatpush.bf16.msra.mxu0 %v630
    %692 = vmatpush.bf16.msra.mxu0 %v626
    %693 = vmatpush.bf16.msra.mxu0 %v622
    %694 = vmatmul.bf16.gmra.mxu0 %v492
    %v695 = vpop.f32.mrf.mxu0
    %v696 = vadd.f32 0.0, %v695
    %v697 = vpop.f32.mrf.mxu0
    %698 = vdwg.mxu0
    %699 = vmatpush.bf16.msra.mxu0 %v651
    %700 = vmatpush.bf16.msra.mxu0 %v647
    %701 = vmatpush.bf16.msra.mxu0 %v643
    %702 = vmatpush.bf16.msra.mxu0 %v639
    %703 = vmatpush.bf16.msra.mxu0 %v635
    %704 = vmatpush.bf16.msra.mxu0 %v631
    %705 = vmatpush.bf16.msra.mxu0 %v627
    %706 = vmatpush.bf16.msra.mxu0 %v623
    %707 = vmatmul.bf16.gmra.mxu0 %v492
    %v708 = vpop.f32.mrf.mxu0
    %v709 = vadd.f32 0.0, %v708
    %v710 = vpop.f32.mrf.mxu0
    %711 = vdwg.mxu0
    %712 = vmatpush.bf16.msra.mxu0 %v652
    %713 = vmatpush.bf16.msra.mxu0 %v648
    %714 = vmatpush.bf16.msra.mxu0 %v644
    %715 = vmatpush.bf16.msra.mxu0 %v640
    %716 = vmatpush.bf16.msra.mxu0 %v636
    %717 = vmatpush.bf16.msra.mxu0 %v632
    %718 = vmatpush.bf16.msra.mxu0 %v628
    %719 = vmatpush.bf16.msra.mxu0 %v624
    %720 = vmatmul.bf16.gmra.mxu0 %v492
    %v721 = vpop.f32.mrf.mxu0
    %v722 = vadd.f32 0.0, %v721
    %v723 = vpop.f32.mrf.mxu0
    %724 = vdwg.mxu0
    %725 = vmatpush.bf16.msra.mxu0 %v653
    %726 = vmatpush.bf16.msra.mxu0 %v649
    %727 = vmatpush.bf16.msra.mxu0 %v645
    %728 = vmatpush.bf16.msra.mxu0 %v641
    %729 = vmatpush.bf16.msra.mxu0 %v637
    %730 = vmatpush.bf16.msra.mxu0 %v633
    %731 = vmatpush.bf16.msra.mxu0 %v629
    %732 = vmatpush.bf16.msra.mxu0 %v625
    %733 = vmatmul.bf16.gmra.mxu0 %v492
    %v734 = vpop.f32.mrf.mxu0
    %v735 = vadd.f32 0.0, %v734
    %v736 = vpop.f32.mrf.mxu0
    %737 = vdwg.mxu0
    %v738 = vadd.f32 %v487, %v696
    %v739 = vadd.f32 %v488, %v709
    %v740 = vadd.f32 %v489, %v722
    %v741 = vadd.f32 %v490, %v735
    %v742 = vxor.u32 %v738, 2147483648
    %v743 = vmul.f32 %v742, 1.442695
    %v744 = vpow.pop %v743
    %v745 = vadd.f32 %v744, 1.0
    %v746 = vrcp.pop %v745
    %v747 = vmul.f32 %v745, %v746
    %v748 = vsub.f32 1.0, %v747
    %v749 = vmul.f32 %v746, %v748
    %v750 = vadd.f32 %v746, %v749
    %vm751 = vweird.f32 %v745
    %vm752 = vweird.f32 %v746
    %vm753 = vmor %vm751, %vm752
    %v754 = vsel %vm753, %v746, %v750
    %v755 = vand.u32 2147483647, %v745
    %vm756 = vcmp.eq.f32.partialorder %v755, 8.507059e+37
    %v757 = vand.u32 %v745, 2147483648
    %v758 = vor.u32 1.1754944e-38, %v757
    %v759 = vsel %vm756, %v758, %v754
    %v760 = vmul.f32 1.0, %v759
    %v761 = vxor.u32 %v739, 2147483648
    %v762 = vmul.f32 %v761, 1.442695
    %v763 = vpow.pop %v762
    %v764 = vadd.f32 %v763, 1.0
    %v765 = vrcp.pop %v764
    %v766 = vmul.f32 %v764, %v765
    %v767 = vsub.f32 1.0, %v766
    %v768 = vmul.f32 %v765, %v767
    %v769 = vadd.f32 %v765, %v768
    %vm770 = vweird.f32 %v764
    %vm771 = vweird.f32 %v765
    %vm772 = vmor %vm770, %vm771
    %v773 = vsel %vm772, %v765, %v769
    %v774 = vand.u32 2147483647, %v764
    %vm775 = vcmp.eq.f32.partialorder %v774, 8.507059e+37
    %v776 = vand.u32 %v764, 2147483648
    %v777 = vor.u32 1.1754944e-38, %v776
    %v778 = vsel %vm775, %v777, %v773
    %v779 = vmul.f32 1.0, %v778
    %v780 = vtanh.pop %v740
    %v781 = vxor.u32 %v741, 2147483648
    %v782 = vmul.f32 %v781, 1.442695
    %v783 = vpow.pop %v782
    %v784 = vadd.f32 %v783, 1.0
    %v785 = vrcp.pop %v784
    %v786 = vmul.f32 %v784, %v785
    %v787 = vsub.f32 1.0, %v786
    %v788 = vmul.f32 %v785, %v787
    %v789 = vadd.f32 %v785, %v788
    %vm790 = vweird.f32 %v784
    %vm791 = vweird.f32 %v785
    %vm792 = vmor %vm790, %vm791
    %v793 = vsel %vm792, %v785, %v789
    %v794 = vand.u32 2147483647, %v784
    %vm795 = vcmp.eq.f32.partialorder %v794, 8.507059e+37
    %v796 = vand.u32 %v784, 2147483648
    %v797 = vor.u32 1.1754944e-38, %v796
    %v798 = vsel %vm795, %v797, %v793
    %v799 = vmul.f32 1.0, %v798
    %v800 = vld [vmem:[#allocation5] sm:$0xff]
    %v801 = vmul.f32 %v779, %v800
    %v802 = vmul.f32 %v760, %v780
    %v803 = vadd.f32 %v801, %v802
    %v804 = vtanh.pop %v803
    %v805 = vmul.f32 %v799, %v804
    %806 = vst [vmem:[#allocation5] sm:$0xff] %v803
    %807 = vst [vmem:[#allocation4] sm:$0xff] %v805
    %v808 = vpack.c.bf16 %v805, %v805
    %s809 = scalar_lea.vmem %s149, 28
    %810 = vst [vmem:[%s809] sm:$0xf] %v808
    %s811 = scalar_lea.vmem [#allocation6], 16
    %v812 = vld [vmem:[%s811] sm:$0xff]
    %v813 = vld [vmem:[%s811 + $0x8] sm:$0xff]
    %v814 = vunpack.c.l.bf16 %v812
    %v815 = vunpack.c.h.bf16 %v812
    %v816 = vunpack.c.l.bf16 %v813
    %v817 = vunpack.c.h.bf16 %v813
    %v818 = vld [vmem:[#allocation2] sm:$0xff]
    %v819 = vpack.c.bf16 %v818, %v818
    %v820 = vld [vmem:[#allocation8] sm:$0xff]
    %v821 = vld [vmem:[#allocation8 + $0x8] sm:$0xff]
    %v822 = vld [vmem:[#allocation8 + $0x10] sm:$0xff]
    %v823 = vld [vmem:[#allocation8 + $0x18] sm:$0xff]
    %v824 = vld [vmem:[#allocation8 + $0x20] sm:$0xff]
    %v825 = vld [vmem:[#allocation8 + $0x28] sm:$0xff]
    %v826 = vld [vmem:[#allocation8 + $0x30] sm:$0xff]
    %v827 = vld [vmem:[#allocation8 + $0x38] sm:$0xff]
    %v828 = vld [vmem:[#allocation8 + $0x40] sm:$0xff]
    %v829 = vld [vmem:[#allocation8 + $0x48] sm:$0xff]
    %v830 = vld [vmem:[#allocation8 + $0x50] sm:$0xff]
    %v831 = vld [vmem:[#allocation8 + $0x58] sm:$0xff]
    %v832 = vld [vmem:[#allocation8 + $0x60] sm:$0xff]
    %v833 = vld [vmem:[#allocation8 + $0x68] sm:$0xff]
    %v834 = vld [vmem:[#allocation8 + $0x70] sm:$0xff]
    %v835 = vld [vmem:[#allocation8 + $0x78] sm:$0xff]
    %v836 = vld [vmem:[#allocation8 + $0x80] sm:$0xff]
    %v837 = vld [vmem:[#allocation8 + $0x88] sm:$0xff]
    %v838 = vld [vmem:[#allocation8 + $0x90] sm:$0xff]
    %v839 = vld [vmem:[#allocation8 + $0x98] sm:$0xff]
    %v840 = vld [vmem:[#allocation8 + $0xa0] sm:$0xff]
    %v841 = vld [vmem:[#allocation8 + $0xa8] sm:$0xff]
    %v842 = vld [vmem:[#allocation8 + $0xb0] sm:$0xff]
    %v843 = vld [vmem:[#allocation8 + $0xb8] sm:$0xff]
    %v844 = vld [vmem:[#allocation8 + $0xc0] sm:$0xff]
    %v845 = vld [vmem:[#allocation8 + $0xc8] sm:$0xff]
    %v846 = vld [vmem:[#allocation8 + $0xd0] sm:$0xff]
    %v847 = vld [vmem:[#allocation8 + $0xd8] sm:$0xff]
    %v848 = vld [vmem:[#allocation8 + $0xe0] sm:$0xff]
    %v849 = vld [vmem:[#allocation8 + $0xe8] sm:$0xff]
    %v850 = vld [vmem:[#allocation8 + $0xf0] sm:$0xff]
    %v851 = vld [vmem:[#allocation8 + $0xf8] sm:$0xff]
    %v884 = vunpack.c.l.b16 %v820
    %v885 = vunpack.c.h.b16 %v820
    %v886 = vunpack.c.l.b16 %v821
    %v887 = vunpack.c.h.b16 %v821
    %v888 = vunpack.c.l.b16 %v822
    %v889 = vunpack.c.h.b16 %v822
    %v890 = vunpack.c.l.b16 %v823
    %v891 = vunpack.c.h.b16 %v823
    %v892 = vunpack.c.l.b16 %v824
    %v893 = vunpack.c.h.b16 %v824
    %v894 = vunpack.c.l.b16 %v825
    %v895 = vunpack.c.h.b16 %v825
    %v896 = vunpack.c.l.b16 %v826
    %v897 = vunpack.c.h.b16 %v826
    %v898 = vunpack.c.l.b16 %v827
    %v899 = vunpack.c.h.b16 %v827
    %v900 = vunpack.c.l.b16 %v828
    %v901 = vunpack.c.h.b16 %v828
    %v902 = vunpack.c.l.b16 %v829
    %v903 = vunpack.c.h.b16 %v829
    %v904 = vunpack.c.l.b16 %v830
    %v905 = vunpack.c.h.b16 %v830
    %v906 = vunpack.c.l.b16 %v831
    %v907 = vunpack.c.h.b16 %v831
    %v908 = vunpack.c.l.b16 %v832
    %v909 = vunpack.c.h.b16 %v832
    %v910 = vunpack.c.l.b16 %v833
    %v911 = vunpack.c.h.b16 %v833
    %v912 = vunpack.c.l.b16 %v834
    %v913 = vunpack.c.h.b16 %v834
    %v914 = vunpack.c.l.b16 %v835
    %v915 = vunpack.c.h.b16 %v835
    %v916 = vunpack.c.l.b16 %v836
    %v917 = vunpack.c.h.b16 %v836
    %v918 = vunpack.c.l.b16 %v837
    %v919 = vunpack.c.h.b16 %v837
    %v920 = vunpack.c.l.b16 %v838
    %v921 = vunpack.c.h.b16 %v838
    %v922 = vunpack.c.l.b16 %v839
    %v923 = vunpack.c.h.b16 %v839
    %v924 = vunpack.c.l.b16 %v840
    %v925 = vunpack.c.h.b16 %v840
    %v926 = vunpack.c.l.b16 %v841
    %v927 = vunpack.c.h.b16 %v841
    %v928 = vunpack.c.l.b16 %v842
    %v929 = vunpack.c.h.b16 %v842
    %v930 = vunpack.c.l.b16 %v843
    %v931 = vunpack.c.h.b16 %v843
    %v932 = vunpack.c.l.b16 %v844
    %v933 = vunpack.c.h.b16 %v844
    %v934 = vunpack.c.l.b16 %v845
    %v935 = vunpack.c.h.b16 %v845
    %v936 = vunpack.c.l.b16 %v846
    %v937 = vunpack.c.h.b16 %v846
    %v938 = vunpack.c.l.b16 %v847
    %v939 = vunpack.c.h.b16 %v847
    %v940 = vunpack.c.l.b16 %v848
    %v941 = vunpack.c.h.b16 %v848
    %v942 = vunpack.c.l.b16 %v849
    %v943 = vunpack.c.h.b16 %v849
    %v944 = vunpack.c.l.b16 %v850
    %v945 = vunpack.c.h.b16 %v850
    %v946 = vunpack.c.l.b16 %v851
    %v947 = vunpack.c.h.b16 %v851
    %v948 = vpack.c.b16 %v888, %v884
    %v949 = vpack.c.b16 %v889, %v885
    %v950 = vpack.c.b16 %v890, %v886
    %v951 = vpack.c.b16 %v891, %v887
    %v952 = vpack.c.b16 %v896, %v892
    %v953 = vpack.c.b16 %v897, %v893
    %v954 = vpack.c.b16 %v898, %v894
    %v955 = vpack.c.b16 %v899, %v895
    %v956 = vpack.c.b16 %v904, %v900
    %v957 = vpack.c.b16 %v905, %v901
    %v958 = vpack.c.b16 %v906, %v902
    %v959 = vpack.c.b16 %v907, %v903
    %v960 = vpack.c.b16 %v912, %v908
    %v961 = vpack.c.b16 %v913, %v909
    %v962 = vpack.c.b16 %v914, %v910
    %v963 = vpack.c.b16 %v915, %v911
    %v964 = vpack.c.b16 %v920, %v916
    %v965 = vpack.c.b16 %v921, %v917
    %v966 = vpack.c.b16 %v922, %v918
    %v967 = vpack.c.b16 %v923, %v919
    %v968 = vpack.c.b16 %v928, %v924
    %v969 = vpack.c.b16 %v929, %v925
    %v970 = vpack.c.b16 %v930, %v926
    %v971 = vpack.c.b16 %v931, %v927
    %v972 = vpack.c.b16 %v936, %v932
    %v973 = vpack.c.b16 %v937, %v933
    %v974 = vpack.c.b16 %v938, %v934
    %v975 = vpack.c.b16 %v939, %v935
    %v976 = vpack.c.b16 %v944, %v940
    %v977 = vpack.c.b16 %v945, %v941
    %v978 = vpack.c.b16 %v946, %v942
    %v979 = vpack.c.b16 %v947, %v943
    %1012 = vmatpush.bf16.msra.mxu0 %v976
    %1013 = vmatpush.bf16.msra.mxu0 %v972
    %1014 = vmatpush.bf16.msra.mxu0 %v968
    %1015 = vmatpush.bf16.msra.mxu0 %v964
    %1016 = vmatpush.bf16.msra.mxu0 %v960
    %1017 = vmatpush.bf16.msra.mxu0 %v956
    %1018 = vmatpush.bf16.msra.mxu0 %v952
    %1019 = vmatpush.bf16.msra.mxu0 %v948
    %1020 = vmatmul.bf16.gmra.mxu0 %v819
    %v1021 = vpop.f32.mrf.mxu0
    %v1022 = vadd.f32 0.0, %v1021
    %v1023 = vpop.f32.mrf.mxu0
    %1024 = vdwg.mxu0
    %1025 = vmatpush.bf16.msra.mxu0 %v977
    %1026 = vmatpush.bf16.msra.mxu0 %v973
    %1027 = vmatpush.bf16.msra.mxu0 %v969
    %1028 = vmatpush.bf16.msra.mxu0 %v965
    %1029 = vmatpush.bf16.msra.mxu0 %v961
    %1030 = vmatpush.bf16.msra.mxu0 %v957
    %1031 = vmatpush.bf16.msra.mxu0 %v953
    %1032 = vmatpush.bf16.msra.mxu0 %v949
    %1033 = vmatmul.bf16.gmra.mxu0 %v819
    %v1034 = vpop.f32.mrf.mxu0
    %v1035 = vadd.f32 0.0, %v1034
    %v1036 = vpop.f32.mrf.mxu0
    %1037 = vdwg.mxu0
    %1038 = vmatpush.bf16.msra.mxu0 %v978
    %1039 = vmatpush.bf16.msra.mxu0 %v974
    %1040 = vmatpush.bf16.msra.mxu0 %v970
    %1041 = vmatpush.bf16.msra.mxu0 %v966
    %1042 = vmatpush.bf16.msra.mxu0 %v962
    %1043 = vmatpush.bf16.msra.mxu0 %v958
    %1044 = vmatpush.bf16.msra.mxu0 %v954
    %1045 = vmatpush.bf16.msra.mxu0 %v950
    %1046 = vmatmul.bf16.gmra.mxu0 %v819
    %v1047 = vpop.f32.mrf.mxu0
    %v1048 = vadd.f32 0.0, %v1047
    %v1049 = vpop.f32.mrf.mxu0
    %1050 = vdwg.mxu0
    %1051 = vmatpush.bf16.msra.mxu0 %v979
    %1052 = vmatpush.bf16.msra.mxu0 %v975
    %1053 = vmatpush.bf16.msra.mxu0 %v971
    %1054 = vmatpush.bf16.msra.mxu0 %v967
    %1055 = vmatpush.bf16.msra.mxu0 %v963
    %1056 = vmatpush.bf16.msra.mxu0 %v959
    %1057 = vmatpush.bf16.msra.mxu0 %v955
    %1058 = vmatpush.bf16.msra.mxu0 %v951
    %1059 = vmatmul.bf16.gmra.mxu0 %v819
    %v1060 = vpop.f32.mrf.mxu0
    %v1061 = vadd.f32 0.0, %v1060
    %v1062 = vpop.f32.mrf.mxu0
    %1063 = vdwg.mxu0
    %v1064 = vadd.f32 %v814, %v1022
    %v1065 = vadd.f32 %v815, %v1035
    %v1066 = vadd.f32 %v816, %v1048
    %v1067 = vadd.f32 %v817, %v1061
    %v1068 = vxor.u32 %v1064, 2147483648
    %v1069 = vmul.f32 %v1068, 1.442695
    %v1070 = vpow.pop %v1069
    %v1071 = vadd.f32 %v1070, 1.0
    %v1072 = vrcp.pop %v1071
    %v1073 = vmul.f32 %v1071, %v1072
    %v1074 = vsub.f32 1.0, %v1073
    %v1075 = vmul.f32 %v1072, %v1074
    %v1076 = vadd.f32 %v1072, %v1075
    %vm1077 = vweird.f32 %v1071
    %vm1078 = vweird.f32 %v1072
    %vm1079 = vmor %vm1077, %vm1078
    %v1080 = vsel %vm1079, %v1072, %v1076
    %v1081 = vand.u32 2147483647, %v1071
    %vm1082 = vcmp.eq.f32.partialorder %v1081, 8.507059e+37
    %v1083 = vand.u32 %v1071, 2147483648
    %v1084 = vor.u32 1.1754944e-38, %v1083
    %v1085 = vsel %vm1082, %v1084, %v1080
    %v1086 = vmul.f32 1.0, %v1085
    %v1087 = vxor.u32 %v1065, 2147483648
    %v1088 = vmul.f32 %v1087, 1.442695
    %v1089 = vpow.pop %v1088
    %v1090 = vadd.f32 %v1089, 1.0
    %v1091 = vrcp.pop %v1090
    %v1092 = vmul.f32 %v1090, %v1091
    %v1093 = vsub.f32 1.0, %v1092
    %v1094 = vmul.f32 %v1091, %v1093
    %v1095 = vadd.f32 %v1091, %v1094
    %vm1096 = vweird.f32 %v1090
    %vm1097 = vweird.f32 %v1091
    %vm1098 = vmor %vm1096, %vm1097
    %v1099 = vsel %vm1098, %v1091, %v1095
    %v1100 = vand.u32 2147483647, %v1090
    %vm1101 = vcmp.eq.f32.partialorder %v1100, 8.507059e+37
    %v1102 = vand.u32 %v1090, 2147483648
    %v1103 = vor.u32 1.1754944e-38, %v1102
    %v1104 = vsel %vm1101, %v1103, %v1099
    %v1105 = vmul.f32 1.0, %v1104
    %v1106 = vtanh.pop %v1066
    %v1107 = vxor.u32 %v1067, 2147483648
    %v1108 = vmul.f32 %v1107, 1.442695
    %v1109 = vpow.pop %v1108
    %v1110 = vadd.f32 %v1109, 1.0
    %v1111 = vrcp.pop %v1110
    %v1112 = vmul.f32 %v1110, %v1111
    %v1113 = vsub.f32 1.0, %v1112
    %v1114 = vmul.f32 %v1111, %v1113
    %v1115 = vadd.f32 %v1111, %v1114
    %vm1116 = vweird.f32 %v1110
    %vm1117 = vweird.f32 %v1111
    %vm1118 = vmor %vm1116, %vm1117
    %v1119 = vsel %vm1118, %v1111, %v1115
    %v1120 = vand.u32 2147483647, %v1110
    %vm1121 = vcmp.eq.f32.partialorder %v1120, 8.507059e+37
    %v1122 = vand.u32 %v1110, 2147483648
    %v1123 = vor.u32 1.1754944e-38, %v1122
    %v1124 = vsel %vm1121, %v1123, %v1119
    %v1125 = vmul.f32 1.0, %v1124
    %v1126 = vld [vmem:[#allocation3] sm:$0xff]
    %v1127 = vmul.f32 %v1105, %v1126
    %v1128 = vmul.f32 %v1086, %v1106
    %v1129 = vadd.f32 %v1127, %v1128
    %v1130 = vtanh.pop %v1129
    %v1131 = vmul.f32 %v1125, %v1130
    %1132 = vst [vmem:[#allocation3] sm:$0xff] %v1129
    %1133 = vst [vmem:[#allocation2] sm:$0xff] %v1131
    %v1134 = vpack.c.bf16 %v1131, %v1131
    %s1135 = scalar_lea.vmem %s3, 4
    %1136 = vst [vmem:[%s1135] sm:$0xf] %v1134
    %s1137 = scalar_lea.vmem [#allocation7], 96
    %v1138 = vld [vmem:[%s1137] sm:$0xff]
    %v1139 = vld [vmem:[%s1137 + $0x8] sm:$0xff]
    %v1140 = vunpack.c.l.bf16 %v1138
    %v1141 = vunpack.c.h.bf16 %v1138
    %v1142 = vunpack.c.l.bf16 %v1139
    %v1143 = vunpack.c.h.bf16 %v1139
    %v1144 = vld [vmem:[#allocation4] sm:$0xff]
    %v1145 = vpack.c.bf16 %v1144, %v1144
    %v1146 = vld [vmem:[%s493] sm:$0xff]
    %v1147 = vld [vmem:[%s493 + $0x8] sm:$0xff]
    %v1148 = vld [vmem:[%s493 + $0x10] sm:$0xff]
    %v1149 = vld [vmem:[%s493 + $0x18] sm:$0xff]
    %v1150 = vld [vmem:[%s493 + $0x20] sm:$0xff]
    %v1151 = vld [vmem:[%s493 + $0x28] sm:$0xff]
    %v1152 = vld [vmem:[%s493 + $0x30] sm:$0xff]
    %v1153 = vld [vmem:[%s493 + $0x38] sm:$0xff]
    %v1154 = vld [vmem:[%s493 + $0x40] sm:$0xff]
    %v1155 = vld [vmem:[%s493 + $0x48] sm:$0xff]
    %v1156 = vld [vmem:[%s493 + $0x50] sm:$0xff]
    %v1157 = vld [vmem:[%s493 + $0x58] sm:$0xff]
    %v1158 = vld [vmem:[%s493 + $0x60] sm:$0xff]
    %v1159 = vld [vmem:[%s493 + $0x68] sm:$0xff]
    %v1160 = vld [vmem:[%s493 + $0x70] sm:$0xff]
    %v1161 = vld [vmem:[%s493 + $0x78] sm:$0xff]
    %v1162 = vld [vmem:[%s493 + $0x80] sm:$0xff]
    %v1163 = vld [vmem:[%s493 + $0x88] sm:$0xff]
    %v1164 = vld [vmem:[%s493 + $0x90] sm:$0xff]
    %v1165 = vld [vmem:[%s493 + $0x98] sm:$0xff]
    %v1166 = vld [vmem:[%s493 + $0xa0] sm:$0xff]
    %v1167 = vld [vmem:[%s493 + $0xa8] sm:$0xff]
    %v1168 = vld [vmem:[%s493 + $0xb0] sm:$0xff]
    %v1169 = vld [vmem:[%s493 + $0xb8] sm:$0xff]
    %v1170 = vld [vmem:[%s493 + $0xc0] sm:$0xff]
    %v1171 = vld [vmem:[%s493 + $0xc8] sm:$0xff]
    %v1172 = vld [vmem:[%s493 + $0xd0] sm:$0xff]
    %v1173 = vld [vmem:[%s493 + $0xd8] sm:$0xff]
    %v1174 = vld [vmem:[%s493 + $0xe0] sm:$0xff]
    %v1175 = vld [vmem:[%s493 + $0xe8] sm:$0xff]
    %v1176 = vld [vmem:[%s493 + $0xf0] sm:$0xff]
    %v1177 = vld [vmem:[%s493 + $0xf8] sm:$0xff]
    %v1210 = vunpack.c.l.b16 %v1146
    %v1211 = vunpack.c.h.b16 %v1146
    %v1212 = vunpack.c.l.b16 %v1147
    %v1213 = vunpack.c.h.b16 %v1147
    %v1214 = vunpack.c.l.b16 %v1148
    %v1215 = vunpack.c.h.b16 %v1148
    %v1216 = vunpack.c.l.b16 %v1149
    %v1217 = vunpack.c.h.b16 %v1149
    %v1218 = vunpack.c.l.b16 %v1150
    %v1219 = vunpack.c.h.b16 %v1150
    %v1220 = vunpack.c.l.b16 %v1151
    %v1221 = vunpack.c.h.b16 %v1151
    %v1222 = vunpack.c.l.b16 %v1152
    %v1223 = vunpack.c.h.b16 %v1152
    %v1224 = vunpack.c.l.b16 %v1153
    %v1225 = vunpack.c.h.b16 %v1153
    %v1226 = vunpack.c.l.b16 %v1154
    %v1227 = vunpack.c.h.b16 %v1154
    %v1228 = vunpack.c.l.b16 %v1155
    %v1229 = vunpack.c.h.b16 %v1155
    %v1230 = vunpack.c.l.b16 %v1156
    %v1231 = vunpack.c.h.b16 %v1156
    %v1232 = vunpack.c.l.b16 %v1157
    %v1233 = vunpack.c.h.b16 %v1157
    %v1234 = vunpack.c.l.b16 %v1158
    %v1235 = vunpack.c.h.b16 %v1158
    %v1236 = vunpack.c.l.b16 %v1159
    %v1237 = vunpack.c.h.b16 %v1159
    %v1238 = vunpack.c.l.b16 %v1160
    %v1239 = vunpack.c.h.b16 %v1160
    %v1240 = vunpack.c.l.b16 %v1161
    %v1241 = vunpack.c.h.b16 %v1161
    %v1242 = vunpack.c.l.b16 %v1162
    %v1243 = vunpack.c.h.b16 %v1162
    %v1244 = vunpack.c.l.b16 %v1163
    %v1245 = vunpack.c.h.b16 %v1163
    %v1246 = vunpack.c.l.b16 %v1164
    %v1247 = vunpack.c.h.b16 %v1164
    %v1248 = vunpack.c.l.b16 %v1165
    %v1249 = vunpack.c.h.b16 %v1165
    %v1250 = vunpack.c.l.b16 %v1166
    %v1251 = vunpack.c.h.b16 %v1166
    %v1252 = vunpack.c.l.b16 %v1167
    %v1253 = vunpack.c.h.b16 %v1167
    %v1254 = vunpack.c.l.b16 %v1168
    %v1255 = vunpack.c.h.b16 %v1168
    %v1256 = vunpack.c.l.b16 %v1169
    %v1257 = vunpack.c.h.b16 %v1169
    %v1258 = vunpack.c.l.b16 %v1170
    %v1259 = vunpack.c.h.b16 %v1170
    %v1260 = vunpack.c.l.b16 %v1171
    %v1261 = vunpack.c.h.b16 %v1171
    %v1262 = vunpack.c.l.b16 %v1172
    %v1263 = vunpack.c.h.b16 %v1172
    %v1264 = vunpack.c.l.b16 %v1173
    %v1265 = vunpack.c.h.b16 %v1173
    %v1266 = vunpack.c.l.b16 %v1174
    %v1267 = vunpack.c.h.b16 %v1174
    %v1268 = vunpack.c.l.b16 %v1175
    %v1269 = vunpack.c.h.b16 %v1175
    %v1270 = vunpack.c.l.b16 %v1176
    %v1271 = vunpack.c.h.b16 %v1176
    %v1272 = vunpack.c.l.b16 %v1177
    %v1273 = vunpack.c.h.b16 %v1177
    %v1274 = vpack.c.b16 %v1214, %v1210
    %v1275 = vpack.c.b16 %v1215, %v1211
    %v1276 = vpack.c.b16 %v1216, %v1212
    %v1277 = vpack.c.b16 %v1217, %v1213
    %v1278 = vpack.c.b16 %v1222, %v1218
    %v1279 = vpack.c.b16 %v1223, %v1219
    %v1280 = vpack.c.b16 %v1224, %v1220
    %v1281 = vpack.c.b16 %v1225, %v1221
    %v1282 = vpack.c.b16 %v1230, %v1226
    %v1283 = vpack.c.b16 %v1231, %v1227
    %v1284 = vpack.c.b16 %v1232, %v1228
    %v1285 = vpack.c.b16 %v1233, %v1229
    %v1286 = vpack.c.b16 %v1238, %v1234
    %v1287 = vpack.c.b16 %v1239, %v1235
    %v1288 = vpack.c.b16 %v1240, %v1236
    %v1289 = vpack.c.b16 %v1241, %v1237
    %v1290 = vpack.c.b16 %v1246, %v1242
    %v1291 = vpack.c.b16 %v1247, %v1243
    %v1292 = vpack.c.b16 %v1248, %v1244
    %v1293 = vpack.c.b16 %v1249, %v1245
    %v1294 = vpack.c.b16 %v1254, %v1250
    %v1295 = vpack.c.b16 %v1255, %v1251
    %v1296 = vpack.c.b16 %v1256, %v1252
    %v1297 = vpack.c.b16 %v1257, %v1253
    %v1298 = vpack.c.b16 %v1262, %v1258
    %v1299 = vpack.c.b16 %v1263, %v1259
    %v1300 = vpack.c.b16 %v1264, %v1260
    %v1301 = vpack.c.b16 %v1265, %v1261
    %v1302 = vpack.c.b16 %v1270, %v1266
    %v1303 = vpack.c.b16 %v1271, %v1267
    %v1304 = vpack.c.b16 %v1272, %v1268
    %v1305 = vpack.c.b16 %v1273, %v1269
    %1338 = vmatpush.bf16.msra.mxu0 %v1302
    %1339 = vmatpush.bf16.msra.mxu0 %v1298
    %1340 = vmatpush.bf16.msra.mxu0 %v1294
    %1341 = vmatpush.bf16.msra.mxu0 %v1290
    %1342 = vmatpush.bf16.msra.mxu0 %v1286
    %1343 = vmatpush.bf16.msra.mxu0 %v1282
    %1344 = vmatpush.bf16.msra.mxu0 %v1278
    %1345 = vmatpush.bf16.msra.mxu0 %v1274
    %1346 = vmatmul.bf16.gmra.mxu0 %v1145
    %v1347 = vpop.f32.mrf.mxu0
    %v1348 = vadd.f32 0.0, %v1347
    %v1349 = vpop.f32.mrf.mxu0
    %1350 = vdwg.mxu0
    %1351 = vmatpush.bf16.msra.mxu0 %v1303
    %1352 = vmatpush.bf16.msra.mxu0 %v1299
    %1353 = vmatpush.bf16.msra.mxu0 %v1295
    %1354 = vmatpush.bf16.msra.mxu0 %v1291
    %1355 = vmatpush.bf16.msra.mxu0 %v1287
    %1356 = vmatpush.bf16.msra.mxu0 %v1283
    %1357 = vmatpush.bf16.msra.mxu0 %v1279
    %1358 = vmatpush.bf16.msra.mxu0 %v1275
    %1359 = vmatmul.bf16.gmra.mxu0 %v1145
    %v1360 = vpop.f32.mrf.mxu0
    %v1361 = vadd.f32 0.0, %v1360
    %v1362 = vpop.f32.mrf.mxu0
    %1363 = vdwg.mxu0
    %1364 = vmatpush.bf16.msra.mxu0 %v1304
    %1365 = vmatpush.bf16.msra.mxu0 %v1300
    %1366 = vmatpush.bf16.msra.mxu0 %v1296
    %1367 = vmatpush.bf16.msra.mxu0 %v1292
    %1368 = vmatpush.bf16.msra.mxu0 %v1288
    %1369 = vmatpush.bf16.msra.mxu0 %v1284
    %1370 = vmatpush.bf16.msra.mxu0 %v1280
    %1371 = vmatpush.bf16.msra.mxu0 %v1276
    %1372 = vmatmul.bf16.gmra.mxu0 %v1145
    %v1373 = vpop.f32.mrf.mxu0
    %v1374 = vadd.f32 0.0, %v1373
    %v1375 = vpop.f32.mrf.mxu0
    %1376 = vdwg.mxu0
    %1377 = vmatpush.bf16.msra.mxu0 %v1305
    %1378 = vmatpush.bf16.msra.mxu0 %v1301
    %1379 = vmatpush.bf16.msra.mxu0 %v1297
    %1380 = vmatpush.bf16.msra.mxu0 %v1293
    %1381 = vmatpush.bf16.msra.mxu0 %v1289
    %1382 = vmatpush.bf16.msra.mxu0 %v1285
    %1383 = vmatpush.bf16.msra.mxu0 %v1281
    %1384 = vmatpush.bf16.msra.mxu0 %v1277
    %1385 = vmatmul.bf16.gmra.mxu0 %v1145
    %v1386 = vpop.f32.mrf.mxu0
    %v1387 = vadd.f32 0.0, %v1386
    %v1388 = vpop.f32.mrf.mxu0
    %1389 = vdwg.mxu0
    %v1390 = vadd.f32 %v1140, %v1348
    %v1391 = vadd.f32 %v1141, %v1361
    %v1392 = vadd.f32 %v1142, %v1374
    %v1393 = vadd.f32 %v1143, %v1387
    %v1394 = vxor.u32 %v1390, 2147483648
    %v1395 = vmul.f32 %v1394, 1.442695
    %v1396 = vpow.pop %v1395
    %v1397 = vadd.f32 %v1396, 1.0
    %v1398 = vrcp.pop %v1397
    %v1399 = vmul.f32 %v1397, %v1398
    %v1400 = vsub.f32 1.0, %v1399
    %v1401 = vmul.f32 %v1398, %v1400
    %v1402 = vadd.f32 %v1398, %v1401
    %vm1403 = vweird.f32 %v1397
    %vm1404 = vweird.f32 %v1398
    %vm1405 = vmor %vm1403, %vm1404
    %v1406 = vsel %vm1405, %v1398, %v1402
    %v1407 = vand.u32 2147483647, %v1397
    %vm1408 = vcmp.eq.f32.partialorder %v1407, 8.507059e+37
    %v1409 = vand.u32 %v1397, 2147483648
    %v1410 = vor.u32 1.1754944e-38, %v1409
    %v1411 = vsel %vm1408, %v1410, %v1406
    %v1412 = vmul.f32 1.0, %v1411
    %v1413 = vxor.u32 %v1391, 2147483648
    %v1414 = vmul.f32 %v1413, 1.442695
    %v1415 = vpow.pop %v1414
    %v1416 = vadd.f32 %v1415, 1.0
    %v1417 = vrcp.pop %v1416
    %v1418 = vmul.f32 %v1416, %v1417
    %v1419 = vsub.f32 1.0, %v1418
    %v1420 = vmul.f32 %v1417, %v1419
    %v1421 = vadd.f32 %v1417, %v1420
    %vm1422 = vweird.f32 %v1416
    %vm1423 = vweird.f32 %v1417
    %vm1424 = vmor %vm1422, %vm1423
    %v1425 = vsel %vm1424, %v1417, %v1421
    %v1426 = vand.u32 2147483647, %v1416
    %vm1427 = vcmp.eq.f32.partialorder %v1426, 8.507059e+37
    %v1428 = vand.u32 %v1416, 2147483648
    %v1429 = vor.u32 1.1754944e-38, %v1428
    %v1430 = vsel %vm1427, %v1429, %v1425
    %v1431 = vmul.f32 1.0, %v1430
    %v1432 = vtanh.pop %v1392
    %v1433 = vxor.u32 %v1393, 2147483648
    %v1434 = vmul.f32 %v1433, 1.442695
    %v1435 = vpow.pop %v1434
    %v1436 = vadd.f32 %v1435, 1.0
    %v1437 = vrcp.pop %v1436
    %v1438 = vmul.f32 %v1436, %v1437
    %v1439 = vsub.f32 1.0, %v1438
    %v1440 = vmul.f32 %v1437, %v1439
    %v1441 = vadd.f32 %v1437, %v1440
    %vm1442 = vweird.f32 %v1436
    %vm1443 = vweird.f32 %v1437
    %vm1444 = vmor %vm1442, %vm1443
    %v1445 = vsel %vm1444, %v1437, %v1441
    %v1446 = vand.u32 2147483647, %v1436
    %vm1447 = vcmp.eq.f32.partialorder %v1446, 8.507059e+37
    %v1448 = vand.u32 %v1436, 2147483648
    %v1449 = vor.u32 1.1754944e-38, %v1448
    %v1450 = vsel %vm1447, %v1449, %v1445
    %v1451 = vmul.f32 1.0, %v1450
    %v1452 = vld [vmem:[#allocation5] sm:$0xff]
    %v1453 = vmul.f32 %v1431, %v1452
    %v1454 = vmul.f32 %v1412, %v1432
    %v1455 = vadd.f32 %v1453, %v1454
    %v1456 = vtanh.pop %v1455
    %v1457 = vmul.f32 %v1451, %v1456
    %1458 = vst [vmem:[#allocation5] sm:$0xff] %v1455
    %1459 = vst [vmem:[#allocation4] sm:$0xff] %v1457
    %v1460 = vpack.c.bf16 %v1457, %v1457
    %s1461 = scalar_lea.vmem %s149, 24
    %1462 = vst [vmem:[%s1461] sm:$0xf] %v1460
    %s1463 = scalar_lea.vmem [#allocation6], 32
    %v1464 = vld [vmem:[%s1463] sm:$0xff]
    %v1465 = vld [vmem:[%s1463 + $0x8] sm:$0xff]
    %v1466 = vunpack.c.l.bf16 %v1464
    %v1467 = vunpack.c.h.bf16 %v1464
    %v1468 = vunpack.c.l.bf16 %v1465
    %v1469 = vunpack.c.h.bf16 %v1465
    %v1470 = vld [vmem:[#allocation2] sm:$0xff]
    %v1471 = vpack.c.bf16 %v1470, %v1470
    %v1472 = vld [vmem:[#allocation8] sm:$0xff]
    %v1473 = vld [vmem:[#allocation8 + $0x8] sm:$0xff]
    %v1474 = vld [vmem:[#allocation8 + $0x10] sm:$0xff]
    %v1475 = vld [vmem:[#allocation8 + $0x18] sm:$0xff]
    %v1476 = vld [vmem:[#allocation8 + $0x20] sm:$0xff]
    %v1477 = vld [vmem:[#allocation8 + $0x28] sm:$0xff]
    %v1478 = vld [vmem:[#allocation8 + $0x30] sm:$0xff]
    %v1479 = vld [vmem:[#allocation8 + $0x38] sm:$0xff]
    %v1480 = vld [vmem:[#allocation8 + $0x40] sm:$0xff]
    %v1481 = vld [vmem:[#allocation8 + $0x48] sm:$0xff]
    %v1482 = vld [vmem:[#allocation8 + $0x50] sm:$0xff]
    %v1483 = vld [vmem:[#allocation8 + $0x58] sm:$0xff]
    %v1484 = vld [vmem:[#allocation8 + $0x60] sm:$0xff]
    %v1485 = vld [vmem:[#allocation8 + $0x68] sm:$0xff]
    %v1486 = vld [vmem:[#allocation8 + $0x70] sm:$0xff]
    %v1487 = vld [vmem:[#allocation8 + $0x78] sm:$0xff]
    %v1488 = vld [vmem:[#allocation8 + $0x80] sm:$0xff]
    %v1489 = vld [vmem:[#allocation8 + $0x88] sm:$0xff]
    %v1490 = vld [vmem:[#allocation8 + $0x90] sm:$0xff]
    %v1491 = vld [vmem:[#allocation8 + $0x98] sm:$0xff]
    %v1492 = vld [vmem:[#allocation8 + $0xa0] sm:$0xff]
    %v1493 = vld [vmem:[#allocation8 + $0xa8] sm:$0xff]
    %v1494 = vld [vmem:[#allocation8 + $0xb0] sm:$0xff]
    %v1495 = vld [vmem:[#allocation8 + $0xb8] sm:$0xff]
    %v1496 = vld [vmem:[#allocation8 + $0xc0] sm:$0xff]
    %v1497 = vld [vmem:[#allocation8 + $0xc8] sm:$0xff]
    %v1498 = vld [vmem:[#allocation8 + $0xd0] sm:$0xff]
    %v1499 = vld [vmem:[#allocation8 + $0xd8] sm:$0xff]
    %v1500 = vld [vmem:[#allocation8 + $0xe0] sm:$0xff]
    %v1501 = vld [vmem:[#allocation8 + $0xe8] sm:$0xff]
    %v1502 = vld [vmem:[#allocation8 + $0xf0] sm:$0xff]
    %v1503 = vld [vmem:[#allocation8 + $0xf8] sm:$0xff]
    %v1536 = vunpack.c.l.b16 %v1472
    %v1537 = vunpack.c.h.b16 %v1472
    %v1538 = vunpack.c.l.b16 %v1473
    %v1539 = vunpack.c.h.b16 %v1473
    %v1540 = vunpack.c.l.b16 %v1474
    %v1541 = vunpack.c.h.b16 %v1474
    %v1542 = vunpack.c.l.b16 %v1475
    %v1543 = vunpack.c.h.b16 %v1475
    %v1544 = vunpack.c.l.b16 %v1476
    %v1545 = vunpack.c.h.b16 %v1476
    %v1546 = vunpack.c.l.b16 %v1477
    %v1547 = vunpack.c.h.b16 %v1477
    %v1548 = vunpack.c.l.b16 %v1478
    %v1549 = vunpack.c.h.b16 %v1478
    %v1550 = vunpack.c.l.b16 %v1479
    %v1551 = vunpack.c.h.b16 %v1479
    %v1552 = vunpack.c.l.b16 %v1480
    %v1553 = vunpack.c.h.b16 %v1480
    %v1554 = vunpack.c.l.b16 %v1481
    %v1555 = vunpack.c.h.b16 %v1481
    %v1556 = vunpack.c.l.b16 %v1482
    %v1557 = vunpack.c.h.b16 %v1482
    %v1558 = vunpack.c.l.b16 %v1483
    %v1559 = vunpack.c.h.b16 %v1483
    %v1560 = vunpack.c.l.b16 %v1484
    %v1561 = vunpack.c.h.b16 %v1484
    %v1562 = vunpack.c.l.b16 %v1485
    %v1563 = vunpack.c.h.b16 %v1485
    %v1564 = vunpack.c.l.b16 %v1486
    %v1565 = vunpack.c.h.b16 %v1486
    %v1566 = vunpack.c.l.b16 %v1487
    %v1567 = vunpack.c.h.b16 %v1487
    %v1568 = vunpack.c.l.b16 %v1488
    %v1569 = vunpack.c.h.b16 %v1488
    %v1570 = vunpack.c.l.b16 %v1489
    %v1571 = vunpack.c.h.b16 %v1489
    %v1572 = vunpack.c.l.b16 %v1490
    %v1573 = vunpack.c.h.b16 %v1490
    %v1574 = vunpack.c.l.b16 %v1491
    %v1575 = vunpack.c.h.b16 %v1491
    %v1576 = vunpack.c.l.b16 %v1492
    %v1577 = vunpack.c.h.b16 %v1492
    %v1578 = vunpack.c.l.b16 %v1493
    %v1579 = vunpack.c.h.b16 %v1493
    %v1580 = vunpack.c.l.b16 %v1494
    %v1581 = vunpack.c.h.b16 %v1494
    %v1582 = vunpack.c.l.b16 %v1495
    %v1583 = vunpack.c.h.b16 %v1495
    %v1584 = vunpack.c.l.b16 %v1496
    %v1585 = vunpack.c.h.b16 %v1496
    %v1586 = vunpack.c.l.b16 %v1497
    %v1587 = vunpack.c.h.b16 %v1497
    %v1588 = vunpack.c.l.b16 %v1498
    %v1589 = vunpack.c.h.b16 %v1498
    %v1590 = vunpack.c.l.b16 %v1499
    %v1591 = vunpack.c.h.b16 %v1499
    %v1592 = vunpack.c.l.b16 %v1500
    %v1593 = vunpack.c.h.b16 %v1500
    %v1594 = vunpack.c.l.b16 %v1501
    %v1595 = vunpack.c.h.b16 %v1501
    %v1596 = vunpack.c.l.b16 %v1502
    %v1597 = vunpack.c.h.b16 %v1502
    %v1598 = vunpack.c.l.b16 %v1503
    %v1599 = vunpack.c.h.b16 %v1503
    %v1600 = vpack.c.b16 %v1540, %v1536
    %v1601 = vpack.c.b16 %v1541, %v1537
    %v1602 = vpack.c.b16 %v1542, %v1538
    %v1603 = vpack.c.b16 %v1543, %v1539
    %v1604 = vpack.c.b16 %v1548, %v1544
    %v1605 = vpack.c.b16 %v1549, %v1545
    %v1606 = vpack.c.b16 %v1550, %v1546
    %v1607 = vpack.c.b16 %v1551, %v1547
    %v1608 = vpack.c.b16 %v1556, %v1552
    %v1609 = vpack.c.b16 %v1557, %v1553
    %v1610 = vpack.c.b16 %v1558, %v1554
    %v1611 = vpack.c.b16 %v1559, %v1555
    %v1612 = vpack.c.b16 %v1564, %v1560
    %v1613 = vpack.c.b16 %v1565, %v1561
    %v1614 = vpack.c.b16 %v1566, %v1562
    %v1615 = vpack.c.b16 %v1567, %v1563
    %v1616 = vpack.c.b16 %v1572, %v1568
    %v1617 = vpack.c.b16 %v1573, %v1569
    %v1618 = vpack.c.b16 %v1574, %v1570
    %v1619 = vpack.c.b16 %v1575, %v1571
    %v1620 = vpack.c.b16 %v1580, %v1576
    %v1621 = vpack.c.b16 %v1581, %v1577
    %v1622 = vpack.c.b16 %v1582, %v1578
    %v1623 = vpack.c.b16 %v1583, %v1579
    %v1624 = vpack.c.b16 %v1588, %v1584
    %v1625 = vpack.c.b16 %v1589, %v1585
    %v1626 = vpack.c.b16 %v1590, %v1586
    %v1627 = vpack.c.b16 %v1591, %v1587
    %v1628 = vpack.c.b16 %v1596, %v1592
    %v1629 = vpack.c.b16 %v1597, %v1593
    %v1630 = vpack.c.b16 %v1598, %v1594
    %v1631 = vpack.c.b16 %v1599, %v1595
    %1664 = vmatpush.bf16.msra.mxu0 %v1628
    %1665 = vmatpush.bf16.msra.mxu0 %v1624
    %1666 = vmatpush.bf16.msra.mxu0 %v1620
    %1667 = vmatpush.bf16.msra.mxu0 %v1616
    %1668 = vmatpush.bf16.msra.mxu0 %v1612
    %1669 = vmatpush.bf16.msra.mxu0 %v1608
    %1670 = vmatpush.bf16.msra.mxu0 %v1604
    %1671 = vmatpush.bf16.msra.mxu0 %v1600
    %1672 = vmatmul.bf16.gmra.mxu0 %v1471
    %v1673 = vpop.f32.mrf.mxu0
    %v1674 = vadd.f32 0.0, %v1673
    %v1675 = vpop.f32.mrf.mxu0
    %1676 = vdwg.mxu0
    %1677 = vmatpush.bf16.msra.mxu0 %v1629
    %1678 = vmatpush.bf16.msra.mxu0 %v1625
    %1679 = vmatpush.bf16.msra.mxu0 %v1621
    %1680 = vmatpush.bf16.msra.mxu0 %v1617
    %1681 = vmatpush.bf16.msra.mxu0 %v1613
    %1682 = vmatpush.bf16.msra.mxu0 %v1609
    %1683 = vmatpush.bf16.msra.mxu0 %v1605
    %1684 = vmatpush.bf16.msra.mxu0 %v1601
    %1685 = vmatmul.bf16.gmra.mxu0 %v1471
    %v1686 = vpop.f32.mrf.mxu0
    %v1687 = vadd.f32 0.0, %v1686
    %v1688 = vpop.f32.mrf.mxu0
    %1689 = vdwg.mxu0
    %1690 = vmatpush.bf16.msra.mxu0 %v1630
    %1691 = vmatpush.bf16.msra.mxu0 %v1626
    %1692 = vmatpush.bf16.msra.mxu0 %v1622
    %1693 = vmatpush.bf16.msra.mxu0 %v1618
    %1694 = vmatpush.bf16.msra.mxu0 %v1614
    %1695 = vmatpush.bf16.msra.mxu0 %v1610
    %1696 = vmatpush.bf16.msra.mxu0 %v1606
    %1697 = vmatpush.bf16.msra.mxu0 %v1602
    %1698 = vmatmul.bf16.gmra.mxu0 %v1471
    %v1699 = vpop.f32.mrf.mxu0
    %v1700 = vadd.f32 0.0, %v1699
    %v1701 = vpop.f32.mrf.mxu0
    %1702 = vdwg.mxu0
    %1703 = vmatpush.bf16.msra.mxu0 %v1631
    %1704 = vmatpush.bf16.msra.mxu0 %v1627
    %1705 = vmatpush.bf16.msra.mxu0 %v1623
    %1706 = vmatpush.bf16.msra.mxu0 %v1619
    %1707 = vmatpush.bf16.msra.mxu0 %v1615
    %1708 = vmatpush.bf16.msra.mxu0 %v1611
    %1709 = vmatpush.bf16.msra.mxu0 %v1607
    %1710 = vmatpush.bf16.msra.mxu0 %v1603
    %1711 = vmatmul.bf16.gmra.mxu0 %v1471
    %v1712 = vpop.f32.mrf.mxu0
    %v1713 = vadd.f32 0.0, %v1712
    %v1714 = vpop.f32.mrf.mxu0
    %1715 = vdwg.mxu0
    %v1716 = vadd.f32 %v1466, %v1674
    %v1717 = vadd.f32 %v1467, %v1687
    %v1718 = vadd.f32 %v1468, %v1700
    %v1719 = vadd.f32 %v1469, %v1713
    %v1720 = vxor.u32 %v1716, 2147483648
    %v1721 = vmul.f32 %v1720, 1.442695
    %v1722 = vpow.pop %v1721
    %v1723 = vadd.f32 %v1722, 1.0
    %v1724 = vrcp.pop %v1723
    %v1725 = vmul.f32 %v1723, %v1724
    %v1726 = vsub.f32 1.0, %v1725
    %v1727 = vmul.f32 %v1724, %v1726
    %v1728 = vadd.f32 %v1724, %v1727
    %vm1729 = vweird.f32 %v1723
    %vm1730 = vweird.f32 %v1724
    %vm1731 = vmor %vm1729, %vm1730
    %v1732 = vsel %vm1731, %v1724, %v1728
    %v1733 = vand.u32 2147483647, %v1723
    %vm1734 = vcmp.eq.f32.partialorder %v1733, 8.507059e+37
    %v1735 = vand.u32 %v1723, 2147483648
    %v1736 = vor.u32 1.1754944e-38, %v1735
    %v1737 = vsel %vm1734, %v1736, %v1732
    %v1738 = vmul.f32 1.0, %v1737
    %v1739 = vxor.u32 %v1717, 2147483648
    %v1740 = vmul.f32 %v1739, 1.442695
    %v1741 = vpow.pop %v1740
    %v1742 = vadd.f32 %v1741, 1.0
    %v1743 = vrcp.pop %v1742
    %v1744 = vmul.f32 %v1742, %v1743
    %v1745 = vsub.f32 1.0, %v1744
    %v1746 = vmul.f32 %v1743, %v1745
    %v1747 = vadd.f32 %v1743, %v1746
    %vm1748 = vweird.f32 %v1742
    %vm1749 = vweird.f32 %v1743
    %vm1750 = vmor %vm1748, %vm1749
    %v1751 = vsel %vm1750, %v1743, %v1747
    %v1752 = vand.u32 2147483647, %v1742
    %vm1753 = vcmp.eq.f32.partialorder %v1752, 8.507059e+37
    %v1754 = vand.u32 %v1742, 2147483648
    %v1755 = vor.u32 1.1754944e-38, %v1754
    %v1756 = vsel %vm1753, %v1755, %v1751
    %v1757 = vmul.f32 1.0, %v1756
    %v1758 = vtanh.pop %v1718
    %v1759 = vxor.u32 %v1719, 2147483648
    %v1760 = vmul.f32 %v1759, 1.442695
    %v1761 = vpow.pop %v1760
    %v1762 = vadd.f32 %v1761, 1.0
    %v1763 = vrcp.pop %v1762
    %v1764 = vmul.f32 %v1762, %v1763
    %v1765 = vsub.f32 1.0, %v1764
    %v1766 = vmul.f32 %v1763, %v1765
    %v1767 = vadd.f32 %v1763, %v1766
    %vm1768 = vweird.f32 %v1762
    %vm1769 = vweird.f32 %v1763
    %vm1770 = vmor %vm1768, %vm1769
    %v1771 = vsel %vm1770, %v1763, %v1767
    %v1772 = vand.u32 2147483647, %v1762
    %vm1773 = vcmp.eq.f32.partialorder %v1772, 8.507059e+37
    %v1774 = vand.u32 %v1762, 2147483648
    %v1775 = vor.u32 1.1754944e-38, %v1774
    %v1776 = vsel %vm1773, %v1775, %v1771
    %v1777 = vmul.f32 1.0, %v1776
    %v1778 = vld [vmem:[#allocation3] sm:$0xff]
    %v1779 = vmul.f32 %v1757, %v1778
    %v1780 = vmul.f32 %v1738, %v1758
    %v1781 = vadd.f32 %v1779, %v1780
    %v1782 = vtanh.pop %v1781
    %v1783 = vmul.f32 %v1777, %v1782
    %1784 = vst [vmem:[#allocation3] sm:$0xff] %v1781
    %1785 = vst [vmem:[#allocation2] sm:$0xff] %v1783
    %v1786 = vpack.c.bf16 %v1783, %v1783
    %s1787 = scalar_lea.vmem %s3, 8
    %1788 = vst [vmem:[%s1787] sm:$0xf] %v1786
    %s1789 = scalar_lea.vmem [#allocation7], 80
    %v1790 = vld [vmem:[%s1789] sm:$0xff]
    %v1791 = vld [vmem:[%s1789 + $0x8] sm:$0xff]
    %v1792 = vunpack.c.l.bf16 %v1790
    %v1793 = vunpack.c.h.bf16 %v1790
    %v1794 = vunpack.c.l.bf16 %v1791
    %v1795 = vunpack.c.h.bf16 %v1791
    %v1796 = vld [vmem:[#allocation4] sm:$0xff]
    %v1797 = vpack.c.bf16 %v1796, %v1796
    %v1798 = vld [vmem:[%s493] sm:$0xff]
    %v1799 = vld [vmem:[%s493 + $0x8] sm:$0xff]
    %v1800 = vld [vmem:[%s493 + $0x10] sm:$0xff]
    %v1801 = vld [vmem:[%s493 + $0x18] sm:$0xff]
    %v1802 = vld [vmem:[%s493 + $0x20] sm:$0xff]
    %v1803 = vld [vmem:[%s493 + $0x28] sm:$0xff]
    %v1804 = vld [vmem:[%s493 + $0x30] sm:$0xff]
    %v1805 = vld [vmem:[%s493 + $0x38] sm:$0xff]
    %v1806 = vld [vmem:[%s493 + $0x40] sm:$0xff]
    %v1807 = vld [vmem:[%s493 + $0x48] sm:$0xff]
    %v1808 = vld [vmem:[%s493 + $0x50] sm:$0xff]
    %v1809 = vld [vmem:[%s493 + $0x58] sm:$0xff]
    %v1810 = vld [vmem:[%s493 + $0x60] sm:$0xff]
    %v1811 = vld [vmem:[%s493 + $0x68] sm:$0xff]
    %v1812 = vld [vmem:[%s493 + $0x70] sm:$0xff]
    %v1813 = vld [vmem:[%s493 + $0x78] sm:$0xff]
    %v1814 = vld [vmem:[%s493 + $0x80] sm:$0xff]
    %v1815 = vld [vmem:[%s493 + $0x88] sm:$0xff]
    %v1816 = vld [vmem:[%s493 + $0x90] sm:$0xff]
    %v1817 = vld [vmem:[%s493 + $0x98] sm:$0xff]
    %v1818 = vld [vmem:[%s493 + $0xa0] sm:$0xff]
    %v1819 = vld [vmem:[%s493 + $0xa8] sm:$0xff]
    %v1820 = vld [vmem:[%s493 + $0xb0] sm:$0xff]
    %v1821 = vld [vmem:[%s493 + $0xb8] sm:$0xff]
    %v1822 = vld [vmem:[%s493 + $0xc0] sm:$0xff]
    %v1823 = vld [vmem:[%s493 + $0xc8] sm:$0xff]
    %v1824 = vld [vmem:[%s493 + $0xd0] sm:$0xff]
    %v1825 = vld [vmem:[%s493 + $0xd8] sm:$0xff]
    %v1826 = vld [vmem:[%s493 + $0xe0] sm:$0xff]
    %v1827 = vld [vmem:[%s493 + $0xe8] sm:$0xff]
    %v1828 = vld [vmem:[%s493 + $0xf0] sm:$0xff]
    %v1829 = vld [vmem:[%s493 + $0xf8] sm:$0xff]
    %v1862 = vunpack.c.l.b16 %v1798
    %v1863 = vunpack.c.h.b16 %v1798
    %v1864 = vunpack.c.l.b16 %v1799
    %v1865 = vunpack.c.h.b16 %v1799
    %v1866 = vunpack.c.l.b16 %v1800
    %v1867 = vunpack.c.h.b16 %v1800
    %v1868 = vunpack.c.l.b16 %v1801
    %v1869 = vunpack.c.h.b16 %v1801
    %v1870 = vunpack.c.l.b16 %v1802
    %v1871 = vunpack.c.h.b16 %v1802
    %v1872 = vunpack.c.l.b16 %v1803
    %v1873 = vunpack.c.h.b16 %v1803
    %v1874 = vunpack.c.l.b16 %v1804
    %v1875 = vunpack.c.h.b16 %v1804
    %v1876 = vunpack.c.l.b16 %v1805
    %v1877 = vunpack.c.h.b16 %v1805
    %v1878 = vunpack.c.l.b16 %v1806
    %v1879 = vunpack.c.h.b16 %v1806
    %v1880 = vunpack.c.l.b16 %v1807
    %v1881 = vunpack.c.h.b16 %v1807
    %v1882 = vunpack.c.l.b16 %v1808
    %v1883 = vunpack.c.h.b16 %v1808
    %v1884 = vunpack.c.l.b16 %v1809
    %v1885 = vunpack.c.h.b16 %v1809
    %v1886 = vunpack.c.l.b16 %v1810
    %v1887 = vunpack.c.h.b16 %v1810
    %v1888 = vunpack.c.l.b16 %v1811
    %v1889 = vunpack.c.h.b16 %v1811
    %v1890 = vunpack.c.l.b16 %v1812
    %v1891 = vunpack.c.h.b16 %v1812
    %v1892 = vunpack.c.l.b16 %v1813
    %v1893 = vunpack.c.h.b16 %v1813
    %v1894 = vunpack.c.l.b16 %v1814
    %v1895 = vunpack.c.h.b16 %v1814
    %v1896 = vunpack.c.l.b16 %v1815
    %v1897 = vunpack.c.h.b16 %v1815
    %v1898 = vunpack.c.l.b16 %v1816
    %v1899 = vunpack.c.h.b16 %v1816
    %v1900 = vunpack.c.l.b16 %v1817
    %v1901 = vunpack.c.h.b16 %v1817
    %v1902 = vunpack.c.l.b16 %v1818
    %v1903 = vunpack.c.h.b16 %v1818
    %v1904 = vunpack.c.l.b16 %v1819
    %v1905 = vunpack.c.h.b16 %v1819
    %v1906 = vunpack.c.l.b16 %v1820
    %v1907 = vunpack.c.h.b16 %v1820
    %v1908 = vunpack.c.l.b16 %v1821
    %v1909 = vunpack.c.h.b16 %v1821
    %v1910 = vunpack.c.l.b16 %v1822
    %v1911 = vunpack.c.h.b16 %v1822
    %v1912 = vunpack.c.l.b16 %v1823
    %v1913 = vunpack.c.h.b16 %v1823
    %v1914 = vunpack.c.l.b16 %v1824
    %v1915 = vunpack.c.h.b16 %v1824
    %v1916 = vunpack.c.l.b16 %v1825
    %v1917 = vunpack.c.h.b16 %v1825
    %v1918 = vunpack.c.l.b16 %v1826
    %v1919 = vunpack.c.h.b16 %v1826
    %v1920 = vunpack.c.l.b16 %v1827
    %v1921 = vunpack.c.h.b16 %v1827
    %v1922 = vunpack.c.l.b16 %v1828
    %v1923 = vunpack.c.h.b16 %v1828
    %v1924 = vunpack.c.l.b16 %v1829
    %v1925 = vunpack.c.h.b16 %v1829
    %v1926 = vpack.c.b16 %v1866, %v1862
    %v1927 = vpack.c.b16 %v1867, %v1863
    %v1928 = vpack.c.b16 %v1868, %v1864
    %v1929 = vpack.c.b16 %v1869, %v1865
    %v1930 = vpack.c.b16 %v1874, %v1870
    %v1931 = vpack.c.b16 %v1875, %v1871
    %v1932 = vpack.c.b16 %v1876, %v1872
    %v1933 = vpack.c.b16 %v1877, %v1873
    %v1934 = vpack.c.b16 %v1882, %v1878
    %v1935 = vpack.c.b16 %v1883, %v1879
    %v1936 = vpack.c.b16 %v1884, %v1880
    %v1937 = vpack.c.b16 %v1885, %v1881
    %v1938 = vpack.c.b16 %v1890, %v1886
    %v1939 = vpack.c.b16 %v1891, %v1887
    %v1940 = vpack.c.b16 %v1892, %v1888
    %v1941 = vpack.c.b16 %v1893, %v1889
    %v1942 = vpack.c.b16 %v1898, %v1894
    %v1943 = vpack.c.b16 %v1899, %v1895
    %v1944 = vpack.c.b16 %v1900, %v1896
    %v1945 = vpack.c.b16 %v1901, %v1897
    %v1946 = vpack.c.b16 %v1906, %v1902
    %v1947 = vpack.c.b16 %v1907, %v1903
    %v1948 = vpack.c.b16 %v1908, %v1904
    %v1949 = vpack.c.b16 %v1909, %v1905
    %v1950 = vpack.c.b16 %v1914, %v1910
    %v1951 = vpack.c.b16 %v1915, %v1911
    %v1952 = vpack.c.b16 %v1916, %v1912
    %v1953 = vpack.c.b16 %v1917, %v1913
    %v1954 = vpack.c.b16 %v1922, %v1918
    %v1955 = vpack.c.b16 %v1923, %v1919
    %v1956 = vpack.c.b16 %v1924, %v1920
    %v1957 = vpack.c.b16 %v1925, %v1921
    %1990 = vmatpush.bf16.msra.mxu0 %v1954
    %1991 = vmatpush.bf16.msra.mxu0 %v1950
    %1992 = vmatpush.bf16.msra.mxu0 %v1946
    %1993 = vmatpush.bf16.msra.mxu0 %v1942
    %1994 = vmatpush.bf16.msra.mxu0 %v1938
    %1995 = vmatpush.bf16.msra.mxu0 %v1934
    %1996 = vmatpush.bf16.msra.mxu0 %v1930
    %1997 = vmatpush.bf16.msra.mxu0 %v1926
    %1998 = vmatmul.bf16.gmra.mxu0 %v1797
    %v1999 = vpop.f32.mrf.mxu0
    %v2000 = vadd.f32 0.0, %v1999
    %v2001 = vpop.f32.mrf.mxu0
    %2002 = vdwg.mxu0
    %2003 = vmatpush.bf16.msra.mxu0 %v1955
    %2004 = vmatpush.bf16.msra.mxu0 %v1951
    %2005 = vmatpush.bf16.msra.mxu0 %v1947
    %2006 = vmatpush.bf16.msra.mxu0 %v1943
    %2007 = vmatpush.bf16.msra.mxu0 %v1939
    %2008 = vmatpush.bf16.msra.mxu0 %v1935
    %2009 = vmatpush.bf16.msra.mxu0 %v1931
    %2010 = vmatpush.bf16.msra.mxu0 %v1927
    %2011 = vmatmul.bf16.gmra.mxu0 %v1797
    %v2012 = vpop.f32.mrf.mxu0
    %v2013 = vadd.f32 0.0, %v2012
    %v2014 = vpop.f32.mrf.mxu0
    %2015 = vdwg.mxu0
    %2016 = vmatpush.bf16.msra.mxu0 %v1956
    %2017 = vmatpush.bf16.msra.mxu0 %v1952
    %2018 = vmatpush.bf16.msra.mxu0 %v1948
    %2019 = vmatpush.bf16.msra.mxu0 %v1944
    %2020 = vmatpush.bf16.msra.mxu0 %v1940
    %2021 = vmatpush.bf16.msra.mxu0 %v1936
    %2022 = vmatpush.bf16.msra.mxu0 %v1932
    %2023 = vmatpush.bf16.msra.mxu0 %v1928
    %2024 = vmatmul.bf16.gmra.mxu0 %v1797
    %v2025 = vpop.f32.mrf.mxu0
    %v2026 = vadd.f32 0.0, %v2025
    %v2027 = vpop.f32.mrf.mxu0
    %2028 = vdwg.mxu0
    %2029 = vmatpush.bf16.msra.mxu0 %v1957
    %2030 = vmatpush.bf16.msra.mxu0 %v1953
    %2031 = vmatpush.bf16.msra.mxu0 %v1949
    %2032 = vmatpush.bf16.msra.mxu0 %v1945
    %2033 = vmatpush.bf16.msra.mxu0 %v1941
    %2034 = vmatpush.bf16.msra.mxu0 %v1937
    %2035 = vmatpush.bf16.msra.mxu0 %v1933
    %2036 = vmatpush.bf16.msra.mxu0 %v1929
    %2037 = vmatmul.bf16.gmra.mxu0 %v1797
    %v2038 = vpop.f32.mrf.mxu0
    %v2039 = vadd.f32 0.0, %v2038
    %v2040 = vpop.f32.mrf.mxu0
    %2041 = vdwg.mxu0
    %v2042 = vadd.f32 %v1792, %v2000
    %v2043 = vadd.f32 %v1793, %v2013
    %v2044 = vadd.f32 %v1794, %v2026
    %v2045 = vadd.f32 %v1795, %v2039
    %v2046 = vxor.u32 %v2042, 2147483648
    %v2047 = vmul.f32 %v2046, 1.442695
    %v2048 = vpow.pop %v2047
    %v2049 = vadd.f32 %v2048, 1.0
    %v2050 = vrcp.pop %v2049
    %v2051 = vmul.f32 %v2049, %v2050
    %v2052 = vsub.f32 1.0, %v2051
    %v2053 = vmul.f32 %v2050, %v2052
    %v2054 = vadd.f32 %v2050, %v2053
    %vm2055 = vweird.f32 %v2049
    %vm2056 = vweird.f32 %v2050
    %vm2057 = vmor %vm2055, %vm2056
    %v2058 = vsel %vm2057, %v2050, %v2054
    %v2059 = vand.u32 2147483647, %v2049
    %vm2060 = vcmp.eq.f32.partialorder %v2059, 8.507059e+37
    %v2061 = vand.u32 %v2049, 2147483648
    %v2062 = vor.u32 1.1754944e-38, %v2061
    %v2063 = vsel %vm2060, %v2062, %v2058
    %v2064 = vmul.f32 1.0, %v2063
    %v2065 = vxor.u32 %v2043, 2147483648
    %v2066 = vmul.f32 %v2065, 1.442695
    %v2067 = vpow.pop %v2066
    %v2068 = vadd.f32 %v2067, 1.0
    %v2069 = vrcp.pop %v2068
    %v2070 = vmul.f32 %v2068, %v2069
    %v2071 = vsub.f32 1.0, %v2070
    %v2072 = vmul.f32 %v2069, %v2071
    %v2073 = vadd.f32 %v2069, %v2072
    %vm2074 = vweird.f32 %v2068
    %vm2075 = vweird.f32 %v2069
    %vm2076 = vmor %vm2074, %vm2075
    %v2077 = vsel %vm2076, %v2069, %v2073
    %v2078 = vand.u32 2147483647, %v2068
    %vm2079 = vcmp.eq.f32.partialorder %v2078, 8.507059e+37
    %v2080 = vand.u32 %v2068, 2147483648
    %v2081 = vor.u32 1.1754944e-38, %v2080
    %v2082 = vsel %vm2079, %v2081, %v2077
    %v2083 = vmul.f32 1.0, %v2082
    %v2084 = vtanh.pop %v2044
    %v2085 = vxor.u32 %v2045, 2147483648
    %v2086 = vmul.f32 %v2085, 1.442695
    %v2087 = vpow.pop %v2086
    %v2088 = vadd.f32 %v2087, 1.0
    %v2089 = vrcp.pop %v2088
    %v2090 = vmul.f32 %v2088, %v2089
    %v2091 = vsub.f32 1.0, %v2090
    %v2092 = vmul.f32 %v2089, %v2091
    %v2093 = vadd.f32 %v2089, %v2092
    %vm2094 = vweird.f32 %v2088
    %vm2095 = vweird.f32 %v2089
    %vm2096 = vmor %vm2094, %vm2095
    %v2097 = vsel %vm2096, %v2089, %v2093
    %v2098 = vand.u32 2147483647, %v2088
    %vm2099 = vcmp.eq.f32.partialorder %v2098, 8.507059e+37
    %v2100 = vand.u32 %v2088, 2147483648
    %v2101 = vor.u32 1.1754944e-38, %v2100
    %v2102 = vsel %vm2099, %v2101, %v2097
    %v2103 = vmul.f32 1.0, %v2102
    %v2104 = vld [vmem:[#allocation5] sm:$0xff]
    %v2105 = vmul.f32 %v2083, %v2104
    %v2106 = vmul.f32 %v2064, %v2084
    %v2107 = vadd.f32 %v2105, %v2106
    %v2108 = vtanh.pop %v2107
    %v2109 = vmul.f32 %v2103, %v2108
    %2110 = vst [vmem:[#allocation5] sm:$0xff] %v2107
    %2111 = vst [vmem:[#allocation4] sm:$0xff] %v2109
    %v2112 = vpack.c.bf16 %v2109, %v2109
    %s2113 = scalar_lea.vmem %s149, 20
    %2114 = vst [vmem:[%s2113] sm:$0xf] %v2112
    %s2115 = scalar_lea.vmem [#allocation6], 48
    %v2116 = vld [vmem:[%s2115] sm:$0xff]
    %v2117 = vld [vmem:[%s2115 + $0x8] sm:$0xff]
    %v2118 = vunpack.c.l.bf16 %v2116
    %v2119 = vunpack.c.h.bf16 %v2116
    %v2120 = vunpack.c.l.bf16 %v2117
    %v2121 = vunpack.c.h.bf16 %v2117
    %v2122 = vld [vmem:[#allocation2] sm:$0xff]
    %v2123 = vpack.c.bf16 %v2122, %v2122
    %v2124 = vld [vmem:[#allocation8] sm:$0xff]
    %v2125 = vld [vmem:[#allocation8 + $0x8] sm:$0xff]
    %v2126 = vld [vmem:[#allocation8 + $0x10] sm:$0xff]
    %v2127 = vld [vmem:[#allocation8 + $0x18] sm:$0xff]
    %v2128 = vld [vmem:[#allocation8 + $0x20] sm:$0xff]
    %v2129 = vld [vmem:[#allocation8 + $0x28] sm:$0xff]
    %v2130 = vld [vmem:[#allocation8 + $0x30] sm:$0xff]
    %v2131 = vld [vmem:[#allocation8 + $0x38] sm:$0xff]
    %v2132 = vld [vmem:[#allocation8 + $0x40] sm:$0xff]
    %v2133 = vld [vmem:[#allocation8 + $0x48] sm:$0xff]
    %v2134 = vld [vmem:[#allocation8 + $0x50] sm:$0xff]
    %v2135 = vld [vmem:[#allocation8 + $0x58] sm:$0xff]
    %v2136 = vld [vmem:[#allocation8 + $0x60] sm:$0xff]
    %v2137 = vld [vmem:[#allocation8 + $0x68] sm:$0xff]
    %v2138 = vld [vmem:[#allocation8 + $0x70] sm:$0xff]
    %v2139 = vld [vmem:[#allocation8 + $0x78] sm:$0xff]
    %v2140 = vld [vmem:[#allocation8 + $0x80] sm:$0xff]
    %v2141 = vld [vmem:[#allocation8 + $0x88] sm:$0xff]
    %v2142 = vld [vmem:[#allocation8 + $0x90] sm:$0xff]
    %v2143 = vld [vmem:[#allocation8 + $0x98] sm:$0xff]
    %v2144 = vld [vmem:[#allocation8 + $0xa0] sm:$0xff]
    %v2145 = vld [vmem:[#allocation8 + $0xa8] sm:$0xff]
    %v2146 = vld [vmem:[#allocation8 + $0xb0] sm:$0xff]
    %v2147 = vld [vmem:[#allocation8 + $0xb8] sm:$0xff]
    %v2148 = vld [vmem:[#allocation8 + $0xc0] sm:$0xff]
    %v2149 = vld [vmem:[#allocation8 + $0xc8] sm:$0xff]
    %v2150 = vld [vmem:[#allocation8 + $0xd0] sm:$0xff]
    %v2151 = vld [vmem:[#allocation8 + $0xd8] sm:$0xff]
    %v2152 = vld [vmem:[#allocation8 + $0xe0] sm:$0xff]
    %v2153 = vld [vmem:[#allocation8 + $0xe8] sm:$0xff]
    %v2154 = vld [vmem:[#allocation8 + $0xf0] sm:$0xff]
    %v2155 = vld [vmem:[#allocation8 + $0xf8] sm:$0xff]
    %v2188 = vunpack.c.l.b16 %v2124
    %v2189 = vunpack.c.h.b16 %v2124
    %v2190 = vunpack.c.l.b16 %v2125
    %v2191 = vunpack.c.h.b16 %v2125
    %v2192 = vunpack.c.l.b16 %v2126
    %v2193 = vunpack.c.h.b16 %v2126
    %v2194 = vunpack.c.l.b16 %v2127
    %v2195 = vunpack.c.h.b16 %v2127
    %v2196 = vunpack.c.l.b16 %v2128
    %v2197 = vunpack.c.h.b16 %v2128
    %v2198 = vunpack.c.l.b16 %v2129
    %v2199 = vunpack.c.h.b16 %v2129
    %v2200 = vunpack.c.l.b16 %v2130
    %v2201 = vunpack.c.h.b16 %v2130
    %v2202 = vunpack.c.l.b16 %v2131
    %v2203 = vunpack.c.h.b16 %v2131
    %v2204 = vunpack.c.l.b16 %v2132
    %v2205 = vunpack.c.h.b16 %v2132
    %v2206 = vunpack.c.l.b16 %v2133
    %v2207 = vunpack.c.h.b16 %v2133
    %v2208 = vunpack.c.l.b16 %v2134
    %v2209 = vunpack.c.h.b16 %v2134
    %v2210 = vunpack.c.l.b16 %v2135
    %v2211 = vunpack.c.h.b16 %v2135
    %v2212 = vunpack.c.l.b16 %v2136
    %v2213 = vunpack.c.h.b16 %v2136
    %v2214 = vunpack.c.l.b16 %v2137
    %v2215 = vunpack.c.h.b16 %v2137
    %v2216 = vunpack.c.l.b16 %v2138
    %v2217 = vunpack.c.h.b16 %v2138
    %v2218 = vunpack.c.l.b16 %v2139
    %v2219 = vunpack.c.h.b16 %v2139
    %v2220 = vunpack.c.l.b16 %v2140
    %v2221 = vunpack.c.h.b16 %v2140
    %v2222 = vunpack.c.l.b16 %v2141
    %v2223 = vunpack.c.h.b16 %v2141
    %v2224 = vunpack.c.l.b16 %v2142
    %v2225 = vunpack.c.h.b16 %v2142
    %v2226 = vunpack.c.l.b16 %v2143
    %v2227 = vunpack.c.h.b16 %v2143
    %v2228 = vunpack.c.l.b16 %v2144
    %v2229 = vunpack.c.h.b16 %v2144
    %v2230 = vunpack.c.l.b16 %v2145
    %v2231 = vunpack.c.h.b16 %v2145
    %v2232 = vunpack.c.l.b16 %v2146
    %v2233 = vunpack.c.h.b16 %v2146
    %v2234 = vunpack.c.l.b16 %v2147
    %v2235 = vunpack.c.h.b16 %v2147
    %v2236 = vunpack.c.l.b16 %v2148
    %v2237 = vunpack.c.h.b16 %v2148
    %v2238 = vunpack.c.l.b16 %v2149
    %v2239 = vunpack.c.h.b16 %v2149
    %v2240 = vunpack.c.l.b16 %v2150
    %v2241 = vunpack.c.h.b16 %v2150
    %v2242 = vunpack.c.l.b16 %v2151
    %v2243 = vunpack.c.h.b16 %v2151
    %v2244 = vunpack.c.l.b16 %v2152
    %v2245 = vunpack.c.h.b16 %v2152
    %v2246 = vunpack.c.l.b16 %v2153
    %v2247 = vunpack.c.h.b16 %v2153
    %v2248 = vunpack.c.l.b16 %v2154
    %v2249 = vunpack.c.h.b16 %v2154
    %v2250 = vunpack.c.l.b16 %v2155
    %v2251 = vunpack.c.h.b16 %v2155
    %v2252 = vpack.c.b16 %v2192, %v2188
    %v2253 = vpack.c.b16 %v2193, %v2189
    %v2254 = vpack.c.b16 %v2194, %v2190
    %v2255 = vpack.c.b16 %v2195, %v2191
    %v2256 = vpack.c.b16 %v2200, %v2196
    %v2257 = vpack.c.b16 %v2201, %v2197
    %v2258 = vpack.c.b16 %v2202, %v2198
    %v2259 = vpack.c.b16 %v2203, %v2199
    %v2260 = vpack.c.b16 %v2208, %v2204
    %v2261 = vpack.c.b16 %v2209, %v2205
    %v2262 = vpack.c.b16 %v2210, %v2206
    %v2263 = vpack.c.b16 %v2211, %v2207
    %v2264 = vpack.c.b16 %v2216, %v2212
    %v2265 = vpack.c.b16 %v2217, %v2213
    %v2266 = vpack.c.b16 %v2218, %v2214
    %v2267 = vpack.c.b16 %v2219, %v2215
    %v2268 = vpack.c.b16 %v2224, %v2220
    %v2269 = vpack.c.b16 %v2225, %v2221
    %v2270 = vpack.c.b16 %v2226, %v2222
    %v2271 = vpack.c.b16 %v2227, %v2223
    %v2272 = vpack.c.b16 %v2232, %v2228
    %v2273 = vpack.c.b16 %v2233, %v2229
    %v2274 = vpack.c.b16 %v2234, %v2230
    %v2275 = vpack.c.b16 %v2235, %v2231
    %v2276 = vpack.c.b16 %v2240, %v2236
    %v2277 = vpack.c.b16 %v2241, %v2237
    %v2278 = vpack.c.b16 %v2242, %v2238
    %v2279 = vpack.c.b16 %v2243, %v2239
    %v2280 = vpack.c.b16 %v2248, %v2244
    %v2281 = vpack.c.b16 %v2249, %v2245
    %v2282 = vpack.c.b16 %v2250, %v2246
    %v2283 = vpack.c.b16 %v2251, %v2247
    %2316 = vmatpush.bf16.msra.mxu0 %v2280
    %2317 = vmatpush.bf16.msra.mxu0 %v2276
    %2318 = vmatpush.bf16.msra.mxu0 %v2272
    %2319 = vmatpush.bf16.msra.mxu0 %v2268
    %2320 = vmatpush.bf16.msra.mxu0 %v2264
    %2321 = vmatpush.bf16.msra.mxu0 %v2260
    %2322 = vmatpush.bf16.msra.mxu0 %v2256
    %2323 = vmatpush.bf16.msra.mxu0 %v2252
    %2324 = vmatmul.bf16.gmra.mxu0 %v2123
    %v2325 = vpop.f32.mrf.mxu0
    %v2326 = vadd.f32 0.0, %v2325
    %v2327 = vpop.f32.mrf.mxu0
    %2328 = vdwg.mxu0
    %2329 = vmatpush.bf16.msra.mxu0 %v2281
    %2330 = vmatpush.bf16.msra.mxu0 %v2277
    %2331 = vmatpush.bf16.msra.mxu0 %v2273
    %2332 = vmatpush.bf16.msra.mxu0 %v2269
    %2333 = vmatpush.bf16.msra.mxu0 %v2265
    %2334 = vmatpush.bf16.msra.mxu0 %v2261
    %2335 = vmatpush.bf16.msra.mxu0 %v2257
    %2336 = vmatpush.bf16.msra.mxu0 %v2253
    %2337 = vmatmul.bf16.gmra.mxu0 %v2123
    %v2338 = vpop.f32.mrf.mxu0
    %v2339 = vadd.f32 0.0, %v2338
    %v2340 = vpop.f32.mrf.mxu0
    %2341 = vdwg.mxu0
    %2342 = vmatpush.bf16.msra.mxu0 %v2282
    %2343 = vmatpush.bf16.msra.mxu0 %v2278
    %2344 = vmatpush.bf16.msra.mxu0 %v2274
    %2345 = vmatpush.bf16.msra.mxu0 %v2270
    %2346 = vmatpush.bf16.msra.mxu0 %v2266
    %2347 = vmatpush.bf16.msra.mxu0 %v2262
    %2348 = vmatpush.bf16.msra.mxu0 %v2258
    %2349 = vmatpush.bf16.msra.mxu0 %v2254
    %2350 = vmatmul.bf16.gmra.mxu0 %v2123
    %v2351 = vpop.f32.mrf.mxu0
    %v2352 = vadd.f32 0.0, %v2351
    %v2353 = vpop.f32.mrf.mxu0
    %2354 = vdwg.mxu0
    %2355 = vmatpush.bf16.msra.mxu0 %v2283
    %2356 = vmatpush.bf16.msra.mxu0 %v2279
    %2357 = vmatpush.bf16.msra.mxu0 %v2275
    %2358 = vmatpush.bf16.msra.mxu0 %v2271
    %2359 = vmatpush.bf16.msra.mxu0 %v2267
    %2360 = vmatpush.bf16.msra.mxu0 %v2263
    %2361 = vmatpush.bf16.msra.mxu0 %v2259
    %2362 = vmatpush.bf16.msra.mxu0 %v2255
    %2363 = vmatmul.bf16.gmra.mxu0 %v2123
    %v2364 = vpop.f32.mrf.mxu0
    %v2365 = vadd.f32 0.0, %v2364
    %v2366 = vpop.f32.mrf.mxu0
    %2367 = vdwg.mxu0
    %v2368 = vadd.f32 %v2118, %v2326
    %v2369 = vadd.f32 %v2119, %v2339
    %v2370 = vadd.f32 %v2120, %v2352
    %v2371 = vadd.f32 %v2121, %v2365
    %v2372 = vxor.u32 %v2368, 2147483648
    %v2373 = vmul.f32 %v2372, 1.442695
    %v2374 = vpow.pop %v2373
    %v2375 = vadd.f32 %v2374, 1.0
    %v2376 = vrcp.pop %v2375
    %v2377 = vmul.f32 %v2375, %v2376
    %v2378 = vsub.f32 1.0, %v2377
    %v2379 = vmul.f32 %v2376, %v2378
    %v2380 = vadd.f32 %v2376, %v2379
    %vm2381 = vweird.f32 %v2375
    %vm2382 = vweird.f32 %v2376
    %vm2383 = vmor %vm2381, %vm2382
    %v2384 = vsel %vm2383, %v2376, %v2380
    %v2385 = vand.u32 2147483647, %v2375
    %vm2386 = vcmp.eq.f32.partialorder %v2385, 8.507059e+37
    %v2387 = vand.u32 %v2375, 2147483648
    %v2388 = vor.u32 1.1754944e-38, %v2387
    %v2389 = vsel %vm2386, %v2388, %v2384
    %v2390 = vmul.f32 1.0, %v2389
    %v2391 = vxor.u32 %v2369, 2147483648
    %v2392 = vmul.f32 %v2391, 1.442695
    %v2393 = vpow.pop %v2392
    %v2394 = vadd.f32 %v2393, 1.0
    %v2395 = vrcp.pop %v2394
    %v2396 = vmul.f32 %v2394, %v2395
    %v2397 = vsub.f32 1.0, %v2396
    %v2398 = vmul.f32 %v2395, %v2397
    %v2399 = vadd.f32 %v2395, %v2398
    %vm2400 = vweird.f32 %v2394
    %vm2401 = vweird.f32 %v2395
    %vm2402 = vmor %vm2400, %vm2401
    %v2403 = vsel %vm2402, %v2395, %v2399
    %v2404 = vand.u32 2147483647, %v2394
    %vm2405 = vcmp.eq.f32.partialorder %v2404, 8.507059e+37
    %v2406 = vand.u32 %v2394, 2147483648
    %v2407 = vor.u32 1.1754944e-38, %v2406
    %v2408 = vsel %vm2405, %v2407, %v2403
    %v2409 = vmul.f32 1.0, %v2408
    %v2410 = vtanh.pop %v2370
    %v2411 = vxor.u32 %v2371, 2147483648
    %v2412 = vmul.f32 %v2411, 1.442695
    %v2413 = vpow.pop %v2412
    %v2414 = vadd.f32 %v2413, 1.0
    %v2415 = vrcp.pop %v2414
    %v2416 = vmul.f32 %v2414, %v2415
    %v2417 = vsub.f32 1.0, %v2416
    %v2418 = vmul.f32 %v2415, %v2417
    %v2419 = vadd.f32 %v2415, %v2418
    %vm2420 = vweird.f32 %v2414
    %vm2421 = vweird.f32 %v2415
    %vm2422 = vmor %vm2420, %vm2421
    %v2423 = vsel %vm2422, %v2415, %v2419
    %v2424 = vand.u32 2147483647, %v2414
    %vm2425 = vcmp.eq.f32.partialorder %v2424, 8.507059e+37
    %v2426 = vand.u32 %v2414, 2147483648
    %v2427 = vor.u32 1.1754944e-38, %v2426
    %v2428 = vsel %vm2425, %v2427, %v2423
    %v2429 = vmul.f32 1.0, %v2428
    %v2430 = vld [vmem:[#allocation3] sm:$0xff]
    %v2431 = vmul.f32 %v2409, %v2430
    %v2432 = vmul.f32 %v2390, %v2410
    %v2433 = vadd.f32 %v2431, %v2432
    %v2434 = vtanh.pop %v2433
    %v2435 = vmul.f32 %v2429, %v2434
    %2436 = vst [vmem:[#allocation3] sm:$0xff] %v2433
    %2437 = vst [vmem:[#allocation2] sm:$0xff] %v2435
    %v2438 = vpack.c.bf16 %v2435, %v2435
    %s2439 = scalar_lea.vmem %s3, 12
    %2440 = vst [vmem:[%s2439] sm:$0xf] %v2438
    %s2441 = scalar_lea.vmem [#allocation7], 64
    %v2442 = vld [vmem:[%s2441] sm:$0xff]
    %v2443 = vld [vmem:[%s2441 + $0x8] sm:$0xff]
    %v2444 = vunpack.c.l.bf16 %v2442
    %v2445 = vunpack.c.h.bf16 %v2442
    %v2446 = vunpack.c.l.bf16 %v2443
    %v2447 = vunpack.c.h.bf16 %v2443
    %v2448 = vld [vmem:[#allocation4] sm:$0xff]
    %v2449 = vpack.c.bf16 %v2448, %v2448
    %v2450 = vld [vmem:[%s493] sm:$0xff]
    %v2451 = vld [vmem:[%s493 + $0x8] sm:$0xff]
    %v2452 = vld [vmem:[%s493 + $0x10] sm:$0xff]
    %v2453 = vld [vmem:[%s493 + $0x18] sm:$0xff]
    %v2454 = vld [vmem:[%s493 + $0x20] sm:$0xff]
    %v2455 = vld [vmem:[%s493 + $0x28] sm:$0xff]
    %v2456 = vld [vmem:[%s493 + $0x30] sm:$0xff]
    %v2457 = vld [vmem:[%s493 + $0x38] sm:$0xff]
    %v2458 = vld [vmem:[%s493 + $0x40] sm:$0xff]
    %v2459 = vld [vmem:[%s493 + $0x48] sm:$0xff]
    %v2460 = vld [vmem:[%s493 + $0x50] sm:$0xff]
    %v2461 = vld [vmem:[%s493 + $0x58] sm:$0xff]
    %v2462 = vld [vmem:[%s493 + $0x60] sm:$0xff]
    %v2463 = vld [vmem:[%s493 + $0x68] sm:$0xff]
    %v2464 = vld [vmem:[%s493 + $0x70] sm:$0xff]
    %v2465 = vld [vmem:[%s493 + $0x78] sm:$0xff]
    %v2466 = vld [vmem:[%s493 + $0x80] sm:$0xff]
    %v2467 = vld [vmem:[%s493 + $0x88] sm:$0xff]
    %v2468 = vld [vmem:[%s493 + $0x90] sm:$0xff]
    %v2469 = vld [vmem:[%s493 + $0x98] sm:$0xff]
    %v2470 = vld [vmem:[%s493 + $0xa0] sm:$0xff]
    %v2471 = vld [vmem:[%s493 + $0xa8] sm:$0xff]
    %v2472 = vld [vmem:[%s493 + $0xb0] sm:$0xff]
    %v2473 = vld [vmem:[%s493 + $0xb8] sm:$0xff]
    %v2474 = vld [vmem:[%s493 + $0xc0] sm:$0xff]
    %v2475 = vld [vmem:[%s493 + $0xc8] sm:$0xff]
    %v2476 = vld [vmem:[%s493 + $0xd0] sm:$0xff]
    %v2477 = vld [vmem:[%s493 + $0xd8] sm:$0xff]
    %v2478 = vld [vmem:[%s493 + $0xe0] sm:$0xff]
    %v2479 = vld [vmem:[%s493 + $0xe8] sm:$0xff]
    %v2480 = vld [vmem:[%s493 + $0xf0] sm:$0xff]
    %v2481 = vld [vmem:[%s493 + $0xf8] sm:$0xff]
    %v2514 = vunpack.c.l.b16 %v2450
    %v2515 = vunpack.c.h.b16 %v2450
    %v2516 = vunpack.c.l.b16 %v2451
    %v2517 = vunpack.c.h.b16 %v2451
    %v2518 = vunpack.c.l.b16 %v2452
    %v2519 = vunpack.c.h.b16 %v2452
    %v2520 = vunpack.c.l.b16 %v2453
    %v2521 = vunpack.c.h.b16 %v2453
    %v2522 = vunpack.c.l.b16 %v2454
    %v2523 = vunpack.c.h.b16 %v2454
    %v2524 = vunpack.c.l.b16 %v2455
    %v2525 = vunpack.c.h.b16 %v2455
    %v2526 = vunpack.c.l.b16 %v2456
    %v2527 = vunpack.c.h.b16 %v2456
    %v2528 = vunpack.c.l.b16 %v2457
    %v2529 = vunpack.c.h.b16 %v2457
    %v2530 = vunpack.c.l.b16 %v2458
    %v2531 = vunpack.c.h.b16 %v2458
    %v2532 = vunpack.c.l.b16 %v2459
    %v2533 = vunpack.c.h.b16 %v2459
    %v2534 = vunpack.c.l.b16 %v2460
    %v2535 = vunpack.c.h.b16 %v2460
    %v2536 = vunpack.c.l.b16 %v2461
    %v2537 = vunpack.c.h.b16 %v2461
    %v2538 = vunpack.c.l.b16 %v2462
    %v2539 = vunpack.c.h.b16 %v2462
    %v2540 = vunpack.c.l.b16 %v2463
    %v2541 = vunpack.c.h.b16 %v2463
    %v2542 = vunpack.c.l.b16 %v2464
    %v2543 = vunpack.c.h.b16 %v2464
    %v2544 = vunpack.c.l.b16 %v2465
    %v2545 = vunpack.c.h.b16 %v2465
    %v2546 = vunpack.c.l.b16 %v2466
    %v2547 = vunpack.c.h.b16 %v2466
    %v2548 = vunpack.c.l.b16 %v2467
    %v2549 = vunpack.c.h.b16 %v2467
    %v2550 = vunpack.c.l.b16 %v2468
    %v2551 = vunpack.c.h.b16 %v2468
    %v2552 = vunpack.c.l.b16 %v2469
    %v2553 = vunpack.c.h.b16 %v2469
    %v2554 = vunpack.c.l.b16 %v2470
    %v2555 = vunpack.c.h.b16 %v2470
    %v2556 = vunpack.c.l.b16 %v2471
    %v2557 = vunpack.c.h.b16 %v2471
    %v2558 = vunpack.c.l.b16 %v2472
    %v2559 = vunpack.c.h.b16 %v2472
    %v2560 = vunpack.c.l.b16 %v2473
    %v2561 = vunpack.c.h.b16 %v2473
    %v2562 = vunpack.c.l.b16 %v2474
    %v2563 = vunpack.c.h.b16 %v2474
    %v2564 = vunpack.c.l.b16 %v2475
    %v2565 = vunpack.c.h.b16 %v2475
    %v2566 = vunpack.c.l.b16 %v2476
    %v2567 = vunpack.c.h.b16 %v2476
    %v2568 = vunpack.c.l.b16 %v2477
    %v2569 = vunpack.c.h.b16 %v2477
    %v2570 = vunpack.c.l.b16 %v2478
    %v2571 = vunpack.c.h.b16 %v2478
    %v2572 = vunpack.c.l.b16 %v2479
    %v2573 = vunpack.c.h.b16 %v2479
    %v2574 = vunpack.c.l.b16 %v2480
    %v2575 = vunpack.c.h.b16 %v2480
    %v2576 = vunpack.c.l.b16 %v2481
    %v2577 = vunpack.c.h.b16 %v2481
    %v2578 = vpack.c.b16 %v2518, %v2514
    %v2579 = vpack.c.b16 %v2519, %v2515
    %v2580 = vpack.c.b16 %v2520, %v2516
    %v2581 = vpack.c.b16 %v2521, %v2517
    %v2582 = vpack.c.b16 %v2526, %v2522
    %v2583 = vpack.c.b16 %v2527, %v2523
    %v2584 = vpack.c.b16 %v2528, %v2524
    %v2585 = vpack.c.b16 %v2529, %v2525
    %v2586 = vpack.c.b16 %v2534, %v2530
    %v2587 = vpack.c.b16 %v2535, %v2531
    %v2588 = vpack.c.b16 %v2536, %v2532
    %v2589 = vpack.c.b16 %v2537, %v2533
    %v2590 = vpack.c.b16 %v2542, %v2538
    %v2591 = vpack.c.b16 %v2543, %v2539
    %v2592 = vpack.c.b16 %v2544, %v2540
    %v2593 = vpack.c.b16 %v2545, %v2541
    %v2594 = vpack.c.b16 %v2550, %v2546
    %v2595 = vpack.c.b16 %v2551, %v2547
    %v2596 = vpack.c.b16 %v2552, %v2548
    %v2597 = vpack.c.b16 %v2553, %v2549
    %v2598 = vpack.c.b16 %v2558, %v2554
    %v2599 = vpack.c.b16 %v2559, %v2555
    %v2600 = vpack.c.b16 %v2560, %v2556
    %v2601 = vpack.c.b16 %v2561, %v2557
    %v2602 = vpack.c.b16 %v2566, %v2562
    %v2603 = vpack.c.b16 %v2567, %v2563
    %v2604 = vpack.c.b16 %v2568, %v2564
    %v2605 = vpack.c.b16 %v2569, %v2565
    %v2606 = vpack.c.b16 %v2574, %v2570
    %v2607 = vpack.c.b16 %v2575, %v2571
    %v2608 = vpack.c.b16 %v2576, %v2572
    %v2609 = vpack.c.b16 %v2577, %v2573
    %2642 = vmatpush.bf16.msra.mxu0 %v2606
    %2643 = vmatpush.bf16.msra.mxu0 %v2602
    %2644 = vmatpush.bf16.msra.mxu0 %v2598
    %2645 = vmatpush.bf16.msra.mxu0 %v2594
    %2646 = vmatpush.bf16.msra.mxu0 %v2590
    %2647 = vmatpush.bf16.msra.mxu0 %v2586
    %2648 = vmatpush.bf16.msra.mxu0 %v2582
    %2649 = vmatpush.bf16.msra.mxu0 %v2578
    %2650 = vmatmul.bf16.gmra.mxu0 %v2449
    %v2651 = vpop.f32.mrf.mxu0
    %v2652 = vadd.f32 0.0, %v2651
    %v2653 = vpop.f32.mrf.mxu0
    %2654 = vdwg.mxu0
    %2655 = vmatpush.bf16.msra.mxu0 %v2607
    %2656 = vmatpush.bf16.msra.mxu0 %v2603
    %2657 = vmatpush.bf16.msra.mxu0 %v2599
    %2658 = vmatpush.bf16.msra.mxu0 %v2595
    %2659 = vmatpush.bf16.msra.mxu0 %v2591
    %2660 = vmatpush.bf16.msra.mxu0 %v2587
    %2661 = vmatpush.bf16.msra.mxu0 %v2583
    %2662 = vmatpush.bf16.msra.mxu0 %v2579
    %2663 = vmatmul.bf16.gmra.mxu0 %v2449
    %v2664 = vpop.f32.mrf.mxu0
    %v2665 = vadd.f32 0.0, %v2664
    %v2666 = vpop.f32.mrf.mxu0
    %2667 = vdwg.mxu0
    %2668 = vmatpush.bf16.msra.mxu0 %v2608
    %2669 = vmatpush.bf16.msra.mxu0 %v2604
    %2670 = vmatpush.bf16.msra.mxu0 %v2600
    %2671 = vmatpush.bf16.msra.mxu0 %v2596
    %2672 = vmatpush.bf16.msra.mxu0 %v2592
    %2673 = vmatpush.bf16.msra.mxu0 %v2588
    %2674 = vmatpush.bf16.msra.mxu0 %v2584
    %2675 = vmatpush.bf16.msra.mxu0 %v2580
    %2676 = vmatmul.bf16.gmra.mxu0 %v2449
    %v2677 = vpop.f32.mrf.mxu0
    %v2678 = vadd.f32 0.0, %v2677
    %v2679 = vpop.f32.mrf.mxu0
    %2680 = vdwg.mxu0
    %2681 = vmatpush.bf16.msra.mxu0 %v2609
    %2682 = vmatpush.bf16.msra.mxu0 %v2605
    %2683 = vmatpush.bf16.msra.mxu0 %v2601
    %2684 = vmatpush.bf16.msra.mxu0 %v2597
    %2685 = vmatpush.bf16.msra.mxu0 %v2593
    %2686 = vmatpush.bf16.msra.mxu0 %v2589
    %2687 = vmatpush.bf16.msra.mxu0 %v2585
    %2688 = vmatpush.bf16.msra.mxu0 %v2581
    %2689 = vmatmul.bf16.gmra.mxu0 %v2449
    %v2690 = vpop.f32.mrf.mxu0
    %v2691 = vadd.f32 0.0, %v2690
    %v2692 = vpop.f32.mrf.mxu0
    %2693 = vdwg.mxu0
    %v2694 = vadd.f32 %v2444, %v2652
    %v2695 = vadd.f32 %v2445, %v2665
    %v2696 = vadd.f32 %v2446, %v2678
    %v2697 = vadd.f32 %v2447, %v2691
    %v2698 = vxor.u32 %v2694, 2147483648
    %v2699 = vmul.f32 %v2698, 1.442695
    %v2700 = vpow.pop %v2699
    %v2701 = vadd.f32 %v2700, 1.0
    %v2702 = vrcp.pop %v2701
    %v2703 = vmul.f32 %v2701, %v2702
    %v2704 = vsub.f32 1.0, %v2703
    %v2705 = vmul.f32 %v2702, %v2704
    %v2706 = vadd.f32 %v2702, %v2705
    %vm2707 = vweird.f32 %v2701
    %vm2708 = vweird.f32 %v2702
    %vm2709 = vmor %vm2707, %vm2708
    %v2710 = vsel %vm2709, %v2702, %v2706
    %v2711 = vand.u32 2147483647, %v2701
    %vm2712 = vcmp.eq.f32.partialorder %v2711, 8.507059e+37
    %v2713 = vand.u32 %v2701, 2147483648
    %v2714 = vor.u32 1.1754944e-38, %v2713
    %v2715 = vsel %vm2712, %v2714, %v2710
    %v2716 = vmul.f32 1.0, %v2715
    %v2717 = vxor.u32 %v2695, 2147483648
    %v2718 = vmul.f32 %v2717, 1.442695
    %v2719 = vpow.pop %v2718
    %v2720 = vadd.f32 %v2719, 1.0
    %v2721 = vrcp.pop %v2720
    %v2722 = vmul.f32 %v2720, %v2721
    %v2723 = vsub.f32 1.0, %v2722
    %v2724 = vmul.f32 %v2721, %v2723
    %v2725 = vadd.f32 %v2721, %v2724
    %vm2726 = vweird.f32 %v2720
    %vm2727 = vweird.f32 %v2721
    %vm2728 = vmor %vm2726, %vm2727
    %v2729 = vsel %vm2728, %v2721, %v2725
    %v2730 = vand.u32 2147483647, %v2720
    %vm2731 = vcmp.eq.f32.partialorder %v2730, 8.507059e+37
    %v2732 = vand.u32 %v2720, 2147483648
    %v2733 = vor.u32 1.1754944e-38, %v2732
    %v2734 = vsel %vm2731, %v2733, %v2729
    %v2735 = vmul.f32 1.0, %v2734
    %v2736 = vtanh.pop %v2696
    %v2737 = vxor.u32 %v2697, 2147483648
    %v2738 = vmul.f32 %v2737, 1.442695
    %v2739 = vpow.pop %v2738
    %v2740 = vadd.f32 %v2739, 1.0
    %v2741 = vrcp.pop %v2740
    %v2742 = vmul.f32 %v2740, %v2741
    %v2743 = vsub.f32 1.0, %v2742
    %v2744 = vmul.f32 %v2741, %v2743
    %v2745 = vadd.f32 %v2741, %v2744
    %vm2746 = vweird.f32 %v2740
    %vm2747 = vweird.f32 %v2741
    %vm2748 = vmor %vm2746, %vm2747
    %v2749 = vsel %vm2748, %v2741, %v2745
    %v2750 = vand.u32 2147483647, %v2740
    %vm2751 = vcmp.eq.f32.partialorder %v2750, 8.507059e+37
    %v2752 = vand.u32 %v2740, 2147483648
    %v2753 = vor.u32 1.1754944e-38, %v2752
    %v2754 = vsel %vm2751, %v2753, %v2749
    %v2755 = vmul.f32 1.0, %v2754
    %v2756 = vld [vmem:[#allocation5] sm:$0xff]
    %v2757 = vmul.f32 %v2735, %v2756
    %v2758 = vmul.f32 %v2716, %v2736
    %v2759 = vadd.f32 %v2757, %v2758
    %v2760 = vtanh.pop %v2759
    %v2761 = vmul.f32 %v2755, %v2760
    %2762 = vst [vmem:[#allocation5] sm:$0xff] %v2759
    %2763 = vst [vmem:[#allocation4] sm:$0xff] %v2761
    %v2764 = vpack.c.bf16 %v2761, %v2761
    %s2765 = scalar_lea.vmem %s149, 16
    %2766 = vst [vmem:[%s2765] sm:$0xf] %v2764
    %s2767 = scalar_lea.vmem [#allocation6], 64
    %v2768 = vld [vmem:[%s2767] sm:$0xff]
    %v2769 = vld [vmem:[%s2767 + $0x8] sm:$0xff]
    %v2770 = vunpack.c.l.bf16 %v2768
    %v2771 = vunpack.c.h.bf16 %v2768
    %v2772 = vunpack.c.l.bf16 %v2769
    %v2773 = vunpack.c.h.bf16 %v2769
    %v2774 = vld [vmem:[#allocation2] sm:$0xff]
    %v2775 = vpack.c.bf16 %v2774, %v2774
    %v2776 = vld [vmem:[#allocation8] sm:$0xff]
    %v2777 = vld [vmem:[#allocation8 + $0x8] sm:$0xff]
    %v2778 = vld [vmem:[#allocation8 + $0x10] sm:$0xff]
    %v2779 = vld [vmem:[#allocation8 + $0x18] sm:$0xff]
    %v2780 = vld [vmem:[#allocation8 + $0x20] sm:$0xff]
    %v2781 = vld [vmem:[#allocation8 + $0x28] sm:$0xff]
    %v2782 = vld [vmem:[#allocation8 + $0x30] sm:$0xff]
    %v2783 = vld [vmem:[#allocation8 + $0x38] sm:$0xff]
    %v2784 = vld [vmem:[#allocation8 + $0x40] sm:$0xff]
    %v2785 = vld [vmem:[#allocation8 + $0x48] sm:$0xff]
    %v2786 = vld [vmem:[#allocation8 + $0x50] sm:$0xff]
    %v2787 = vld [vmem:[#allocation8 + $0x58] sm:$0xff]
    %v2788 = vld [vmem:[#allocation8 + $0x60] sm:$0xff]
    %v2789 = vld [vmem:[#allocation8 + $0x68] sm:$0xff]
    %v2790 = vld [vmem:[#allocation8 + $0x70] sm:$0xff]
    %v2791 = vld [vmem:[#allocation8 + $0x78] sm:$0xff]
    %v2792 = vld [vmem:[#allocation8 + $0x80] sm:$0xff]
    %v2793 = vld [vmem:[#allocation8 + $0x88] sm:$0xff]
    %v2794 = vld [vmem:[#allocation8 + $0x90] sm:$0xff]
    %v2795 = vld [vmem:[#allocation8 + $0x98] sm:$0xff]
    %v2796 = vld [vmem:[#allocation8 + $0xa0] sm:$0xff]
    %v2797 = vld [vmem:[#allocation8 + $0xa8] sm:$0xff]
    %v2798 = vld [vmem:[#allocation8 + $0xb0] sm:$0xff]
    %v2799 = vld [vmem:[#allocation8 + $0xb8] sm:$0xff]
    %v2800 = vld [vmem:[#allocation8 + $0xc0] sm:$0xff]
    %v2801 = vld [vmem:[#allocation8 + $0xc8] sm:$0xff]
    %v2802 = vld [vmem:[#allocation8 + $0xd0] sm:$0xff]
    %v2803 = vld [vmem:[#allocation8 + $0xd8] sm:$0xff]
    %v2804 = vld [vmem:[#allocation8 + $0xe0] sm:$0xff]
    %v2805 = vld [vmem:[#allocation8 + $0xe8] sm:$0xff]
    %v2806 = vld [vmem:[#allocation8 + $0xf0] sm:$0xff]
    %v2807 = vld [vmem:[#allocation8 + $0xf8] sm:$0xff]
    %v2840 = vunpack.c.l.b16 %v2776
    %v2841 = vunpack.c.h.b16 %v2776
    %v2842 = vunpack.c.l.b16 %v2777
    %v2843 = vunpack.c.h.b16 %v2777
    %v2844 = vunpack.c.l.b16 %v2778
    %v2845 = vunpack.c.h.b16 %v2778
    %v2846 = vunpack.c.l.b16 %v2779
    %v2847 = vunpack.c.h.b16 %v2779
    %v2848 = vunpack.c.l.b16 %v2780
    %v2849 = vunpack.c.h.b16 %v2780
    %v2850 = vunpack.c.l.b16 %v2781
    %v2851 = vunpack.c.h.b16 %v2781
    %v2852 = vunpack.c.l.b16 %v2782
    %v2853 = vunpack.c.h.b16 %v2782
    %v2854 = vunpack.c.l.b16 %v2783
    %v2855 = vunpack.c.h.b16 %v2783
    %v2856 = vunpack.c.l.b16 %v2784
    %v2857 = vunpack.c.h.b16 %v2784
    %v2858 = vunpack.c.l.b16 %v2785
    %v2859 = vunpack.c.h.b16 %v2785
    %v2860 = vunpack.c.l.b16 %v2786
    %v2861 = vunpack.c.h.b16 %v2786
    %v2862 = vunpack.c.l.b16 %v2787
    %v2863 = vunpack.c.h.b16 %v2787
    %v2864 = vunpack.c.l.b16 %v2788
    %v2865 = vunpack.c.h.b16 %v2788
    %v2866 = vunpack.c.l.b16 %v2789
    %v2867 = vunpack.c.h.b16 %v2789
    %v2868 = vunpack.c.l.b16 %v2790
    %v2869 = vunpack.c.h.b16 %v2790
    %v2870 = vunpack.c.l.b16 %v2791
    %v2871 = vunpack.c.h.b16 %v2791
    %v2872 = vunpack.c.l.b16 %v2792
    %v2873 = vunpack.c.h.b16 %v2792
    %v2874 = vunpack.c.l.b16 %v2793
    %v2875 = vunpack.c.h.b16 %v2793
    %v2876 = vunpack.c.l.b16 %v2794
    %v2877 = vunpack.c.h.b16 %v2794
    %v2878 = vunpack.c.l.b16 %v2795
    %v2879 = vunpack.c.h.b16 %v2795
    %v2880 = vunpack.c.l.b16 %v2796
    %v2881 = vunpack.c.h.b16 %v2796
    %v2882 = vunpack.c.l.b16 %v2797
    %v2883 = vunpack.c.h.b16 %v2797
    %v2884 = vunpack.c.l.b16 %v2798
    %v2885 = vunpack.c.h.b16 %v2798
    %v2886 = vunpack.c.l.b16 %v2799
    %v2887 = vunpack.c.h.b16 %v2799
    %v2888 = vunpack.c.l.b16 %v2800
    %v2889 = vunpack.c.h.b16 %v2800
    %v2890 = vunpack.c.l.b16 %v2801
    %v2891 = vunpack.c.h.b16 %v2801
    %v2892 = vunpack.c.l.b16 %v2802
    %v2893 = vunpack.c.h.b16 %v2802
    %v2894 = vunpack.c.l.b16 %v2803
    %v2895 = vunpack.c.h.b16 %v2803
    %v2896 = vunpack.c.l.b16 %v2804
    %v2897 = vunpack.c.h.b16 %v2804
    %v2898 = vunpack.c.l.b16 %v2805
    %v2899 = vunpack.c.h.b16 %v2805
    %v2900 = vunpack.c.l.b16 %v2806
    %v2901 = vunpack.c.h.b16 %v2806
    %v2902 = vunpack.c.l.b16 %v2807
    %v2903 = vunpack.c.h.b16 %v2807
    %v2904 = vpack.c.b16 %v2844, %v2840
    %v2905 = vpack.c.b16 %v2845, %v2841
    %v2906 = vpack.c.b16 %v2846, %v2842
    %v2907 = vpack.c.b16 %v2847, %v2843
    %v2908 = vpack.c.b16 %v2852, %v2848
    %v2909 = vpack.c.b16 %v2853, %v2849
    %v2910 = vpack.c.b16 %v2854, %v2850
    %v2911 = vpack.c.b16 %v2855, %v2851
    %v2912 = vpack.c.b16 %v2860, %v2856
    %v2913 = vpack.c.b16 %v2861, %v2857
    %v2914 = vpack.c.b16 %v2862, %v2858
    %v2915 = vpack.c.b16 %v2863, %v2859
    %v2916 = vpack.c.b16 %v2868, %v2864
    %v2917 = vpack.c.b16 %v2869, %v2865
    %v2918 = vpack.c.b16 %v2870, %v2866
    %v2919 = vpack.c.b16 %v2871, %v2867
    %v2920 = vpack.c.b16 %v2876, %v2872
    %v2921 = vpack.c.b16 %v2877, %v2873
    %v2922 = vpack.c.b16 %v2878, %v2874
    %v2923 = vpack.c.b16 %v2879, %v2875
    %v2924 = vpack.c.b16 %v2884, %v2880
    %v2925 = vpack.c.b16 %v2885, %v2881
    %v2926 = vpack.c.b16 %v2886, %v2882
    %v2927 = vpack.c.b16 %v2887, %v2883
    %v2928 = vpack.c.b16 %v2892, %v2888
    %v2929 = vpack.c.b16 %v2893, %v2889
    %v2930 = vpack.c.b16 %v2894, %v2890
    %v2931 = vpack.c.b16 %v2895, %v2891
    %v2932 = vpack.c.b16 %v2900, %v2896
    %v2933 = vpack.c.b16 %v2901, %v2897
    %v2934 = vpack.c.b16 %v2902, %v2898
    %v2935 = vpack.c.b16 %v2903, %v2899
    %2968 = vmatpush.bf16.msra.mxu0 %v2932
    %2969 = vmatpush.bf16.msra.mxu0 %v2928
    %2970 = vmatpush.bf16.msra.mxu0 %v2924
    %2971 = vmatpush.bf16.msra.mxu0 %v2920
    %2972 = vmatpush.bf16.msra.mxu0 %v2916
    %2973 = vmatpush.bf16.msra.mxu0 %v2912
    %2974 = vmatpush.bf16.msra.mxu0 %v2908
    %2975 = vmatpush.bf16.msra.mxu0 %v2904
    %2976 = vmatmul.bf16.gmra.mxu0 %v2775
    %v2977 = vpop.f32.mrf.mxu0
    %v2978 = vadd.f32 0.0, %v2977
    %v2979 = vpop.f32.mrf.mxu0
    %2980 = vdwg.mxu0
    %2981 = vmatpush.bf16.msra.mxu0 %v2933
    %2982 = vmatpush.bf16.msra.mxu0 %v2929
    %2983 = vmatpush.bf16.msra.mxu0 %v2925
    %2984 = vmatpush.bf16.msra.mxu0 %v2921
    %2985 = vmatpush.bf16.msra.mxu0 %v2917
    %2986 = vmatpush.bf16.msra.mxu0 %v2913
    %2987 = vmatpush.bf16.msra.mxu0 %v2909
    %2988 = vmatpush.bf16.msra.mxu0 %v2905
    %2989 = vmatmul.bf16.gmra.mxu0 %v2775
    %v2990 = vpop.f32.mrf.mxu0
    %v2991 = vadd.f32 0.0, %v2990
    %v2992 = vpop.f32.mrf.mxu0
    %2993 = vdwg.mxu0
    %2994 = vmatpush.bf16.msra.mxu0 %v2934
    %2995 = vmatpush.bf16.msra.mxu0 %v2930
    %2996 = vmatpush.bf16.msra.mxu0 %v2926
    %2997 = vmatpush.bf16.msra.mxu0 %v2922
    %2998 = vmatpush.bf16.msra.mxu0 %v2918
    %2999 = vmatpush.bf16.msra.mxu0 %v2914
    %3000 = vmatpush.bf16.msra.mxu0 %v2910
    %3001 = vmatpush.bf16.msra.mxu0 %v2906
    %3002 = vmatmul.bf16.gmra.mxu0 %v2775
    %v3003 = vpop.f32.mrf.mxu0
    %v3004 = vadd.f32 0.0, %v3003
    %v3005 = vpop.f32.mrf.mxu0
    %3006 = vdwg.mxu0
    %3007 = vmatpush.bf16.msra.mxu0 %v2935
    %3008 = vmatpush.bf16.msra.mxu0 %v2931
    %3009 = vmatpush.bf16.msra.mxu0 %v2927
    %3010 = vmatpush.bf16.msra.mxu0 %v2923
    %3011 = vmatpush.bf16.msra.mxu0 %v2919
    %3012 = vmatpush.bf16.msra.mxu0 %v2915
    %3013 = vmatpush.bf16.msra.mxu0 %v2911
    %3014 = vmatpush.bf16.msra.mxu0 %v2907
    %3015 = vmatmul.bf16.gmra.mxu0 %v2775
    %v3016 = vpop.f32.mrf.mxu0
    %v3017 = vadd.f32 0.0, %v3016
    %v3018 = vpop.f32.mrf.mxu0
    %3019 = vdwg.mxu0
    %v3020 = vadd.f32 %v2770, %v2978
    %v3021 = vadd.f32 %v2771, %v2991
    %v3022 = vadd.f32 %v2772, %v3004
    %v3023 = vadd.f32 %v2773, %v3017
    %v3024 = vxor.u32 %v3020, 2147483648
    %v3025 = vmul.f32 %v3024, 1.442695
    %v3026 = vpow.pop %v3025
    %v3027 = vadd.f32 %v3026, 1.0
    %v3028 = vrcp.pop %v3027
    %v3029 = vmul.f32 %v3027, %v3028
    %v3030 = vsub.f32 1.0, %v3029
    %v3031 = vmul.f32 %v3028, %v3030
    %v3032 = vadd.f32 %v3028, %v3031
    %vm3033 = vweird.f32 %v3027
    %vm3034 = vweird.f32 %v3028
    %vm3035 = vmor %vm3033, %vm3034
    %v3036 = vsel %vm3035, %v3028, %v3032
    %v3037 = vand.u32 2147483647, %v3027
    %vm3038 = vcmp.eq.f32.partialorder %v3037, 8.507059e+37
    %v3039 = vand.u32 %v3027, 2147483648
    %v3040 = vor.u32 1.1754944e-38, %v3039
    %v3041 = vsel %vm3038, %v3040, %v3036
    %v3042 = vmul.f32 1.0, %v3041
    %v3043 = vxor.u32 %v3021, 2147483648
    %v3044 = vmul.f32 %v3043, 1.442695
    %v3045 = vpow.pop %v3044
    %v3046 = vadd.f32 %v3045, 1.0
    %v3047 = vrcp.pop %v3046
    %v3048 = vmul.f32 %v3046, %v3047
    %v3049 = vsub.f32 1.0, %v3048
    %v3050 = vmul.f32 %v3047, %v3049
    %v3051 = vadd.f32 %v3047, %v3050
    %vm3052 = vweird.f32 %v3046
    %vm3053 = vweird.f32 %v3047
    %vm3054 = vmor %vm3052, %vm3053
    %v3055 = vsel %vm3054, %v3047, %v3051
    %v3056 = vand.u32 2147483647, %v3046
    %vm3057 = vcmp.eq.f32.partialorder %v3056, 8.507059e+37
    %v3058 = vand.u32 %v3046, 2147483648
    %v3059 = vor.u32 1.1754944e-38, %v3058
    %v3060 = vsel %vm3057, %v3059, %v3055
    %v3061 = vmul.f32 1.0, %v3060
    %v3062 = vtanh.pop %v3022
    %v3063 = vxor.u32 %v3023, 2147483648
    %v3064 = vmul.f32 %v3063, 1.442695
    %v3065 = vpow.pop %v3064
    %v3066 = vadd.f32 %v3065, 1.0
    %v3067 = vrcp.pop %v3066
    %v3068 = vmul.f32 %v3066, %v3067
    %v3069 = vsub.f32 1.0, %v3068
    %v3070 = vmul.f32 %v3067, %v3069
    %v3071 = vadd.f32 %v3067, %v3070
    %vm3072 = vweird.f32 %v3066
    %vm3073 = vweird.f32 %v3067
    %vm3074 = vmor %vm3072, %vm3073
    %v3075 = vsel %vm3074, %v3067, %v3071
    %v3076 = vand.u32 2147483647, %v3066
    %vm3077 = vcmp.eq.f32.partialorder %v3076, 8.507059e+37
    %v3078 = vand.u32 %v3066, 2147483648
    %v3079 = vor.u32 1.1754944e-38, %v3078
    %v3080 = vsel %vm3077, %v3079, %v3075
    %v3081 = vmul.f32 1.0, %v3080
    %v3082 = vld [vmem:[#allocation3] sm:$0xff]
    %v3083 = vmul.f32 %v3061, %v3082
    %v3084 = vmul.f32 %v3042, %v3062
    %v3085 = vadd.f32 %v3083, %v3084
    %v3086 = vtanh.pop %v3085
    %v3087 = vmul.f32 %v3081, %v3086
    %3088 = vst [vmem:[#allocation3] sm:$0xff] %v3085
    %3089 = vst [vmem:[#allocation2] sm:$0xff] %v3087
    %v3090 = vpack.c.bf16 %v3087, %v3087
    %s3091 = scalar_lea.vmem %s3, 16
    %3092 = vst [vmem:[%s3091] sm:$0xf] %v3090
    %s3093 = scalar_lea.vmem [#allocation7], 48
    %v3094 = vld [vmem:[%s3093] sm:$0xff]
    %v3095 = vld [vmem:[%s3093 + $0x8] sm:$0xff]
    %v3096 = vunpack.c.l.bf16 %v3094
    %v3097 = vunpack.c.h.bf16 %v3094
    %v3098 = vunpack.c.l.bf16 %v3095
    %v3099 = vunpack.c.h.bf16 %v3095
    %v3100 = vld [vmem:[#allocation4] sm:$0xff]
    %v3101 = vpack.c.bf16 %v3100, %v3100
    %v3102 = vld [vmem:[%s493] sm:$0xff]
    %v3103 = vld [vmem:[%s493 + $0x8] sm:$0xff]
    %v3104 = vld [vmem:[%s493 + $0x10] sm:$0xff]
    %v3105 = vld [vmem:[%s493 + $0x18] sm:$0xff]
    %v3106 = vld [vmem:[%s493 + $0x20] sm:$0xff]
    %v3107 = vld [vmem:[%s493 + $0x28] sm:$0xff]
    %v3108 = vld [vmem:[%s493 + $0x30] sm:$0xff]
    %v3109 = vld [vmem:[%s493 + $0x38] sm:$0xff]
    %v3110 = vld [vmem:[%s493 + $0x40] sm:$0xff]
    %v3111 = vld [vmem:[%s493 + $0x48] sm:$0xff]
    %v3112 = vld [vmem:[%s493 + $0x50] sm:$0xff]
    %v3113 = vld [vmem:[%s493 + $0x58] sm:$0xff]
    %v3114 = vld [vmem:[%s493 + $0x60] sm:$0xff]
    %v3115 = vld [vmem:[%s493 + $0x68] sm:$0xff]
    %v3116 = vld [vmem:[%s493 + $0x70] sm:$0xff]
    %v3117 = vld [vmem:[%s493 + $0x78] sm:$0xff]
    %v3118 = vld [vmem:[%s493 + $0x80] sm:$0xff]
    %v3119 = vld [vmem:[%s493 + $0x88] sm:$0xff]
    %v3120 = vld [vmem:[%s493 + $0x90] sm:$0xff]
    %v3121 = vld [vmem:[%s493 + $0x98] sm:$0xff]
    %v3122 = vld [vmem:[%s493 + $0xa0] sm:$0xff]
    %v3123 = vld [vmem:[%s493 + $0xa8] sm:$0xff]
    %v3124 = vld [vmem:[%s493 + $0xb0] sm:$0xff]
    %v3125 = vld [vmem:[%s493 + $0xb8] sm:$0xff]
    %v3126 = vld [vmem:[%s493 + $0xc0] sm:$0xff]
    %v3127 = vld [vmem:[%s493 + $0xc8] sm:$0xff]
    %v3128 = vld [vmem:[%s493 + $0xd0] sm:$0xff]
    %v3129 = vld [vmem:[%s493 + $0xd8] sm:$0xff]
    %v3130 = vld [vmem:[%s493 + $0xe0] sm:$0xff]
    %v3131 = vld [vmem:[%s493 + $0xe8] sm:$0xff]
    %v3132 = vld [vmem:[%s493 + $0xf0] sm:$0xff]
    %v3133 = vld [vmem:[%s493 + $0xf8] sm:$0xff]
    %v3166 = vunpack.c.l.b16 %v3102
    %v3167 = vunpack.c.h.b16 %v3102
    %v3168 = vunpack.c.l.b16 %v3103
    %v3169 = vunpack.c.h.b16 %v3103
    %v3170 = vunpack.c.l.b16 %v3104
    %v3171 = vunpack.c.h.b16 %v3104
    %v3172 = vunpack.c.l.b16 %v3105
    %v3173 = vunpack.c.h.b16 %v3105
    %v3174 = vunpack.c.l.b16 %v3106
    %v3175 = vunpack.c.h.b16 %v3106
    %v3176 = vunpack.c.l.b16 %v3107
    %v3177 = vunpack.c.h.b16 %v3107
    %v3178 = vunpack.c.l.b16 %v3108
    %v3179 = vunpack.c.h.b16 %v3108
    %v3180 = vunpack.c.l.b16 %v3109
    %v3181 = vunpack.c.h.b16 %v3109
    %v3182 = vunpack.c.l.b16 %v3110
    %v3183 = vunpack.c.h.b16 %v3110
    %v3184 = vunpack.c.l.b16 %v3111
    %v3185 = vunpack.c.h.b16 %v3111
    %v3186 = vunpack.c.l.b16 %v3112
    %v3187 = vunpack.c.h.b16 %v3112
    %v3188 = vunpack.c.l.b16 %v3113
    %v3189 = vunpack.c.h.b16 %v3113
    %v3190 = vunpack.c.l.b16 %v3114
    %v3191 = vunpack.c.h.b16 %v3114
    %v3192 = vunpack.c.l.b16 %v3115
    %v3193 = vunpack.c.h.b16 %v3115
    %v3194 = vunpack.c.l.b16 %v3116
    %v3195 = vunpack.c.h.b16 %v3116
    %v3196 = vunpack.c.l.b16 %v3117
    %v3197 = vunpack.c.h.b16 %v3117
    %v3198 = vunpack.c.l.b16 %v3118
    %v3199 = vunpack.c.h.b16 %v3118
    %v3200 = vunpack.c.l.b16 %v3119
    %v3201 = vunpack.c.h.b16 %v3119
    %v3202 = vunpack.c.l.b16 %v3120
    %v3203 = vunpack.c.h.b16 %v3120
    %v3204 = vunpack.c.l.b16 %v3121
    %v3205 = vunpack.c.h.b16 %v3121
    %v3206 = vunpack.c.l.b16 %v3122
    %v3207 = vunpack.c.h.b16 %v3122
    %v3208 = vunpack.c.l.b16 %v3123
    %v3209 = vunpack.c.h.b16 %v3123
    %v3210 = vunpack.c.l.b16 %v3124
    %v3211 = vunpack.c.h.b16 %v3124
    %v3212 = vunpack.c.l.b16 %v3125
    %v3213 = vunpack.c.h.b16 %v3125
    %v3214 = vunpack.c.l.b16 %v3126
    %v3215 = vunpack.c.h.b16 %v3126
    %v3216 = vunpack.c.l.b16 %v3127
    %v3217 = vunpack.c.h.b16 %v3127
    %v3218 = vunpack.c.l.b16 %v3128
    %v3219 = vunpack.c.h.b16 %v3128
    %v3220 = vunpack.c.l.b16 %v3129
    %v3221 = vunpack.c.h.b16 %v3129
    %v3222 = vunpack.c.l.b16 %v3130
    %v3223 = vunpack.c.h.b16 %v3130
    %v3224 = vunpack.c.l.b16 %v3131
    %v3225 = vunpack.c.h.b16 %v3131
    %v3226 = vunpack.c.l.b16 %v3132
    %v3227 = vunpack.c.h.b16 %v3132
    %v3228 = vunpack.c.l.b16 %v3133
    %v3229 = vunpack.c.h.b16 %v3133
    %v3230 = vpack.c.b16 %v3170, %v3166
    %v3231 = vpack.c.b16 %v3171, %v3167
    %v3232 = vpack.c.b16 %v3172, %v3168
    %v3233 = vpack.c.b16 %v3173, %v3169
    %v3234 = vpack.c.b16 %v3178, %v3174
    %v3235 = vpack.c.b16 %v3179, %v3175
    %v3236 = vpack.c.b16 %v3180, %v3176
    %v3237 = vpack.c.b16 %v3181, %v3177
    %v3238 = vpack.c.b16 %v3186, %v3182
    %v3239 = vpack.c.b16 %v3187, %v3183
    %v3240 = vpack.c.b16 %v3188, %v3184
    %v3241 = vpack.c.b16 %v3189, %v3185
    %v3242 = vpack.c.b16 %v3194, %v3190
    %v3243 = vpack.c.b16 %v3195, %v3191
    %v3244 = vpack.c.b16 %v3196, %v3192
    %v3245 = vpack.c.b16 %v3197, %v3193
    %v3246 = vpack.c.b16 %v3202, %v3198
    %v3247 = vpack.c.b16 %v3203, %v3199
    %v3248 = vpack.c.b16 %v3204, %v3200
    %v3249 = vpack.c.b16 %v3205, %v3201
    %v3250 = vpack.c.b16 %v3210, %v3206
    %v3251 = vpack.c.b16 %v3211, %v3207
    %v3252 = vpack.c.b16 %v3212, %v3208
    %v3253 = vpack.c.b16 %v3213, %v3209
    %v3254 = vpack.c.b16 %v3218, %v3214
    %v3255 = vpack.c.b16 %v3219, %v3215
    %v3256 = vpack.c.b16 %v3220, %v3216
    %v3257 = vpack.c.b16 %v3221, %v3217
    %v3258 = vpack.c.b16 %v3226, %v3222
    %v3259 = vpack.c.b16 %v3227, %v3223
    %v3260 = vpack.c.b16 %v3228, %v3224
    %v3261 = vpack.c.b16 %v3229, %v3225
    %3294 = vmatpush.bf16.msra.mxu0 %v3258
    %3295 = vmatpush.bf16.msra.mxu0 %v3254
    %3296 = vmatpush.bf16.msra.mxu0 %v3250
    %3297 = vmatpush.bf16.msra.mxu0 %v3246
    %3298 = vmatpush.bf16.msra.mxu0 %v3242
    %3299 = vmatpush.bf16.msra.mxu0 %v3238
    %3300 = vmatpush.bf16.msra.mxu0 %v3234
    %3301 = vmatpush.bf16.msra.mxu0 %v3230
    %3302 = vmatmul.bf16.gmra.mxu0 %v3101
    %v3303 = vpop.f32.mrf.mxu0
    %v3304 = vadd.f32 0.0, %v3303
    %v3305 = vpop.f32.mrf.mxu0
    %3306 = vdwg.mxu0
    %3307 = vmatpush.bf16.msra.mxu0 %v3259
    %3308 = vmatpush.bf16.msra.mxu0 %v3255
    %3309 = vmatpush.bf16.msra.mxu0 %v3251
    %3310 = vmatpush.bf16.msra.mxu0 %v3247
    %3311 = vmatpush.bf16.msra.mxu0 %v3243
    %3312 = vmatpush.bf16.msra.mxu0 %v3239
    %3313 = vmatpush.bf16.msra.mxu0 %v3235
    %3314 = vmatpush.bf16.msra.mxu0 %v3231
    %3315 = vmatmul.bf16.gmra.mxu0 %v3101
    %v3316 = vpop.f32.mrf.mxu0
    %v3317 = vadd.f32 0.0, %v3316
    %v3318 = vpop.f32.mrf.mxu0
    %3319 = vdwg.mxu0
    %3320 = vmatpush.bf16.msra.mxu0 %v3260
    %3321 = vmatpush.bf16.msra.mxu0 %v3256
    %3322 = vmatpush.bf16.msra.mxu0 %v3252
    %3323 = vmatpush.bf16.msra.mxu0 %v3248
    %3324 = vmatpush.bf16.msra.mxu0 %v3244
    %3325 = vmatpush.bf16.msra.mxu0 %v3240
    %3326 = vmatpush.bf16.msra.mxu0 %v3236
    %3327 = vmatpush.bf16.msra.mxu0 %v3232
    %3328 = vmatmul.bf16.gmra.mxu0 %v3101
    %v3329 = vpop.f32.mrf.mxu0
    %v3330 = vadd.f32 0.0, %v3329
    %v3331 = vpop.f32.mrf.mxu0
    %3332 = vdwg.mxu0
    %3333 = vmatpush.bf16.msra.mxu0 %v3261
    %3334 = vmatpush.bf16.msra.mxu0 %v3257
    %3335 = vmatpush.bf16.msra.mxu0 %v3253
    %3336 = vmatpush.bf16.msra.mxu0 %v3249
    %3337 = vmatpush.bf16.msra.mxu0 %v3245
    %3338 = vmatpush.bf16.msra.mxu0 %v3241
    %3339 = vmatpush.bf16.msra.mxu0 %v3237
    %3340 = vmatpush.bf16.msra.mxu0 %v3233
    %3341 = vmatmul.bf16.gmra.mxu0 %v3101
    %v3342 = vpop.f32.mrf.mxu0
    %v3343 = vadd.f32 0.0, %v3342
    %v3344 = vpop.f32.mrf.mxu0
    %3345 = vdwg.mxu0
    %v3346 = vadd.f32 %v3096, %v3304
    %v3347 = vadd.f32 %v3097, %v3317
    %v3348 = vadd.f32 %v3098, %v3330
    %v3349 = vadd.f32 %v3099, %v3343
    %v3350 = vxor.u32 %v3346, 2147483648
    %v3351 = vmul.f32 %v3350, 1.442695
    %v3352 = vpow.pop %v3351
    %v3353 = vadd.f32 %v3352, 1.0
    %v3354 = vrcp.pop %v3353
    %v3355 = vmul.f32 %v3353, %v3354
    %v3356 = vsub.f32 1.0, %v3355
    %v3357 = vmul.f32 %v3354, %v3356
    %v3358 = vadd.f32 %v3354, %v3357
    %vm3359 = vweird.f32 %v3353
    %vm3360 = vweird.f32 %v3354
    %vm3361 = vmor %vm3359, %vm3360
    %v3362 = vsel %vm3361, %v3354, %v3358
    %v3363 = vand.u32 2147483647, %v3353
    %vm3364 = vcmp.eq.f32.partialorder %v3363, 8.507059e+37
    %v3365 = vand.u32 %v3353, 2147483648
    %v3366 = vor.u32 1.1754944e-38, %v3365
    %v3367 = vsel %vm3364, %v3366, %v3362
    %v3368 = vmul.f32 1.0, %v3367
    %v3369 = vxor.u32 %v3347, 2147483648
    %v3370 = vmul.f32 %v3369, 1.442695
    %v3371 = vpow.pop %v3370
    %v3372 = vadd.f32 %v3371, 1.0
    %v3373 = vrcp.pop %v3372
    %v3374 = vmul.f32 %v3372, %v3373
    %v3375 = vsub.f32 1.0, %v3374
    %v3376 = vmul.f32 %v3373, %v3375
    %v3377 = vadd.f32 %v3373, %v3376
    %vm3378 = vweird.f32 %v3372
    %vm3379 = vweird.f32 %v3373
    %vm3380 = vmor %vm3378, %vm3379
    %v3381 = vsel %vm3380, %v3373, %v3377
    %v3382 = vand.u32 2147483647, %v3372
    %vm3383 = vcmp.eq.f32.partialorder %v3382, 8.507059e+37
    %v3384 = vand.u32 %v3372, 2147483648
    %v3385 = vor.u32 1.1754944e-38, %v3384
    %v3386 = vsel %vm3383, %v3385, %v3381
    %v3387 = vmul.f32 1.0, %v3386
    %v3388 = vtanh.pop %v3348
    %v3389 = vxor.u32 %v3349, 2147483648
    %v3390 = vmul.f32 %v3389, 1.442695
    %v3391 = vpow.pop %v3390
    %v3392 = vadd.f32 %v3391, 1.0
    %v3393 = vrcp.pop %v3392
    %v3394 = vmul.f32 %v3392, %v3393
    %v3395 = vsub.f32 1.0, %v3394
    %v3396 = vmul.f32 %v3393, %v3395
    %v3397 = vadd.f32 %v3393, %v3396
    %vm3398 = vweird.f32 %v3392
    %vm3399 = vweird.f32 %v3393
    %vm3400 = vmor %vm3398, %vm3399
    %v3401 = vsel %vm3400, %v3393, %v3397
    %v3402 = vand.u32 2147483647, %v3392
    %vm3403 = vcmp.eq.f32.partialorder %v3402, 8.507059e+37
    %v3404 = vand.u32 %v3392, 2147483648
    %v3405 = vor.u32 1.1754944e-38, %v3404
    %v3406 = vsel %vm3403, %v3405, %v3401
    %v3407 = vmul.f32 1.0, %v3406
    %v3408 = vld [vmem:[#allocation5] sm:$0xff]
    %v3409 = vmul.f32 %v3387, %v3408
    %v3410 = vmul.f32 %v3368, %v3388
    %v3411 = vadd.f32 %v3409, %v3410
    %v3412 = vtanh.pop %v3411
    %v3413 = vmul.f32 %v3407, %v3412
    %3414 = vst [vmem:[#allocation5] sm:$0xff] %v3411
    %3415 = vst [vmem:[#allocation4] sm:$0xff] %v3413
    %v3416 = vpack.c.bf16 %v3413, %v3413
    %s3417 = scalar_lea.vmem %s149, 12
    %3418 = vst [vmem:[%s3417] sm:$0xf] %v3416
    %s3419 = scalar_lea.vmem [#allocation6], 80
    %v3420 = vld [vmem:[%s3419] sm:$0xff]
    %v3421 = vld [vmem:[%s3419 + $0x8] sm:$0xff]
    %v3422 = vunpack.c.l.bf16 %v3420
    %v3423 = vunpack.c.h.bf16 %v3420
    %v3424 = vunpack.c.l.bf16 %v3421
    %v3425 = vunpack.c.h.bf16 %v3421
    %v3426 = vld [vmem:[#allocation2] sm:$0xff]
    %v3427 = vpack.c.bf16 %v3426, %v3426
    %v3428 = vld [vmem:[#allocation8] sm:$0xff]
    %v3429 = vld [vmem:[#allocation8 + $0x8] sm:$0xff]
    %v3430 = vld [vmem:[#allocation8 + $0x10] sm:$0xff]
    %v3431 = vld [vmem:[#allocation8 + $0x18] sm:$0xff]
    %v3432 = vld [vmem:[#allocation8 + $0x20] sm:$0xff]
    %v3433 = vld [vmem:[#allocation8 + $0x28] sm:$0xff]
    %v3434 = vld [vmem:[#allocation8 + $0x30] sm:$0xff]
    %v3435 = vld [vmem:[#allocation8 + $0x38] sm:$0xff]
    %v3436 = vld [vmem:[#allocation8 + $0x40] sm:$0xff]
    %v3437 = vld [vmem:[#allocation8 + $0x48] sm:$0xff]
    %v3438 = vld [vmem:[#allocation8 + $0x50] sm:$0xff]
    %v3439 = vld [vmem:[#allocation8 + $0x58] sm:$0xff]
    %v3440 = vld [vmem:[#allocation8 + $0x60] sm:$0xff]
    %v3441 = vld [vmem:[#allocation8 + $0x68] sm:$0xff]
    %v3442 = vld [vmem:[#allocation8 + $0x70] sm:$0xff]
    %v3443 = vld [vmem:[#allocation8 + $0x78] sm:$0xff]
    %v3444 = vld [vmem:[#allocation8 + $0x80] sm:$0xff]
    %v3445 = vld [vmem:[#allocation8 + $0x88] sm:$0xff]
    %v3446 = vld [vmem:[#allocation8 + $0x90] sm:$0xff]
    %v3447 = vld [vmem:[#allocation8 + $0x98] sm:$0xff]
    %v3448 = vld [vmem:[#allocation8 + $0xa0] sm:$0xff]
    %v3449 = vld [vmem:[#allocation8 + $0xa8] sm:$0xff]
    %v3450 = vld [vmem:[#allocation8 + $0xb0] sm:$0xff]
    %v3451 = vld [vmem:[#allocation8 + $0xb8] sm:$0xff]
    %v3452 = vld [vmem:[#allocation8 + $0xc0] sm:$0xff]
    %v3453 = vld [vmem:[#allocation8 + $0xc8] sm:$0xff]
    %v3454 = vld [vmem:[#allocation8 + $0xd0] sm:$0xff]
    %v3455 = vld [vmem:[#allocation8 + $0xd8] sm:$0xff]
    %v3456 = vld [vmem:[#allocation8 + $0xe0] sm:$0xff]
    %v3457 = vld [vmem:[#allocation8 + $0xe8] sm:$0xff]
    %v3458 = vld [vmem:[#allocation8 + $0xf0] sm:$0xff]
    %v3459 = vld [vmem:[#allocation8 + $0xf8] sm:$0xff]
    %v3492 = vunpack.c.l.b16 %v3428
    %v3493 = vunpack.c.h.b16 %v3428
    %v3494 = vunpack.c.l.b16 %v3429
    %v3495 = vunpack.c.h.b16 %v3429
    %v3496 = vunpack.c.l.b16 %v3430
    %v3497 = vunpack.c.h.b16 %v3430
    %v3498 = vunpack.c.l.b16 %v3431
    %v3499 = vunpack.c.h.b16 %v3431
    %v3500 = vunpack.c.l.b16 %v3432
    %v3501 = vunpack.c.h.b16 %v3432
    %v3502 = vunpack.c.l.b16 %v3433
    %v3503 = vunpack.c.h.b16 %v3433
    %v3504 = vunpack.c.l.b16 %v3434
    %v3505 = vunpack.c.h.b16 %v3434
    %v3506 = vunpack.c.l.b16 %v3435
    %v3507 = vunpack.c.h.b16 %v3435
    %v3508 = vunpack.c.l.b16 %v3436
    %v3509 = vunpack.c.h.b16 %v3436
    %v3510 = vunpack.c.l.b16 %v3437
    %v3511 = vunpack.c.h.b16 %v3437
    %v3512 = vunpack.c.l.b16 %v3438
    %v3513 = vunpack.c.h.b16 %v3438
    %v3514 = vunpack.c.l.b16 %v3439
    %v3515 = vunpack.c.h.b16 %v3439
    %v3516 = vunpack.c.l.b16 %v3440
    %v3517 = vunpack.c.h.b16 %v3440
    %v3518 = vunpack.c.l.b16 %v3441
    %v3519 = vunpack.c.h.b16 %v3441
    %v3520 = vunpack.c.l.b16 %v3442
    %v3521 = vunpack.c.h.b16 %v3442
    %v3522 = vunpack.c.l.b16 %v3443
    %v3523 = vunpack.c.h.b16 %v3443
    %v3524 = vunpack.c.l.b16 %v3444
    %v3525 = vunpack.c.h.b16 %v3444
    %v3526 = vunpack.c.l.b16 %v3445
    %v3527 = vunpack.c.h.b16 %v3445
    %v3528 = vunpack.c.l.b16 %v3446
    %v3529 = vunpack.c.h.b16 %v3446
    %v3530 = vunpack.c.l.b16 %v3447
    %v3531 = vunpack.c.h.b16 %v3447
    %v3532 = vunpack.c.l.b16 %v3448
    %v3533 = vunpack.c.h.b16 %v3448
    %v3534 = vunpack.c.l.b16 %v3449
    %v3535 = vunpack.c.h.b16 %v3449
    %v3536 = vunpack.c.l.b16 %v3450
    %v3537 = vunpack.c.h.b16 %v3450
    %v3538 = vunpack.c.l.b16 %v3451
    %v3539 = vunpack.c.h.b16 %v3451
    %v3540 = vunpack.c.l.b16 %v3452
    %v3541 = vunpack.c.h.b16 %v3452
    %v3542 = vunpack.c.l.b16 %v3453
    %v3543 = vunpack.c.h.b16 %v3453
    %v3544 = vunpack.c.l.b16 %v3454
    %v3545 = vunpack.c.h.b16 %v3454
    %v3546 = vunpack.c.l.b16 %v3455
    %v3547 = vunpack.c.h.b16 %v3455
    %v3548 = vunpack.c.l.b16 %v3456
    %v3549 = vunpack.c.h.b16 %v3456
    %v3550 = vunpack.c.l.b16 %v3457
    %v3551 = vunpack.c.h.b16 %v3457
    %v3552 = vunpack.c.l.b16 %v3458
    %v3553 = vunpack.c.h.b16 %v3458
    %v3554 = vunpack.c.l.b16 %v3459
    %v3555 = vunpack.c.h.b16 %v3459
    %v3556 = vpack.c.b16 %v3496, %v3492
    %v3557 = vpack.c.b16 %v3497, %v3493
    %v3558 = vpack.c.b16 %v3498, %v3494
    %v3559 = vpack.c.b16 %v3499, %v3495
    %v3560 = vpack.c.b16 %v3504, %v3500
    %v3561 = vpack.c.b16 %v3505, %v3501
    %v3562 = vpack.c.b16 %v3506, %v3502
    %v3563 = vpack.c.b16 %v3507, %v3503
    %v3564 = vpack.c.b16 %v3512, %v3508
    %v3565 = vpack.c.b16 %v3513, %v3509
    %v3566 = vpack.c.b16 %v3514, %v3510
    %v3567 = vpack.c.b16 %v3515, %v3511
    %v3568 = vpack.c.b16 %v3520, %v3516
    %v3569 = vpack.c.b16 %v3521, %v3517
    %v3570 = vpack.c.b16 %v3522, %v3518
    %v3571 = vpack.c.b16 %v3523, %v3519
    %v3572 = vpack.c.b16 %v3528, %v3524
    %v3573 = vpack.c.b16 %v3529, %v3525
    %v3574 = vpack.c.b16 %v3530, %v3526
    %v3575 = vpack.c.b16 %v3531, %v3527
    %v3576 = vpack.c.b16 %v3536, %v3532
    %v3577 = vpack.c.b16 %v3537, %v3533
    %v3578 = vpack.c.b16 %v3538, %v3534
    %v3579 = vpack.c.b16 %v3539, %v3535
    %v3580 = vpack.c.b16 %v3544, %v3540
    %v3581 = vpack.c.b16 %v3545, %v3541
    %v3582 = vpack.c.b16 %v3546, %v3542
    %v3583 = vpack.c.b16 %v3547, %v3543
    %v3584 = vpack.c.b16 %v3552, %v3548
    %v3585 = vpack.c.b16 %v3553, %v3549
    %v3586 = vpack.c.b16 %v3554, %v3550
    %v3587 = vpack.c.b16 %v3555, %v3551
    %3620 = vmatpush.bf16.msra.mxu0 %v3584
    %3621 = vmatpush.bf16.msra.mxu0 %v3580
    %3622 = vmatpush.bf16.msra.mxu0 %v3576
    %3623 = vmatpush.bf16.msra.mxu0 %v3572
    %3624 = vmatpush.bf16.msra.mxu0 %v3568
    %3625 = vmatpush.bf16.msra.mxu0 %v3564
    %3626 = vmatpush.bf16.msra.mxu0 %v3560
    %3627 = vmatpush.bf16.msra.mxu0 %v3556
    %3628 = vmatmul.bf16.gmra.mxu0 %v3427
    %v3629 = vpop.f32.mrf.mxu0
    %v3630 = vadd.f32 0.0, %v3629
    %v3631 = vpop.f32.mrf.mxu0
    %3632 = vdwg.mxu0
    %3633 = vmatpush.bf16.msra.mxu0 %v3585
    %3634 = vmatpush.bf16.msra.mxu0 %v3581
    %3635 = vmatpush.bf16.msra.mxu0 %v3577
    %3636 = vmatpush.bf16.msra.mxu0 %v3573
    %3637 = vmatpush.bf16.msra.mxu0 %v3569
    %3638 = vmatpush.bf16.msra.mxu0 %v3565
    %3639 = vmatpush.bf16.msra.mxu0 %v3561
    %3640 = vmatpush.bf16.msra.mxu0 %v3557
    %3641 = vmatmul.bf16.gmra.mxu0 %v3427
    %v3642 = vpop.f32.mrf.mxu0
    %v3643 = vadd.f32 0.0, %v3642
    %v3644 = vpop.f32.mrf.mxu0
    %3645 = vdwg.mxu0
    %3646 = vmatpush.bf16.msra.mxu0 %v3586
    %3647 = vmatpush.bf16.msra.mxu0 %v3582
    %3648 = vmatpush.bf16.msra.mxu0 %v3578
    %3649 = vmatpush.bf16.msra.mxu0 %v3574
    %3650 = vmatpush.bf16.msra.mxu0 %v3570
    %3651 = vmatpush.bf16.msra.mxu0 %v3566
    %3652 = vmatpush.bf16.msra.mxu0 %v3562
    %3653 = vmatpush.bf16.msra.mxu0 %v3558
    %3654 = vmatmul.bf16.gmra.mxu0 %v3427
    %v3655 = vpop.f32.mrf.mxu0
    %v3656 = vadd.f32 0.0, %v3655
    %v3657 = vpop.f32.mrf.mxu0
    %3658 = vdwg.mxu0
    %3659 = vmatpush.bf16.msra.mxu0 %v3587
    %3660 = vmatpush.bf16.msra.mxu0 %v3583
    %3661 = vmatpush.bf16.msra.mxu0 %v3579
    %3662 = vmatpush.bf16.msra.mxu0 %v3575
    %3663 = vmatpush.bf16.msra.mxu0 %v3571
    %3664 = vmatpush.bf16.msra.mxu0 %v3567
    %3665 = vmatpush.bf16.msra.mxu0 %v3563
    %3666 = vmatpush.bf16.msra.mxu0 %v3559
    %3667 = vmatmul.bf16.gmra.mxu0 %v3427
    %v3668 = vpop.f32.mrf.mxu0
    %v3669 = vadd.f32 0.0, %v3668
    %v3670 = vpop.f32.mrf.mxu0
    %3671 = vdwg.mxu0
    %v3672 = vadd.f32 %v3422, %v3630
    %v3673 = vadd.f32 %v3423, %v3643
    %v3674 = vadd.f32 %v3424, %v3656
    %v3675 = vadd.f32 %v3425, %v3669
    %v3676 = vxor.u32 %v3672, 2147483648
    %v3677 = vmul.f32 %v3676, 1.442695
    %v3678 = vpow.pop %v3677
    %v3679 = vadd.f32 %v3678, 1.0
    %v3680 = vrcp.pop %v3679
    %v3681 = vmul.f32 %v3679, %v3680
    %v3682 = vsub.f32 1.0, %v3681
    %v3683 = vmul.f32 %v3680, %v3682
    %v3684 = vadd.f32 %v3680, %v3683
    %vm3685 = vweird.f32 %v3679
    %vm3686 = vweird.f32 %v3680
    %vm3687 = vmor %vm3685, %vm3686
    %v3688 = vsel %vm3687, %v3680, %v3684
    %v3689 = vand.u32 2147483647, %v3679
    %vm3690 = vcmp.eq.f32.partialorder %v3689, 8.507059e+37
    %v3691 = vand.u32 %v3679, 2147483648
    %v3692 = vor.u32 1.1754944e-38, %v3691
    %v3693 = vsel %vm3690, %v3692, %v3688
    %v3694 = vmul.f32 1.0, %v3693
    %v3695 = vxor.u32 %v3673, 2147483648
    %v3696 = vmul.f32 %v3695, 1.442695
    %v3697 = vpow.pop %v3696
    %v3698 = vadd.f32 %v3697, 1.0
    %v3699 = vrcp.pop %v3698
    %v3700 = vmul.f32 %v3698, %v3699
    %v3701 = vsub.f32 1.0, %v3700
    %v3702 = vmul.f32 %v3699, %v3701
    %v3703 = vadd.f32 %v3699, %v3702
    %vm3704 = vweird.f32 %v3698
    %vm3705 = vweird.f32 %v3699
    %vm3706 = vmor %vm3704, %vm3705
    %v3707 = vsel %vm3706, %v3699, %v3703
    %v3708 = vand.u32 2147483647, %v3698
    %vm3709 = vcmp.eq.f32.partialorder %v3708, 8.507059e+37
    %v3710 = vand.u32 %v3698, 2147483648
    %v3711 = vor.u32 1.1754944e-38, %v3710
    %v3712 = vsel %vm3709, %v3711, %v3707
    %v3713 = vmul.f32 1.0, %v3712
    %v3714 = vtanh.pop %v3674
    %v3715 = vxor.u32 %v3675, 2147483648
    %v3716 = vmul.f32 %v3715, 1.442695
    %v3717 = vpow.pop %v3716
    %v3718 = vadd.f32 %v3717, 1.0
    %v3719 = vrcp.pop %v3718
    %v3720 = vmul.f32 %v3718, %v3719
    %v3721 = vsub.f32 1.0, %v3720
    %v3722 = vmul.f32 %v3719, %v3721
    %v3723 = vadd.f32 %v3719, %v3722
    %vm3724 = vweird.f32 %v3718
    %vm3725 = vweird.f32 %v3719
    %vm3726 = vmor %vm3724, %vm3725
    %v3727 = vsel %vm3726, %v3719, %v3723
    %v3728 = vand.u32 2147483647, %v3718
    %vm3729 = vcmp.eq.f32.partialorder %v3728, 8.507059e+37
    %v3730 = vand.u32 %v3718, 2147483648
    %v3731 = vor.u32 1.1754944e-38, %v3730
    %v3732 = vsel %vm3729, %v3731, %v3727
    %v3733 = vmul.f32 1.0, %v3732
    %v3734 = vld [vmem:[#allocation3] sm:$0xff]
    %v3735 = vmul.f32 %v3713, %v3734
    %v3736 = vmul.f32 %v3694, %v3714
    %v3737 = vadd.f32 %v3735, %v3736
    %v3738 = vtanh.pop %v3737
    %v3739 = vmul.f32 %v3733, %v3738
    %3740 = vst [vmem:[#allocation3] sm:$0xff] %v3737
    %3741 = vst [vmem:[#allocation2] sm:$0xff] %v3739
    %v3742 = vpack.c.bf16 %v3739, %v3739
    %s3743 = scalar_lea.vmem %s3, 20
    %3744 = vst [vmem:[%s3743] sm:$0xf] %v3742
    %s3745 = scalar_lea.vmem [#allocation7], 32
    %v3746 = vld [vmem:[%s3745] sm:$0xff]
    %v3747 = vld [vmem:[%s3745 + $0x8] sm:$0xff]
    %v3748 = vunpack.c.l.bf16 %v3746
    %v3749 = vunpack.c.h.bf16 %v3746
    %v3750 = vunpack.c.l.bf16 %v3747
    %v3751 = vunpack.c.h.bf16 %v3747
    %v3752 = vld [vmem:[#allocation4] sm:$0xff]
    %v3753 = vpack.c.bf16 %v3752, %v3752
    %v3754 = vld [vmem:[%s493] sm:$0xff]
    %v3755 = vld [vmem:[%s493 + $0x8] sm:$0xff]
    %v3756 = vld [vmem:[%s493 + $0x10] sm:$0xff]
    %v3757 = vld [vmem:[%s493 + $0x18] sm:$0xff]
    %v3758 = vld [vmem:[%s493 + $0x20] sm:$0xff]
    %v3759 = vld [vmem:[%s493 + $0x28] sm:$0xff]
    %v3760 = vld [vmem:[%s493 + $0x30] sm:$0xff]
    %v3761 = vld [vmem:[%s493 + $0x38] sm:$0xff]
    %v3762 = vld [vmem:[%s493 + $0x40] sm:$0xff]
    %v3763 = vld [vmem:[%s493 + $0x48] sm:$0xff]
    %v3764 = vld [vmem:[%s493 + $0x50] sm:$0xff]
    %v3765 = vld [vmem:[%s493 + $0x58] sm:$0xff]
    %v3766 = vld [vmem:[%s493 + $0x60] sm:$0xff]
    %v3767 = vld [vmem:[%s493 + $0x68] sm:$0xff]
    %v3768 = vld [vmem:[%s493 + $0x70] sm:$0xff]
    %v3769 = vld [vmem:[%s493 + $0x78] sm:$0xff]
    %v3770 = vld [vmem:[%s493 + $0x80] sm:$0xff]
    %v3771 = vld [vmem:[%s493 + $0x88] sm:$0xff]
    %v3772 = vld [vmem:[%s493 + $0x90] sm:$0xff]
    %v3773 = vld [vmem:[%s493 + $0x98] sm:$0xff]
    %v3774 = vld [vmem:[%s493 + $0xa0] sm:$0xff]
    %v3775 = vld [vmem:[%s493 + $0xa8] sm:$0xff]
    %v3776 = vld [vmem:[%s493 + $0xb0] sm:$0xff]
    %v3777 = vld [vmem:[%s493 + $0xb8] sm:$0xff]
    %v3778 = vld [vmem:[%s493 + $0xc0] sm:$0xff]
    %v3779 = vld [vmem:[%s493 + $0xc8] sm:$0xff]
    %v3780 = vld [vmem:[%s493 + $0xd0] sm:$0xff]
    %v3781 = vld [vmem:[%s493 + $0xd8] sm:$0xff]
    %v3782 = vld [vmem:[%s493 + $0xe0] sm:$0xff]
    %v3783 = vld [vmem:[%s493 + $0xe8] sm:$0xff]
    %v3784 = vld [vmem:[%s493 + $0xf0] sm:$0xff]
    %v3785 = vld [vmem:[%s493 + $0xf8] sm:$0xff]
    %v3818 = vunpack.c.l.b16 %v3754
    %v3819 = vunpack.c.h.b16 %v3754
    %v3820 = vunpack.c.l.b16 %v3755
    %v3821 = vunpack.c.h.b16 %v3755
    %v3822 = vunpack.c.l.b16 %v3756
    %v3823 = vunpack.c.h.b16 %v3756
    %v3824 = vunpack.c.l.b16 %v3757
    %v3825 = vunpack.c.h.b16 %v3757
    %v3826 = vunpack.c.l.b16 %v3758
    %v3827 = vunpack.c.h.b16 %v3758
    %v3828 = vunpack.c.l.b16 %v3759
    %v3829 = vunpack.c.h.b16 %v3759
    %v3830 = vunpack.c.l.b16 %v3760
    %v3831 = vunpack.c.h.b16 %v3760
    %v3832 = vunpack.c.l.b16 %v3761
    %v3833 = vunpack.c.h.b16 %v3761
    %v3834 = vunpack.c.l.b16 %v3762
    %v3835 = vunpack.c.h.b16 %v3762
    %v3836 = vunpack.c.l.b16 %v3763
    %v3837 = vunpack.c.h.b16 %v3763
    %v3838 = vunpack.c.l.b16 %v3764
    %v3839 = vunpack.c.h.b16 %v3764
    %v3840 = vunpack.c.l.b16 %v3765
    %v3841 = vunpack.c.h.b16 %v3765
    %v3842 = vunpack.c.l.b16 %v3766
    %v3843 = vunpack.c.h.b16 %v3766
    %v3844 = vunpack.c.l.b16 %v3767
    %v3845 = vunpack.c.h.b16 %v3767
    %v3846 = vunpack.c.l.b16 %v3768
    %v3847 = vunpack.c.h.b16 %v3768
    %v3848 = vunpack.c.l.b16 %v3769
    %v3849 = vunpack.c.h.b16 %v3769
    %v3850 = vunpack.c.l.b16 %v3770
    %v3851 = vunpack.c.h.b16 %v3770
    %v3852 = vunpack.c.l.b16 %v3771
    %v3853 = vunpack.c.h.b16 %v3771
    %v3854 = vunpack.c.l.b16 %v3772
    %v3855 = vunpack.c.h.b16 %v3772
    %v3856 = vunpack.c.l.b16 %v3773
    %v3857 = vunpack.c.h.b16 %v3773
    %v3858 = vunpack.c.l.b16 %v3774
    %v3859 = vunpack.c.h.b16 %v3774
    %v3860 = vunpack.c.l.b16 %v3775
    %v3861 = vunpack.c.h.b16 %v3775
    %v3862 = vunpack.c.l.b16 %v3776
    %v3863 = vunpack.c.h.b16 %v3776
    %v3864 = vunpack.c.l.b16 %v3777
    %v3865 = vunpack.c.h.b16 %v3777
    %v3866 = vunpack.c.l.b16 %v3778
    %v3867 = vunpack.c.h.b16 %v3778
    %v3868 = vunpack.c.l.b16 %v3779
    %v3869 = vunpack.c.h.b16 %v3779
    %v3870 = vunpack.c.l.b16 %v3780
    %v3871 = vunpack.c.h.b16 %v3780
    %v3872 = vunpack.c.l.b16 %v3781
    %v3873 = vunpack.c.h.b16 %v3781
    %v3874 = vunpack.c.l.b16 %v3782
    %v3875 = vunpack.c.h.b16 %v3782
    %v3876 = vunpack.c.l.b16 %v3783
    %v3877 = vunpack.c.h.b16 %v3783
    %v3878 = vunpack.c.l.b16 %v3784
    %v3879 = vunpack.c.h.b16 %v3784
    %v3880 = vunpack.c.l.b16 %v3785
    %v3881 = vunpack.c.h.b16 %v3785
    %v3882 = vpack.c.b16 %v3822, %v3818
    %v3883 = vpack.c.b16 %v3823, %v3819
    %v3884 = vpack.c.b16 %v3824, %v3820
    %v3885 = vpack.c.b16 %v3825, %v3821
    %v3886 = vpack.c.b16 %v3830, %v3826
    %v3887 = vpack.c.b16 %v3831, %v3827
    %v3888 = vpack.c.b16 %v3832, %v3828
    %v3889 = vpack.c.b16 %v3833, %v3829
    %v3890 = vpack.c.b16 %v3838, %v3834
    %v3891 = vpack.c.b16 %v3839, %v3835
    %v3892 = vpack.c.b16 %v3840, %v3836
    %v3893 = vpack.c.b16 %v3841, %v3837
    %v3894 = vpack.c.b16 %v3846, %v3842
    %v3895 = vpack.c.b16 %v3847, %v3843
    %v3896 = vpack.c.b16 %v3848, %v3844
    %v3897 = vpack.c.b16 %v3849, %v3845
    %v3898 = vpack.c.b16 %v3854, %v3850
    %v3899 = vpack.c.b16 %v3855, %v3851
    %v3900 = vpack.c.b16 %v3856, %v3852
    %v3901 = vpack.c.b16 %v3857, %v3853
    %v3902 = vpack.c.b16 %v3862, %v3858
    %v3903 = vpack.c.b16 %v3863, %v3859
    %v3904 = vpack.c.b16 %v3864, %v3860
    %v3905 = vpack.c.b16 %v3865, %v3861
    %v3906 = vpack.c.b16 %v3870, %v3866
    %v3907 = vpack.c.b16 %v3871, %v3867
    %v3908 = vpack.c.b16 %v3872, %v3868
    %v3909 = vpack.c.b16 %v3873, %v3869
    %v3910 = vpack.c.b16 %v3878, %v3874
    %v3911 = vpack.c.b16 %v3879, %v3875
    %v3912 = vpack.c.b16 %v3880, %v3876
    %v3913 = vpack.c.b16 %v3881, %v3877
    %3946 = vmatpush.bf16.msra.mxu0 %v3910
    %3947 = vmatpush.bf16.msra.mxu0 %v3906
    %3948 = vmatpush.bf16.msra.mxu0 %v3902
    %3949 = vmatpush.bf16.msra.mxu0 %v3898
    %3950 = vmatpush.bf16.msra.mxu0 %v3894
    %3951 = vmatpush.bf16.msra.mxu0 %v3890
    %3952 = vmatpush.bf16.msra.mxu0 %v3886
    %3953 = vmatpush.bf16.msra.mxu0 %v3882
    %3954 = vmatmul.bf16.gmra.mxu0 %v3753
    %v3955 = vpop.f32.mrf.mxu0
    %v3956 = vadd.f32 0.0, %v3955
    %v3957 = vpop.f32.mrf.mxu0
    %3958 = vdwg.mxu0
    %3959 = vmatpush.bf16.msra.mxu0 %v3911
    %3960 = vmatpush.bf16.msra.mxu0 %v3907
    %3961 = vmatpush.bf16.msra.mxu0 %v3903
    %3962 = vmatpush.bf16.msra.mxu0 %v3899
    %3963 = vmatpush.bf16.msra.mxu0 %v3895
    %3964 = vmatpush.bf16.msra.mxu0 %v3891
    %3965 = vmatpush.bf16.msra.mxu0 %v3887
    %3966 = vmatpush.bf16.msra.mxu0 %v3883
    %3967 = vmatmul.bf16.gmra.mxu0 %v3753
    %v3968 = vpop.f32.mrf.mxu0
    %v3969 = vadd.f32 0.0, %v3968
    %v3970 = vpop.f32.mrf.mxu0
    %3971 = vdwg.mxu0
    %3972 = vmatpush.bf16.msra.mxu0 %v3912
    %3973 = vmatpush.bf16.msra.mxu0 %v3908
    %3974 = vmatpush.bf16.msra.mxu0 %v3904
    %3975 = vmatpush.bf16.msra.mxu0 %v3900
    %3976 = vmatpush.bf16.msra.mxu0 %v3896
    %3977 = vmatpush.bf16.msra.mxu0 %v3892
    %3978 = vmatpush.bf16.msra.mxu0 %v3888
    %3979 = vmatpush.bf16.msra.mxu0 %v3884
    %3980 = vmatmul.bf16.gmra.mxu0 %v3753
    %v3981 = vpop.f32.mrf.mxu0
    %v3982 = vadd.f32 0.0, %v3981
    %v3983 = vpop.f32.mrf.mxu0
    %3984 = vdwg.mxu0
    %3985 = vmatpush.bf16.msra.mxu0 %v3913
    %3986 = vmatpush.bf16.msra.mxu0 %v3909
    %3987 = vmatpush.bf16.msra.mxu0 %v3905
    %3988 = vmatpush.bf16.msra.mxu0 %v3901
    %3989 = vmatpush.bf16.msra.mxu0 %v3897
    %3990 = vmatpush.bf16.msra.mxu0 %v3893
    %3991 = vmatpush.bf16.msra.mxu0 %v3889
    %3992 = vmatpush.bf16.msra.mxu0 %v3885
    %3993 = vmatmul.bf16.gmra.mxu0 %v3753
    %v3994 = vpop.f32.mrf.mxu0
    %v3995 = vadd.f32 0.0, %v3994
    %v3996 = vpop.f32.mrf.mxu0
    %3997 = vdwg.mxu0
    %v3998 = vadd.f32 %v3748, %v3956
    %v3999 = vadd.f32 %v3749, %v3969
    %v4000 = vadd.f32 %v3750, %v3982
    %v4001 = vadd.f32 %v3751, %v3995
    %v4002 = vxor.u32 %v3998, 2147483648
    %v4003 = vmul.f32 %v4002, 1.442695
    %v4004 = vpow.pop %v4003
    %v4005 = vadd.f32 %v4004, 1.0
    %v4006 = vrcp.pop %v4005
    %v4007 = vmul.f32 %v4005, %v4006
    %v4008 = vsub.f32 1.0, %v4007
    %v4009 = vmul.f32 %v4006, %v4008
    %v4010 = vadd.f32 %v4006, %v4009
    %vm4011 = vweird.f32 %v4005
    %vm4012 = vweird.f32 %v4006
    %vm4013 = vmor %vm4011, %vm4012
    %v4014 = vsel %vm4013, %v4006, %v4010
    %v4015 = vand.u32 2147483647, %v4005
    %vm4016 = vcmp.eq.f32.partialorder %v4015, 8.507059e+37
    %v4017 = vand.u32 %v4005, 2147483648
    %v4018 = vor.u32 1.1754944e-38, %v4017
    %v4019 = vsel %vm4016, %v4018, %v4014
    %v4020 = vmul.f32 1.0, %v4019
    %v4021 = vxor.u32 %v3999, 2147483648
    %v4022 = vmul.f32 %v4021, 1.442695
    %v4023 = vpow.pop %v4022
    %v4024 = vadd.f32 %v4023, 1.0
    %v4025 = vrcp.pop %v4024
    %v4026 = vmul.f32 %v4024, %v4025
    %v4027 = vsub.f32 1.0, %v4026
    %v4028 = vmul.f32 %v4025, %v4027
    %v4029 = vadd.f32 %v4025, %v4028
    %vm4030 = vweird.f32 %v4024
    %vm4031 = vweird.f32 %v4025
    %vm4032 = vmor %vm4030, %vm4031
    %v4033 = vsel %vm4032, %v4025, %v4029
    %v4034 = vand.u32 2147483647, %v4024
    %vm4035 = vcmp.eq.f32.partialorder %v4034, 8.507059e+37
    %v4036 = vand.u32 %v4024, 2147483648
    %v4037 = vor.u32 1.1754944e-38, %v4036
    %v4038 = vsel %vm4035, %v4037, %v4033
    %v4039 = vmul.f32 1.0, %v4038
    %v4040 = vtanh.pop %v4000
    %v4041 = vxor.u32 %v4001, 2147483648
    %v4042 = vmul.f32 %v4041, 1.442695
    %v4043 = vpow.pop %v4042
    %v4044 = vadd.f32 %v4043, 1.0
    %v4045 = vrcp.pop %v4044
    %v4046 = vmul.f32 %v4044, %v4045
    %v4047 = vsub.f32 1.0, %v4046
    %v4048 = vmul.f32 %v4045, %v4047
    %v4049 = vadd.f32 %v4045, %v4048
    %vm4050 = vweird.f32 %v4044
    %vm4051 = vweird.f32 %v4045
    %vm4052 = vmor %vm4050, %vm4051
    %v4053 = vsel %vm4052, %v4045, %v4049
    %v4054 = vand.u32 2147483647, %v4044
    %vm4055 = vcmp.eq.f32.partialorder %v4054, 8.507059e+37
    %v4056 = vand.u32 %v4044, 2147483648
    %v4057 = vor.u32 1.1754944e-38, %v4056
    %v4058 = vsel %vm4055, %v4057, %v4053
    %v4059 = vmul.f32 1.0, %v4058
    %v4060 = vld [vmem:[#allocation5] sm:$0xff]
    %v4061 = vmul.f32 %v4039, %v4060
    %v4062 = vmul.f32 %v4020, %v4040
    %v4063 = vadd.f32 %v4061, %v4062
    %v4064 = vtanh.pop %v4063
    %v4065 = vmul.f32 %v4059, %v4064
    %4066 = vst [vmem:[#allocation5] sm:$0xff] %v4063
    %4067 = vst [vmem:[#allocation4] sm:$0xff] %v4065
    %v4068 = vpack.c.bf16 %v4065, %v4065
    %s4069 = scalar_lea.vmem %s149, 8
    %4070 = vst [vmem:[%s4069] sm:$0xf] %v4068
    %s4071 = scalar_lea.vmem [#allocation6], 96
    %v4072 = vld [vmem:[%s4071] sm:$0xff]
    %v4073 = vld [vmem:[%s4071 + $0x8] sm:$0xff]
    %v4074 = vunpack.c.l.bf16 %v4072
    %v4075 = vunpack.c.h.bf16 %v4072
    %v4076 = vunpack.c.l.bf16 %v4073
    %v4077 = vunpack.c.h.bf16 %v4073
    %v4078 = vld [vmem:[#allocation2] sm:$0xff]
    %v4079 = vpack.c.bf16 %v4078, %v4078
    %v4080 = vld [vmem:[#allocation8] sm:$0xff]
    %v4081 = vld [vmem:[#allocation8 + $0x8] sm:$0xff]
    %v4082 = vld [vmem:[#allocation8 + $0x10] sm:$0xff]
    %v4083 = vld [vmem:[#allocation8 + $0x18] sm:$0xff]
    %v4084 = vld [vmem:[#allocation8 + $0x20] sm:$0xff]
    %v4085 = vld [vmem:[#allocation8 + $0x28] sm:$0xff]
    %v4086 = vld [vmem:[#allocation8 + $0x30] sm:$0xff]
    %v4087 = vld [vmem:[#allocation8 + $0x38] sm:$0xff]
    %v4088 = vld [vmem:[#allocation8 + $0x40] sm:$0xff]
    %v4089 = vld [vmem:[#allocation8 + $0x48] sm:$0xff]
    %v4090 = vld [vmem:[#allocation8 + $0x50] sm:$0xff]
    %v4091 = vld [vmem:[#allocation8 + $0x58] sm:$0xff]
    %v4092 = vld [vmem:[#allocation8 + $0x60] sm:$0xff]
    %v4093 = vld [vmem:[#allocation8 + $0x68] sm:$0xff]
    %v4094 = vld [vmem:[#allocation8 + $0x70] sm:$0xff]
    %v4095 = vld [vmem:[#allocation8 + $0x78] sm:$0xff]
    %v4096 = vld [vmem:[#allocation8 + $0x80] sm:$0xff]
    %v4097 = vld [vmem:[#allocation8 + $0x88] sm:$0xff]
    %v4098 = vld [vmem:[#allocation8 + $0x90] sm:$0xff]
    %v4099 = vld [vmem:[#allocation8 + $0x98] sm:$0xff]
    %v4100 = vld [vmem:[#allocation8 + $0xa0] sm:$0xff]
    %v4101 = vld [vmem:[#allocation8 + $0xa8] sm:$0xff]
    %v4102 = vld [vmem:[#allocation8 + $0xb0] sm:$0xff]
    %v4103 = vld [vmem:[#allocation8 + $0xb8] sm:$0xff]
    %v4104 = vld [vmem:[#allocation8 + $0xc0] sm:$0xff]
    %v4105 = vld [vmem:[#allocation8 + $0xc8] sm:$0xff]
    %v4106 = vld [vmem:[#allocation8 + $0xd0] sm:$0xff]
    %v4107 = vld [vmem:[#allocation8 + $0xd8] sm:$0xff]
    %v4108 = vld [vmem:[#allocation8 + $0xe0] sm:$0xff]
    %v4109 = vld [vmem:[#allocation8 + $0xe8] sm:$0xff]
    %v4110 = vld [vmem:[#allocation8 + $0xf0] sm:$0xff]
    %v4111 = vld [vmem:[#allocation8 + $0xf8] sm:$0xff]
    %v4144 = vunpack.c.l.b16 %v4080
    %v4145 = vunpack.c.h.b16 %v4080
    %v4146 = vunpack.c.l.b16 %v4081
    %v4147 = vunpack.c.h.b16 %v4081
    %v4148 = vunpack.c.l.b16 %v4082
    %v4149 = vunpack.c.h.b16 %v4082
    %v4150 = vunpack.c.l.b16 %v4083
    %v4151 = vunpack.c.h.b16 %v4083
    %v4152 = vunpack.c.l.b16 %v4084
    %v4153 = vunpack.c.h.b16 %v4084
    %v4154 = vunpack.c.l.b16 %v4085
    %v4155 = vunpack.c.h.b16 %v4085
    %v4156 = vunpack.c.l.b16 %v4086
    %v4157 = vunpack.c.h.b16 %v4086
    %v4158 = vunpack.c.l.b16 %v4087
    %v4159 = vunpack.c.h.b16 %v4087
    %v4160 = vunpack.c.l.b16 %v4088
    %v4161 = vunpack.c.h.b16 %v4088
    %v4162 = vunpack.c.l.b16 %v4089
    %v4163 = vunpack.c.h.b16 %v4089
    %v4164 = vunpack.c.l.b16 %v4090
    %v4165 = vunpack.c.h.b16 %v4090
    %v4166 = vunpack.c.l.b16 %v4091
    %v4167 = vunpack.c.h.b16 %v4091
    %v4168 = vunpack.c.l.b16 %v4092
    %v4169 = vunpack.c.h.b16 %v4092
    %v4170 = vunpack.c.l.b16 %v4093
    %v4171 = vunpack.c.h.b16 %v4093
    %v4172 = vunpack.c.l.b16 %v4094
    %v4173 = vunpack.c.h.b16 %v4094
    %v4174 = vunpack.c.l.b16 %v4095
    %v4175 = vunpack.c.h.b16 %v4095
    %v4176 = vunpack.c.l.b16 %v4096
    %v4177 = vunpack.c.h.b16 %v4096
    %v4178 = vunpack.c.l.b16 %v4097
    %v4179 = vunpack.c.h.b16 %v4097
    %v4180 = vunpack.c.l.b16 %v4098
    %v4181 = vunpack.c.h.b16 %v4098
    %v4182 = vunpack.c.l.b16 %v4099
    %v4183 = vunpack.c.h.b16 %v4099
    %v4184 = vunpack.c.l.b16 %v4100
    %v4185 = vunpack.c.h.b16 %v4100
    %v4186 = vunpack.c.l.b16 %v4101
    %v4187 = vunpack.c.h.b16 %v4101
    %v4188 = vunpack.c.l.b16 %v4102
    %v4189 = vunpack.c.h.b16 %v4102
    %v4190 = vunpack.c.l.b16 %v4103
    %v4191 = vunpack.c.h.b16 %v4103
    %v4192 = vunpack.c.l.b16 %v4104
    %v4193 = vunpack.c.h.b16 %v4104
    %v4194 = vunpack.c.l.b16 %v4105
    %v4195 = vunpack.c.h.b16 %v4105
    %v4196 = vunpack.c.l.b16 %v4106
    %v4197 = vunpack.c.h.b16 %v4106
    %v4198 = vunpack.c.l.b16 %v4107
    %v4199 = vunpack.c.h.b16 %v4107
    %v4200 = vunpack.c.l.b16 %v4108
    %v4201 = vunpack.c.h.b16 %v4108
    %v4202 = vunpack.c.l.b16 %v4109
    %v4203 = vunpack.c.h.b16 %v4109
    %v4204 = vunpack.c.l.b16 %v4110
    %v4205 = vunpack.c.h.b16 %v4110
    %v4206 = vunpack.c.l.b16 %v4111
    %v4207 = vunpack.c.h.b16 %v4111
    %v4208 = vpack.c.b16 %v4148, %v4144
    %v4209 = vpack.c.b16 %v4149, %v4145
    %v4210 = vpack.c.b16 %v4150, %v4146
    %v4211 = vpack.c.b16 %v4151, %v4147
    %v4212 = vpack.c.b16 %v4156, %v4152
    %v4213 = vpack.c.b16 %v4157, %v4153
    %v4214 = vpack.c.b16 %v4158, %v4154
    %v4215 = vpack.c.b16 %v4159, %v4155
    %v4216 = vpack.c.b16 %v4164, %v4160
    %v4217 = vpack.c.b16 %v4165, %v4161
    %v4218 = vpack.c.b16 %v4166, %v4162
    %v4219 = vpack.c.b16 %v4167, %v4163
    %v4220 = vpack.c.b16 %v4172, %v4168
    %v4221 = vpack.c.b16 %v4173, %v4169
    %v4222 = vpack.c.b16 %v4174, %v4170
    %v4223 = vpack.c.b16 %v4175, %v4171
    %v4224 = vpack.c.b16 %v4180, %v4176
    %v4225 = vpack.c.b16 %v4181, %v4177
    %v4226 = vpack.c.b16 %v4182, %v4178
    %v4227 = vpack.c.b16 %v4183, %v4179
    %v4228 = vpack.c.b16 %v4188, %v4184
    %v4229 = vpack.c.b16 %v4189, %v4185
    %v4230 = vpack.c.b16 %v4190, %v4186
    %v4231 = vpack.c.b16 %v4191, %v4187
    %v4232 = vpack.c.b16 %v4196, %v4192
    %v4233 = vpack.c.b16 %v4197, %v4193
    %v4234 = vpack.c.b16 %v4198, %v4194
    %v4235 = vpack.c.b16 %v4199, %v4195
    %v4236 = vpack.c.b16 %v4204, %v4200
    %v4237 = vpack.c.b16 %v4205, %v4201
    %v4238 = vpack.c.b16 %v4206, %v4202
    %v4239 = vpack.c.b16 %v4207, %v4203
    %4272 = vmatpush.bf16.msra.mxu0 %v4236
    %4273 = vmatpush.bf16.msra.mxu0 %v4232
    %4274 = vmatpush.bf16.msra.mxu0 %v4228
    %4275 = vmatpush.bf16.msra.mxu0 %v4224
    %4276 = vmatpush.bf16.msra.mxu0 %v4220
    %4277 = vmatpush.bf16.msra.mxu0 %v4216
    %4278 = vmatpush.bf16.msra.mxu0 %v4212
    %4279 = vmatpush.bf16.msra.mxu0 %v4208
    %4280 = vmatmul.bf16.gmra.mxu0 %v4079
    %v4281 = vpop.f32.mrf.mxu0
    %v4282 = vadd.f32 0.0, %v4281
    %v4283 = vpop.f32.mrf.mxu0
    %4284 = vdwg.mxu0
    %4285 = vmatpush.bf16.msra.mxu0 %v4237
    %4286 = vmatpush.bf16.msra.mxu0 %v4233
    %4287 = vmatpush.bf16.msra.mxu0 %v4229
    %4288 = vmatpush.bf16.msra.mxu0 %v4225
    %4289 = vmatpush.bf16.msra.mxu0 %v4221
    %4290 = vmatpush.bf16.msra.mxu0 %v4217
    %4291 = vmatpush.bf16.msra.mxu0 %v4213
    %4292 = vmatpush.bf16.msra.mxu0 %v4209
    %4293 = vmatmul.bf16.gmra.mxu0 %v4079
    %v4294 = vpop.f32.mrf.mxu0
    %v4295 = vadd.f32 0.0, %v4294
    %v4296 = vpop.f32.mrf.mxu0
    %4297 = vdwg.mxu0
    %4298 = vmatpush.bf16.msra.mxu0 %v4238
    %4299 = vmatpush.bf16.msra.mxu0 %v4234
    %4300 = vmatpush.bf16.msra.mxu0 %v4230
    %4301 = vmatpush.bf16.msra.mxu0 %v4226
    %4302 = vmatpush.bf16.msra.mxu0 %v4222
    %4303 = vmatpush.bf16.msra.mxu0 %v4218
    %4304 = vmatpush.bf16.msra.mxu0 %v4214
    %4305 = vmatpush.bf16.msra.mxu0 %v4210
    %4306 = vmatmul.bf16.gmra.mxu0 %v4079
    %v4307 = vpop.f32.mrf.mxu0
    %v4308 = vadd.f32 0.0, %v4307
    %v4309 = vpop.f32.mrf.mxu0
    %4310 = vdwg.mxu0
    %4311 = vmatpush.bf16.msra.mxu0 %v4239
    %4312 = vmatpush.bf16.msra.mxu0 %v4235
    %4313 = vmatpush.bf16.msra.mxu0 %v4231
    %4314 = vmatpush.bf16.msra.mxu0 %v4227
    %4315 = vmatpush.bf16.msra.mxu0 %v4223
    %4316 = vmatpush.bf16.msra.mxu0 %v4219
    %4317 = vmatpush.bf16.msra.mxu0 %v4215
    %4318 = vmatpush.bf16.msra.mxu0 %v4211
    %4319 = vmatmul.bf16.gmra.mxu0 %v4079
    %v4320 = vpop.f32.mrf.mxu0
    %v4321 = vadd.f32 0.0, %v4320
    %v4322 = vpop.f32.mrf.mxu0
    %4323 = vdwg.mxu0
    %v4324 = vadd.f32 %v4074, %v4282
    %v4325 = vadd.f32 %v4075, %v4295
    %v4326 = vadd.f32 %v4076, %v4308
    %v4327 = vadd.f32 %v4077, %v4321
    %v4328 = vxor.u32 %v4324, 2147483648
    %v4329 = vmul.f32 %v4328, 1.442695
    %v4330 = vpow.pop %v4329
    %v4331 = vadd.f32 %v4330, 1.0
    %v4332 = vrcp.pop %v4331
    %v4333 = vmul.f32 %v4331, %v4332
    %v4334 = vsub.f32 1.0, %v4333
    %v4335 = vmul.f32 %v4332, %v4334
    %v4336 = vadd.f32 %v4332, %v4335
    %vm4337 = vweird.f32 %v4331
    %vm4338 = vweird.f32 %v4332
    %vm4339 = vmor %vm4337, %vm4338
    %v4340 = vsel %vm4339, %v4332, %v4336
    %v4341 = vand.u32 2147483647, %v4331
    %vm4342 = vcmp.eq.f32.partialorder %v4341, 8.507059e+37
    %v4343 = vand.u32 %v4331, 2147483648
    %v4344 = vor.u32 1.1754944e-38, %v4343
    %v4345 = vsel %vm4342, %v4344, %v4340
    %v4346 = vmul.f32 1.0, %v4345
    %v4347 = vxor.u32 %v4325, 2147483648
    %v4348 = vmul.f32 %v4347, 1.442695
    %v4349 = vpow.pop %v4348
    %v4350 = vadd.f32 %v4349, 1.0
    %v4351 = vrcp.pop %v4350
    %v4352 = vmul.f32 %v4350, %v4351
    %v4353 = vsub.f32 1.0, %v4352
    %v4354 = vmul.f32 %v4351, %v4353
    %v4355 = vadd.f32 %v4351, %v4354
    %vm4356 = vweird.f32 %v4350
    %vm4357 = vweird.f32 %v4351
    %vm4358 = vmor %vm4356, %vm4357
    %v4359 = vsel %vm4358, %v4351, %v4355
    %v4360 = vand.u32 2147483647, %v4350
    %vm4361 = vcmp.eq.f32.partialorder %v4360, 8.507059e+37
    %v4362 = vand.u32 %v4350, 2147483648
    %v4363 = vor.u32 1.1754944e-38, %v4362
    %v4364 = vsel %vm4361, %v4363, %v4359
    %v4365 = vmul.f32 1.0, %v4364
    %v4366 = vtanh.pop %v4326
    %v4367 = vxor.u32 %v4327, 2147483648
    %v4368 = vmul.f32 %v4367, 1.442695
    %v4369 = vpow.pop %v4368
    %v4370 = vadd.f32 %v4369, 1.0
    %v4371 = vrcp.pop %v4370
    %v4372 = vmul.f32 %v4370, %v4371
    %v4373 = vsub.f32 1.0, %v4372
    %v4374 = vmul.f32 %v4371, %v4373
    %v4375 = vadd.f32 %v4371, %v4374
    %vm4376 = vweird.f32 %v4370
    %vm4377 = vweird.f32 %v4371
    %vm4378 = vmor %vm4376, %vm4377
    %v4379 = vsel %vm4378, %v4371, %v4375
    %v4380 = vand.u32 2147483647, %v4370
    %vm4381 = vcmp.eq.f32.partialorder %v4380, 8.507059e+37
    %v4382 = vand.u32 %v4370, 2147483648
    %v4383 = vor.u32 1.1754944e-38, %v4382
    %v4384 = vsel %vm4381, %v4383, %v4379
    %v4385 = vmul.f32 1.0, %v4384
    %v4386 = vld [vmem:[#allocation3] sm:$0xff]
    %v4387 = vmul.f32 %v4365, %v4386
    %v4388 = vmul.f32 %v4346, %v4366
    %v4389 = vadd.f32 %v4387, %v4388
    %v4390 = vtanh.pop %v4389
    %v4391 = vmul.f32 %v4385, %v4390
    %4392 = vst [vmem:[#allocation3] sm:$0xff] %v4389
    %4393 = vst [vmem:[#allocation2] sm:$0xff] %v4391
    %v4394 = vpack.c.bf16 %v4391, %v4391
    %s4395 = scalar_lea.vmem %s3, 24
    %4396 = vst [vmem:[%s4395] sm:$0xf] %v4394
    %s4397 = scalar_lea.vmem [#allocation7], 16
    %v4398 = vld [vmem:[%s4397] sm:$0xff]
    %v4399 = vld [vmem:[%s4397 + $0x8] sm:$0xff]
    %v4400 = vunpack.c.l.bf16 %v4398
    %v4401 = vunpack.c.h.bf16 %v4398
    %v4402 = vunpack.c.l.bf16 %v4399
    %v4403 = vunpack.c.h.bf16 %v4399
    %v4404 = vld [vmem:[#allocation4] sm:$0xff]
    %v4405 = vpack.c.bf16 %v4404, %v4404
    %v4406 = vld [vmem:[%s493] sm:$0xff]
    %v4407 = vld [vmem:[%s493 + $0x8] sm:$0xff]
    %v4408 = vld [vmem:[%s493 + $0x10] sm:$0xff]
    %v4409 = vld [vmem:[%s493 + $0x18] sm:$0xff]
    %v4410 = vld [vmem:[%s493 + $0x20] sm:$0xff]
    %v4411 = vld [vmem:[%s493 + $0x28] sm:$0xff]
    %v4412 = vld [vmem:[%s493 + $0x30] sm:$0xff]
    %v4413 = vld [vmem:[%s493 + $0x38] sm:$0xff]
    %v4414 = vld [vmem:[%s493 + $0x40] sm:$0xff]
    %v4415 = vld [vmem:[%s493 + $0x48] sm:$0xff]
    %v4416 = vld [vmem:[%s493 + $0x50] sm:$0xff]
    %v4417 = vld [vmem:[%s493 + $0x58] sm:$0xff]
    %v4418 = vld [vmem:[%s493 + $0x60] sm:$0xff]
    %v4419 = vld [vmem:[%s493 + $0x68] sm:$0xff]
    %v4420 = vld [vmem:[%s493 + $0x70] sm:$0xff]
    %v4421 = vld [vmem:[%s493 + $0x78] sm:$0xff]
    %v4422 = vld [vmem:[%s493 + $0x80] sm:$0xff]
    %v4423 = vld [vmem:[%s493 + $0x88] sm:$0xff]
    %v4424 = vld [vmem:[%s493 + $0x90] sm:$0xff]
    %v4425 = vld [vmem:[%s493 + $0x98] sm:$0xff]
    %v4426 = vld [vmem:[%s493 + $0xa0] sm:$0xff]
    %v4427 = vld [vmem:[%s493 + $0xa8] sm:$0xff]
    %v4428 = vld [vmem:[%s493 + $0xb0] sm:$0xff]
    %v4429 = vld [vmem:[%s493 + $0xb8] sm:$0xff]
    %v4430 = vld [vmem:[%s493 + $0xc0] sm:$0xff]
    %v4431 = vld [vmem:[%s493 + $0xc8] sm:$0xff]
    %v4432 = vld [vmem:[%s493 + $0xd0] sm:$0xff]
    %v4433 = vld [vmem:[%s493 + $0xd8] sm:$0xff]
    %v4434 = vld [vmem:[%s493 + $0xe0] sm:$0xff]
    %v4435 = vld [vmem:[%s493 + $0xe8] sm:$0xff]
    %v4436 = vld [vmem:[%s493 + $0xf0] sm:$0xff]
    %v4437 = vld [vmem:[%s493 + $0xf8] sm:$0xff]
    %v4470 = vunpack.c.l.b16 %v4406
    %v4471 = vunpack.c.h.b16 %v4406
    %v4472 = vunpack.c.l.b16 %v4407
    %v4473 = vunpack.c.h.b16 %v4407
    %v4474 = vunpack.c.l.b16 %v4408
    %v4475 = vunpack.c.h.b16 %v4408
    %v4476 = vunpack.c.l.b16 %v4409
    %v4477 = vunpack.c.h.b16 %v4409
    %v4478 = vunpack.c.l.b16 %v4410
    %v4479 = vunpack.c.h.b16 %v4410
    %v4480 = vunpack.c.l.b16 %v4411
    %v4481 = vunpack.c.h.b16 %v4411
    %v4482 = vunpack.c.l.b16 %v4412
    %v4483 = vunpack.c.h.b16 %v4412
    %v4484 = vunpack.c.l.b16 %v4413
    %v4485 = vunpack.c.h.b16 %v4413
    %v4486 = vunpack.c.l.b16 %v4414
    %v4487 = vunpack.c.h.b16 %v4414
    %v4488 = vunpack.c.l.b16 %v4415
    %v4489 = vunpack.c.h.b16 %v4415
    %v4490 = vunpack.c.l.b16 %v4416
    %v4491 = vunpack.c.h.b16 %v4416
    %v4492 = vunpack.c.l.b16 %v4417
    %v4493 = vunpack.c.h.b16 %v4417
    %v4494 = vunpack.c.l.b16 %v4418
    %v4495 = vunpack.c.h.b16 %v4418
    %v4496 = vunpack.c.l.b16 %v4419
    %v4497 = vunpack.c.h.b16 %v4419
    %v4498 = vunpack.c.l.b16 %v4420
    %v4499 = vunpack.c.h.b16 %v4420
    %v4500 = vunpack.c.l.b16 %v4421
    %v4501 = vunpack.c.h.b16 %v4421
    %v4502 = vunpack.c.l.b16 %v4422
    %v4503 = vunpack.c.h.b16 %v4422
    %v4504 = vunpack.c.l.b16 %v4423
    %v4505 = vunpack.c.h.b16 %v4423
    %v4506 = vunpack.c.l.b16 %v4424
    %v4507 = vunpack.c.h.b16 %v4424
    %v4508 = vunpack.c.l.b16 %v4425
    %v4509 = vunpack.c.h.b16 %v4425
    %v4510 = vunpack.c.l.b16 %v4426
    %v4511 = vunpack.c.h.b16 %v4426
    %v4512 = vunpack.c.l.b16 %v4427
    %v4513 = vunpack.c.h.b16 %v4427
    %v4514 = vunpack.c.l.b16 %v4428
    %v4515 = vunpack.c.h.b16 %v4428
    %v4516 = vunpack.c.l.b16 %v4429
    %v4517 = vunpack.c.h.b16 %v4429
    %v4518 = vunpack.c.l.b16 %v4430
    %v4519 = vunpack.c.h.b16 %v4430
    %v4520 = vunpack.c.l.b16 %v4431
    %v4521 = vunpack.c.h.b16 %v4431
    %v4522 = vunpack.c.l.b16 %v4432
    %v4523 = vunpack.c.h.b16 %v4432
    %v4524 = vunpack.c.l.b16 %v4433
    %v4525 = vunpack.c.h.b16 %v4433
    %v4526 = vunpack.c.l.b16 %v4434
    %v4527 = vunpack.c.h.b16 %v4434
    %v4528 = vunpack.c.l.b16 %v4435
    %v4529 = vunpack.c.h.b16 %v4435
    %v4530 = vunpack.c.l.b16 %v4436
    %v4531 = vunpack.c.h.b16 %v4436
    %v4532 = vunpack.c.l.b16 %v4437
    %v4533 = vunpack.c.h.b16 %v4437
    %v4534 = vpack.c.b16 %v4474, %v4470
    %v4535 = vpack.c.b16 %v4475, %v4471
    %v4536 = vpack.c.b16 %v4476, %v4472
    %v4537 = vpack.c.b16 %v4477, %v4473
    %v4538 = vpack.c.b16 %v4482, %v4478
    %v4539 = vpack.c.b16 %v4483, %v4479
    %v4540 = vpack.c.b16 %v4484, %v4480
    %v4541 = vpack.c.b16 %v4485, %v4481
    %v4542 = vpack.c.b16 %v4490, %v4486
    %v4543 = vpack.c.b16 %v4491, %v4487
    %v4544 = vpack.c.b16 %v4492, %v4488
    %v4545 = vpack.c.b16 %v4493, %v4489
    %v4546 = vpack.c.b16 %v4498, %v4494
    %v4547 = vpack.c.b16 %v4499, %v4495
    %v4548 = vpack.c.b16 %v4500, %v4496
    %v4549 = vpack.c.b16 %v4501, %v4497
    %v4550 = vpack.c.b16 %v4506, %v4502
    %v4551 = vpack.c.b16 %v4507, %v4503
    %v4552 = vpack.c.b16 %v4508, %v4504
    %v4553 = vpack.c.b16 %v4509, %v4505
    %v4554 = vpack.c.b16 %v4514, %v4510
    %v4555 = vpack.c.b16 %v4515, %v4511
    %v4556 = vpack.c.b16 %v4516, %v4512
    %v4557 = vpack.c.b16 %v4517, %v4513
    %v4558 = vpack.c.b16 %v4522, %v4518
    %v4559 = vpack.c.b16 %v4523, %v4519
    %v4560 = vpack.c.b16 %v4524, %v4520
    %v4561 = vpack.c.b16 %v4525, %v4521
    %v4562 = vpack.c.b16 %v4530, %v4526
    %v4563 = vpack.c.b16 %v4531, %v4527
    %v4564 = vpack.c.b16 %v4532, %v4528
    %v4565 = vpack.c.b16 %v4533, %v4529
    %4598 = vmatpush.bf16.msra.mxu0 %v4562
    %4599 = vmatpush.bf16.msra.mxu0 %v4558
    %4600 = vmatpush.bf16.msra.mxu0 %v4554
    %4601 = vmatpush.bf16.msra.mxu0 %v4550
    %4602 = vmatpush.bf16.msra.mxu0 %v4546
    %4603 = vmatpush.bf16.msra.mxu0 %v4542
    %4604 = vmatpush.bf16.msra.mxu0 %v4538
    %4605 = vmatpush.bf16.msra.mxu0 %v4534
    %4606 = vmatmul.bf16.gmra.mxu0 %v4405
    %v4607 = vpop.f32.mrf.mxu0
    %v4608 = vadd.f32 0.0, %v4607
    %v4609 = vpop.f32.mrf.mxu0
    %4610 = vdwg.mxu0
    %4611 = vmatpush.bf16.msra.mxu0 %v4563
    %4612 = vmatpush.bf16.msra.mxu0 %v4559
    %4613 = vmatpush.bf16.msra.mxu0 %v4555
    %4614 = vmatpush.bf16.msra.mxu0 %v4551
    %4615 = vmatpush.bf16.msra.mxu0 %v4547
    %4616 = vmatpush.bf16.msra.mxu0 %v4543
    %4617 = vmatpush.bf16.msra.mxu0 %v4539
    %4618 = vmatpush.bf16.msra.mxu0 %v4535
    %4619 = vmatmul.bf16.gmra.mxu0 %v4405
    %v4620 = vpop.f32.mrf.mxu0
    %v4621 = vadd.f32 0.0, %v4620
    %v4622 = vpop.f32.mrf.mxu0
    %4623 = vdwg.mxu0
    %4624 = vmatpush.bf16.msra.mxu0 %v4564
    %4625 = vmatpush.bf16.msra.mxu0 %v4560
    %4626 = vmatpush.bf16.msra.mxu0 %v4556
    %4627 = vmatpush.bf16.msra.mxu0 %v4552
    %4628 = vmatpush.bf16.msra.mxu0 %v4548
    %4629 = vmatpush.bf16.msra.mxu0 %v4544
    %4630 = vmatpush.bf16.msra.mxu0 %v4540
    %4631 = vmatpush.bf16.msra.mxu0 %v4536
    %4632 = vmatmul.bf16.gmra.mxu0 %v4405
    %v4633 = vpop.f32.mrf.mxu0
    %v4634 = vadd.f32 0.0, %v4633
    %v4635 = vpop.f32.mrf.mxu0
    %4636 = vdwg.mxu0
    %4637 = vmatpush.bf16.msra.mxu0 %v4565
    %4638 = vmatpush.bf16.msra.mxu0 %v4561
    %4639 = vmatpush.bf16.msra.mxu0 %v4557
    %4640 = vmatpush.bf16.msra.mxu0 %v4553
    %4641 = vmatpush.bf16.msra.mxu0 %v4549
    %4642 = vmatpush.bf16.msra.mxu0 %v4545
    %4643 = vmatpush.bf16.msra.mxu0 %v4541
    %4644 = vmatpush.bf16.msra.mxu0 %v4537
    %4645 = vmatmul.bf16.gmra.mxu0 %v4405
    %v4646 = vpop.f32.mrf.mxu0
    %v4647 = vadd.f32 0.0, %v4646
    %v4648 = vpop.f32.mrf.mxu0
    %4649 = vdwg.mxu0
    %v4650 = vadd.f32 %v4400, %v4608
    %v4651 = vadd.f32 %v4401, %v4621
    %v4652 = vadd.f32 %v4402, %v4634
    %v4653 = vadd.f32 %v4403, %v4647
    %v4654 = vxor.u32 %v4650, 2147483648
    %v4655 = vmul.f32 %v4654, 1.442695
    %v4656 = vpow.pop %v4655
    %v4657 = vadd.f32 %v4656, 1.0
    %v4658 = vrcp.pop %v4657
    %v4659 = vmul.f32 %v4657, %v4658
    %v4660 = vsub.f32 1.0, %v4659
    %v4661 = vmul.f32 %v4658, %v4660
    %v4662 = vadd.f32 %v4658, %v4661
    %vm4663 = vweird.f32 %v4657
    %vm4664 = vweird.f32 %v4658
    %vm4665 = vmor %vm4663, %vm4664
    %v4666 = vsel %vm4665, %v4658, %v4662
    %v4667 = vand.u32 2147483647, %v4657
    %vm4668 = vcmp.eq.f32.partialorder %v4667, 8.507059e+37
    %v4669 = vand.u32 %v4657, 2147483648
    %v4670 = vor.u32 1.1754944e-38, %v4669
    %v4671 = vsel %vm4668, %v4670, %v4666
    %v4672 = vmul.f32 1.0, %v4671
    %v4673 = vxor.u32 %v4651, 2147483648
    %v4674 = vmul.f32 %v4673, 1.442695
    %v4675 = vpow.pop %v4674
    %v4676 = vadd.f32 %v4675, 1.0
    %v4677 = vrcp.pop %v4676
    %v4678 = vmul.f32 %v4676, %v4677
    %v4679 = vsub.f32 1.0, %v4678
    %v4680 = vmul.f32 %v4677, %v4679
    %v4681 = vadd.f32 %v4677, %v4680
    %vm4682 = vweird.f32 %v4676
    %vm4683 = vweird.f32 %v4677
    %vm4684 = vmor %vm4682, %vm4683
    %v4685 = vsel %vm4684, %v4677, %v4681
    %v4686 = vand.u32 2147483647, %v4676
    %vm4687 = vcmp.eq.f32.partialorder %v4686, 8.507059e+37
    %v4688 = vand.u32 %v4676, 2147483648
    %v4689 = vor.u32 1.1754944e-38, %v4688
    %v4690 = vsel %vm4687, %v4689, %v4685
    %v4691 = vmul.f32 1.0, %v4690
    %v4692 = vtanh.pop %v4652
    %v4693 = vxor.u32 %v4653, 2147483648
    %v4694 = vmul.f32 %v4693, 1.442695
    %v4695 = vpow.pop %v4694
    %v4696 = vadd.f32 %v4695, 1.0
    %v4697 = vrcp.pop %v4696
    %v4698 = vmul.f32 %v4696, %v4697
    %v4699 = vsub.f32 1.0, %v4698
    %v4700 = vmul.f32 %v4697, %v4699
    %v4701 = vadd.f32 %v4697, %v4700
    %vm4702 = vweird.f32 %v4696
    %vm4703 = vweird.f32 %v4697
    %vm4704 = vmor %vm4702, %vm4703
    %v4705 = vsel %vm4704, %v4697, %v4701
    %v4706 = vand.u32 2147483647, %v4696
    %vm4707 = vcmp.eq.f32.partialorder %v4706, 8.507059e+37
    %v4708 = vand.u32 %v4696, 2147483648
    %v4709 = vor.u32 1.1754944e-38, %v4708
    %v4710 = vsel %vm4707, %v4709, %v4705
    %v4711 = vmul.f32 1.0, %v4710
    %v4712 = vld [vmem:[#allocation5] sm:$0xff]
    %v4713 = vmul.f32 %v4691, %v4712
    %v4714 = vmul.f32 %v4672, %v4692
    %v4715 = vadd.f32 %v4713, %v4714
    %v4716 = vtanh.pop %v4715
    %v4717 = vmul.f32 %v4711, %v4716
    %4718 = vst [vmem:[#allocation5] sm:$0xff] %v4715
    %4719 = vst [vmem:[#allocation4] sm:$0xff] %v4717
    %v4720 = vpack.c.bf16 %v4717, %v4717
    %s4721 = scalar_lea.vmem %s149, 4
    %4722 = vst [vmem:[%s4721] sm:$0xf] %v4720
    %s4723 = scalar_lea.vmem [#allocation6], 112
    %v4724 = vld [vmem:[%s4723] sm:$0xff]
    %v4725 = vld [vmem:[%s4723 + $0x8] sm:$0xff]
    %v4726 = vunpack.c.l.bf16 %v4724
    %v4727 = vunpack.c.h.bf16 %v4724
    %v4728 = vunpack.c.l.bf16 %v4725
    %v4729 = vunpack.c.h.bf16 %v4725
    %v4730 = vld [vmem:[#allocation2] sm:$0xff]
    %v4731 = vpack.c.bf16 %v4730, %v4730
    %v4732 = vld [vmem:[#allocation8] sm:$0xff]
    %v4733 = vld [vmem:[#allocation8 + $0x8] sm:$0xff]
    %v4734 = vld [vmem:[#allocation8 + $0x10] sm:$0xff]
    %v4735 = vld [vmem:[#allocation8 + $0x18] sm:$0xff]
    %v4736 = vld [vmem:[#allocation8 + $0x20] sm:$0xff]
    %v4737 = vld [vmem:[#allocation8 + $0x28] sm:$0xff]
    %v4738 = vld [vmem:[#allocation8 + $0x30] sm:$0xff]
    %v4739 = vld [vmem:[#allocation8 + $0x38] sm:$0xff]
    %v4740 = vld [vmem:[#allocation8 + $0x40] sm:$0xff]
    %v4741 = vld [vmem:[#allocation8 + $0x48] sm:$0xff]
    %v4742 = vld [vmem:[#allocation8 + $0x50] sm:$0xff]
    %v4743 = vld [vmem:[#allocation8 + $0x58] sm:$0xff]
    %v4744 = vld [vmem:[#allocation8 + $0x60] sm:$0xff]
    %v4745 = vld [vmem:[#allocation8 + $0x68] sm:$0xff]
    %v4746 = vld [vmem:[#allocation8 + $0x70] sm:$0xff]
    %v4747 = vld [vmem:[#allocation8 + $0x78] sm:$0xff]
    %v4748 = vld [vmem:[#allocation8 + $0x80] sm:$0xff]
    %v4749 = vld [vmem:[#allocation8 + $0x88] sm:$0xff]
    %v4750 = vld [vmem:[#allocation8 + $0x90] sm:$0xff]
    %v4751 = vld [vmem:[#allocation8 + $0x98] sm:$0xff]
    %v4752 = vld [vmem:[#allocation8 + $0xa0] sm:$0xff]
    %v4753 = vld [vmem:[#allocation8 + $0xa8] sm:$0xff]
    %v4754 = vld [vmem:[#allocation8 + $0xb0] sm:$0xff]
    %v4755 = vld [vmem:[#allocation8 + $0xb8] sm:$0xff]
    %v4756 = vld [vmem:[#allocation8 + $0xc0] sm:$0xff]
    %v4757 = vld [vmem:[#allocation8 + $0xc8] sm:$0xff]
    %v4758 = vld [vmem:[#allocation8 + $0xd0] sm:$0xff]
    %v4759 = vld [vmem:[#allocation8 + $0xd8] sm:$0xff]
    %v4760 = vld [vmem:[#allocation8 + $0xe0] sm:$0xff]
    %v4761 = vld [vmem:[#allocation8 + $0xe8] sm:$0xff]
    %v4762 = vld [vmem:[#allocation8 + $0xf0] sm:$0xff]
    %v4763 = vld [vmem:[#allocation8 + $0xf8] sm:$0xff]
    %v4796 = vunpack.c.l.b16 %v4732
    %v4797 = vunpack.c.h.b16 %v4732
    %v4798 = vunpack.c.l.b16 %v4733
    %v4799 = vunpack.c.h.b16 %v4733
    %v4800 = vunpack.c.l.b16 %v4734
    %v4801 = vunpack.c.h.b16 %v4734
    %v4802 = vunpack.c.l.b16 %v4735
    %v4803 = vunpack.c.h.b16 %v4735
    %v4804 = vunpack.c.l.b16 %v4736
    %v4805 = vunpack.c.h.b16 %v4736
    %v4806 = vunpack.c.l.b16 %v4737
    %v4807 = vunpack.c.h.b16 %v4737
    %v4808 = vunpack.c.l.b16 %v4738
    %v4809 = vunpack.c.h.b16 %v4738
    %v4810 = vunpack.c.l.b16 %v4739
    %v4811 = vunpack.c.h.b16 %v4739
    %v4812 = vunpack.c.l.b16 %v4740
    %v4813 = vunpack.c.h.b16 %v4740
    %v4814 = vunpack.c.l.b16 %v4741
    %v4815 = vunpack.c.h.b16 %v4741
    %v4816 = vunpack.c.l.b16 %v4742
    %v4817 = vunpack.c.h.b16 %v4742
    %v4818 = vunpack.c.l.b16 %v4743
    %v4819 = vunpack.c.h.b16 %v4743
    %v4820 = vunpack.c.l.b16 %v4744
    %v4821 = vunpack.c.h.b16 %v4744
    %v4822 = vunpack.c.l.b16 %v4745
    %v4823 = vunpack.c.h.b16 %v4745
    %v4824 = vunpack.c.l.b16 %v4746
    %v4825 = vunpack.c.h.b16 %v4746
    %v4826 = vunpack.c.l.b16 %v4747
    %v4827 = vunpack.c.h.b16 %v4747
    %v4828 = vunpack.c.l.b16 %v4748
    %v4829 = vunpack.c.h.b16 %v4748
    %v4830 = vunpack.c.l.b16 %v4749
    %v4831 = vunpack.c.h.b16 %v4749
    %v4832 = vunpack.c.l.b16 %v4750
    %v4833 = vunpack.c.h.b16 %v4750
    %v4834 = vunpack.c.l.b16 %v4751
    %v4835 = vunpack.c.h.b16 %v4751
    %v4836 = vunpack.c.l.b16 %v4752
    %v4837 = vunpack.c.h.b16 %v4752
    %v4838 = vunpack.c.l.b16 %v4753
    %v4839 = vunpack.c.h.b16 %v4753
    %v4840 = vunpack.c.l.b16 %v4754
    %v4841 = vunpack.c.h.b16 %v4754
    %v4842 = vunpack.c.l.b16 %v4755
    %v4843 = vunpack.c.h.b16 %v4755
    %v4844 = vunpack.c.l.b16 %v4756
    %v4845 = vunpack.c.h.b16 %v4756
    %v4846 = vunpack.c.l.b16 %v4757
    %v4847 = vunpack.c.h.b16 %v4757
    %v4848 = vunpack.c.l.b16 %v4758
    %v4849 = vunpack.c.h.b16 %v4758
    %v4850 = vunpack.c.l.b16 %v4759
    %v4851 = vunpack.c.h.b16 %v4759
    %v4852 = vunpack.c.l.b16 %v4760
    %v4853 = vunpack.c.h.b16 %v4760
    %v4854 = vunpack.c.l.b16 %v4761
    %v4855 = vunpack.c.h.b16 %v4761
    %v4856 = vunpack.c.l.b16 %v4762
    %v4857 = vunpack.c.h.b16 %v4762
    %v4858 = vunpack.c.l.b16 %v4763
    %v4859 = vunpack.c.h.b16 %v4763
    %v4860 = vpack.c.b16 %v4800, %v4796
    %v4861 = vpack.c.b16 %v4801, %v4797
    %v4862 = vpack.c.b16 %v4802, %v4798
    %v4863 = vpack.c.b16 %v4803, %v4799
    %v4864 = vpack.c.b16 %v4808, %v4804
    %v4865 = vpack.c.b16 %v4809, %v4805
    %v4866 = vpack.c.b16 %v4810, %v4806
    %v4867 = vpack.c.b16 %v4811, %v4807
    %v4868 = vpack.c.b16 %v4816, %v4812
    %v4869 = vpack.c.b16 %v4817, %v4813
    %v4870 = vpack.c.b16 %v4818, %v4814
    %v4871 = vpack.c.b16 %v4819, %v4815
    %v4872 = vpack.c.b16 %v4824, %v4820
    %v4873 = vpack.c.b16 %v4825, %v4821
    %v4874 = vpack.c.b16 %v4826, %v4822
    %v4875 = vpack.c.b16 %v4827, %v4823
    %v4876 = vpack.c.b16 %v4832, %v4828
    %v4877 = vpack.c.b16 %v4833, %v4829
    %v4878 = vpack.c.b16 %v4834, %v4830
    %v4879 = vpack.c.b16 %v4835, %v4831
    %v4880 = vpack.c.b16 %v4840, %v4836
    %v4881 = vpack.c.b16 %v4841, %v4837
    %v4882 = vpack.c.b16 %v4842, %v4838
    %v4883 = vpack.c.b16 %v4843, %v4839
    %v4884 = vpack.c.b16 %v4848, %v4844
    %v4885 = vpack.c.b16 %v4849, %v4845
    %v4886 = vpack.c.b16 %v4850, %v4846
    %v4887 = vpack.c.b16 %v4851, %v4847
    %v4888 = vpack.c.b16 %v4856, %v4852
    %v4889 = vpack.c.b16 %v4857, %v4853
    %v4890 = vpack.c.b16 %v4858, %v4854
    %v4891 = vpack.c.b16 %v4859, %v4855
    %4924 = vmatpush.bf16.msra.mxu0 %v4888
    %4925 = vmatpush.bf16.msra.mxu0 %v4884
    %4926 = vmatpush.bf16.msra.mxu0 %v4880
    %4927 = vmatpush.bf16.msra.mxu0 %v4876
    %4928 = vmatpush.bf16.msra.mxu0 %v4872
    %4929 = vmatpush.bf16.msra.mxu0 %v4868
    %4930 = vmatpush.bf16.msra.mxu0 %v4864
    %4931 = vmatpush.bf16.msra.mxu0 %v4860
    %4932 = vmatmul.bf16.gmra.mxu0 %v4731
    %v4933 = vpop.f32.mrf.mxu0
    %v4934 = vadd.f32 0.0, %v4933
    %v4935 = vpop.f32.mrf.mxu0
    %4936 = vdwg.mxu0
    %4937 = vmatpush.bf16.msra.mxu0 %v4889
    %4938 = vmatpush.bf16.msra.mxu0 %v4885
    %4939 = vmatpush.bf16.msra.mxu0 %v4881
    %4940 = vmatpush.bf16.msra.mxu0 %v4877
    %4941 = vmatpush.bf16.msra.mxu0 %v4873
    %4942 = vmatpush.bf16.msra.mxu0 %v4869
    %4943 = vmatpush.bf16.msra.mxu0 %v4865
    %4944 = vmatpush.bf16.msra.mxu0 %v4861
    %4945 = vmatmul.bf16.gmra.mxu0 %v4731
    %v4946 = vpop.f32.mrf.mxu0
    %v4947 = vadd.f32 0.0, %v4946
    %v4948 = vpop.f32.mrf.mxu0
    %4949 = vdwg.mxu0
    %4950 = vmatpush.bf16.msra.mxu0 %v4890
    %4951 = vmatpush.bf16.msra.mxu0 %v4886
    %4952 = vmatpush.bf16.msra.mxu0 %v4882
    %4953 = vmatpush.bf16.msra.mxu0 %v4878
    %4954 = vmatpush.bf16.msra.mxu0 %v4874
    %4955 = vmatpush.bf16.msra.mxu0 %v4870
    %4956 = vmatpush.bf16.msra.mxu0 %v4866
    %4957 = vmatpush.bf16.msra.mxu0 %v4862
    %4958 = vmatmul.bf16.gmra.mxu0 %v4731
    %v4959 = vpop.f32.mrf.mxu0
    %v4960 = vadd.f32 0.0, %v4959
    %v4961 = vpop.f32.mrf.mxu0
    %4962 = vdwg.mxu0
    %4963 = vmatpush.bf16.msra.mxu0 %v4891
    %4964 = vmatpush.bf16.msra.mxu0 %v4887
    %4965 = vmatpush.bf16.msra.mxu0 %v4883
    %4966 = vmatpush.bf16.msra.mxu0 %v4879
    %4967 = vmatpush.bf16.msra.mxu0 %v4875
    %4968 = vmatpush.bf16.msra.mxu0 %v4871
    %4969 = vmatpush.bf16.msra.mxu0 %v4867
    %4970 = vmatpush.bf16.msra.mxu0 %v4863
    %4971 = vmatmul.bf16.gmra.mxu0 %v4731
    %v4972 = vpop.f32.mrf.mxu0
    %v4973 = vadd.f32 0.0, %v4972
    %v4974 = vpop.f32.mrf.mxu0
    %4975 = vdwg.mxu0
    %v4976 = vadd.f32 %v4726, %v4934
    %v4977 = vadd.f32 %v4727, %v4947
    %v4978 = vadd.f32 %v4728, %v4960
    %v4979 = vadd.f32 %v4729, %v4973
    %v4980 = vxor.u32 %v4976, 2147483648
    %v4981 = vmul.f32 %v4980, 1.442695
    %v4982 = vpow.pop %v4981
    %v4983 = vadd.f32 %v4982, 1.0
    %v4984 = vrcp.pop %v4983
    %v4985 = vmul.f32 %v4983, %v4984
    %v4986 = vsub.f32 1.0, %v4985
    %v4987 = vmul.f32 %v4984, %v4986
    %v4988 = vadd.f32 %v4984, %v4987
    %vm4989 = vweird.f32 %v4983
    %vm4990 = vweird.f32 %v4984
    %vm4991 = vmor %vm4989, %vm4990
    %v4992 = vsel %vm4991, %v4984, %v4988
    %v4993 = vand.u32 2147483647, %v4983
    %vm4994 = vcmp.eq.f32.partialorder %v4993, 8.507059e+37
    %v4995 = vand.u32 %v4983, 2147483648
    %v4996 = vor.u32 1.1754944e-38, %v4995
    %v4997 = vsel %vm4994, %v4996, %v4992
    %v4998 = vmul.f32 1.0, %v4997
    %v4999 = vxor.u32 %v4977, 2147483648
    %v5000 = vmul.f32 %v4999, 1.442695
    %v5001 = vpow.pop %v5000
    %v5002 = vadd.f32 %v5001, 1.0
    %v5003 = vrcp.pop %v5002
    %v5004 = vmul.f32 %v5002, %v5003
    %v5005 = vsub.f32 1.0, %v5004
    %v5006 = vmul.f32 %v5003, %v5005
    %v5007 = vadd.f32 %v5003, %v5006
    %vm5008 = vweird.f32 %v5002
    %vm5009 = vweird.f32 %v5003
    %vm5010 = vmor %vm5008, %vm5009
    %v5011 = vsel %vm5010, %v5003, %v5007
    %v5012 = vand.u32 2147483647, %v5002
    %vm5013 = vcmp.eq.f32.partialorder %v5012, 8.507059e+37
    %v5014 = vand.u32 %v5002, 2147483648
    %v5015 = vor.u32 1.1754944e-38, %v5014
    %v5016 = vsel %vm5013, %v5015, %v5011
    %v5017 = vmul.f32 1.0, %v5016
    %v5018 = vtanh.pop %v4978
    %v5019 = vxor.u32 %v4979, 2147483648
    %v5020 = vmul.f32 %v5019, 1.442695
    %v5021 = vpow.pop %v5020
    %v5022 = vadd.f32 %v5021, 1.0
    %v5023 = vrcp.pop %v5022
    %v5024 = vmul.f32 %v5022, %v5023
    %v5025 = vsub.f32 1.0, %v5024
    %v5026 = vmul.f32 %v5023, %v5025
    %v5027 = vadd.f32 %v5023, %v5026
    %vm5028 = vweird.f32 %v5022
    %vm5029 = vweird.f32 %v5023
    %vm5030 = vmor %vm5028, %vm5029
    %v5031 = vsel %vm5030, %v5023, %v5027
    %v5032 = vand.u32 2147483647, %v5022
    %vm5033 = vcmp.eq.f32.partialorder %v5032, 8.507059e+37
    %v5034 = vand.u32 %v5022, 2147483648
    %v5035 = vor.u32 1.1754944e-38, %v5034
    %v5036 = vsel %vm5033, %v5035, %v5031
    %v5037 = vmul.f32 1.0, %v5036
    %v5038 = vld [vmem:[#allocation3] sm:$0xff]
    %v5039 = vmul.f32 %v5017, %v5038
    %v5040 = vmul.f32 %v4998, %v5018
    %v5041 = vadd.f32 %v5039, %v5040
    %v5042 = vtanh.pop %v5041
    %v5043 = vmul.f32 %v5037, %v5042
    %5044 = vst [vmem:[#allocation3] sm:$0xff] %v5041
    %5045 = vst [vmem:[#allocation2] sm:$0xff] %v5043
    %v5046 = vpack.c.bf16 %v5043, %v5043
    %s5047 = scalar_lea.vmem %s3, 28
    %5048 = vst [vmem:[%s5047] sm:$0xf] %v5046
    %v5049 = vld [vmem:[#allocation7] sm:$0xff]
    %v5050 = vld [vmem:[#allocation7 + $0x8] sm:$0xff]
    %v5051 = vunpack.c.l.bf16 %v5049
    %v5052 = vunpack.c.h.bf16 %v5049
    %v5053 = vunpack.c.l.bf16 %v5050
    %v5054 = vunpack.c.h.bf16 %v5050
    %v5055 = vld [vmem:[#allocation4] sm:$0xff]
    %v5056 = vpack.c.bf16 %v5055, %v5055
    %v5057 = vld [vmem:[%s493] sm:$0xff]
    %v5058 = vld [vmem:[%s493 + $0x8] sm:$0xff]
    %v5059 = vld [vmem:[%s493 + $0x10] sm:$0xff]
    %v5060 = vld [vmem:[%s493 + $0x18] sm:$0xff]
    %v5061 = vld [vmem:[%s493 + $0x20] sm:$0xff]
    %v5062 = vld [vmem:[%s493 + $0x28] sm:$0xff]
    %v5063 = vld [vmem:[%s493 + $0x30] sm:$0xff]
    %v5064 = vld [vmem:[%s493 + $0x38] sm:$0xff]
    %v5065 = vld [vmem:[%s493 + $0x40] sm:$0xff]
    %v5066 = vld [vmem:[%s493 + $0x48] sm:$0xff]
    %v5067 = vld [vmem:[%s493 + $0x50] sm:$0xff]
    %v5068 = vld [vmem:[%s493 + $0x58] sm:$0xff]
    %v5069 = vld [vmem:[%s493 + $0x60] sm:$0xff]
    %v5070 = vld [vmem:[%s493 + $0x68] sm:$0xff]
    %v5071 = vld [vmem:[%s493 + $0x70] sm:$0xff]
    %v5072 = vld [vmem:[%s493 + $0x78] sm:$0xff]
    %v5073 = vld [vmem:[%s493 + $0x80] sm:$0xff]
    %v5074 = vld [vmem:[%s493 + $0x88] sm:$0xff]
    %v5075 = vld [vmem:[%s493 + $0x90] sm:$0xff]
    %v5076 = vld [vmem:[%s493 + $0x98] sm:$0xff]
    %v5077 = vld [vmem:[%s493 + $0xa0] sm:$0xff]
    %v5078 = vld [vmem:[%s493 + $0xa8] sm:$0xff]
    %v5079 = vld [vmem:[%s493 + $0xb0] sm:$0xff]
    %v5080 = vld [vmem:[%s493 + $0xb8] sm:$0xff]
    %v5081 = vld [vmem:[%s493 + $0xc0] sm:$0xff]
    %v5082 = vld [vmem:[%s493 + $0xc8] sm:$0xff]
    %v5083 = vld [vmem:[%s493 + $0xd0] sm:$0xff]
    %v5084 = vld [vmem:[%s493 + $0xd8] sm:$0xff]
    %v5085 = vld [vmem:[%s493 + $0xe0] sm:$0xff]
    %v5086 = vld [vmem:[%s493 + $0xe8] sm:$0xff]
    %v5087 = vld [vmem:[%s493 + $0xf0] sm:$0xff]
    %v5088 = vld [vmem:[%s493 + $0xf8] sm:$0xff]
    %v5121 = vunpack.c.l.b16 %v5057
    %v5122 = vunpack.c.h.b16 %v5057
    %v5123 = vunpack.c.l.b16 %v5058
    %v5124 = vunpack.c.h.b16 %v5058
    %v5125 = vunpack.c.l.b16 %v5059
    %v5126 = vunpack.c.h.b16 %v5059
    %v5127 = vunpack.c.l.b16 %v5060
    %v5128 = vunpack.c.h.b16 %v5060
    %v5129 = vunpack.c.l.b16 %v5061
    %v5130 = vunpack.c.h.b16 %v5061
    %v5131 = vunpack.c.l.b16 %v5062
    %v5132 = vunpack.c.h.b16 %v5062
    %v5133 = vunpack.c.l.b16 %v5063
    %v5134 = vunpack.c.h.b16 %v5063
    %v5135 = vunpack.c.l.b16 %v5064
    %v5136 = vunpack.c.h.b16 %v5064
    %v5137 = vunpack.c.l.b16 %v5065
    %v5138 = vunpack.c.h.b16 %v5065
    %v5139 = vunpack.c.l.b16 %v5066
    %v5140 = vunpack.c.h.b16 %v5066
    %v5141 = vunpack.c.l.b16 %v5067
    %v5142 = vunpack.c.h.b16 %v5067
    %v5143 = vunpack.c.l.b16 %v5068
    %v5144 = vunpack.c.h.b16 %v5068
    %v5145 = vunpack.c.l.b16 %v5069
    %v5146 = vunpack.c.h.b16 %v5069
    %v5147 = vunpack.c.l.b16 %v5070
    %v5148 = vunpack.c.h.b16 %v5070
    %v5149 = vunpack.c.l.b16 %v5071
    %v5150 = vunpack.c.h.b16 %v5071
    %v5151 = vunpack.c.l.b16 %v5072
    %v5152 = vunpack.c.h.b16 %v5072
    %v5153 = vunpack.c.l.b16 %v5073
    %v5154 = vunpack.c.h.b16 %v5073
    %v5155 = vunpack.c.l.b16 %v5074
    %v5156 = vunpack.c.h.b16 %v5074
    %v5157 = vunpack.c.l.b16 %v5075
    %v5158 = vunpack.c.h.b16 %v5075
    %v5159 = vunpack.c.l.b16 %v5076
    %v5160 = vunpack.c.h.b16 %v5076
    %v5161 = vunpack.c.l.b16 %v5077
    %v5162 = vunpack.c.h.b16 %v5077
    %v5163 = vunpack.c.l.b16 %v5078
    %v5164 = vunpack.c.h.b16 %v5078
    %v5165 = vunpack.c.l.b16 %v5079
    %v5166 = vunpack.c.h.b16 %v5079
    %v5167 = vunpack.c.l.b16 %v5080
    %v5168 = vunpack.c.h.b16 %v5080
    %v5169 = vunpack.c.l.b16 %v5081
    %v5170 = vunpack.c.h.b16 %v5081
    %v5171 = vunpack.c.l.b16 %v5082
    %v5172 = vunpack.c.h.b16 %v5082
    %v5173 = vunpack.c.l.b16 %v5083
    %v5174 = vunpack.c.h.b16 %v5083
    %v5175 = vunpack.c.l.b16 %v5084
    %v5176 = vunpack.c.h.b16 %v5084
    %v5177 = vunpack.c.l.b16 %v5085
    %v5178 = vunpack.c.h.b16 %v5085
    %v5179 = vunpack.c.l.b16 %v5086
    %v5180 = vunpack.c.h.b16 %v5086
    %v5181 = vunpack.c.l.b16 %v5087
    %v5182 = vunpack.c.h.b16 %v5087
    %v5183 = vunpack.c.l.b16 %v5088
    %v5184 = vunpack.c.h.b16 %v5088
    %v5185 = vpack.c.b16 %v5125, %v5121
    %v5186 = vpack.c.b16 %v5126, %v5122
    %v5187 = vpack.c.b16 %v5127, %v5123
    %v5188 = vpack.c.b16 %v5128, %v5124
    %v5189 = vpack.c.b16 %v5133, %v5129
    %v5190 = vpack.c.b16 %v5134, %v5130
    %v5191 = vpack.c.b16 %v5135, %v5131
    %v5192 = vpack.c.b16 %v5136, %v5132
    %v5193 = vpack.c.b16 %v5141, %v5137
    %v5194 = vpack.c.b16 %v5142, %v5138
    %v5195 = vpack.c.b16 %v5143, %v5139
    %v5196 = vpack.c.b16 %v5144, %v5140
    %v5197 = vpack.c.b16 %v5149, %v5145
    %v5198 = vpack.c.b16 %v5150, %v5146
    %v5199 = vpack.c.b16 %v5151, %v5147
    %v5200 = vpack.c.b16 %v5152, %v5148
    %v5201 = vpack.c.b16 %v5157, %v5153
    %v5202 = vpack.c.b16 %v5158, %v5154
    %v5203 = vpack.c.b16 %v5159, %v5155
    %v5204 = vpack.c.b16 %v5160, %v5156
    %v5205 = vpack.c.b16 %v5165, %v5161
    %v5206 = vpack.c.b16 %v5166, %v5162
    %v5207 = vpack.c.b16 %v5167, %v5163
    %v5208 = vpack.c.b16 %v5168, %v5164
    %v5209 = vpack.c.b16 %v5173, %v5169
    %v5210 = vpack.c.b16 %v5174, %v5170
    %v5211 = vpack.c.b16 %v5175, %v5171
    %v5212 = vpack.c.b16 %v5176, %v5172
    %v5213 = vpack.c.b16 %v5181, %v5177
    %v5214 = vpack.c.b16 %v5182, %v5178
    %v5215 = vpack.c.b16 %v5183, %v5179
    %v5216 = vpack.c.b16 %v5184, %v5180
    %5249 = vmatpush.bf16.msra.mxu0 %v5213
    %5250 = vmatpush.bf16.msra.mxu0 %v5209
    %5251 = vmatpush.bf16.msra.mxu0 %v5205
    %5252 = vmatpush.bf16.msra.mxu0 %v5201
    %5253 = vmatpush.bf16.msra.mxu0 %v5197
    %5254 = vmatpush.bf16.msra.mxu0 %v5193
    %5255 = vmatpush.bf16.msra.mxu0 %v5189
    %5256 = vmatpush.bf16.msra.mxu0 %v5185
    %5257 = vmatmul.bf16.gmra.mxu0 %v5056
    %v5258 = vpop.f32.mrf.mxu0
    %v5259 = vadd.f32 0.0, %v5258
    %v5260 = vpop.f32.mrf.mxu0
    %5261 = vdwg.mxu0
    %5262 = vmatpush.bf16.msra.mxu0 %v5214
    %5263 = vmatpush.bf16.msra.mxu0 %v5210
    %5264 = vmatpush.bf16.msra.mxu0 %v5206
    %5265 = vmatpush.bf16.msra.mxu0 %v5202
    %5266 = vmatpush.bf16.msra.mxu0 %v5198
    %5267 = vmatpush.bf16.msra.mxu0 %v5194
    %5268 = vmatpush.bf16.msra.mxu0 %v5190
    %5269 = vmatpush.bf16.msra.mxu0 %v5186
    %5270 = vmatmul.bf16.gmra.mxu0 %v5056
    %v5271 = vpop.f32.mrf.mxu0
    %v5272 = vadd.f32 0.0, %v5271
    %v5273 = vpop.f32.mrf.mxu0
    %5274 = vdwg.mxu0
    %5275 = vmatpush.bf16.msra.mxu0 %v5215
    %5276 = vmatpush.bf16.msra.mxu0 %v5211
    %5277 = vmatpush.bf16.msra.mxu0 %v5207
    %5278 = vmatpush.bf16.msra.mxu0 %v5203
    %5279 = vmatpush.bf16.msra.mxu0 %v5199
    %5280 = vmatpush.bf16.msra.mxu0 %v5195
    %5281 = vmatpush.bf16.msra.mxu0 %v5191
    %5282 = vmatpush.bf16.msra.mxu0 %v5187
    %5283 = vmatmul.bf16.gmra.mxu0 %v5056
    %v5284 = vpop.f32.mrf.mxu0
    %v5285 = vadd.f32 0.0, %v5284
    %v5286 = vpop.f32.mrf.mxu0
    %5287 = vdwg.mxu0
    %5288 = vmatpush.bf16.msra.mxu0 %v5216
    %5289 = vmatpush.bf16.msra.mxu0 %v5212
    %5290 = vmatpush.bf16.msra.mxu0 %v5208
    %5291 = vmatpush.bf16.msra.mxu0 %v5204
    %5292 = vmatpush.bf16.msra.mxu0 %v5200
    %5293 = vmatpush.bf16.msra.mxu0 %v5196
    %5294 = vmatpush.bf16.msra.mxu0 %v5192
    %5295 = vmatpush.bf16.msra.mxu0 %v5188
    %5296 = vmatmul.bf16.gmra.mxu0 %v5056
    %v5297 = vpop.f32.mrf.mxu0
    %v5298 = vadd.f32 0.0, %v5297
    %v5299 = vpop.f32.mrf.mxu0
    %5300 = vdwg.mxu0
    %v5301 = vadd.f32 %v5051, %v5259
    %v5302 = vadd.f32 %v5052, %v5272
    %v5303 = vadd.f32 %v5053, %v5285
    %v5304 = vadd.f32 %v5054, %v5298
    %v5305 = vxor.u32 %v5301, 2147483648
    %v5306 = vmul.f32 %v5305, 1.442695
    %v5307 = vpow.pop %v5306
    %v5308 = vadd.f32 %v5307, 1.0
    %v5309 = vrcp.pop %v5308
    %v5310 = vmul.f32 %v5308, %v5309
    %v5311 = vsub.f32 1.0, %v5310
    %v5312 = vmul.f32 %v5309, %v5311
    %v5313 = vadd.f32 %v5309, %v5312
    %vm5314 = vweird.f32 %v5308
    %vm5315 = vweird.f32 %v5309
    %vm5316 = vmor %vm5314, %vm5315
    %v5317 = vsel %vm5316, %v5309, %v5313
    %v5318 = vand.u32 2147483647, %v5308
    %vm5319 = vcmp.eq.f32.partialorder %v5318, 8.507059e+37
    %v5320 = vand.u32 %v5308, 2147483648
    %v5321 = vor.u32 1.1754944e-38, %v5320
    %v5322 = vsel %vm5319, %v5321, %v5317
    %v5323 = vmul.f32 1.0, %v5322
    %v5324 = vxor.u32 %v5302, 2147483648
    %v5325 = vmul.f32 %v5324, 1.442695
    %v5326 = vpow.pop %v5325
    %v5327 = vadd.f32 %v5326, 1.0
    %v5328 = vrcp.pop %v5327
    %v5329 = vmul.f32 %v5327, %v5328
    %v5330 = vsub.f32 1.0, %v5329
    %v5331 = vmul.f32 %v5328, %v5330
    %v5332 = vadd.f32 %v5328, %v5331
    %vm5333 = vweird.f32 %v5327
    %vm5334 = vweird.f32 %v5328
    %vm5335 = vmor %vm5333, %vm5334
    %v5336 = vsel %vm5335, %v5328, %v5332
    %v5337 = vand.u32 2147483647, %v5327
    %vm5338 = vcmp.eq.f32.partialorder %v5337, 8.507059e+37
    %v5339 = vand.u32 %v5327, 2147483648
    %v5340 = vor.u32 1.1754944e-38, %v5339
    %v5341 = vsel %vm5338, %v5340, %v5336
    %v5342 = vmul.f32 1.0, %v5341
    %v5343 = vtanh.pop %v5303
    %v5344 = vxor.u32 %v5304, 2147483648
    %v5345 = vmul.f32 %v5344, 1.442695
    %v5346 = vpow.pop %v5345
    %v5347 = vadd.f32 %v5346, 1.0
    %v5348 = vrcp.pop %v5347
    %v5349 = vmul.f32 %v5347, %v5348
    %v5350 = vsub.f32 1.0, %v5349
    %v5351 = vmul.f32 %v5348, %v5350
    %v5352 = vadd.f32 %v5348, %v5351
    %vm5353 = vweird.f32 %v5347
    %vm5354 = vweird.f32 %v5348
    %vm5355 = vmor %vm5353, %vm5354
    %v5356 = vsel %vm5355, %v5348, %v5352
    %v5357 = vand.u32 2147483647, %v5347
    %vm5358 = vcmp.eq.f32.partialorder %v5357, 8.507059e+37
    %v5359 = vand.u32 %v5347, 2147483648
    %v5360 = vor.u32 1.1754944e-38, %v5359
    %v5361 = vsel %vm5358, %v5360, %v5356
    %v5362 = vmul.f32 1.0, %v5361
    %v5363 = vld [vmem:[#allocation5] sm:$0xff]
    %v5364 = vmul.f32 %v5342, %v5363
    %v5365 = vmul.f32 %v5323, %v5343
    %v5366 = vadd.f32 %v5364, %v5365
    %v5367 = vtanh.pop %v5366
    %v5368 = vmul.f32 %v5362, %v5367
    %5369 = vst [vmem:[#allocation5] sm:$0xff] %v5366
    %5370 = vst [vmem:[#allocation4] sm:$0xff] %v5368
    %v5371 = vpack.c.bf16 %v5368, %v5368
    %5372 = vst [vmem:[%s149] sm:$0xf] %v5371
    %s5373 = ssub.s32 0, 0
    %s5374 = smul.u32 8, %s5373
    %p5375 = scmp.lt.s32.totalorder %s5374, 7
    %s5376 = scalar_select %p5375, %s5374, 7
    %s5377 = smul.addr %s5376, 4
    %s5378 = scalar_lea.vmem %s4, %s5377
    // Predicated region
    $region68: #{bidirectional_lstm.4} parent=1 // pred_check
      _
    $region69: #{bidirectional_lstm.4} parent=1 // pred_check_branch
      %5380 = sbr.rel (0) target = $region71
    $region70: #{bidirectional_lstm.4} parent=1 // pred_region
      _
    $region71: #{bidirectional_lstm.4} parent=1 // pred_fallthru
      _
    // Predicated region
    $region72: #{bidirectional_lstm.4} parent=1 // pred_check
      _
    $region73: #{bidirectional_lstm.4} parent=1 // pred_check_branch
      %5382 = sbr.rel (0) target = $region75
    $region74: #{bidirectional_lstm.4} parent=1 // pred_region
      %s5383 = ssub.s32 0, 0
      %s5384 = smul.u32 8, %s5383
    $region75: #{bidirectional_lstm.4} parent=1 // pred_fallthru
      _
    // Predicated region
    $region76: #{bidirectional_lstm.4} parent=1 // pred_check
      _
    $region77: #{bidirectional_lstm.4} parent=1 // pred_check_branch
      %5386 = sbr.rel (0) target = $region79
    $region78: #{bidirectional_lstm.4} parent=1 // pred_region
      _
    $region79: #{bidirectional_lstm.4} parent=1 // pred_fallthru
      _
    // Predicated region
    $region80: #{bidirectional_lstm.4} parent=1 // pred_check
      _
    $region81: #{bidirectional_lstm.4} parent=1 // pred_check_branch
      %5388 = sbr.rel (0) target = $region83
    $region82: #{bidirectional_lstm.4} parent=1 // pred_region
      %s5389 = ssub.s32 0, 0
      %s5390 = smul.u32 8, %s5389
      %p5391 = scmp.lt.s32.totalorder %s5390, 7
      %s5392 = scalar_select %p5391, %s5390, 7
      %s5393 = smul.addr %s5392, 4
      %s5394 = scalar_lea.vmem %s4, %s5393
    $region83: #{bidirectional_lstm.4} parent=1 // pred_fallthru
      _
    %5395 = vsyncpa [#allocation9], 1

</llo_original>
